<compile_context>
chip_gen: v7x
topology: tpu7x:2x2x1
jax: 0.10.0
libtpu: 0.0.40
codegen_flags: <defaults>
</compile_context>

<pallas_src>
import functools

import jax
import jax.numpy as jnp
from jax.experimental import pallas as pl
from jax.experimental.pallas import tpu as pltpu


# ----------------------------------------------------------------------------- kernels

def _mm_bias_bn_relu_kernel(x_ref, w_ref, b_ref, g_ref, beta_ref, o_ref, *, n_rows):
    # matmul (bf16 operands, f32 accumulate) + bias + train-mode BN + ReLU in one body.
    y = jnp.dot(x_ref[...].astype(jnp.bfloat16), w_ref[...].astype(jnp.bfloat16),
                preferred_element_type=jnp.float32)
    y = y + b_ref[...]
    inv_n = 1.0 / float(n_rows)
    mean = jnp.sum(y, axis=0, keepdims=True) * inv_n
    d = y - mean
    var = jnp.sum(d * d, axis=0, keepdims=True) * inv_n          # biased var (PyTorch train)
    y = d * jax.lax.rsqrt(var + 1e-5) * g_ref[...] + beta_ref[...]
    o_ref[...] = jnp.maximum(y, 0.0)


def mm_bias_bn_relu(x, w, b2, g2, beta2):
    """y = relu(batchnorm(x @ w + b)) over rows; single fused Pallas kernel."""
    R, K = x.shape
    C = w.shape[1]
    return pl.pallas_call(
        functools.partial(_mm_bias_bn_relu_kernel, n_rows=R),
        grid=(1,),
        in_specs=[
            pl.BlockSpec((R, K), lambda i: (0, 0)),
            pl.BlockSpec((K, C), lambda i: (0, 0)),
            pl.BlockSpec((1, C), lambda i: (0, 0)),
            pl.BlockSpec((1, C), lambda i: (0, 0)),
            pl.BlockSpec((1, C), lambda i: (0, 0)),
        ],
        out_specs=pl.BlockSpec((R, C), lambda i: (0, 0)),
        out_shape=jax.ShapeDtypeStruct((R, C), jnp.float32),
        cost_estimate=pl.CostEstimate(
            flops=2 * R * K * C + 8 * R * C,
            transcendentals=C,
            bytes_accessed=4 * (R * K + K * C + R * C + 3 * C)),
    )(x, w, b2, g2, beta2)


def _mm_bias_sigmoid_kernel(x_ref, w_ref, b_ref, o_ref):
    y = jnp.dot(x_ref[...].astype(jnp.bfloat16), w_ref[...].astype(jnp.bfloat16),
                preferred_element_type=jnp.float32)
    o_ref[...] = jax.nn.sigmoid(y + b_ref[...])


def mm_bias_sigmoid(x, w, b2):
    """Final layer: y = sigmoid(x @ w + b); row-blocked grid, parallel over TensorCores."""
    R, K = x.shape
    C = w.shape[1]
    n_blk = 2 if (R % 2 == 0 and (R // 2) % 8 == 0 and R >= 256) else 1
    rb = R // n_blk
    return pl.pallas_call(
        _mm_bias_sigmoid_kernel,
        grid=(n_blk,),
        in_specs=[
            pl.BlockSpec((rb, K), lambda i: (i, 0)),
            pl.BlockSpec((K, C), lambda i: (0, 0)),
            pl.BlockSpec((1, C), lambda i: (0, 0)),
        ],
        out_specs=pl.BlockSpec((rb, C), lambda i: (i, 0)),
        out_shape=jax.ShapeDtypeStruct((R, C), jnp.float32),
        compiler_params=pltpu.CompilerParams(dimension_semantics=("parallel",)),
        cost_estimate=pl.CostEstimate(
            flops=2 * R * K * C,
            transcendentals=R * C,
            bytes_accessed=4 * (R * K + K * C + R * C)),
    )(x, w, b2)


def _fc_latent_kernel(x_ref, eps_ref,
                      fcw_ref, fcb_ref, fcg_ref, fcbeta_ref,
                      zmw_ref, zmb_ref, zlw_ref, zlb_ref,
                      d1w_ref, d1b_ref, d1g_ref, d1beta_ref,
                      d2w_ref, d2b_ref, d2g_ref, d2beta_ref,
                      zm_ref, zl_ref, enc_ref, dec_ref, *, n_rows):
    """Whole FC/latent middle: fc->BN->ReLU, z heads, sample, d1->BN->ReLU, d2->BN->ReLU."""
    inv_n = 1.0 / float(n_rows)

    def bn_relu(y, g, beta):
        mean = jnp.sum(y, axis=0, keepdims=True) * inv_n
        d = y - mean
        var = jnp.sum(d * d, axis=0, keepdims=True) * inv_n
        return jnp.maximum(d * jax.lax.rsqrt(var + 1e-5) * g + beta, 0.0)

    h = jnp.dot(x_ref[...], fcw_ref[...], preferred_element_type=jnp.float32) + fcb_ref[...]
    h = bn_relu(h, fcg_ref[...], fcbeta_ref[...])                       # (N, 64)

    zm = jnp.dot(h, zmw_ref[...], preferred_element_type=jnp.float32) + zmb_ref[...]
    zl = jnp.dot(h, zlw_ref[...], preferred_element_type=jnp.float32) + zlb_ref[...]
    enc = zm + eps_ref[...] * jnp.exp(zl * 0.5)                         # reparameterization

    u = jnp.dot(enc, d1w_ref[...], preferred_element_type=jnp.float32) + d1b_ref[...]
    u = bn_relu(u, d1g_ref[...], d1beta_ref[...])                       # (N, 64)
    v = jnp.dot(u, d2w_ref[...], preferred_element_type=jnp.float32) + d2b_ref[...]
    v = bn_relu(v, d2g_ref[...], d2beta_ref[...])                       # (N, 1152)

    zm_ref[...] = zm
    zl_ref[...] = zl
    enc_ref[...] = enc
    dec_ref[...] = v


def _full_spec(shape):
    return pl.BlockSpec(shape, lambda i: (0,) * len(shape))


def fc_latent_block(x, eps, q):
    N = x.shape[0]
    L = q["zm_w"].shape[1]
    D2 = q["d2_w"].shape[1]
    K1 = q["fc_w"].shape[0]
    ins = (x, eps,
           q["fc_w"], q["fc_b"], q["bnfc_g"], q["bnfc_b"],
           q["zm_w"], q["zm_b"], q["zl_w"], q["zl_b"],
           q["d1_w"], q["d1_b"], q["dbn1_g"], q["dbn1_b"],
           q["d2_w"], q["d2_b"], q["dbn2_g"], q["dbn2_b"])
    out_shape = (jax.ShapeDtypeStruct((N, L), jnp.float32),
                 jax.ShapeDtypeStruct((N, L), jnp.float32),
                 jax.ShapeDtypeStruct((N, L), jnp.float32),
                 jax.ShapeDtypeStruct((N, D2), jnp.float32))
    return pl.pallas_call(
        functools.partial(_fc_latent_kernel, n_rows=N),
        grid=(1,),
        in_specs=[_full_spec(a.shape) for a in ins],
        out_specs=tuple(_full_spec(s.shape) for s in out_shape),
        out_shape=out_shape,
        cost_estimate=pl.CostEstimate(
            flops=2 * N * (K1 * 64 + 2 * 64 * L + L * 64 + 64 * D2),
            transcendentals=N * L + 8,
            bytes_accessed=4 * sum(int(a.size) for a in ins)),
    )(*ins)


# ----------------------------------------------------------------------------- conv glue

def _im2col(x_nhwc, kh, kw, stride):
    """x already padded; returns (N*OH*OW, kh*kw*C) patches in (kh, kw, cin) order."""
    # TODO(synk): patch extraction stays host-side XLA (strided slices + stack); moving it
    # in-kernel would need strided VMEM slicing / leading-dim reshapes Mosaic handles poorly.
    N, H, W, C = x_nhwc.shape
    OH = (H - kh) // stride + 1
    OW = (W - kw) // stride + 1
    cols = []
    for i in range(kh):
        for j in range(kw):
            cols.append(x_nhwc[:, i:i + (OH - 1) * stride + 1:stride,
                               j:j + (OW - 1) * stride + 1:stride, :])
    patches = jnp.stack(cols, axis=3)                       # (N, OH, OW, kh*kw, C)
    return patches.reshape(N * OH * OW, kh * kw * C), N, OH, OW


def _dilate(x, stride):
    """Zero-interleave rows/cols (ConvTranspose stride) via pad+reshape (no scatter)."""
    if stride == 1:
        return x
    N, H, W, C = x.shape
    x6 = x[:, :, None, :, None, :]
    x6 = jnp.pad(x6, ((0, 0), (0, 0), (0, stride - 1), (0, 0), (0, stride - 1), (0, 0)))
    xd = x6.reshape(N, H * stride, W * stride, C)
    return xd[:, :(H - 1) * stride + 1, :(W - 1) * stride + 1, :]


def conv_bn_relu(x_nhwc, w2, b2, g2, beta2, kh, kw, stride, pad):
    xp = jnp.pad(x_nhwc, ((0, 0), (pad, pad), (pad, pad), (0, 0)))
    patches, N, OH, OW = _im2col(xp, kh, kw, stride)
    y = mm_bias_bn_relu(patches, w2, b2, g2, beta2)
    return y.reshape(N, OH, OW, w2.shape[1])


def convt_bn_relu(x_nhwc, w2, b2, g2, beta2, kh, kw, stride, pad, out_pad):
    """ConvTranspose2d == dilate(stride) + asymmetric pad + conv(flipped W, stride 1)."""
    xd = _dilate(x_nhwc, stride)
    p_lo = kh - 1 - pad
    p_hi = kh - 1 - pad + out_pad
    xp = jnp.pad(xd, ((0, 0), (p_lo, p_hi), (p_lo, p_hi), (0, 0)))
    patches, N, OH, OW = _im2col(xp, kh, kw, 1)
    y = mm_bias_bn_relu(patches, w2, b2, g2, beta2)
    return y.reshape(N, OH, OW, w2.shape[1])


def convt_sigmoid(x_nhwc, w2, b2, kh, kw, stride, pad, out_pad):
    xd = _dilate(x_nhwc, stride)
    p_lo = kh - 1 - pad
    p_hi = kh - 1 - pad + out_pad
    xp = jnp.pad(xd, ((0, 0), (p_lo, p_hi), (p_lo, p_hi), (0, 0)))
    patches, N, OH, OW = _im2col(xp, kh, kw, 1)
    y = mm_bias_sigmoid(patches, w2, b2)
    return y.reshape(N, OH, OW, w2.shape[1])


# ----------------------------------------------------------------------------- parameters

def init_params(key, n_channels, latent_dim):
    """PyTorch-layout parameters: Conv2d (Cout,Cin,KH,KW), ConvT (Cin,Cout,KH,KW), Linear (out,in)."""
    keys = iter(jax.random.split(key, 32))

    def w(shape, scale=0.1):
        return jax.random.normal(next(keys), shape, jnp.float32) * scale

    p = {}

    def bn(name, c):
        p[name + "_g"] = jnp.ones((c,), jnp.float32)
        p[name + "_b"] = jnp.zeros((c,), jnp.float32)

    p["c1_w"] = w((16, n_channels, 3, 3)); p["c1_b"] = w((16,)); bn("bn1", 16)
    p["c2_w"] = w((32, 16, 3, 3));         p["c2_b"] = w((32,)); bn("bn2", 32)
    p["c3_w"] = w((64, 32, 3, 3));         p["c3_b"] = w((64,)); bn("bn3", 64)
    p["c4_w"] = w((128, 64, 2, 2));        p["c4_b"] = w((128,)); bn("bn4", 128)
    p["fc_w"] = w((64, 128 * 3 * 3), 0.02); p["fc_b"] = w((64,)); bn("bnfc", 64)
    p["zm_w"] = w((latent_dim, 64)); p["zm_b"] = w((latent_dim,))
    p["zl_w"] = w((latent_dim, 64)); p["zl_b"] = w((latent_dim,))
    p["d1_w"] = w((64, latent_dim));            p["d1_b"] = w((64,)); bn("dbn1", 64)
    p["d2_w"] = w((128 * 3 * 3, 64), 0.05);     p["d2_b"] = w((128 * 3 * 3,)); bn("dbn2", 1152)
    p["t1_w"] = w((128, 64, 2, 2)); p["t1_b"] = w((64,)); bn("tbn1", 64)
    p["t2_w"] = w((64, 32, 3, 3));  p["t2_b"] = w((32,)); bn("tbn2", 32)
    p["t3_w"] = w((32, 16, 3, 3));  p["t3_b"] = w((16,)); bn("tbn3", 16)
    p["t4_w"] = w((16, n_channels, 3, 3)); p["t4_b"] = w((n_channels,))
    return p


def prepare_params(p):
    """One-time layout prep so the forward path has no weight transposes/flips/reshapes."""
    q = {}

    def conv_w(w_oihw):                                       # -> (KH*KW*Cin, Cout)
        cout, cin, kh, kw = w_oihw.shape
        return jnp.transpose(w_oihw, (2, 3, 1, 0)).reshape(kh * kw * cin, cout)

    def convt_w(w_iohw):                                      # flip + -> (KH*KW*Cin, Cout)
        cin, cout, kh, kw = w_iohw.shape
        wf = jnp.flip(w_iohw, axis=(2, 3))
        return jnp.transpose(wf, (2, 3, 0, 1)).reshape(kh * kw * cin, cout)

    def row(v):
        return v.reshape(1, -1).astype(jnp.float32)

    for name in ("c1", "c2", "c3", "c4"):
        q[name + "_w"] = conv_w(p[name + "_w"]); q[name + "_b"] = row(p[name + "_b"])
    for name in ("t1", "t2", "t3", "t4"):
        q[name + "_w"] = convt_w(p[name + "_w"]); q[name + "_b"] = row(p[name + "_b"])
    for name in ("bn1", "bn2", "bn3", "bn4", "bnfc", "dbn1", "dbn2", "tbn1", "tbn2", "tbn3"):
        q[name + "_g"] = row(p[name + "_g"]); q[name + "_b"] = row(p[name + "_b"])
    for name in ("fc", "zm", "zl", "d1", "d2"):               # Linear -> (in, out)
        q[name + "_w"] = jnp.asarray(p[name + "_w"].T, jnp.float32)
        q[name + "_b"] = row(p[name + "_b"])
    return q


# ----------------------------------------------------------------------------- forward

def vae_forward(q, x_nchw, eps):
    x = jnp.transpose(x_nchw, (0, 2, 3, 1)).astype(jnp.float32)       # NCHW -> NHWC

    # encoder: each layer = one fused (im2col-matmul + bias + BN + ReLU) kernel
    x = conv_bn_relu(x, q["c1_w"], q["c1_b"], q["bn1_g"], q["bn1_b"], 3, 3, 2, 1)   # (N,14,14,16)
    x = conv_bn_relu(x, q["c2_w"], q["c2_b"], q["bn2_g"], q["bn2_b"], 3, 3, 2, 1)   # (N, 7, 7,32)
    x = conv_bn_relu(x, q["c3_w"], q["c3_b"], q["bn3_g"], q["bn3_b"], 3, 3, 2, 1)   # (N, 4, 4,64)
    x = conv_bn_relu(x, q["c4_w"], q["c4_b"], q["bn4_g"], q["bn4_b"], 2, 2, 1, 0)   # (N, 3, 3,128)

    N = x.shape[0]
    x = jnp.transpose(x, (0, 3, 1, 2)).reshape(N, -1)                 # torch Flatten (C,H,W) order

    # one fused kernel for fc -> BN -> ReLU -> {z_mean, z_log_var} -> sample -> d1 -> BN -> ReLU -> d2 -> BN -> ReLU
    z_mean, z_log_var, encoded, d = fc_latent_block(x, eps, q)

    d = d.reshape(N, 128, 3, 3)                                       # torch Unflatten
    d = jnp.transpose(d, (0, 2, 3, 1))                                # -> NHWC (N,3,3,128)

    # decoder: each transposed-conv layer = one fused kernel
    d = convt_bn_relu(d, q["t1_w"], q["t1_b"], q["tbn1_g"], q["tbn1_b"], 2, 2, 1, 0, 0)  # (N, 4, 4,64)
    d = convt_bn_relu(d, q["t2_w"], q["t2_b"], q["tbn2_g"], q["tbn2_b"], 3, 3, 2, 1, 0)  # (N, 7, 7,32)
    d = convt_bn_relu(d, q["t3_w"], q["t3_b"], q["tbn3_g"], q["tbn3_b"], 3, 3, 2, 1, 1)  # (N,14,14,16)
    decoded = convt_sigmoid(d, q["t4_w"], q["t4_b"], 3, 3, 2, 1, 1)                       # (N,28,28,nc)
    decoded = jnp.transpose(decoded, (0, 3, 1, 2))                    # NHWC -> NCHW

    return encoded, z_mean, z_log_var, decoded


# ----------------------------------------------------------------------------- main

if __name__ == "__main__":
    key = jax.random.PRNGKey(0)
    kp, kx, ke = jax.random.split(key, 3)

    n_channels, latent_dim, batch = 3, 8, 2
    params = init_params(kp, n_channels, latent_dim)
    prepared = prepare_params(params)                 # one-time weight layout (outside jit)

    # MNIST-like spatial size (28) is required by the architecture (flatten = 128*3*3)
    x = jax.random.uniform(kx, (batch, n_channels, 28, 28), jnp.float32)
    # TODO(synk): torch.randn eps is generated host-side with jax.random (no in-kernel RNG)
    eps = jax.random.normal(ke, (batch, latent_dim), jnp.float32)

    fwd = jax.jit(vae_forward)
    encoded, z_mean, z_log_var, decoded = fwd(prepared, x, eps)
    jax.block_until_ready((encoded, z_mean, z_log_var, decoded))

    assert encoded.shape == (batch, latent_dim)
    assert z_mean.shape == (batch, latent_dim)
    assert z_log_var.shape == (batch, latent_dim)
    assert decoded.shape == (batch, n_channels, 28, 28)
    assert bool(jnp.all(jnp.isfinite(encoded)))
    assert bool(jnp.all(jnp.isfinite(decoded)))
    print("KERNEL_OK")
</pallas_src>

<mosaic_0001>
module attributes {stable_mosaic.version = 11 : i64} {
  func.func @_mm_bias_bn_relu_kernel(%arg0: i32, %arg1: memref<392x27xf32, #tpu.memory_space<vmem>>, %arg2: memref<27x16xf32, #tpu.memory_space<vmem>>, %arg3: memref<1x16xf32, #tpu.memory_space<vmem>>, %arg4: memref<1x16xf32, #tpu.memory_space<vmem>>, %arg5: memref<1x16xf32, #tpu.memory_space<vmem>>, %arg6: memref<392x16xf32, #tpu.memory_space<vmem>>) attributes {dimension_semantics = [#tpu.dimension_semantics<arbitrary>], iteration_bounds = array<i64: 1>, scalar_prefetch = 0 : i64, scratch_operands = 0 : i64, tpu.core_type = #tpu.core_type<tc>, window_params = [{pipeline_mode = #tpu.pipeline_mode<synchronous>, transform_indices = @transform_0, window_bounds = array<i64: 392, 27>}, {pipeline_mode = #tpu.pipeline_mode<synchronous>, transform_indices = @transform_1, window_bounds = array<i64: 27, 16>}, {pipeline_mode = #tpu.pipeline_mode<synchronous>, transform_indices = @transform_2, window_bounds = array<i64: 1, 16>}, {pipeline_mode = #tpu.pipeline_mode<synchronous>, transform_indices = @transform_3, window_bounds = array<i64: 1, 16>}, {pipeline_mode = #tpu.pipeline_mode<synchronous>, transform_indices = @transform_4, window_bounds = array<i64: 1, 16>}, {pipeline_mode = #tpu.pipeline_mode<synchronous>, transform_indices = @transform_5, window_bounds = array<i64: 392, 16>}]} {
    %c0 = arith.constant 0 : index
    %c0_0 = arith.constant 0 : index
    %0 = vector.load %arg1[%c0, %c0_0] : memref<392x27xf32, #tpu.memory_space<vmem>>, vector<392x27xf32>
    %1 = arith.truncf %0 : vector<392x27xf32> to vector<392x27xbf16>
    %c0_1 = arith.constant 0 : index
    %c0_2 = arith.constant 0 : index
    %2 = vector.load %arg2[%c0_1, %c0_2] : memref<27x16xf32, #tpu.memory_space<vmem>>, vector<27x16xf32>
    %3 = arith.truncf %2 : vector<27x16xf32> to vector<27x16xbf16>
    %cst = arith.constant dense<0.000000e+00> : vector<392x16xf32>
    %4 = tpu.matmul %1, %3, %cst {dimension_numbers = #tpu.dot_dimension_numbers<[1], [0], [0], [1], [0, 0, 1, 1], [], []>} : vector<392x27xbf16>, vector<27x16xbf16>, vector<392x16xf32> -> vector<392x16xf32>
    %c0_3 = arith.constant 0 : index
    %c0_4 = arith.constant 0 : index
    %5 = vector.load %arg3[%c0_3, %c0_4] : memref<1x16xf32, #tpu.memory_space<vmem>>, vector<1x16xf32>
    %6 = vector.broadcast %5 : vector<1x16xf32> to vector<392x16xf32>
    %7 = arith.addf %4, %6 : vector<392x16xf32>
    %cst_5 = arith.constant dense<0.000000e+00> : vector<16xf32>
    %8 = vector.multi_reduction <add>, %7, %cst_5 [0] : vector<392x16xf32> to vector<16xf32>
    %9 = vector.shape_cast %8 : vector<16xf32> to vector<1x16xf32>
    %cst_6 = arith.constant 0.00255102036 : f32
    %10 = vector.broadcast %cst_6 : f32 to vector<1x16xf32>
    %11 = arith.mulf %9, %10 : vector<1x16xf32>
    %12 = vector.broadcast %11 : vector<1x16xf32> to vector<392x16xf32>
    %13 = arith.subf %7, %12 : vector<392x16xf32>
    %14 = arith.mulf %13, %13 : vector<392x16xf32>
    %cst_7 = arith.constant dense<0.000000e+00> : vector<16xf32>
    %15 = vector.multi_reduction <add>, %14, %cst_7 [0] : vector<392x16xf32> to vector<16xf32>
    %16 = vector.shape_cast %15 : vector<16xf32> to vector<1x16xf32>
    %cst_8 = arith.constant 0.00255102036 : f32
    %17 = vector.broadcast %cst_8 : f32 to vector<1x16xf32>
    %18 = arith.mulf %16, %17 : vector<1x16xf32>
    %cst_9 = arith.constant 9.99999974E-6 : f32
    %19 = vector.broadcast %cst_9 : f32 to vector<1x16xf32>
    %20 = arith.addf %18, %19 : vector<1x16xf32>
    %21 = math.rsqrt %20 : vector<1x16xf32>
    %22 = vector.broadcast %21 : vector<1x16xf32> to vector<392x16xf32>
    %23 = arith.mulf %13, %22 : vector<392x16xf32>
    %c0_10 = arith.constant 0 : index
    %c0_11 = arith.constant 0 : index
    %24 = vector.load %arg4[%c0_10, %c0_11] : memref<1x16xf32, #tpu.memory_space<vmem>>, vector<1x16xf32>
    %25 = vector.broadcast %24 : vector<1x16xf32> to vector<392x16xf32>
    %26 = arith.mulf %23, %25 : vector<392x16xf32>
    %c0_12 = arith.constant 0 : index
    %c0_13 = arith.constant 0 : index
    %27 = vector.load %arg5[%c0_12, %c0_13] : memref<1x16xf32, #tpu.memory_space<vmem>>, vector<1x16xf32>
    %28 = vector.broadcast %27 : vector<1x16xf32> to vector<392x16xf32>
    %29 = arith.addf %26, %28 : vector<392x16xf32>
    %cst_14 = arith.constant 0.000000e+00 : f32
    %30 = vector.broadcast %cst_14 : f32 to vector<392x16xf32>
    %31 = arith.maximumf %29, %30 : vector<392x16xf32>
    %c0_15 = arith.constant 0 : index
    %c0_16 = arith.constant 0 : index
    %32 = vector.load %arg6[%c0_15, %c0_16] : memref<392x16xf32, #tpu.memory_space<vmem>>, vector<392x16xf32>
    tpu.vector_store %arg6[%c0_15, %c0_16], %31 {strides = array<i32>} : memref<392x16xf32, #tpu.memory_space<vmem>>, vector<392x16xf32>,
    return
  }
  func.func @transform_0(%arg0: i32) -> (i32, i32) {
    %c0_i32 = arith.constant 0 : i32
    %c0_i32_0 = arith.constant 0 : i32
    %c0_i32_1 = arith.constant 0 : i32
    return %c0_i32, %c0_i32_0 : i32, i32
  }
  func.func @transform_1(%arg0: i32) -> (i32, i32) {
    %c0_i32 = arith.constant 0 : i32
    %c0_i32_0 = arith.constant 0 : i32
    %c0_i32_1 = arith.constant 0 : i32
    return %c0_i32, %c0_i32_0 : i32, i32
  }
  func.func @transform_2(%arg0: i32) -> (i32, i32) {
    %c0_i32 = arith.constant 0 : i32
    %c0_i32_0 = arith.constant 0 : i32
    %c0_i32_1 = arith.constant 0 : i32
    return %c0_i32, %c0_i32_0 : i32, i32
  }
  func.func @transform_3(%arg0: i32) -> (i32, i32) {
    %c0_i32 = arith.constant 0 : i32
    %c0_i32_0 = arith.constant 0 : i32
    %c0_i32_1 = arith.constant 0 : i32
    return %c0_i32, %c0_i32_0 : i32, i32
  }
  func.func @transform_4(%arg0: i32) -> (i32, i32) {
    %c0_i32 = arith.constant 0 : i32
    %c0_i32_0 = arith.constant 0 : i32
    %c0_i32_1 = arith.constant 0 : i32
    return %c0_i32, %c0_i32_0 : i32, i32
  }
  func.func @transform_5(%arg0: i32) -> (i32, i32) {
    %c0_i32 = arith.constant 0 : i32
    %c0_i32_0 = arith.constant 0 : i32
    %c0_i32_1 = arith.constant 0 : i32
    return %c0_i32, %c0_i32_0 : i32, i32
  }
}

module attributes {stable_mosaic.version = 11 : i64} {
  func.func @_mm_bias_bn_relu_kernel(%arg0: i32, %arg1: memref<98x144xf32, #tpu.memory_space<vmem>>, %arg2: memref<144x32xf32, #tpu.memory_space<vmem>>, %arg3: memref<1x32xf32, #tpu.memory_space<vmem>>, %arg4: memref<1x32xf32, #tpu.memory_space<vmem>>, %arg5: memref<1x32xf32, #tpu.memory_space<vmem>>, %arg6: memref<98x32xf32, #tpu.memory_space<vmem>>) attributes {dimension_semantics = [#tpu.dimension_semantics<arbitrary>], iteration_bounds = array<i64: 1>, scalar_prefetch = 0 : i64, scratch_operands = 0 : i64, tpu.core_type = #tpu.core_type<tc>, window_params = [{pipeline_mode = #tpu.pipeline_mode<synchronous>, transform_indices = @transform_0, window_bounds = array<i64: 98, 144>}, {pipeline_mode = #tpu.pipeline_mode<synchronous>, transform_indices = @transform_1, window_bounds = array<i64: 144, 32>}, {pipeline_mode = #tpu.pipeline_mode<synchronous>, transform_indices = @transform_2, window_bounds = array<i64: 1, 32>}, {pipeline_mode = #tpu.pipeline_mode<synchronous>, transform_indices = @transform_3, window_bounds = array<i64: 1, 32>}, {pipeline_mode = #tpu.pipeline_mode<synchronous>, transform_indices = @transform_4, window_bounds = array<i64: 1, 32>}, {pipeline_mode = #tpu.pipeline_mode<synchronous>, transform_indices = @transform_5, window_bounds = array<i64: 98, 32>}]} {
    %c0 = arith.constant 0 : index
    %c0_0 = arith.constant 0 : index
    %0 = vector.load %arg1[%c0, %c0_0] : memref<98x144xf32, #tpu.memory_space<vmem>>, vector<98x144xf32>
    %1 = arith.truncf %0 : vector<98x144xf32> to vector<98x144xbf16>
    %c0_1 = arith.constant 0 : index
    %c0_2 = arith.constant 0 : index
    %2 = vector.load %arg2[%c0_1, %c0_2] : memref<144x32xf32, #tpu.memory_space<vmem>>, vector<144x32xf32>
    %3 = arith.truncf %2 : vector<144x32xf32> to vector<144x32xbf16>
    %cst = arith.constant dense<0.000000e+00> : vector<98x32xf32>
    %4 = tpu.matmul %1, %3, %cst {dimension_numbers = #tpu.dot_dimension_numbers<[1], [0], [0], [1], [0, 0, 1, 1], [], []>} : vector<98x144xbf16>, vector<144x32xbf16>, vector<98x32xf32> -> vector<98x32xf32>
    %c0_3 = arith.constant 0 : index
    %c0_4 = arith.constant 0 : index
    %5 = vector.load %arg3[%c0_3, %c0_4] : memref<1x32xf32, #tpu.memory_space<vmem>>, vector<1x32xf32>
    %6 = vector.broadcast %5 : vector<1x32xf32> to vector<98x32xf32>
    %7 = arith.addf %4, %6 : vector<98x32xf32>
    %cst_5 = arith.constant dense<0.000000e+00> : vector<32xf32>
    %8 = vector.multi_reduction <add>, %7, %cst_5 [0] : vector<98x32xf32> to vector<32xf32>
    %9 = vector.shape_cast %8 : vector<32xf32> to vector<1x32xf32>
    %cst_6 = arith.constant 0.0102040814 : f32
    %10 = vector.broadcast %cst_6 : f32 to vector<1x32xf32>
    %11 = arith.mulf %9, %10 : vector<1x32xf32>
    %12 = vector.broadcast %11 : vector<1x32xf32> to vector<98x32xf32>
    %13 = arith.subf %7, %12 : vector<98x32xf32>
    %14 = arith.mulf %13, %13 : vector<98x32xf32>
    %cst_7 = arith.constant dense<0.000000e+00> : vector<32xf32>
    %15 = vector.multi_reduction <add>, %14, %cst_7 [0] : vector<98x32xf32> to vector<32xf32>
    %16 = vector.shape_cast %15 : vector<32xf32> to vector<1x32xf32>
    %cst_8 = arith.constant 0.0102040814 : f32
    %17 = vector.broadcast %cst_8 : f32 to vector<1x32xf32>
    %18 = arith.mulf %16, %17 : vector<1x32xf32>
    %cst_9 = arith.constant 9.99999974E-6 : f32
    %19 = vector.broadcast %cst_9 : f32 to vector<1x32xf32>
    %20 = arith.addf %18, %19 : vector<1x32xf32>
    %21 = math.rsqrt %20 : vector<1x32xf32>
    %22 = vector.broadcast %21 : vector<1x32xf32> to vector<98x32xf32>
    %23 = arith.mulf %13, %22 : vector<98x32xf32>
    %c0_10 = arith.constant 0 : index
    %c0_11 = arith.constant 0 : index
    %24 = vector.load %arg4[%c0_10, %c0_11] : memref<1x32xf32, #tpu.memory_space<vmem>>, vector<1x32xf32>
    %25 = vector.broadcast %24 : vector<1x32xf32> to vector<98x32xf32>
    %26 = arith.mulf %23, %25 : vector<98x32xf32>
    %c0_12 = arith.constant 0 : index
    %c0_13 = arith.constant 0 : index
    %27 = vector.load %arg5[%c0_12, %c0_13] : memref<1x32xf32, #tpu.memory_space<vmem>>, vector<1x32xf32>
    %28 = vector.broadcast %27 : vector<1x32xf32> to vector<98x32xf32>
    %29 = arith.addf %26, %28 : vector<98x32xf32>
    %cst_14 = arith.constant 0.000000e+00 : f32
    %30 = vector.broadcast %cst_14 : f32 to vector<98x32xf32>
    %31 = arith.maximumf %29, %30 : vector<98x32xf32>
    %c0_15 = arith.constant 0 : index
    %c0_16 = arith.constant 0 : index
    %32 = vector.load %arg6[%c0_15, %c0_16] : memref<98x32xf32, #tpu.memory_space<vmem>>, vector<98x32xf32>
    tpu.vector_store %arg6[%c0_15, %c0_16], %31 {strides = array<i32>} : memref<98x32xf32, #tpu.memory_space<vmem>>, vector<98x32xf32>,
    return
  }
  func.func @transform_0(%arg0: i32) -> (i32, i32) {
    %c0_i32 = arith.constant 0 : i32
    %c0_i32_0 = arith.constant 0 : i32
    %c0_i32_1 = arith.constant 0 : i32
    return %c0_i32, %c0_i32_0 : i32, i32
  }
  func.func @transform_1(%arg0: i32) -> (i32, i32) {
    %c0_i32 = arith.constant 0 : i32
    %c0_i32_0 = arith.constant 0 : i32
    %c0_i32_1 = arith.constant 0 : i32
    return %c0_i32, %c0_i32_0 : i32, i32
  }
  func.func @transform_2(%arg0: i32) -> (i32, i32) {
    %c0_i32 = arith.constant 0 : i32
    %c0_i32_0 = arith.constant 0 : i32
    %c0_i32_1 = arith.constant 0 : i32
    return %c0_i32, %c0_i32_0 : i32, i32
  }
  func.func @transform_3(%arg0: i32) -> (i32, i32) {
    %c0_i32 = arith.constant 0 : i32
    %c0_i32_0 = arith.constant 0 : i32
    %c0_i32_1 = arith.constant 0 : i32
    return %c0_i32, %c0_i32_0 : i32, i32
  }
  func.func @transform_4(%arg0: i32) -> (i32, i32) {
    %c0_i32 = arith.constant 0 : i32
    %c0_i32_0 = arith.constant 0 : i32
    %c0_i32_1 = arith.constant 0 : i32
    return %c0_i32, %c0_i32_0 : i32, i32
  }
  func.func @transform_5(%arg0: i32) -> (i32, i32) {
    %c0_i32 = arith.constant 0 : i32
    %c0_i32_0 = arith.constant 0 : i32
    %c0_i32_1 = arith.constant 0 : i32
    return %c0_i32, %c0_i32_0 : i32, i32
  }
}

module attributes {stable_mosaic.version = 11 : i64} {
  func.func @_mm_bias_bn_relu_kernel(%arg0: i32, %arg1: memref<32x288xf32, #tpu.memory_space<vmem>>, %arg2: memref<288x64xf32, #tpu.memory_space<vmem>>, %arg3: memref<1x64xf32, #tpu.memory_space<vmem>>, %arg4: memref<1x64xf32, #tpu.memory_space<vmem>>, %arg5: memref<1x64xf32, #tpu.memory_space<vmem>>, %arg6: memref<32x64xf32, #tpu.memory_space<vmem>>) attributes {dimension_semantics = [#tpu.dimension_semantics<arbitrary>], iteration_bounds = array<i64: 1>, scalar_prefetch = 0 : i64, scratch_operands = 0 : i64, tpu.core_type = #tpu.core_type<tc>, window_params = [{pipeline_mode = #tpu.pipeline_mode<synchronous>, transform_indices = @transform_0, window_bounds = array<i64: 32, 288>}, {pipeline_mode = #tpu.pipeline_mode<synchronous>, transform_indices = @transform_1, window_bounds = array<i64: 288, 64>}, {pipeline_mode = #tpu.pipeline_mode<synchronous>, transform_indices = @transform_2, window_bounds = array<i64: 1, 64>}, {pipeline_mode = #tpu.pipeline_mode<synchronous>, transform_indices = @transform_3, window_bounds = array<i64: 1, 64>}, {pipeline_mode = #tpu.pipeline_mode<synchronous>, transform_indices = @transform_4, window_bounds = array<i64: 1, 64>}, {pipeline_mode = #tpu.pipeline_mode<synchronous>, transform_indices = @transform_5, window_bounds = array<i64: 32, 64>}]} {
    %c0 = arith.constant 0 : index
    %c0_0 = arith.constant 0 : index
    %0 = vector.load %arg1[%c0, %c0_0] : memref<32x288xf32, #tpu.memory_space<vmem>>, vector<32x288xf32>
    %1 = arith.truncf %0 : vector<32x288xf32> to vector<32x288xbf16>
    %c0_1 = arith.constant 0 : index
    %c0_2 = arith.constant 0 : index
    %2 = vector.load %arg2[%c0_1, %c0_2] : memref<288x64xf32, #tpu.memory_space<vmem>>, vector<288x64xf32>
    %3 = arith.truncf %2 : vector<288x64xf32> to vector<288x64xbf16>
    %cst = arith.constant dense<0.000000e+00> : vector<32x64xf32>
    %4 = tpu.matmul %1, %3, %cst {dimension_numbers = #tpu.dot_dimension_numbers<[1], [0], [0], [1], [0, 0, 1, 1], [], []>} : vector<32x288xbf16>, vector<288x64xbf16>, vector<32x64xf32> -> vector<32x64xf32>
    %c0_3 = arith.constant 0 : index
    %c0_4 = arith.constant 0 : index
    %5 = vector.load %arg3[%c0_3, %c0_4] : memref<1x64xf32, #tpu.memory_space<vmem>>, vector<1x64xf32>
    %6 = vector.broadcast %5 : vector<1x64xf32> to vector<32x64xf32>
    %7 = arith.addf %4, %6 : vector<32x64xf32>
    %cst_5 = arith.constant dense<0.000000e+00> : vector<64xf32>
    %8 = vector.multi_reduction <add>, %7, %cst_5 [0] : vector<32x64xf32> to vector<64xf32>
    %9 = vector.shape_cast %8 : vector<64xf32> to vector<1x64xf32>
    %cst_6 = arith.constant 3.125000e-02 : f32
    %10 = vector.broadcast %cst_6 : f32 to vector<1x64xf32>
    %11 = arith.mulf %9, %10 : vector<1x64xf32>
    %12 = vector.broadcast %11 : vector<1x64xf32> to vector<32x64xf32>
    %13 = arith.subf %7, %12 : vector<32x64xf32>
    %14 = arith.mulf %13, %13 : vector<32x64xf32>
    %cst_7 = arith.constant dense<0.000000e+00> : vector<64xf32>
    %15 = vector.multi_reduction <add>, %14, %cst_7 [0] : vector<32x64xf32> to vector<64xf32>
    %16 = vector.shape_cast %15 : vector<64xf32> to vector<1x64xf32>
    %cst_8 = arith.constant 3.125000e-02 : f32
    %17 = vector.broadcast %cst_8 : f32 to vector<1x64xf32>
    %18 = arith.mulf %16, %17 : vector<1x64xf32>
    %cst_9 = arith.constant 9.99999974E-6 : f32
    %19 = vector.broadcast %cst_9 : f32 to vector<1x64xf32>
    %20 = arith.addf %18, %19 : vector<1x64xf32>
    %21 = math.rsqrt %20 : vector<1x64xf32>
    %22 = vector.broadcast %21 : vector<1x64xf32> to vector<32x64xf32>
    %23 = arith.mulf %13, %22 : vector<32x64xf32>
    %c0_10 = arith.constant 0 : index
    %c0_11 = arith.constant 0 : index
    %24 = vector.load %arg4[%c0_10, %c0_11] : memref<1x64xf32, #tpu.memory_space<vmem>>, vector<1x64xf32>
    %25 = vector.broadcast %24 : vector<1x64xf32> to vector<32x64xf32>
    %26 = arith.mulf %23, %25 : vector<32x64xf32>
    %c0_12 = arith.constant 0 : index
    %c0_13 = arith.constant 0 : index
    %27 = vector.load %arg5[%c0_12, %c0_13] : memref<1x64xf32, #tpu.memory_space<vmem>>, vector<1x64xf32>
    %28 = vector.broadcast %27 : vector<1x64xf32> to vector<32x64xf32>
    %29 = arith.addf %26, %28 : vector<32x64xf32>
    %cst_14 = arith.constant 0.000000e+00 : f32
    %30 = vector.broadcast %cst_14 : f32 to vector<32x64xf32>
    %31 = arith.maximumf %29, %30 : vector<32x64xf32>
    %c0_15 = arith.constant 0 : index
    %c0_16 = arith.constant 0 : index
    %32 = vector.load %arg6[%c0_15, %c0_16] : memref<32x64xf32, #tpu.memory_space<vmem>>, vector<32x64xf32>
    tpu.vector_store %arg6[%c0_15, %c0_16], %31 {strides = array<i32>} : memref<32x64xf32, #tpu.memory_space<vmem>>, vector<32x64xf32>,
    return
  }
  func.func @transform_0(%arg0: i32) -> (i32, i32) {
    %c0_i32 = arith.constant 0 : i32
    %c0_i32_0 = arith.constant 0 : i32
    %c0_i32_1 = arith.constant 0 : i32
    return %c0_i32, %c0_i32_0 : i32, i32
  }
  func.func @transform_1(%arg0: i32) -> (i32, i32) {
    %c0_i32 = arith.constant 0 : i32
    %c0_i32_0 = arith.constant 0 : i32
    %c0_i32_1 = arith.constant 0 : i32
    return %c0_i32, %c0_i32_0 : i32, i32
  }
  func.func @transform_2(%arg0: i32) -> (i32, i32) {
    %c0_i32 = arith.constant 0 : i32
    %c0_i32_0 = arith.constant 0 : i32
    %c0_i32_1 = arith.constant 0 : i32
    return %c0_i32, %c0_i32_0 : i32, i32
  }
  func.func @transform_3(%arg0: i32) -> (i32, i32) {
    %c0_i32 = arith.constant 0 : i32
    %c0_i32_0 = arith.constant 0 : i32
    %c0_i32_1 = arith.constant 0 : i32
    return %c0_i32, %c0_i32_0 : i32, i32
  }
  func.func @transform_4(%arg0: i32) -> (i32, i32) {
    %c0_i32 = arith.constant 0 : i32
    %c0_i32_0 = arith.constant 0 : i32
    %c0_i32_1 = arith.constant 0 : i32
    return %c0_i32, %c0_i32_0 : i32, i32
  }
  func.func @transform_5(%arg0: i32) -> (i32, i32) {
    %c0_i32 = arith.constant 0 : i32
    %c0_i32_0 = arith.constant 0 : i32
    %c0_i32_1 = arith.constant 0 : i32
    return %c0_i32, %c0_i32_0 : i32, i32
  }
}

module attributes {stable_mosaic.version = 11 : i64} {
  func.func @_mm_bias_bn_relu_kernel(%arg0: i32, %arg1: memref<18x256xf32, #tpu.memory_space<vmem>>, %arg2: memref<256x128xf32, #tpu.memory_space<vmem>>, %arg3: memref<1x128xf32, #tpu.memory_space<vmem>>, %arg4: memref<1x128xf32, #tpu.memory_space<vmem>>, %arg5: memref<1x128xf32, #tpu.memory_space<vmem>>, %arg6: memref<18x128xf32, #tpu.memory_space<vmem>>) attributes {dimension_semantics = [#tpu.dimension_semantics<arbitrary>], iteration_bounds = array<i64: 1>, scalar_prefetch = 0 : i64, scratch_operands = 0 : i64, tpu.core_type = #tpu.core_type<tc>, window_params = [{pipeline_mode = #tpu.pipeline_mode<synchronous>, transform_indices = @transform_0, window_bounds = array<i64: 18, 256>}, {pipeline_mode = #tpu.pipeline_mode<synchronous>, transform_indices = @transform_1, window_bounds = array<i64: 256, 128>}, {pipeline_mode = #tpu.pipeline_mode<synchronous>, transform_indices = @transform_2, window_bounds = array<i64: 1, 128>}, {pipeline_mode = #tpu.pipeline_mode<synchronous>, transform_indices = @transform_3, window_bounds = array<i64: 1, 128>}, {pipeline_mode = #tpu.pipeline_mode<synchronous>, transform_indices = @transform_4, window_bounds = array<i64: 1, 128>}, {pipeline_mode = #tpu.pipeline_mode<synchronous>, transform_indices = @transform_5, window_bounds = array<i64: 18, 128>}]} {
    %c0 = arith.constant 0 : index
    %c0_0 = arith.constant 0 : index
    %0 = vector.load %arg1[%c0, %c0_0] : memref<18x256xf32, #tpu.memory_space<vmem>>, vector<18x256xf32>
    %1 = arith.truncf %0 : vector<18x256xf32> to vector<18x256xbf16>
    %c0_1 = arith.constant 0 : index
    %c0_2 = arith.constant 0 : index
    %2 = vector.load %arg2[%c0_1, %c0_2] : memref<256x128xf32, #tpu.memory_space<vmem>>, vector<256x128xf32>
    %3 = arith.truncf %2 : vector<256x128xf32> to vector<256x128xbf16>
    %cst = arith.constant dense<0.000000e+00> : vector<18x128xf32>
    %4 = tpu.matmul %1, %3, %cst {dimension_numbers = #tpu.dot_dimension_numbers<[1], [0], [0], [1], [0, 0, 1, 1], [], []>} : vector<18x256xbf16>, vector<256x128xbf16>, vector<18x128xf32> -> vector<18x128xf32>
    %c0_3 = arith.constant 0 : index
    %c0_4 = arith.constant 0 : index
    %5 = vector.load %arg3[%c0_3, %c0_4] : memref<1x128xf32, #tpu.memory_space<vmem>>, vector<1x128xf32>
    %6 = vector.broadcast %5 : vector<1x128xf32> to vector<18x128xf32>
    %7 = arith.addf %4, %6 : vector<18x128xf32>
    %cst_5 = arith.constant dense<0.000000e+00> : vector<128xf32>
    %8 = vector.multi_reduction <add>, %7, %cst_5 [0] : vector<18x128xf32> to vector<128xf32>
    %9 = vector.shape_cast %8 : vector<128xf32> to vector<1x128xf32>
    %cst_6 = arith.constant 0.055555556 : f32
    %10 = vector.broadcast %cst_6 : f32 to vector<1x128xf32>
    %11 = arith.mulf %9, %10 : vector<1x128xf32>
    %12 = vector.broadcast %11 : vector<1x128xf32> to vector<18x128xf32>
    %13 = arith.subf %7, %12 : vector<18x128xf32>
    %14 = arith.mulf %13, %13 : vector<18x128xf32>
    %cst_7 = arith.constant dense<0.000000e+00> : vector<128xf32>
    %15 = vector.multi_reduction <add>, %14, %cst_7 [0] : vector<18x128xf32> to vector<128xf32>
    %16 = vector.shape_cast %15 : vector<128xf32> to vector<1x128xf32>
    %cst_8 = arith.constant 0.055555556 : f32
    %17 = vector.broadcast %cst_8 : f32 to vector<1x128xf32>
    %18 = arith.mulf %16, %17 : vector<1x128xf32>
    %cst_9 = arith.constant 9.99999974E-6 : f32
    %19 = vector.broadcast %cst_9 : f32 to vector<1x128xf32>
    %20 = arith.addf %18, %19 : vector<1x128xf32>
    %21 = math.rsqrt %20 : vector<1x128xf32>
    %22 = vector.broadcast %21 : vector<1x128xf32> to vector<18x128xf32>
    %23 = arith.mulf %13, %22 : vector<18x128xf32>
    %c0_10 = arith.constant 0 : index
    %c0_11 = arith.constant 0 : index
    %24 = vector.load %arg4[%c0_10, %c0_11] : memref<1x128xf32, #tpu.memory_space<vmem>>, vector<1x128xf32>
    %25 = vector.broadcast %24 : vector<1x128xf32> to vector<18x128xf32>
    %26 = arith.mulf %23, %25 : vector<18x128xf32>
    %c0_12 = arith.constant 0 : index
    %c0_13 = arith.constant 0 : index
    %27 = vector.load %arg5[%c0_12, %c0_13] : memref<1x128xf32, #tpu.memory_space<vmem>>, vector<1x128xf32>
    %28 = vector.broadcast %27 : vector<1x128xf32> to vector<18x128xf32>
    %29 = arith.addf %26, %28 : vector<18x128xf32>
    %cst_14 = arith.constant 0.000000e+00 : f32
    %30 = vector.broadcast %cst_14 : f32 to vector<18x128xf32>
    %31 = arith.maximumf %29, %30 : vector<18x128xf32>
    %c0_15 = arith.constant 0 : index
    %c0_16 = arith.constant 0 : index
    %32 = vector.load %arg6[%c0_15, %c0_16] : memref<18x128xf32, #tpu.memory_space<vmem>>, vector<18x128xf32>
    tpu.vector_store %arg6[%c0_15, %c0_16], %31 {strides = array<i32>} : memref<18x128xf32, #tpu.memory_space<vmem>>, vector<18x128xf32>,
    return
  }
  func.func @transform_0(%arg0: i32) -> (i32, i32) {
    %c0_i32 = arith.constant 0 : i32
    %c0_i32_0 = arith.constant 0 : i32
    %c0_i32_1 = arith.constant 0 : i32
    return %c0_i32, %c0_i32_0 : i32, i32
  }
  func.func @transform_1(%arg0: i32) -> (i32, i32) {
    %c0_i32 = arith.constant 0 : i32
    %c0_i32_0 = arith.constant 0 : i32
    %c0_i32_1 = arith.constant 0 : i32
    return %c0_i32, %c0_i32_0 : i32, i32
  }
  func.func @transform_2(%arg0: i32) -> (i32, i32) {
    %c0_i32 = arith.constant 0 : i32
    %c0_i32_0 = arith.constant 0 : i32
    %c0_i32_1 = arith.constant 0 : i32
    return %c0_i32, %c0_i32_0 : i32, i32
  }
  func.func @transform_3(%arg0: i32) -> (i32, i32) {
    %c0_i32 = arith.constant 0 : i32
    %c0_i32_0 = arith.constant 0 : i32
    %c0_i32_1 = arith.constant 0 : i32
    return %c0_i32, %c0_i32_0 : i32, i32
  }
  func.func @transform_4(%arg0: i32) -> (i32, i32) {
    %c0_i32 = arith.constant 0 : i32
    %c0_i32_0 = arith.constant 0 : i32
    %c0_i32_1 = arith.constant 0 : i32
    return %c0_i32, %c0_i32_0 : i32, i32
  }
  func.func @transform_5(%arg0: i32) -> (i32, i32) {
    %c0_i32 = arith.constant 0 : i32
    %c0_i32_0 = arith.constant 0 : i32
    %c0_i32_1 = arith.constant 0 : i32
    return %c0_i32, %c0_i32_0 : i32, i32
  }
}

module attributes {stable_mosaic.version = 11 : i64} {
  func.func @_fc_latent_kernel(%arg0: i32, %arg1: memref<2x1152xf32, #tpu.memory_space<vmem>>, %arg2: memref<2x8xf32, #tpu.memory_space<vmem>>, %arg3: memref<1152x64xf32, #tpu.memory_space<vmem>>, %arg4: memref<1x64xf32, #tpu.memory_space<vmem>>, %arg5: memref<1x64xf32, #tpu.memory_space<vmem>>, %arg6: memref<1x64xf32, #tpu.memory_space<vmem>>, %arg7: memref<64x8xf32, #tpu.memory_space<vmem>>, %arg8: memref<1x8xf32, #tpu.memory_space<vmem>>, %arg9: memref<64x8xf32, #tpu.memory_space<vmem>>, %arg10: memref<1x8xf32, #tpu.memory_space<vmem>>, %arg11: memref<8x64xf32, #tpu.memory_space<vmem>>, %arg12: memref<1x64xf32, #tpu.memory_space<vmem>>, %arg13: memref<1x64xf32, #tpu.memory_space<vmem>>, %arg14: memref<1x64xf32, #tpu.memory_space<vmem>>, %arg15: memref<64x1152xf32, #tpu.memory_space<vmem>>, %arg16: memref<1x1152xf32, #tpu.memory_space<vmem>>, %arg17: memref<1x1152xf32, #tpu.memory_space<vmem>>, %arg18: memref<1x1152xf32, #tpu.memory_space<vmem>>, %arg19: memref<2x8xf32, #tpu.memory_space<vmem>>, %arg20: memref<2x8xf32, #tpu.memory_space<vmem>>, %arg21: memref<2x8xf32, #tpu.memory_space<vmem>>, %arg22: memref<2x1152xf32, #tpu.memory_space<vmem>>) attributes {dimension_semantics = [#tpu.dimension_semantics<arbitrary>], iteration_bounds = array<i64: 1>, scalar_prefetch = 0 : i64, scratch_operands = 0 : i64, tpu.core_type = #tpu.core_type<tc>, window_params = [{pipeline_mode = #tpu.pipeline_mode<synchronous>, transform_indices = @transform_0, window_bounds = array<i64: 2, 1152>}, {pipeline_mode = #tpu.pipeline_mode<synchronous>, transform_indices = @transform_1, window_bounds = array<i64: 2, 8>}, {pipeline_mode = #tpu.pipeline_mode<synchronous>, transform_indices = @transform_2, window_bounds = array<i64: 1152, 64>}, {pipeline_mode = #tpu.pipeline_mode<synchronous>, transform_indices = @transform_3, window_bounds = array<i64: 1, 64>}, {pipeline_mode = #tpu.pipeline_mode<synchronous>, transform_indices = @transform_4, window_bounds = array<i64: 1, 64>}, {pipeline_mode = #tpu.pipeline_mode<synchronous>, transform_indices = @transform_5, window_bounds = array<i64: 1, 64>}, {pipeline_mode = #tpu.pipeline_mode<synchronous>, transform_indices = @transform_6, window_bounds = array<i64: 64, 8>}, {pipeline_mode = #tpu.pipeline_mode<synchronous>, transform_indices = @transform_7, window_bounds = array<i64: 1, 8>}, {pipeline_mode = #tpu.pipeline_mode<synchronous>, transform_indices = @transform_8, window_bounds = array<i64: 64, 8>}, {pipeline_mode = #tpu.pipeline_mode<synchronous>, transform_indices = @transform_9, window_bounds = array<i64: 1, 8>}, {pipeline_mode = #tpu.pipeline_mode<synchronous>, transform_indices = @transform_10, window_bounds = array<i64: 8, 64>}, {pipeline_mode = #tpu.pipeline_mode<synchronous>, transform_indices = @transform_11, window_bounds = array<i64: 1, 64>}, {pipeline_mode = #tpu.pipeline_mode<synchronous>, transform_indices = @transform_12, window_bounds = array<i64: 1, 64>}, {pipeline_mode = #tpu.pipeline_mode<synchronous>, transform_indices = @transform_13, window_bounds = array<i64: 1, 64>}, {pipeline_mode = #tpu.pipeline_mode<synchronous>, transform_indices = @transform_14, window_bounds = array<i64: 64, 1152>}, {pipeline_mode = #tpu.pipeline_mode<synchronous>, transform_indices = @transform_15, window_bounds = array<i64: 1, 1152>}, {pipeline_mode = #tpu.pipeline_mode<synchronous>, transform_indices = @transform_16, window_bounds = array<i64: 1, 1152>}, {pipeline_mode = #tpu.pipeline_mode<synchronous>, transform_indices = @transform_17, window_bounds = array<i64: 1, 1152>}, {pipeline_mode = #tpu.pipeline_mode<synchronous>, transform_indices = @transform_18, window_bounds = array<i64: 2, 8>}, {pipeline_mode = #tpu.pipeline_mode<synchronous>, transform_indices = @transform_19, window_bounds = array<i64: 2, 8>}, {pipeline_mode = #tpu.pipeline_mode<synchronous>, transform_indices = @transform_20, window_bounds = array<i64: 2, 8>}, {pipeline_mode = #tpu.pipeline_mode<synchronous>, transform_indices = @transform_21, window_bounds = array<i64: 2, 1152>}]} {
    %c0 = arith.constant 0 : index
    %c0_0 = arith.constant 0 : index
    %0 = vector.load %arg1[%c0, %c0_0] : memref<2x1152xf32, #tpu.memory_space<vmem>>, vector<2x1152xf32>
    %c0_1 = arith.constant 0 : index
    %c0_2 = arith.constant 0 : index
    %1 = vector.load %arg3[%c0_1, %c0_2] : memref<1152x64xf32, #tpu.memory_space<vmem>>, vector<1152x64xf32>
    %cst = arith.constant dense<0.000000e+00> : vector<2x64xf32>
    %2 = tpu.matmul %0, %1, %cst {dimension_numbers = #tpu.dot_dimension_numbers<[1], [0], [0], [1], [0, 0, 1, 1], [], []>} : vector<2x1152xf32>, vector<1152x64xf32>, vector<2x64xf32> -> vector<2x64xf32>
    %c0_3 = arith.constant 0 : index
    %c0_4 = arith.constant 0 : index
    %3 = vector.load %arg4[%c0_3, %c0_4] : memref<1x64xf32, #tpu.memory_space<vmem>>, vector<1x64xf32>
    %4 = vector.broadcast %3 : vector<1x64xf32> to vector<2x64xf32>
    %5 = arith.addf %2, %4 : vector<2x64xf32>
    %c0_5 = arith.constant 0 : index
    %c0_6 = arith.constant 0 : index
    %6 = vector.load %arg5[%c0_5, %c0_6] : memref<1x64xf32, #tpu.memory_space<vmem>>, vector<1x64xf32>
    %c0_7 = arith.constant 0 : index
    %c0_8 = arith.constant 0 : index
    %7 = vector.load %arg6[%c0_7, %c0_8] : memref<1x64xf32, #tpu.memory_space<vmem>>, vector<1x64xf32>
    %cst_9 = arith.constant dense<0.000000e+00> : vector<64xf32>
    %8 = vector.multi_reduction <add>, %5, %cst_9 [0] : vector<2x64xf32> to vector<64xf32>
    %9 = vector.shape_cast %8 : vector<64xf32> to vector<1x64xf32>
    %cst_10 = arith.constant 5.000000e-01 : f32
    %10 = vector.broadcast %cst_10 : f32 to vector<1x64xf32>
    %11 = arith.mulf %9, %10 : vector<1x64xf32>
    %12 = vector.broadcast %11 : vector<1x64xf32> to vector<2x64xf32>
    %13 = arith.subf %5, %12 : vector<2x64xf32>
    %14 = arith.mulf %13, %13 : vector<2x64xf32>
    %cst_11 = arith.constant dense<0.000000e+00> : vector<64xf32>
    %15 = vector.multi_reduction <add>, %14, %cst_11 [0] : vector<2x64xf32> to vector<64xf32>
    %16 = vector.shape_cast %15 : vector<64xf32> to vector<1x64xf32>
    %cst_12 = arith.constant 5.000000e-01 : f32
    %17 = vector.broadcast %cst_12 : f32 to vector<1x64xf32>
    %18 = arith.mulf %16, %17 : vector<1x64xf32>
    %cst_13 = arith.constant 9.99999974E-6 : f32
    %19 = vector.broadcast %cst_13 : f32 to vector<1x64xf32>
    %20 = arith.addf %18, %19 : vector<1x64xf32>
    %21 = math.rsqrt %20 : vector<1x64xf32>
    %22 = vector.broadcast %21 : vector<1x64xf32> to vector<2x64xf32>
    %23 = arith.mulf %13, %22 : vector<2x64xf32>
    %24 = vector.broadcast %6 : vector<1x64xf32> to vector<2x64xf32>
    %25 = arith.mulf %23, %24 : vector<2x64xf32>
    %26 = vector.broadcast %7 : vector<1x64xf32> to vector<2x64xf32>
    %27 = arith.addf %25, %26 : vector<2x64xf32>
    %cst_14 = arith.constant 0.000000e+00 : f32
    %28 = vector.broadcast %cst_14 : f32 to vector<2x64xf32>
    %29 = arith.maximumf %27, %28 : vector<2x64xf32>
    %c0_15 = arith.constant 0 : index
    %c0_16 = arith.constant 0 : index
    %30 = vector.load %arg7[%c0_15, %c0_16] : memref<64x8xf32, #tpu.memory_space<vmem>>, vector<64x8xf32>
    %cst_17 = arith.constant dense<0.000000e+00> : vector<2x8xf32>
    %31 = tpu.matmul %29, %30, %cst_17 {dimension_numbers = #tpu.dot_dimension_numbers<[1], [0], [0], [1], [0, 0, 1, 1], [], []>} : vector<2x64xf32>, vector<64x8xf32>, vector<2x8xf32> -> vector<2x8xf32>
    %c0_18 = arith.constant 0 : index
    %c0_19 = arith.constant 0 : index
    %32 = vector.load %arg8[%c0_18, %c0_19] : memref<1x8xf32, #tpu.memory_space<vmem>>, vector<1x8xf32>
    %33 = vector.broadcast %32 : vector<1x8xf32> to vector<2x8xf32>
    %34 = arith.addf %31, %33 : vector<2x8xf32>
    %c0_20 = arith.constant 0 : index
    %c0_21 = arith.constant 0 : index
    %35 = vector.load %arg9[%c0_20, %c0_21] : memref<64x8xf32, #tpu.memory_space<vmem>>, vector<64x8xf32>
    %cst_22 = arith.constant dense<0.000000e+00> : vector<2x8xf32>
    %36 = tpu.matmul %29, %35, %cst_22 {dimension_numbers = #tpu.dot_dimension_numbers<[1], [0], [0], [1], [0, 0, 1, 1], [], []>} : vector<2x64xf32>, vector<64x8xf32>, vector<2x8xf32> -> vector<2x8xf32>
    %c0_23 = arith.constant 0 : index
    %c0_24 = arith.constant 0 : index
    %37 = vector.load %arg10[%c0_23, %c0_24] : memref<1x8xf32, #tpu.memory_space<vmem>>, vector<1x8xf32>
    %38 = vector.broadcast %37 : vector<1x8xf32> to vector<2x8xf32>
    %39 = arith.addf %36, %38 : vector<2x8xf32>
    %c0_25 = arith.constant 0 : index
    %c0_26 = arith.constant 0 : index
    %40 = vector.load %arg2[%c0_25, %c0_26] : memref<2x8xf32, #tpu.memory_space<vmem>>, vector<2x8xf32>
    %cst_27 = arith.constant 5.000000e-01 : f32
    %41 = vector.broadcast %cst_27 : f32 to vector<2x8xf32>
    %42 = arith.mulf %39, %41 : vector<2x8xf32>
    %43 = math.exp %42 : vector<2x8xf32>
    %44 = arith.mulf %40, %43 : vector<2x8xf32>
    %45 = arith.addf %34, %44 : vector<2x8xf32>
    %c0_28 = arith.constant 0 : index
    %c0_29 = arith.constant 0 : index
    %46 = vector.load %arg11[%c0_28, %c0_29] : memref<8x64xf32, #tpu.memory_space<vmem>>, vector<8x64xf32>
    %cst_30 = arith.constant dense<0.000000e+00> : vector<2x64xf32>
    %47 = tpu.matmul %45, %46, %cst_30 {dimension_numbers = #tpu.dot_dimension_numbers<[1], [0], [0], [1], [0, 0, 1, 1], [], []>} : vector<2x8xf32>, vector<8x64xf32>, vector<2x64xf32> -> vector<2x64xf32>
    %c0_31 = arith.constant 0 : index
    %c0_32 = arith.constant 0 : index
    %48 = vector.load %arg12[%c0_31, %c0_32] : memref<1x64xf32, #tpu.memory_space<vmem>>, vector<1x64xf32>
    %49 = vector.broadcast %48 : vector<1x64xf32> to vector<2x64xf32>
    %50 = arith.addf %47, %49 : vector<2x64xf32>
    %c0_33 = arith.constant 0 : index
    %c0_34 = arith.constant 0 : index
    %51 = vector.load %arg13[%c0_33, %c0_34] : memref<1x64xf32, #tpu.memory_space<vmem>>, vector<1x64xf32>
    %c0_35 = arith.constant 0 : index
    %c0_36 = arith.constant 0 : index
    %52 = vector.load %arg14[%c0_35, %c0_36] : memref<1x64xf32, #tpu.memory_space<vmem>>, vector<1x64xf32>
    %cst_37 = arith.constant dense<0.000000e+00> : vector<64xf32>
    %53 = vector.multi_reduction <add>, %50, %cst_37 [0] : vector<2x64xf32> to vector<64xf32>
    %54 = vector.shape_cast %53 : vector<64xf32> to vector<1x64xf32>
    %cst_38 = arith.constant 5.000000e-01 : f32
    %55 = vector.broadcast %cst_38 : f32 to vector<1x64xf32>
    %56 = arith.mulf %54, %55 : vector<1x64xf32>
    %57 = vector.broadcast %56 : vector<1x64xf32> to vector<2x64xf32>
    %58 = arith.subf %50, %57 : vector<2x64xf32>
    %59 = arith.mulf %58, %58 : vector<2x64xf32>
    %cst_39 = arith.constant dense<0.000000e+00> : vector<64xf32>
    %60 = vector.multi_reduction <add>, %59, %cst_39 [0] : vector<2x64xf32> to vector<64xf32>
    %61 = vector.shape_cast %60 : vector<64xf32> to vector<1x64xf32>
    %cst_40 = arith.constant 5.000000e-01 : f32
    %62 = vector.broadcast %cst_40 : f32 to vector<1x64xf32>
    %63 = arith.mulf %61, %62 : vector<1x64xf32>
    %cst_41 = arith.constant 9.99999974E-6 : f32
    %64 = vector.broadcast %cst_41 : f32 to vector<1x64xf32>
    %65 = arith.addf %63, %64 : vector<1x64xf32>
    %66 = math.rsqrt %65 : vector<1x64xf32>
    %67 = vector.broadcast %66 : vector<1x64xf32> to vector<2x64xf32>
    %68 = arith.mulf %58, %67 : vector<2x64xf32>
    %69 = vector.broadcast %51 : vector<1x64xf32> to vector<2x64xf32>
    %70 = arith.mulf %68, %69 : vector<2x64xf32>
    %71 = vector.broadcast %52 : vector<1x64xf32> to vector<2x64xf32>
    %72 = arith.addf %70, %71 : vector<2x64xf32>
    %cst_42 = arith.constant 0.000000e+00 : f32
    %73 = vector.broadcast %cst_42 : f32 to vector<2x64xf32>
    %74 = arith.maximumf %72, %73 : vector<2x64xf32>
    %c0_43 = arith.constant 0 : index
    %c0_44 = arith.constant 0 : index
    %75 = vector.load %arg15[%c0_43, %c0_44] : memref<64x1152xf32, #tpu.memory_space<vmem>>, vector<64x1152xf32>
    %cst_45 = arith.constant dense<0.000000e+00> : vector<2x1152xf32>
    %76 = tpu.matmul %74, %75, %cst_45 {dimension_numbers = #tpu.dot_dimension_numbers<[1], [0], [0], [1], [0, 0, 1, 1], [], []>} : vector<2x64xf32>, vector<64x1152xf32>, vector<2x1152xf32> -> vector<2x1152xf32>
    %c0_46 = arith.constant 0 : index
    %c0_47 = arith.constant 0 : index
    %77 = vector.load %arg16[%c0_46, %c0_47] : memref<1x1152xf32, #tpu.memory_space<vmem>>, vector<1x1152xf32>
    %78 = vector.broadcast %77 : vector<1x1152xf32> to vector<2x1152xf32>
    %79 = arith.addf %76, %78 : vector<2x1152xf32>
    %c0_48 = arith.constant 0 : index
    %c0_49 = arith.constant 0 : index
    %80 = vector.load %arg17[%c0_48, %c0_49] : memref<1x1152xf32, #tpu.memory_space<vmem>>, vector<1x1152xf32>
    %c0_50 = arith.constant 0 : index
    %c0_51 = arith.constant 0 : index
    %81 = vector.load %arg18[%c0_50, %c0_51] : memref<1x1152xf32, #tpu.memory_space<vmem>>, vector<1x1152xf32>
    %cst_52 = arith.constant dense<0.000000e+00> : vector<1152xf32>
    %82 = vector.multi_reduction <add>, %79, %cst_52 [0] : vector<2x1152xf32> to vector<1152xf32>
    %83 = vector.shape_cast %82 : vector<1152xf32> to vector<1x1152xf32>
    %cst_53 = arith.constant 5.000000e-01 : f32
    %84 = vector.broadcast %cst_53 : f32 to vector<1x1152xf32>
    %85 = arith.mulf %83, %84 : vector<1x1152xf32>
    %86 = vector.broadcast %85 : vector<1x1152xf32> to vector<2x1152xf32>
    %87 = arith.subf %79, %86 : vector<2x1152xf32>
    %88 = arith.mulf %87, %87 : vector<2x1152xf32>
    %cst_54 = arith.constant dense<0.000000e+00> : vector<1152xf32>
    %89 = vector.multi_reduction <add>, %88, %cst_54 [0] : vector<2x1152xf32> to vector<1152xf32>
    %90 = vector.shape_cast %89 : vector<1152xf32> to vector<1x1152xf32>
    %cst_55 = arith.constant 5.000000e-01 : f32
    %91 = vector.broadcast %cst_55 : f32 to vector<1x1152xf32>
    %92 = arith.mulf %90, %91 : vector<1x1152xf32>
    %cst_56 = arith.constant 9.99999974E-6 : f32
    %93 = vector.broadcast %cst_56 : f32 to vector<1x1152xf32>
    %94 = arith.addf %92, %93 : vector<1x1152xf32>
    %95 = math.rsqrt %94 : vector<1x1152xf32>
    %96 = vector.broadcast %95 : vector<1x1152xf32> to vector<2x1152xf32>
    %97 = arith.mulf %87, %96 : vector<2x1152xf32>
    %98 = vector.broadcast %80 : vector<1x1152xf32> to vector<2x1152xf32>
    %99 = arith.mulf %97, %98 : vector<2x1152xf32>
    %100 = vector.broadcast %81 : vector<1x1152xf32> to vector<2x1152xf32>
    %101 = arith.addf %99, %100 : vector<2x1152xf32>
    %cst_57 = arith.constant 0.000000e+00 : f32
    %102 = vector.broadcast %cst_57 : f32 to vector<2x1152xf32>
    %103 = arith.maximumf %101, %102 : vector<2x1152xf32>
    %c0_58 = arith.constant 0 : index
    %c0_59 = arith.constant 0 : index
    %104 = vector.load %arg19[%c0_58, %c0_59] : memref<2x8xf32, #tpu.memory_space<vmem>>, vector<2x8xf32>
    tpu.vector_store %arg19[%c0_58, %c0_59], %34 {strides = array<i32>} : memref<2x8xf32, #tpu.memory_space<vmem>>, vector<2x8xf32>,
    %c0_60 = arith.constant 0 : index
    %c0_61 = arith.constant 0 : index
    %105 = vector.load %arg20[%c0_60, %c0_61] : memref<2x8xf32, #tpu.memory_space<vmem>>, vector<2x8xf32>
    tpu.vector_store %arg20[%c0_60, %c0_61], %39 {strides = array<i32>} : memref<2x8xf32, #tpu.memory_space<vmem>>, vector<2x8xf32>,
    %c0_62 = arith.constant 0 : index
    %c0_63 = arith.constant 0 : index
    %106 = vector.load %arg21[%c0_62, %c0_63] : memref<2x8xf32, #tpu.memory_space<vmem>>, vector<2x8xf32>
    tpu.vector_store %arg21[%c0_62, %c0_63], %45 {strides = array<i32>} : memref<2x8xf32, #tpu.memory_space<vmem>>, vector<2x8xf32>,
    %c0_64 = arith.constant 0 : index
    %c0_65 = arith.constant 0 : index
    %107 = vector.load %arg22[%c0_64, %c0_65] : memref<2x1152xf32, #tpu.memory_space<vmem>>, vector<2x1152xf32>
    tpu.vector_store %arg22[%c0_64, %c0_65], %103 {strides = array<i32>} : memref<2x1152xf32, #tpu.memory_space<vmem>>, vector<2x1152xf32>,
    return
  }
  func.func @transform_0(%arg0: i32) -> (i32, i32) {
    %c0_i32 = arith.constant 0 : i32
    %c0_i32_0 = arith.constant 0 : i32
    %c0_i32_1 = arith.constant 0 : i32
    return %c0_i32, %c0_i32_0 : i32, i32
  }
  func.func @transform_1(%arg0: i32) -> (i32, i32) {
    %c0_i32 = arith.constant 0 : i32
    %c0_i32_0 = arith.constant 0 : i32
    %c0_i32_1 = arith.constant 0 : i32
    return %c0_i32, %c0_i32_0 : i32, i32
  }
  func.func @transform_2(%arg0: i32) -> (i32, i32) {
    %c0_i32 = arith.constant 0 : i32
    %c0_i32_0 = arith.constant 0 : i32
    %c0_i32_1 = arith.constant 0 : i32
    return %c0_i32, %c0_i32_0 : i32, i32
  }
  func.func @transform_3(%arg0: i32) -> (i32, i32) {
    %c0_i32 = arith.constant 0 : i32
    %c0_i32_0 = arith.constant 0 : i32
    %c0_i32_1 = arith.constant 0 : i32
    return %c0_i32, %c0_i32_0 : i32, i32
  }
  func.func @transform_4(%arg0: i32) -> (i32, i32) {
    %c0_i32 = arith.constant 0 : i32
    %c0_i32_0 = arith.constant 0 : i32
    %c0_i32_1 = arith.constant 0 : i32
    return %c0_i32, %c0_i32_0 : i32, i32
  }
  func.func @transform_5(%arg0: i32) -> (i32, i32) {
    %c0_i32 = arith.constant 0 : i32
    %c0_i32_0 = arith.constant 0 : i32
    %c0_i32_1 = arith.constant 0 : i32
    return %c0_i32, %c0_i32_0 : i32, i32
  }
  func.func @transform_6(%arg0: i32) -> (i32, i32) {
    %c0_i32 = arith.constant 0 : i32
    %c0_i32_0 = arith.constant 0 : i32
    %c0_i32_1 = arith.constant 0 : i32
    return %c0_i32, %c0_i32_0 : i32, i32
  }
  func.func @transform_7(%arg0: i32) -> (i32, i32) {
    %c0_i32 = arith.constant 0 : i32
    %c0_i32_0 = arith.constant 0 : i32
    %c0_i32_1 = arith.constant 0 : i32
    return %c0_i32, %c0_i32_0 : i32, i32
  }
  func.func @transform_8(%arg0: i32) -> (i32, i32) {
    %c0_i32 = arith.constant 0 : i32
    %c0_i32_0 = arith.constant 0 : i32
    %c0_i32_1 = arith.constant 0 : i32
    return %c0_i32, %c0_i32_0 : i32, i32
  }
  func.func @transform_9(%arg0: i32) -> (i32, i32) {
    %c0_i32 = arith.constant 0 : i32
    %c0_i32_0 = arith.constant 0 : i32
    %c0_i32_1 = arith.constant 0 : i32
    return %c0_i32, %c0_i32_0 : i32, i32
  }
  func.func @transform_10(%arg0: i32) -> (i32, i32) {
    %c0_i32 = arith.constant 0 : i32
    %c0_i32_0 = arith.constant 0 : i32
    %c0_i32_1 = arith.constant 0 : i32
    return %c0_i32, %c0_i32_0 : i32, i32
  }
  func.func @transform_11(%arg0: i32) -> (i32, i32) {
    %c0_i32 = arith.constant 0 : i32
    %c0_i32_0 = arith.constant 0 : i32
    %c0_i32_1 = arith.constant 0 : i32
    return %c0_i32, %c0_i32_0 : i32, i32
  }
  func.func @transform_12(%arg0: i32) -> (i32, i32) {
    %c0_i32 = arith.constant 0 : i32
    %c0_i32_0 = arith.constant 0 : i32
    %c0_i32_1 = arith.constant 0 : i32
    return %c0_i32, %c0_i32_0 : i32, i32
  }
  func.func @transform_13(%arg0: i32) -> (i32, i32) {
    %c0_i32 = arith.constant 0 : i32
    %c0_i32_0 = arith.constant 0 : i32
    %c0_i32_1 = arith.constant 0 : i32
    return %c0_i32, %c0_i32_0 : i32, i32
  }
  func.func @transform_14(%arg0: i32) -> (i32, i32) {
    %c0_i32 = arith.constant 0 : i32
    %c0_i32_0 = arith.constant 0 : i32
    %c0_i32_1 = arith.constant 0 : i32
    return %c0_i32, %c0_i32_0 : i32, i32
  }
  func.func @transform_15(%arg0: i32) -> (i32, i32) {
    %c0_i32 = arith.constant 0 : i32
    %c0_i32_0 = arith.constant 0 : i32
    %c0_i32_1 = arith.constant 0 : i32
    return %c0_i32, %c0_i32_0 : i32, i32
  }
  func.func @transform_16(%arg0: i32) -> (i32, i32) {
    %c0_i32 = arith.constant 0 : i32
    %c0_i32_0 = arith.constant 0 : i32
    %c0_i32_1 = arith.constant 0 : i32
    return %c0_i32, %c0_i32_0 : i32, i32
  }
  func.func @transform_17(%arg0: i32) -> (i32, i32) {
    %c0_i32 = arith.constant 0 : i32
    %c0_i32_0 = arith.constant 0 : i32
    %c0_i32_1 = arith.constant 0 : i32
    return %c0_i32, %c0_i32_0 : i32, i32
  }
  func.func @transform_18(%arg0: i32) -> (i32, i32) {
    %c0_i32 = arith.constant 0 : i32
    %c0_i32_0 = arith.constant 0 : i32
    %c0_i32_1 = arith.constant 0 : i32
    return %c0_i32, %c0_i32_0 : i32, i32
  }
  func.func @transform_19(%arg0: i32) -> (i32, i32) {
    %c0_i32 = arith.constant 0 : i32
    %c0_i32_0 = arith.constant 0 : i32
    %c0_i32_1 = arith.constant 0 : i32
    return %c0_i32, %c0_i32_0 : i32, i32
  }
  func.func @transform_20(%arg0: i32) -> (i32, i32) {
    %c0_i32 = arith.constant 0 : i32
    %c0_i32_0 = arith.constant 0 : i32
    %c0_i32_1 = arith.constant 0 : i32
    return %c0_i32, %c0_i32_0 : i32, i32
  }
  func.func @transform_21(%arg0: i32) -> (i32, i32) {
    %c0_i32 = arith.constant 0 : i32
    %c0_i32_0 = arith.constant 0 : i32
    %c0_i32_1 = arith.constant 0 : i32
    return %c0_i32, %c0_i32_0 : i32, i32
  }
}

module attributes {stable_mosaic.version = 11 : i64} {
  func.func @_mm_bias_bn_relu_kernel(%arg0: i32, %arg1: memref<32x512xf32, #tpu.memory_space<vmem>>, %arg2: memref<512x64xf32, #tpu.memory_space<vmem>>, %arg3: memref<1x64xf32, #tpu.memory_space<vmem>>, %arg4: memref<1x64xf32, #tpu.memory_space<vmem>>, %arg5: memref<1x64xf32, #tpu.memory_space<vmem>>, %arg6: memref<32x64xf32, #tpu.memory_space<vmem>>) attributes {dimension_semantics = [#tpu.dimension_semantics<arbitrary>], iteration_bounds = array<i64: 1>, scalar_prefetch = 0 : i64, scratch_operands = 0 : i64, tpu.core_type = #tpu.core_type<tc>, window_params = [{pipeline_mode = #tpu.pipeline_mode<synchronous>, transform_indices = @transform_0, window_bounds = array<i64: 32, 512>}, {pipeline_mode = #tpu.pipeline_mode<synchronous>, transform_indices = @transform_1, window_bounds = array<i64: 512, 64>}, {pipeline_mode = #tpu.pipeline_mode<synchronous>, transform_indices = @transform_2, window_bounds = array<i64: 1, 64>}, {pipeline_mode = #tpu.pipeline_mode<synchronous>, transform_indices = @transform_3, window_bounds = array<i64: 1, 64>}, {pipeline_mode = #tpu.pipeline_mode<synchronous>, transform_indices = @transform_4, window_bounds = array<i64: 1, 64>}, {pipeline_mode = #tpu.pipeline_mode<synchronous>, transform_indices = @transform_5, window_bounds = array<i64: 32, 64>}]} {
    %c0 = arith.constant 0 : index
    %c0_0 = arith.constant 0 : index
    %0 = vector.load %arg1[%c0, %c0_0] : memref<32x512xf32, #tpu.memory_space<vmem>>, vector<32x512xf32>
    %1 = arith.truncf %0 : vector<32x512xf32> to vector<32x512xbf16>
    %c0_1 = arith.constant 0 : index
    %c0_2 = arith.constant 0 : index
    %2 = vector.load %arg2[%c0_1, %c0_2] : memref<512x64xf32, #tpu.memory_space<vmem>>, vector<512x64xf32>
    %3 = arith.truncf %2 : vector<512x64xf32> to vector<512x64xbf16>
    %cst = arith.constant dense<0.000000e+00> : vector<32x64xf32>
    %4 = tpu.matmul %1, %3, %cst {dimension_numbers = #tpu.dot_dimension_numbers<[1], [0], [0], [1], [0, 0, 1, 1], [], []>} : vector<32x512xbf16>, vector<512x64xbf16>, vector<32x64xf32> -> vector<32x64xf32>
    %c0_3 = arith.constant 0 : index
    %c0_4 = arith.constant 0 : index
    %5 = vector.load %arg3[%c0_3, %c0_4] : memref<1x64xf32, #tpu.memory_space<vmem>>, vector<1x64xf32>
    %6 = vector.broadcast %5 : vector<1x64xf32> to vector<32x64xf32>
    %7 = arith.addf %4, %6 : vector<32x64xf32>
    %cst_5 = arith.constant dense<0.000000e+00> : vector<64xf32>
    %8 = vector.multi_reduction <add>, %7, %cst_5 [0] : vector<32x64xf32> to vector<64xf32>
    %9 = vector.shape_cast %8 : vector<64xf32> to vector<1x64xf32>
    %cst_6 = arith.constant 3.125000e-02 : f32
    %10 = vector.broadcast %cst_6 : f32 to vector<1x64xf32>
    %11 = arith.mulf %9, %10 : vector<1x64xf32>
    %12 = vector.broadcast %11 : vector<1x64xf32> to vector<32x64xf32>
    %13 = arith.subf %7, %12 : vector<32x64xf32>
    %14 = arith.mulf %13, %13 : vector<32x64xf32>
    %cst_7 = arith.constant dense<0.000000e+00> : vector<64xf32>
    %15 = vector.multi_reduction <add>, %14, %cst_7 [0] : vector<32x64xf32> to vector<64xf32>
    %16 = vector.shape_cast %15 : vector<64xf32> to vector<1x64xf32>
    %cst_8 = arith.constant 3.125000e-02 : f32
    %17 = vector.broadcast %cst_8 : f32 to vector<1x64xf32>
    %18 = arith.mulf %16, %17 : vector<1x64xf32>
    %cst_9 = arith.constant 9.99999974E-6 : f32
    %19 = vector.broadcast %cst_9 : f32 to vector<1x64xf32>
    %20 = arith.addf %18, %19 : vector<1x64xf32>
    %21 = math.rsqrt %20 : vector<1x64xf32>
    %22 = vector.broadcast %21 : vector<1x64xf32> to vector<32x64xf32>
    %23 = arith.mulf %13, %22 : vector<32x64xf32>
    %c0_10 = arith.constant 0 : index
    %c0_11 = arith.constant 0 : index
    %24 = vector.load %arg4[%c0_10, %c0_11] : memref<1x64xf32, #tpu.memory_space<vmem>>, vector<1x64xf32>
    %25 = vector.broadcast %24 : vector<1x64xf32> to vector<32x64xf32>
    %26 = arith.mulf %23, %25 : vector<32x64xf32>
    %c0_12 = arith.constant 0 : index
    %c0_13 = arith.constant 0 : index
    %27 = vector.load %arg5[%c0_12, %c0_13] : memref<1x64xf32, #tpu.memory_space<vmem>>, vector<1x64xf32>
    %28 = vector.broadcast %27 : vector<1x64xf32> to vector<32x64xf32>
    %29 = arith.addf %26, %28 : vector<32x64xf32>
    %cst_14 = arith.constant 0.000000e+00 : f32
    %30 = vector.broadcast %cst_14 : f32 to vector<32x64xf32>
    %31 = arith.maximumf %29, %30 : vector<32x64xf32>
    %c0_15 = arith.constant 0 : index
    %c0_16 = arith.constant 0 : index
    %32 = vector.load %arg6[%c0_15, %c0_16] : memref<32x64xf32, #tpu.memory_space<vmem>>, vector<32x64xf32>
    tpu.vector_store %arg6[%c0_15, %c0_16], %31 {strides = array<i32>} : memref<32x64xf32, #tpu.memory_space<vmem>>, vector<32x64xf32>,
    return
  }
  func.func @transform_0(%arg0: i32) -> (i32, i32) {
    %c0_i32 = arith.constant 0 : i32
    %c0_i32_0 = arith.constant 0 : i32
    %c0_i32_1 = arith.constant 0 : i32
    return %c0_i32, %c0_i32_0 : i32, i32
  }
  func.func @transform_1(%arg0: i32) -> (i32, i32) {
    %c0_i32 = arith.constant 0 : i32
    %c0_i32_0 = arith.constant 0 : i32
    %c0_i32_1 = arith.constant 0 : i32
    return %c0_i32, %c0_i32_0 : i32, i32
  }
  func.func @transform_2(%arg0: i32) -> (i32, i32) {
    %c0_i32 = arith.constant 0 : i32
    %c0_i32_0 = arith.constant 0 : i32
    %c0_i32_1 = arith.constant 0 : i32
    return %c0_i32, %c0_i32_0 : i32, i32
  }
  func.func @transform_3(%arg0: i32) -> (i32, i32) {
    %c0_i32 = arith.constant 0 : i32
    %c0_i32_0 = arith.constant 0 : i32
    %c0_i32_1 = arith.constant 0 : i32
    return %c0_i32, %c0_i32_0 : i32, i32
  }
  func.func @transform_4(%arg0: i32) -> (i32, i32) {
    %c0_i32 = arith.constant 0 : i32
    %c0_i32_0 = arith.constant 0 : i32
    %c0_i32_1 = arith.constant 0 : i32
    return %c0_i32, %c0_i32_0 : i32, i32
  }
  func.func @transform_5(%arg0: i32) -> (i32, i32) {
    %c0_i32 = arith.constant 0 : i32
    %c0_i32_0 = arith.constant 0 : i32
    %c0_i32_1 = arith.constant 0 : i32
    return %c0_i32, %c0_i32_0 : i32, i32
  }
}

module attributes {stable_mosaic.version = 11 : i64} {
  func.func @_mm_bias_bn_relu_kernel(%arg0: i32, %arg1: memref<98x576xf32, #tpu.memory_space<vmem>>, %arg2: memref<576x32xf32, #tpu.memory_space<vmem>>, %arg3: memref<1x32xf32, #tpu.memory_space<vmem>>, %arg4: memref<1x32xf32, #tpu.memory_space<vmem>>, %arg5: memref<1x32xf32, #tpu.memory_space<vmem>>, %arg6: memref<98x32xf32, #tpu.memory_space<vmem>>) attributes {dimension_semantics = [#tpu.dimension_semantics<arbitrary>], iteration_bounds = array<i64: 1>, scalar_prefetch = 0 : i64, scratch_operands = 0 : i64, tpu.core_type = #tpu.core_type<tc>, window_params = [{pipeline_mode = #tpu.pipeline_mode<synchronous>, transform_indices = @transform_0, window_bounds = array<i64: 98, 576>}, {pipeline_mode = #tpu.pipeline_mode<synchronous>, transform_indices = @transform_1, window_bounds = array<i64: 576, 32>}, {pipeline_mode = #tpu.pipeline_mode<synchronous>, transform_indices = @transform_2, window_bounds = array<i64: 1, 32>}, {pipeline_mode = #tpu.pipeline_mode<synchronous>, transform_indices = @transform_3, window_bounds = array<i64: 1, 32>}, {pipeline_mode = #tpu.pipeline_mode<synchronous>, transform_indices = @transform_4, window_bounds = array<i64: 1, 32>}, {pipeline_mode = #tpu.pipeline_mode<synchronous>, transform_indices = @transform_5, window_bounds = array<i64: 98, 32>}]} {
    %c0 = arith.constant 0 : index
    %c0_0 = arith.constant 0 : index
    %0 = vector.load %arg1[%c0, %c0_0] : memref<98x576xf32, #tpu.memory_space<vmem>>, vector<98x576xf32>
    %1 = arith.truncf %0 : vector<98x576xf32> to vector<98x576xbf16>
    %c0_1 = arith.constant 0 : index
    %c0_2 = arith.constant 0 : index
    %2 = vector.load %arg2[%c0_1, %c0_2] : memref<576x32xf32, #tpu.memory_space<vmem>>, vector<576x32xf32>
    %3 = arith.truncf %2 : vector<576x32xf32> to vector<576x32xbf16>
    %cst = arith.constant dense<0.000000e+00> : vector<98x32xf32>
    %4 = tpu.matmul %1, %3, %cst {dimension_numbers = #tpu.dot_dimension_numbers<[1], [0], [0], [1], [0, 0, 1, 1], [], []>} : vector<98x576xbf16>, vector<576x32xbf16>, vector<98x32xf32> -> vector<98x32xf32>
    %c0_3 = arith.constant 0 : index
    %c0_4 = arith.constant 0 : index
    %5 = vector.load %arg3[%c0_3, %c0_4] : memref<1x32xf32, #tpu.memory_space<vmem>>, vector<1x32xf32>
    %6 = vector.broadcast %5 : vector<1x32xf32> to vector<98x32xf32>
    %7 = arith.addf %4, %6 : vector<98x32xf32>
    %cst_5 = arith.constant dense<0.000000e+00> : vector<32xf32>
    %8 = vector.multi_reduction <add>, %7, %cst_5 [0] : vector<98x32xf32> to vector<32xf32>
    %9 = vector.shape_cast %8 : vector<32xf32> to vector<1x32xf32>
    %cst_6 = arith.constant 0.0102040814 : f32
    %10 = vector.broadcast %cst_6 : f32 to vector<1x32xf32>
    %11 = arith.mulf %9, %10 : vector<1x32xf32>
    %12 = vector.broadcast %11 : vector<1x32xf32> to vector<98x32xf32>
    %13 = arith.subf %7, %12 : vector<98x32xf32>
    %14 = arith.mulf %13, %13 : vector<98x32xf32>
    %cst_7 = arith.constant dense<0.000000e+00> : vector<32xf32>
    %15 = vector.multi_reduction <add>, %14, %cst_7 [0] : vector<98x32xf32> to vector<32xf32>
    %16 = vector.shape_cast %15 : vector<32xf32> to vector<1x32xf32>
    %cst_8 = arith.constant 0.0102040814 : f32
    %17 = vector.broadcast %cst_8 : f32 to vector<1x32xf32>
    %18 = arith.mulf %16, %17 : vector<1x32xf32>
    %cst_9 = arith.constant 9.99999974E-6 : f32
    %19 = vector.broadcast %cst_9 : f32 to vector<1x32xf32>
    %20 = arith.addf %18, %19 : vector<1x32xf32>
    %21 = math.rsqrt %20 : vector<1x32xf32>
    %22 = vector.broadcast %21 : vector<1x32xf32> to vector<98x32xf32>
    %23 = arith.mulf %13, %22 : vector<98x32xf32>
    %c0_10 = arith.constant 0 : index
    %c0_11 = arith.constant 0 : index
    %24 = vector.load %arg4[%c0_10, %c0_11] : memref<1x32xf32, #tpu.memory_space<vmem>>, vector<1x32xf32>
    %25 = vector.broadcast %24 : vector<1x32xf32> to vector<98x32xf32>
    %26 = arith.mulf %23, %25 : vector<98x32xf32>
    %c0_12 = arith.constant 0 : index
    %c0_13 = arith.constant 0 : index
    %27 = vector.load %arg5[%c0_12, %c0_13] : memref<1x32xf32, #tpu.memory_space<vmem>>, vector<1x32xf32>
    %28 = vector.broadcast %27 : vector<1x32xf32> to vector<98x32xf32>
    %29 = arith.addf %26, %28 : vector<98x32xf32>
    %cst_14 = arith.constant 0.000000e+00 : f32
    %30 = vector.broadcast %cst_14 : f32 to vector<98x32xf32>
    %31 = arith.maximumf %29, %30 : vector<98x32xf32>
    %c0_15 = arith.constant 0 : index
    %c0_16 = arith.constant 0 : index
    %32 = vector.load %arg6[%c0_15, %c0_16] : memref<98x32xf32, #tpu.memory_space<vmem>>, vector<98x32xf32>
    tpu.vector_store %arg6[%c0_15, %c0_16], %31 {strides = array<i32>} : memref<98x32xf32, #tpu.memory_space<vmem>>, vector<98x32xf32>,
    return
  }
  func.func @transform_0(%arg0: i32) -> (i32, i32) {
    %c0_i32 = arith.constant 0 : i32
    %c0_i32_0 = arith.constant 0 : i32
    %c0_i32_1 = arith.constant 0 : i32
    return %c0_i32, %c0_i32_0 : i32, i32
  }
  func.func @transform_1(%arg0: i32) -> (i32, i32) {
    %c0_i32 = arith.constant 0 : i32
    %c0_i32_0 = arith.constant 0 : i32
    %c0_i32_1 = arith.constant 0 : i32
    return %c0_i32, %c0_i32_0 : i32, i32
  }
  func.func @transform_2(%arg0: i32) -> (i32, i32) {
    %c0_i32 = arith.constant 0 : i32
    %c0_i32_0 = arith.constant 0 : i32
    %c0_i32_1 = arith.constant 0 : i32
    return %c0_i32, %c0_i32_0 : i32, i32
  }
  func.func @transform_3(%arg0: i32) -> (i32, i32) {
    %c0_i32 = arith.constant 0 : i32
    %c0_i32_0 = arith.constant 0 : i32
    %c0_i32_1 = arith.constant 0 : i32
    return %c0_i32, %c0_i32_0 : i32, i32
  }
  func.func @transform_4(%arg0: i32) -> (i32, i32) {
    %c0_i32 = arith.constant 0 : i32
    %c0_i32_0 = arith.constant 0 : i32
    %c0_i32_1 = arith.constant 0 : i32
    return %c0_i32, %c0_i32_0 : i32, i32
  }
  func.func @transform_5(%arg0: i32) -> (i32, i32) {
    %c0_i32 = arith.constant 0 : i32
    %c0_i32_0 = arith.constant 0 : i32
    %c0_i32_1 = arith.constant 0 : i32
    return %c0_i32, %c0_i32_0 : i32, i32
  }
}

module attributes {stable_mosaic.version = 11 : i64} {
  func.func @_mm_bias_bn_relu_kernel(%arg0: i32, %arg1: memref<392x288xf32, #tpu.memory_space<vmem>>, %arg2: memref<288x16xf32, #tpu.memory_space<vmem>>, %arg3: memref<1x16xf32, #tpu.memory_space<vmem>>, %arg4: memref<1x16xf32, #tpu.memory_space<vmem>>, %arg5: memref<1x16xf32, #tpu.memory_space<vmem>>, %arg6: memref<392x16xf32, #tpu.memory_space<vmem>>) attributes {dimension_semantics = [#tpu.dimension_semantics<arbitrary>], iteration_bounds = array<i64: 1>, scalar_prefetch = 0 : i64, scratch_operands = 0 : i64, tpu.core_type = #tpu.core_type<tc>, window_params = [{pipeline_mode = #tpu.pipeline_mode<synchronous>, transform_indices = @transform_0, window_bounds = array<i64: 392, 288>}, {pipeline_mode = #tpu.pipeline_mode<synchronous>, transform_indices = @transform_1, window_bounds = array<i64: 288, 16>}, {pipeline_mode = #tpu.pipeline_mode<synchronous>, transform_indices = @transform_2, window_bounds = array<i64: 1, 16>}, {pipeline_mode = #tpu.pipeline_mode<synchronous>, transform_indices = @transform_3, window_bounds = array<i64: 1, 16>}, {pipeline_mode = #tpu.pipeline_mode<synchronous>, transform_indices = @transform_4, window_bounds = array<i64: 1, 16>}, {pipeline_mode = #tpu.pipeline_mode<synchronous>, transform_indices = @transform_5, window_bounds = array<i64: 392, 16>}]} {
    %c0 = arith.constant 0 : index
    %c0_0 = arith.constant 0 : index
    %0 = vector.load %arg1[%c0, %c0_0] : memref<392x288xf32, #tpu.memory_space<vmem>>, vector<392x288xf32>
    %1 = arith.truncf %0 : vector<392x288xf32> to vector<392x288xbf16>
    %c0_1 = arith.constant 0 : index
    %c0_2 = arith.constant 0 : index
    %2 = vector.load %arg2[%c0_1, %c0_2] : memref<288x16xf32, #tpu.memory_space<vmem>>, vector<288x16xf32>
    %3 = arith.truncf %2 : vector<288x16xf32> to vector<288x16xbf16>
    %cst = arith.constant dense<0.000000e+00> : vector<392x16xf32>
    %4 = tpu.matmul %1, %3, %cst {dimension_numbers = #tpu.dot_dimension_numbers<[1], [0], [0], [1], [0, 0, 1, 1], [], []>} : vector<392x288xbf16>, vector<288x16xbf16>, vector<392x16xf32> -> vector<392x16xf32>
    %c0_3 = arith.constant 0 : index
    %c0_4 = arith.constant 0 : index
    %5 = vector.load %arg3[%c0_3, %c0_4] : memref<1x16xf32, #tpu.memory_space<vmem>>, vector<1x16xf32>
    %6 = vector.broadcast %5 : vector<1x16xf32> to vector<392x16xf32>
    %7 = arith.addf %4, %6 : vector<392x16xf32>
    %cst_5 = arith.constant dense<0.000000e+00> : vector<16xf32>
    %8 = vector.multi_reduction <add>, %7, %cst_5 [0] : vector<392x16xf32> to vector<16xf32>
    %9 = vector.shape_cast %8 : vector<16xf32> to vector<1x16xf32>
    %cst_6 = arith.constant 0.00255102036 : f32
    %10 = vector.broadcast %cst_6 : f32 to vector<1x16xf32>
    %11 = arith.mulf %9, %10 : vector<1x16xf32>
    %12 = vector.broadcast %11 : vector<1x16xf32> to vector<392x16xf32>
    %13 = arith.subf %7, %12 : vector<392x16xf32>
    %14 = arith.mulf %13, %13 : vector<392x16xf32>
    %cst_7 = arith.constant dense<0.000000e+00> : vector<16xf32>
    %15 = vector.multi_reduction <add>, %14, %cst_7 [0] : vector<392x16xf32> to vector<16xf32>
    %16 = vector.shape_cast %15 : vector<16xf32> to vector<1x16xf32>
    %cst_8 = arith.constant 0.00255102036 : f32
    %17 = vector.broadcast %cst_8 : f32 to vector<1x16xf32>
    %18 = arith.mulf %16, %17 : vector<1x16xf32>
    %cst_9 = arith.constant 9.99999974E-6 : f32
    %19 = vector.broadcast %cst_9 : f32 to vector<1x16xf32>
    %20 = arith.addf %18, %19 : vector<1x16xf32>
    %21 = math.rsqrt %20 : vector<1x16xf32>
    %22 = vector.broadcast %21 : vector<1x16xf32> to vector<392x16xf32>
    %23 = arith.mulf %13, %22 : vector<392x16xf32>
    %c0_10 = arith.constant 0 : index
    %c0_11 = arith.constant 0 : index
    %24 = vector.load %arg4[%c0_10, %c0_11] : memref<1x16xf32, #tpu.memory_space<vmem>>, vector<1x16xf32>
    %25 = vector.broadcast %24 : vector<1x16xf32> to vector<392x16xf32>
    %26 = arith.mulf %23, %25 : vector<392x16xf32>
    %c0_12 = arith.constant 0 : index
    %c0_13 = arith.constant 0 : index
    %27 = vector.load %arg5[%c0_12, %c0_13] : memref<1x16xf32, #tpu.memory_space<vmem>>, vector<1x16xf32>
    %28 = vector.broadcast %27 : vector<1x16xf32> to vector<392x16xf32>
    %29 = arith.addf %26, %28 : vector<392x16xf32>
    %cst_14 = arith.constant 0.000000e+00 : f32
    %30 = vector.broadcast %cst_14 : f32 to vector<392x16xf32>
    %31 = arith.maximumf %29, %30 : vector<392x16xf32>
    %c0_15 = arith.constant 0 : index
    %c0_16 = arith.constant 0 : index
    %32 = vector.load %arg6[%c0_15, %c0_16] : memref<392x16xf32, #tpu.memory_space<vmem>>, vector<392x16xf32>
    tpu.vector_store %arg6[%c0_15, %c0_16], %31 {strides = array<i32>} : memref<392x16xf32, #tpu.memory_space<vmem>>, vector<392x16xf32>,
    return
  }
  func.func @transform_0(%arg0: i32) -> (i32, i32) {
    %c0_i32 = arith.constant 0 : i32
    %c0_i32_0 = arith.constant 0 : i32
    %c0_i32_1 = arith.constant 0 : i32
    return %c0_i32, %c0_i32_0 : i32, i32
  }
  func.func @transform_1(%arg0: i32) -> (i32, i32) {
    %c0_i32 = arith.constant 0 : i32
    %c0_i32_0 = arith.constant 0 : i32
    %c0_i32_1 = arith.constant 0 : i32
    return %c0_i32, %c0_i32_0 : i32, i32
  }
  func.func @transform_2(%arg0: i32) -> (i32, i32) {
    %c0_i32 = arith.constant 0 : i32
    %c0_i32_0 = arith.constant 0 : i32
    %c0_i32_1 = arith.constant 0 : i32
    return %c0_i32, %c0_i32_0 : i32, i32
  }
  func.func @transform_3(%arg0: i32) -> (i32, i32) {
    %c0_i32 = arith.constant 0 : i32
    %c0_i32_0 = arith.constant 0 : i32
    %c0_i32_1 = arith.constant 0 : i32
    return %c0_i32, %c0_i32_0 : i32, i32
  }
  func.func @transform_4(%arg0: i32) -> (i32, i32) {
    %c0_i32 = arith.constant 0 : i32
    %c0_i32_0 = arith.constant 0 : i32
    %c0_i32_1 = arith.constant 0 : i32
    return %c0_i32, %c0_i32_0 : i32, i32
  }
  func.func @transform_5(%arg0: i32) -> (i32, i32) {
    %c0_i32 = arith.constant 0 : i32
    %c0_i32_0 = arith.constant 0 : i32
    %c0_i32_1 = arith.constant 0 : i32
    return %c0_i32, %c0_i32_0 : i32, i32
  }
}

module attributes {stable_mosaic.version = 11 : i64} {
  func.func @_mm_bias_sigmoid_kernel(%arg0: i32, %arg1: memref<784x144xf32, #tpu.memory_space<vmem>>, %arg2: memref<144x3xf32, #tpu.memory_space<vmem>>, %arg3: memref<1x3xf32, #tpu.memory_space<vmem>>, %arg4: memref<784x3xf32, #tpu.memory_space<vmem>>) attributes {dimension_semantics = [#tpu.dimension_semantics<parallel>], iteration_bounds = array<i64: 2>, scalar_prefetch = 0 : i64, scratch_operands = 0 : i64, tpu.core_type = #tpu.core_type<tc>, window_params = [{transform_indices = @transform_0, window_bounds = array<i64: 784, 144>}, {pipeline_mode = #tpu.pipeline_mode<synchronous>, transform_indices = @transform_1, window_bounds = array<i64: 144, 3>}, {pipeline_mode = #tpu.pipeline_mode<synchronous>, transform_indices = @transform_2, window_bounds = array<i64: 1, 3>}, {transform_indices = @transform_3, window_bounds = array<i64: 784, 3>}]} {
    %c0 = arith.constant 0 : index
    %c0_0 = arith.constant 0 : index
    %0 = vector.load %arg1[%c0, %c0_0] : memref<784x144xf32, #tpu.memory_space<vmem>>, vector<784x144xf32>
    %1 = arith.truncf %0 : vector<784x144xf32> to vector<784x144xbf16>
    %c0_1 = arith.constant 0 : index
    %c0_2 = arith.constant 0 : index
    %2 = vector.load %arg2[%c0_1, %c0_2] : memref<144x3xf32, #tpu.memory_space<vmem>>, vector<144x3xf32>
    %3 = arith.truncf %2 : vector<144x3xf32> to vector<144x3xbf16>
    %cst = arith.constant dense<0.000000e+00> : vector<784x3xf32>
    %4 = tpu.matmul %1, %3, %cst {dimension_numbers = #tpu.dot_dimension_numbers<[1], [0], [0], [1], [0, 0, 1, 1], [], []>} : vector<784x144xbf16>, vector<144x3xbf16>, vector<784x3xf32> -> vector<784x3xf32>
    %c0_3 = arith.constant 0 : index
    %c0_4 = arith.constant 0 : index
    %5 = vector.load %arg3[%c0_3, %c0_4] : memref<1x3xf32, #tpu.memory_space<vmem>>, vector<1x3xf32>
    %6 = vector.broadcast %5 : vector<1x3xf32> to vector<784x3xf32>
    %7 = arith.addf %4, %6 : vector<784x3xf32>
    %8 = arith.negf %7 : vector<784x3xf32>
    %9 = math.exp %8 : vector<784x3xf32>
    %cst_5 = arith.constant 1.000000e+00 : f32
    %10 = vector.broadcast %cst_5 : f32 to vector<784x3xf32>
    %11 = arith.addf %10, %9 : vector<784x3xf32>
    %12 = arith.divf %10, %11 : vector<784x3xf32>
    %c0_6 = arith.constant 0 : index
    %c0_7 = arith.constant 0 : index
    %13 = vector.load %arg4[%c0_6, %c0_7] : memref<784x3xf32, #tpu.memory_space<vmem>>, vector<784x3xf32>
    tpu.vector_store %arg4[%c0_6, %c0_7], %12 {strides = array<i32>} : memref<784x3xf32, #tpu.memory_space<vmem>>, vector<784x3xf32>,
    return
  }
  func.func @transform_0(%arg0: i32) -> (i32, i32) {
    %c0_i32 = arith.constant 0 : i32
    %c0_i32_0 = arith.constant 0 : i32
    return %arg0, %c0_i32 : i32, i32
  }
  func.func @transform_1(%arg0: i32) -> (i32, i32) {
    %c0_i32 = arith.constant 0 : i32
    %c0_i32_0 = arith.constant 0 : i32
    %c0_i32_1 = arith.constant 0 : i32
    return %c0_i32, %c0_i32_0 : i32, i32
  }
  func.func @transform_2(%arg0: i32) -> (i32, i32) {
    %c0_i32 = arith.constant 0 : i32
    %c0_i32_0 = arith.constant 0 : i32
    %c0_i32_1 = arith.constant 0 : i32
    return %c0_i32, %c0_i32_0 : i32, i32
  }
  func.func @transform_3(%arg0: i32) -> (i32, i32) {
    %c0_i32 = arith.constant 0 : i32
    %c0_i32_0 = arith.constant 0 : i32
    return %arg0, %c0_i32 : i32, i32
  }
}

</mosaic_0001>

<llo_original>
// kernel: vae_forward.9
$region0: #{vae_forward.9}
  #allocation0 [shape = 'u32[]', space=smem, size = 0x4, offset = 0x4, fixed_abs, tag = 'smem constant byte address 0x4 - core index']
  #allocation1 [shape = 'u32[144,128]{1,0:T(1,128)}', space=vmem, size = 0x12000, scoped, tag = 'internal scratch']
  %s0 = inlined_call_operand.vmem [shape: f32[392,27], index: 0, kind: input, shape index: {}]
  %s1 = inlined_call_operand.vmem [shape: f32[27,16], index: 1, kind: input, shape index: {}]
  %s2 = inlined_call_operand.vmem [shape: f32[1,16], index: 2, kind: input, shape index: {}]
  %s3 = inlined_call_operand.vmem [shape: f32[1,16], index: 3, kind: input, shape index: {}]
  %s4 = inlined_call_operand.vmem [shape: f32[1,16], index: 4, kind: input, shape index: {}]
  %s5 = inlined_call_operand.vmem [shape: f32[392,16], index: 5, kind: output, shape index: {}]
  %s6 = sld [smem:[#allocation0]]
  $region30: #{vae_forward.9} parent=0
    _
  %s8 = ssub.s32 1, %s6
  %s9 = scalar_select 0, %s8, %s6
  // Predicated region
  $region2: #{vae_forward.9} parent=0 // pred_check
    _
  $region3: #{vae_forward.9} parent=0 // pred_check_branch
    %11 = sbr.rel (0) target = $region5
  $region4: #{vae_forward.9} parent=0 // pred_region
    _
  $region5: #{vae_forward.9} parent=0 // pred_fallthru
    _
  // Predicated region
  $region6: #{vae_forward.9} parent=0 // pred_check
    _
  $region7: #{vae_forward.9} parent=0 // pred_check_branch
    %13 = sbr.rel (0) target = $region9
  $region8: #{vae_forward.9} parent=0 // pred_region
    _
  $region9: #{vae_forward.9} parent=0 // pred_fallthru
    _
  // Predicated region
  $region10: #{vae_forward.9} parent=0 // pred_check
    _
  $region11: #{vae_forward.9} parent=0 // pred_check_branch
    %15 = sbr.rel (0) target = $region13
  $region12: #{vae_forward.9} parent=0 // pred_region
    _
  $region13: #{vae_forward.9} parent=0 // pred_fallthru
    _
  // Predicated region
  $region14: #{vae_forward.9} parent=0 // pred_check
    _
  $region15: #{vae_forward.9} parent=0 // pred_check_branch
    %17 = sbr.rel (0) target = $region17
  $region16: #{vae_forward.9} parent=0 // pred_region
    _
  $region17: #{vae_forward.9} parent=0 // pred_fallthru
    _
  // Predicated region
  $region18: #{vae_forward.9} parent=0 // pred_check
    _
  $region19: #{vae_forward.9} parent=0 // pred_check_branch
    %19 = sbr.rel (0) target = $region21
  $region20: #{vae_forward.9} parent=0 // pred_region
    _
  $region21: #{vae_forward.9} parent=0 // pred_fallthru
    _
  %v21 = vld [vmem:[%s0] sm:$0xff]
  %v22 = vld [vmem:[%s0 + $0x8] sm:$0xff]
  %v23 = vld [vmem:[%s0 + $0x10] sm:$0xff]
  %v24 = vld [vmem:[%s0 + $0x18] sm:$0xff]
  %v25 = vld [vmem:[%s0 + $0x20] sm:$0xff]
  %v26 = vld [vmem:[%s0 + $0x28] sm:$0xff]
  %v27 = vld [vmem:[%s0 + $0x30] sm:$0xff]
  %v28 = vld [vmem:[%s0 + $0x38] sm:$0xff]
  %v29 = vld [vmem:[%s0 + $0x40] sm:$0xff]
  %v30 = vld [vmem:[%s0 + $0x48] sm:$0xff]
  %v31 = vld [vmem:[%s0 + $0x50] sm:$0xff]
  %v32 = vld [vmem:[%s0 + $0x58] sm:$0xff]
  %v33 = vld [vmem:[%s0 + $0x60] sm:$0xff]
  %v34 = vld [vmem:[%s0 + $0x68] sm:$0xff]
  %v35 = vld [vmem:[%s0 + $0x70] sm:$0xff]
  %v36 = vld [vmem:[%s0 + $0x78] sm:$0xff]
  %v37 = vld [vmem:[%s0 + $0x80] sm:$0xff]
  %v38 = vld [vmem:[%s0 + $0x88] sm:$0xff]
  %v39 = vld [vmem:[%s0 + $0x90] sm:$0xff]
  %v40 = vld [vmem:[%s0 + $0x98] sm:$0xff]
  %v41 = vld [vmem:[%s0 + $0xa0] sm:$0xff]
  %v42 = vld [vmem:[%s0 + $0xa8] sm:$0xff]
  %v43 = vld [vmem:[%s0 + $0xb0] sm:$0xff]
  %v44 = vld [vmem:[%s0 + $0xb8] sm:$0xff]
  %v45 = vld [vmem:[%s0 + $0xc0] sm:$0xff]
  %v46 = vld [vmem:[%s0 + $0xc8] sm:$0xff]
  %v47 = vld [vmem:[%s0 + $0xd0] sm:$0xff]
  %v48 = vld [vmem:[%s0 + $0xd8] sm:$0xff]
  %v49 = vld [vmem:[%s0 + $0xe0] sm:$0xff]
  %v50 = vld [vmem:[%s0 + $0xe8] sm:$0xff]
  %v51 = vld [vmem:[%s0 + $0xf0] sm:$0xff]
  %v52 = vld [vmem:[%s0 + $0xf8] sm:$0xff]
  %v53 = vld [vmem:[%s0 + $0x100] sm:$0xff]
  %v54 = vld [vmem:[%s0 + $0x108] sm:$0xff]
  %v55 = vld [vmem:[%s0 + $0x110] sm:$0xff]
  %v56 = vld [vmem:[%s0 + $0x118] sm:$0xff]
  %v57 = vld [vmem:[%s0 + $0x120] sm:$0xff]
  %v58 = vld [vmem:[%s0 + $0x128] sm:$0xff]
  %v59 = vld [vmem:[%s0 + $0x130] sm:$0xff]
  %v60 = vld [vmem:[%s0 + $0x138] sm:$0xff]
  %v61 = vld [vmem:[%s0 + $0x140] sm:$0xff]
  %v62 = vld [vmem:[%s0 + $0x148] sm:$0xff]
  %v63 = vld [vmem:[%s0 + $0x150] sm:$0xff]
  %v64 = vld [vmem:[%s0 + $0x158] sm:$0xff]
  %v65 = vld [vmem:[%s0 + $0x160] sm:$0xff]
  %v66 = vld [vmem:[%s0 + $0x168] sm:$0xff]
  %v67 = vld [vmem:[%s0 + $0x170] sm:$0xff]
  %v68 = vld [vmem:[%s0 + $0x178] sm:$0xff]
  %v69 = vld [vmem:[%s0 + $0x180] sm:$0xff]
  %v70 = vpack.c.bf16 %v22, %v21
  %v71 = vpack.c.bf16 %v24, %v23
  %v72 = vpack.c.bf16 %v26, %v25
  %v73 = vpack.c.bf16 %v28, %v27
  %v74 = vpack.c.bf16 %v30, %v29
  %v75 = vpack.c.bf16 %v32, %v31
  %v76 = vpack.c.bf16 %v34, %v33
  %v77 = vpack.c.bf16 %v36, %v35
  %v78 = vpack.c.bf16 %v38, %v37
  %v79 = vpack.c.bf16 %v40, %v39
  %v80 = vpack.c.bf16 %v42, %v41
  %v81 = vpack.c.bf16 %v44, %v43
  %v82 = vpack.c.bf16 %v46, %v45
  %v83 = vpack.c.bf16 %v48, %v47
  %v84 = vpack.c.bf16 %v50, %v49
  %v85 = vpack.c.bf16 %v52, %v51
  %v86 = vpack.c.bf16 %v54, %v53
  %v87 = vpack.c.bf16 %v56, %v55
  %v88 = vpack.c.bf16 %v58, %v57
  %v89 = vpack.c.bf16 %v60, %v59
  %v90 = vpack.c.bf16 %v62, %v61
  %v91 = vpack.c.bf16 %v64, %v63
  %v92 = vpack.c.bf16 %v66, %v65
  %v93 = vpack.c.bf16 %v68, %v67
  %v94 = vpack.c.bf16 %v69, %v69
  %v95 = vld [vmem:[%s1] sm:$0xff]
  %v96 = vld [vmem:[%s1 + $0x8] sm:$0xff]
  %v97 = vld [vmem:[%s1 + $0x10] sm:$0xff]
  %v98 = vld [vmem:[%s1 + $0x18] sm:$0x7]
  %v99 = vpack.c.bf16 %v96, %v95
  %v100 = vpack.c.bf16 %v98, %v97
  %v101 = vld [vmem:[%s2] sm:$0x1]
  %v103 = vlaneseq
  %v104 = vshrl.u32 %v103, 7
  %v105 = vsub.s32 0, %v104
  %v106 = vrot.slane %v101, %v105
  %vm108 = vcmask 220160
  %v110 = vsel %vm108, %v70, 0
  %v113 = vsel %vm108, %v71, 0
  %v116 = vsel %vm108, %v72, 0
  %v119 = vsel %vm108, %v73, 0
  %v122 = vsel %vm108, %v74, 0
  %v125 = vsel %vm108, %v75, 0
  %v128 = vsel %vm108, %v76, 0
  %v131 = vsel %vm108, %v77, 0
  %v134 = vsel %vm108, %v78, 0
  %v137 = vsel %vm108, %v79, 0
  %v140 = vsel %vm108, %v80, 0
  %v143 = vsel %vm108, %v81, 0
  %v146 = vsel %vm108, %v82, 0
  %v149 = vsel %vm108, %v83, 0
  %v152 = vsel %vm108, %v84, 0
  %v155 = vsel %vm108, %v85, 0
  %v158 = vsel %vm108, %v86, 0
  %v161 = vsel %vm108, %v87, 0
  %v164 = vsel %vm108, %v88, 0
  %v167 = vsel %vm108, %v89, 0
  %v170 = vsel %vm108, %v90, 0
  %v173 = vsel %vm108, %v91, 0
  %v176 = vsel %vm108, %v92, 0
  %v179 = vsel %vm108, %v93, 0
  %v182 = vsel %vm108, %v94, 0
  %vm184 = vcmask 1044480
  %vm185 = vcmask 1045504
  %v186 = vsel %vm184, 4294967295, 65535
  %v187 = vsel %vm185, %v186, 0
  %v189 = vand.u32 %v100, %v187
  %191 = vmatprep.subr.bf16.mxu0 0
  %192 = vmatpush1.bf16.msra.mxu0 %v99
  %193 = vmatprep.subr.bf16.mxu0 0
  %194 = vmatpush1.bf16.msra.mxu0 %v189
  %195 = vmatprep.subr.bf16.mxu0 0
  %196 = vmatpush1.bf16.msra.mxu0 0
  %197 = vmatprep.subr.bf16.mxu0 0
  %198 = vmatpush1.bf16.msra.mxu0 0
  %199 = vmatprep.subr.bf16.mxu0 0
  %200 = vmatpush1.bf16.msra.mxu0 0
  %201 = vmatprep.subr.bf16.mxu0 0
  %202 = vmatpush1.bf16.msra.mxu0 0
  %203 = vmatprep.subr.bf16.mxu0 0
  %204 = vmatpush1.bf16.msra.mxu0 0
  %205 = vmatprep.subr.bf16.mxu0 0
  %206 = vmatpush1.bf16.msra.mxu0 0
  %207 = vmatprep.subr.bf16.mxu0 0
  %208 = vmatpush1.bf16.msra.mxu0 0
  %209 = vmatprep.subr.bf16.mxu0 0
  %210 = vmatpush1.bf16.msra.mxu0 0
  %211 = vmatprep.subr.bf16.mxu0 0
  %212 = vmatpush1.bf16.msra.mxu0 0
  %213 = vmatprep.subr.bf16.mxu0 0
  %214 = vmatpush1.bf16.msra.mxu0 0
  %215 = vmatprep.subr.bf16.mxu0 0
  %216 = vmatpush1.bf16.msra.mxu0 0
  %217 = vmatprep.subr.bf16.mxu0 0
  %218 = vmatpush1.bf16.msra.mxu0 0
  %219 = vmatprep.subr.bf16.mxu0 0
  %220 = vmatpush1.bf16.msra.mxu0 0
  %221 = vmatprep.subr.bf16.mxu0 0
  %222 = vmatpush1.bf16.msra.mxu0 0
  %223 = vmatprep.mubr.bf16.mxu0 0
  %224 = vmatmul.mubr.bf16.gmra.mrb[0].mxu0 %v110
  %v225 = vpop.f32.mrb[0].mxu0
  %v226 = vadd.f32 %v106, %v225
  %v227 = vpop.f32.mrb[0].mxu0
  %v228 = vpop.f32.mrb[0].mxu0
  %v229 = vadd.f32 %v106, %v228
  %v230 = vpop.f32.mrb[0].mxu0
  %231 = vmatprep.mubr.bf16.mxu0 0
  %232 = vmatmul.mubr.bf16.gmra.mrb[0].mxu0 %v113
  %v233 = vpop.f32.mrb[0].mxu0
  %v234 = vadd.f32 %v106, %v233
  %v235 = vpop.f32.mrb[0].mxu0
  %v236 = vpop.f32.mrb[0].mxu0
  %v237 = vadd.f32 %v106, %v236
  %v238 = vpop.f32.mrb[0].mxu0
  %239 = vmatprep.mubr.bf16.mxu0 0
  %240 = vmatmul.mubr.bf16.gmra.mrb[0].mxu0 %v116
  %v241 = vpop.f32.mrb[0].mxu0
  %v242 = vadd.f32 %v106, %v241
  %v243 = vpop.f32.mrb[0].mxu0
  %v244 = vpop.f32.mrb[0].mxu0
  %v245 = vadd.f32 %v106, %v244
  %v246 = vpop.f32.mrb[0].mxu0
  %247 = vmatprep.mubr.bf16.mxu0 0
  %248 = vmatmul.mubr.bf16.gmra.mrb[0].mxu0 %v119
  %v249 = vpop.f32.mrb[0].mxu0
  %v250 = vadd.f32 %v106, %v249
  %v251 = vpop.f32.mrb[0].mxu0
  %v252 = vpop.f32.mrb[0].mxu0
  %v253 = vadd.f32 %v106, %v252
  %v254 = vpop.f32.mrb[0].mxu0
  %255 = vmatprep.mubr.bf16.mxu0 0
  %256 = vmatmul.mubr.bf16.gmra.mrb[0].mxu0 %v122
  %v257 = vpop.f32.mrb[0].mxu0
  %v258 = vadd.f32 %v106, %v257
  %v259 = vpop.f32.mrb[0].mxu0
  %v260 = vpop.f32.mrb[0].mxu0
  %v261 = vadd.f32 %v106, %v260
  %v262 = vpop.f32.mrb[0].mxu0
  %263 = vmatprep.mubr.bf16.mxu0 0
  %264 = vmatmul.mubr.bf16.gmra.mrb[0].mxu0 %v125
  %v265 = vpop.f32.mrb[0].mxu0
  %v266 = vadd.f32 %v106, %v265
  %v267 = vpop.f32.mrb[0].mxu0
  %v268 = vpop.f32.mrb[0].mxu0
  %v269 = vadd.f32 %v106, %v268
  %v270 = vpop.f32.mrb[0].mxu0
  %271 = vmatprep.mubr.bf16.mxu0 0
  %272 = vmatmul.mubr.bf16.gmra.mrb[0].mxu0 %v128
  %v273 = vpop.f32.mrb[0].mxu0
  %v274 = vadd.f32 %v106, %v273
  %v275 = vpop.f32.mrb[0].mxu0
  %v276 = vpop.f32.mrb[0].mxu0
  %v277 = vadd.f32 %v106, %v276
  %v278 = vpop.f32.mrb[0].mxu0
  %279 = vmatprep.mubr.bf16.mxu0 0
  %280 = vmatmul.mubr.bf16.gmra.mrb[0].mxu0 %v131
  %v281 = vpop.f32.mrb[0].mxu0
  %v282 = vadd.f32 %v106, %v281
  %v283 = vpop.f32.mrb[0].mxu0
  %v284 = vpop.f32.mrb[0].mxu0
  %v285 = vadd.f32 %v106, %v284
  %v286 = vpop.f32.mrb[0].mxu0
  %287 = vmatprep.mubr.bf16.mxu0 0
  %288 = vmatmul.mubr.bf16.gmra.mrb[0].mxu0 %v134
  %v289 = vpop.f32.mrb[0].mxu0
  %v290 = vadd.f32 %v106, %v289
  %v291 = vpop.f32.mrb[0].mxu0
  %v292 = vpop.f32.mrb[0].mxu0
  %v293 = vadd.f32 %v106, %v292
  %v294 = vpop.f32.mrb[0].mxu0
  %295 = vmatprep.mubr.bf16.mxu0 0
  %296 = vmatmul.mubr.bf16.gmra.mrb[0].mxu0 %v137
  %v297 = vpop.f32.mrb[0].mxu0
  %v298 = vadd.f32 %v106, %v297
  %v299 = vpop.f32.mrb[0].mxu0
  %v300 = vpop.f32.mrb[0].mxu0
  %v301 = vadd.f32 %v106, %v300
  %v302 = vpop.f32.mrb[0].mxu0
  %303 = vmatprep.mubr.bf16.mxu0 0
  %304 = vmatmul.mubr.bf16.gmra.mrb[0].mxu0 %v140
  %v305 = vpop.f32.mrb[0].mxu0
  %v306 = vadd.f32 %v106, %v305
  %v307 = vpop.f32.mrb[0].mxu0
  %v308 = vpop.f32.mrb[0].mxu0
  %v309 = vadd.f32 %v106, %v308
  %v310 = vpop.f32.mrb[0].mxu0
  %311 = vmatprep.mubr.bf16.mxu0 0
  %312 = vmatmul.mubr.bf16.gmra.mrb[0].mxu0 %v143
  %v313 = vpop.f32.mrb[0].mxu0
  %v314 = vadd.f32 %v106, %v313
  %v315 = vpop.f32.mrb[0].mxu0
  %v316 = vpop.f32.mrb[0].mxu0
  %v317 = vadd.f32 %v106, %v316
  %v318 = vpop.f32.mrb[0].mxu0
  %319 = vmatprep.mubr.bf16.mxu0 0
  %320 = vmatmul.mubr.bf16.gmra.mrb[0].mxu0 %v146
  %v321 = vpop.f32.mrb[0].mxu0
  %v322 = vadd.f32 %v106, %v321
  %v323 = vpop.f32.mrb[0].mxu0
  %v324 = vpop.f32.mrb[0].mxu0
  %v325 = vadd.f32 %v106, %v324
  %v326 = vpop.f32.mrb[0].mxu0
  %327 = vmatprep.mubr.bf16.mxu0 0
  %328 = vmatmul.mubr.bf16.gmra.mrb[0].mxu0 %v149
  %v329 = vpop.f32.mrb[0].mxu0
  %v330 = vadd.f32 %v106, %v329
  %v331 = vpop.f32.mrb[0].mxu0
  %v332 = vpop.f32.mrb[0].mxu0
  %v333 = vadd.f32 %v106, %v332
  %v334 = vpop.f32.mrb[0].mxu0
  %335 = vmatprep.mubr.bf16.mxu0 0
  %336 = vmatmul.mubr.bf16.gmra.mrb[0].mxu0 %v152
  %v337 = vpop.f32.mrb[0].mxu0
  %v338 = vadd.f32 %v106, %v337
  %v339 = vpop.f32.mrb[0].mxu0
  %v340 = vpop.f32.mrb[0].mxu0
  %v341 = vadd.f32 %v106, %v340
  %v342 = vpop.f32.mrb[0].mxu0
  %343 = vmatprep.mubr.bf16.mxu0 0
  %344 = vmatmul.mubr.bf16.gmra.mrb[0].mxu0 %v155
  %v345 = vpop.f32.mrb[0].mxu0
  %v346 = vadd.f32 %v106, %v345
  %v347 = vpop.f32.mrb[0].mxu0
  %v348 = vpop.f32.mrb[0].mxu0
  %v349 = vadd.f32 %v106, %v348
  %v350 = vpop.f32.mrb[0].mxu0
  %351 = vmatprep.mubr.bf16.mxu0 0
  %352 = vmatmul.mubr.bf16.gmra.mrb[0].mxu0 %v158
  %v353 = vpop.f32.mrb[0].mxu0
  %v354 = vadd.f32 %v106, %v353
  %v355 = vpop.f32.mrb[0].mxu0
  %v356 = vpop.f32.mrb[0].mxu0
  %v357 = vadd.f32 %v106, %v356
  %v358 = vpop.f32.mrb[0].mxu0
  %359 = vmatprep.mubr.bf16.mxu0 0
  %360 = vmatmul.mubr.bf16.gmra.mrb[0].mxu0 %v161
  %v361 = vpop.f32.mrb[0].mxu0
  %v362 = vadd.f32 %v106, %v361
  %v363 = vpop.f32.mrb[0].mxu0
  %v364 = vpop.f32.mrb[0].mxu0
  %v365 = vadd.f32 %v106, %v364
  %v366 = vpop.f32.mrb[0].mxu0
  %367 = vmatprep.mubr.bf16.mxu0 0
  %368 = vmatmul.mubr.bf16.gmra.mrb[0].mxu0 %v164
  %v369 = vpop.f32.mrb[0].mxu0
  %v370 = vadd.f32 %v106, %v369
  %v371 = vpop.f32.mrb[0].mxu0
  %v372 = vpop.f32.mrb[0].mxu0
  %v373 = vadd.f32 %v106, %v372
  %v374 = vpop.f32.mrb[0].mxu0
  %375 = vmatprep.mubr.bf16.mxu0 0
  %376 = vmatmul.mubr.bf16.gmra.mrb[0].mxu0 %v167
  %v377 = vpop.f32.mrb[0].mxu0
  %v378 = vadd.f32 %v106, %v377
  %v379 = vpop.f32.mrb[0].mxu0
  %v380 = vpop.f32.mrb[0].mxu0
  %v381 = vadd.f32 %v106, %v380
  %v382 = vpop.f32.mrb[0].mxu0
  %383 = vmatprep.mubr.bf16.mxu0 0
  %384 = vmatmul.mubr.bf16.gmra.mrb[0].mxu0 %v170
  %v385 = vpop.f32.mrb[0].mxu0
  %v386 = vadd.f32 %v106, %v385
  %v387 = vpop.f32.mrb[0].mxu0
  %v388 = vpop.f32.mrb[0].mxu0
  %v389 = vadd.f32 %v106, %v388
  %v390 = vpop.f32.mrb[0].mxu0
  %391 = vmatprep.mubr.bf16.mxu0 0
  %392 = vmatmul.mubr.bf16.gmra.mrb[0].mxu0 %v173
  %v393 = vpop.f32.mrb[0].mxu0
  %v394 = vadd.f32 %v106, %v393
  %v395 = vpop.f32.mrb[0].mxu0
  %v396 = vpop.f32.mrb[0].mxu0
  %v397 = vadd.f32 %v106, %v396
  %v398 = vpop.f32.mrb[0].mxu0
  %399 = vmatprep.mubr.bf16.mxu0 0
  %400 = vmatmul.mubr.bf16.gmra.mrb[0].mxu0 %v176
  %v401 = vpop.f32.mrb[0].mxu0
  %v402 = vadd.f32 %v106, %v401
  %v403 = vpop.f32.mrb[0].mxu0
  %v404 = vpop.f32.mrb[0].mxu0
  %v405 = vadd.f32 %v106, %v404
  %v406 = vpop.f32.mrb[0].mxu0
  %407 = vmatprep.mubr.bf16.mxu0 0
  %408 = vmatmul.mubr.bf16.gmra.mrb[0].mxu0 %v179
  %v409 = vpop.f32.mrb[0].mxu0
  %v410 = vadd.f32 %v106, %v409
  %v411 = vpop.f32.mrb[0].mxu0
  %v412 = vpop.f32.mrb[0].mxu0
  %v413 = vadd.f32 %v106, %v412
  %v414 = vpop.f32.mrb[0].mxu0
  %415 = vmatprep.mubr.bf16.mxu0 0
  %416 = vmatmul.mubr.bf16.gmra.mrb[0].mxu0 %v182
  %v417 = vpop.f32.mrb[0].mxu0
  %v418 = vadd.f32 %v106, %v417
  %v419 = vpop.f32.mrb[0].mxu0
  %v420 = vpop.f32.mrb[0].mxu0
  %v421 = vpop.f32.mrb[0].mxu0
  %422 = vdwg.mxu0
  %vm423 = vcmask 130048
  %v424 = vsel %vm423, %v226, 0.0
  %v425 = vsel %vm423, %v229, 0.0
  %v426 = vadd.f32 %v424, %v425
  %v427 = vsel %vm423, %v234, 0.0
  %v428 = vadd.f32 %v426, %v427
  %v429 = vsel %vm423, %v237, 0.0
  %v430 = vadd.f32 %v428, %v429
  %v431 = vsel %vm423, %v242, 0.0
  %v432 = vadd.f32 %v430, %v431
  %v433 = vsel %vm423, %v245, 0.0
  %v434 = vadd.f32 %v432, %v433
  %v435 = vsel %vm423, %v250, 0.0
  %v436 = vadd.f32 %v434, %v435
  %v437 = vsel %vm423, %v253, 0.0
  %v438 = vadd.f32 %v436, %v437
  %v439 = vsel %vm423, %v258, 0.0
  %v440 = vadd.f32 %v438, %v439
  %v441 = vsel %vm423, %v261, 0.0
  %v442 = vadd.f32 %v440, %v441
  %v443 = vsel %vm423, %v266, 0.0
  %v444 = vadd.f32 %v442, %v443
  %v445 = vsel %vm423, %v269, 0.0
  %v446 = vadd.f32 %v444, %v445
  %v447 = vsel %vm423, %v274, 0.0
  %v448 = vadd.f32 %v446, %v447
  %v449 = vsel %vm423, %v277, 0.0
  %v450 = vadd.f32 %v448, %v449
  %v451 = vsel %vm423, %v282, 0.0
  %v452 = vadd.f32 %v450, %v451
  %v453 = vsel %vm423, %v285, 0.0
  %v454 = vadd.f32 %v452, %v453
  %v455 = vsel %vm423, %v290, 0.0
  %v456 = vadd.f32 %v454, %v455
  %v457 = vsel %vm423, %v293, 0.0
  %v458 = vadd.f32 %v456, %v457
  %v459 = vsel %vm423, %v298, 0.0
  %v460 = vadd.f32 %v458, %v459
  %v461 = vsel %vm423, %v301, 0.0
  %v462 = vadd.f32 %v460, %v461
  %v463 = vsel %vm423, %v306, 0.0
  %v464 = vadd.f32 %v462, %v463
  %v465 = vsel %vm423, %v309, 0.0
  %v466 = vadd.f32 %v464, %v465
  %v467 = vsel %vm423, %v314, 0.0
  %v468 = vadd.f32 %v466, %v467
  %v469 = vsel %vm423, %v317, 0.0
  %v470 = vadd.f32 %v468, %v469
  %v471 = vsel %vm423, %v322, 0.0
  %v472 = vadd.f32 %v470, %v471
  %v473 = vsel %vm423, %v325, 0.0
  %v474 = vadd.f32 %v472, %v473
  %v475 = vsel %vm423, %v330, 0.0
  %v476 = vadd.f32 %v474, %v475
  %v477 = vsel %vm423, %v333, 0.0
  %v478 = vadd.f32 %v476, %v477
  %v479 = vsel %vm423, %v338, 0.0
  %v480 = vadd.f32 %v478, %v479
  %v481 = vsel %vm423, %v341, 0.0
  %v482 = vadd.f32 %v480, %v481
  %v483 = vsel %vm423, %v346, 0.0
  %v484 = vadd.f32 %v482, %v483
  %v485 = vsel %vm423, %v349, 0.0
  %v486 = vadd.f32 %v484, %v485
  %v487 = vsel %vm423, %v354, 0.0
  %v488 = vadd.f32 %v486, %v487
  %v489 = vsel %vm423, %v357, 0.0
  %v490 = vadd.f32 %v488, %v489
  %v491 = vsel %vm423, %v362, 0.0
  %v492 = vadd.f32 %v490, %v491
  %v493 = vsel %vm423, %v365, 0.0
  %v494 = vadd.f32 %v492, %v493
  %v495 = vsel %vm423, %v370, 0.0
  %v496 = vadd.f32 %v494, %v495
  %v497 = vsel %vm423, %v373, 0.0
  %v498 = vadd.f32 %v496, %v497
  %v499 = vsel %vm423, %v378, 0.0
  %v500 = vadd.f32 %v498, %v499
  %v501 = vsel %vm423, %v381, 0.0
  %v502 = vadd.f32 %v500, %v501
  %v503 = vsel %vm423, %v386, 0.0
  %v504 = vadd.f32 %v502, %v503
  %v505 = vsel %vm423, %v389, 0.0
  %v506 = vadd.f32 %v504, %v505
  %v507 = vsel %vm423, %v394, 0.0
  %v508 = vadd.f32 %v506, %v507
  %v509 = vsel %vm423, %v397, 0.0
  %v510 = vadd.f32 %v508, %v509
  %v511 = vsel %vm423, %v402, 0.0
  %v512 = vadd.f32 %v510, %v511
  %v513 = vsel %vm423, %v405, 0.0
  %v514 = vadd.f32 %v512, %v513
  %v515 = vsel %vm423, %v410, 0.0
  %v516 = vadd.f32 %v514, %v515
  %v517 = vsel %vm423, %v413, 0.0
  %v518 = vadd.f32 %v516, %v517
  %v519 = vsel %vm423, %v418, 0.0
  %v520 = vadd.f32 %v518, %v519
  %v521 = vrot.slane %v520, 4
  %v522 = vadd.f32 %v520, %v521
  %v523 = vrot.slane %v522, 2
  %v524 = vadd.f32 %v522, %v523
  %v525 = vrot.slane %v524, 1
  %v526 = vadd.f32 %v524, %v525
  %v527 = vmul.f32 %v526, 0.0025510204
  %v528 = vsub.f32 %v226, %v527
  %v529 = vsub.f32 %v229, %v527
  %v530 = vsub.f32 %v234, %v527
  %v531 = vsub.f32 %v237, %v527
  %v532 = vsub.f32 %v242, %v527
  %v533 = vsub.f32 %v245, %v527
  %v534 = vsub.f32 %v250, %v527
  %v535 = vsub.f32 %v253, %v527
  %v536 = vsub.f32 %v258, %v527
  %v537 = vsub.f32 %v261, %v527
  %v538 = vsub.f32 %v266, %v527
  %v539 = vsub.f32 %v269, %v527
  %v540 = vsub.f32 %v274, %v527
  %v541 = vsub.f32 %v277, %v527
  %v542 = vsub.f32 %v282, %v527
  %v543 = vsub.f32 %v285, %v527
  %v544 = vsub.f32 %v290, %v527
  %v545 = vsub.f32 %v293, %v527
  %v546 = vsub.f32 %v298, %v527
  %v547 = vsub.f32 %v301, %v527
  %v548 = vsub.f32 %v306, %v527
  %v549 = vsub.f32 %v309, %v527
  %v550 = vsub.f32 %v314, %v527
  %v551 = vsub.f32 %v317, %v527
  %v552 = vsub.f32 %v322, %v527
  %v553 = vsub.f32 %v325, %v527
  %v554 = vsub.f32 %v330, %v527
  %v555 = vsub.f32 %v333, %v527
  %v556 = vsub.f32 %v338, %v527
  %v557 = vsub.f32 %v341, %v527
  %v558 = vsub.f32 %v346, %v527
  %v559 = vsub.f32 %v349, %v527
  %v560 = vsub.f32 %v354, %v527
  %v561 = vsub.f32 %v357, %v527
  %v562 = vsub.f32 %v362, %v527
  %v563 = vsub.f32 %v365, %v527
  %v564 = vsub.f32 %v370, %v527
  %v565 = vsub.f32 %v373, %v527
  %v566 = vsub.f32 %v378, %v527
  %v567 = vsub.f32 %v381, %v527
  %v568 = vsub.f32 %v386, %v527
  %v569 = vsub.f32 %v389, %v527
  %v570 = vsub.f32 %v394, %v527
  %v571 = vsub.f32 %v397, %v527
  %v572 = vsub.f32 %v402, %v527
  %v573 = vsub.f32 %v405, %v527
  %v574 = vsub.f32 %v410, %v527
  %v575 = vsub.f32 %v413, %v527
  %v576 = vsub.f32 %v418, %v527
  %v577 = vmul.f32 %v528, %v528
  %v578 = vmul.f32 %v529, %v529
  %v579 = vmul.f32 %v530, %v530
  %v580 = vmul.f32 %v531, %v531
  %v581 = vmul.f32 %v532, %v532
  %v582 = vmul.f32 %v533, %v533
  %v583 = vmul.f32 %v534, %v534
  %v584 = vmul.f32 %v535, %v535
  %v585 = vmul.f32 %v536, %v536
  %v586 = vmul.f32 %v537, %v537
  %v587 = vmul.f32 %v538, %v538
  %v588 = vmul.f32 %v539, %v539
  %v589 = vmul.f32 %v540, %v540
  %v590 = vmul.f32 %v541, %v541
  %v591 = vmul.f32 %v542, %v542
  %v592 = vmul.f32 %v543, %v543
  %v593 = vmul.f32 %v544, %v544
  %v594 = vmul.f32 %v545, %v545
  %v595 = vmul.f32 %v546, %v546
  %v596 = vmul.f32 %v547, %v547
  %v597 = vmul.f32 %v548, %v548
  %v598 = vmul.f32 %v549, %v549
  %v599 = vmul.f32 %v550, %v550
  %v600 = vmul.f32 %v551, %v551
  %v601 = vmul.f32 %v552, %v552
  %v602 = vmul.f32 %v553, %v553
  %v603 = vmul.f32 %v554, %v554
  %v604 = vmul.f32 %v555, %v555
  %v605 = vmul.f32 %v556, %v556
  %v606 = vmul.f32 %v557, %v557
  %v607 = vmul.f32 %v558, %v558
  %v608 = vmul.f32 %v559, %v559
  %v609 = vmul.f32 %v560, %v560
  %v610 = vmul.f32 %v561, %v561
  %v611 = vmul.f32 %v562, %v562
  %v612 = vmul.f32 %v563, %v563
  %v613 = vmul.f32 %v564, %v564
  %v614 = vmul.f32 %v565, %v565
  %v615 = vmul.f32 %v566, %v566
  %v616 = vmul.f32 %v567, %v567
  %v617 = vmul.f32 %v568, %v568
  %v618 = vmul.f32 %v569, %v569
  %v619 = vmul.f32 %v570, %v570
  %v620 = vmul.f32 %v571, %v571
  %v621 = vmul.f32 %v572, %v572
  %v622 = vmul.f32 %v573, %v573
  %v623 = vmul.f32 %v574, %v574
  %v624 = vmul.f32 %v575, %v575
  %v625 = vmul.f32 %v576, %v576
  %v626 = vsel %vm423, %v577, 0.0
  %v627 = vsel %vm423, %v578, 0.0
  %v628 = vadd.f32 %v626, %v627
  %v629 = vsel %vm423, %v579, 0.0
  %v630 = vadd.f32 %v628, %v629
  %v631 = vsel %vm423, %v580, 0.0
  %v632 = vadd.f32 %v630, %v631
  %v633 = vsel %vm423, %v581, 0.0
  %v634 = vadd.f32 %v632, %v633
  %v635 = vsel %vm423, %v582, 0.0
  %v636 = vadd.f32 %v634, %v635
  %v637 = vsel %vm423, %v583, 0.0
  %v638 = vadd.f32 %v636, %v637
  %v639 = vsel %vm423, %v584, 0.0
  %v640 = vadd.f32 %v638, %v639
  %v641 = vsel %vm423, %v585, 0.0
  %v642 = vadd.f32 %v640, %v641
  %v643 = vsel %vm423, %v586, 0.0
  %v644 = vadd.f32 %v642, %v643
  %v645 = vsel %vm423, %v587, 0.0
  %v646 = vadd.f32 %v644, %v645
  %v647 = vsel %vm423, %v588, 0.0
  %v648 = vadd.f32 %v646, %v647
  %v649 = vsel %vm423, %v589, 0.0
  %v650 = vadd.f32 %v648, %v649
  %v651 = vsel %vm423, %v590, 0.0
  %v652 = vadd.f32 %v650, %v651
  %v653 = vsel %vm423, %v591, 0.0
  %v654 = vadd.f32 %v652, %v653
  %v655 = vsel %vm423, %v592, 0.0
  %v656 = vadd.f32 %v654, %v655
  %v657 = vsel %vm423, %v593, 0.0
  %v658 = vadd.f32 %v656, %v657
  %v659 = vsel %vm423, %v594, 0.0
  %v660 = vadd.f32 %v658, %v659
  %v661 = vsel %vm423, %v595, 0.0
  %v662 = vadd.f32 %v660, %v661
  %v663 = vsel %vm423, %v596, 0.0
  %v664 = vadd.f32 %v662, %v663
  %v665 = vsel %vm423, %v597, 0.0
  %v666 = vadd.f32 %v664, %v665
  %v667 = vsel %vm423, %v598, 0.0
  %v668 = vadd.f32 %v666, %v667
  %v669 = vsel %vm423, %v599, 0.0
  %v670 = vadd.f32 %v668, %v669
  %v671 = vsel %vm423, %v600, 0.0
  %v672 = vadd.f32 %v670, %v671
  %v673 = vsel %vm423, %v601, 0.0
  %v674 = vadd.f32 %v672, %v673
  %v675 = vsel %vm423, %v602, 0.0
  %v676 = vadd.f32 %v674, %v675
  %v677 = vsel %vm423, %v603, 0.0
  %v678 = vadd.f32 %v676, %v677
  %v679 = vsel %vm423, %v604, 0.0
  %v680 = vadd.f32 %v678, %v679
  %v681 = vsel %vm423, %v605, 0.0
  %v682 = vadd.f32 %v680, %v681
  %v683 = vsel %vm423, %v606, 0.0
  %v684 = vadd.f32 %v682, %v683
  %v685 = vsel %vm423, %v607, 0.0
  %v686 = vadd.f32 %v684, %v685
  %v687 = vsel %vm423, %v608, 0.0
  %v688 = vadd.f32 %v686, %v687
  %v689 = vsel %vm423, %v609, 0.0
  %v690 = vadd.f32 %v688, %v689
  %v691 = vsel %vm423, %v610, 0.0
  %v692 = vadd.f32 %v690, %v691
  %v693 = vsel %vm423, %v611, 0.0
  %v694 = vadd.f32 %v692, %v693
  %v695 = vsel %vm423, %v612, 0.0
  %v696 = vadd.f32 %v694, %v695
  %v697 = vsel %vm423, %v613, 0.0
  %v698 = vadd.f32 %v696, %v697
  %v699 = vsel %vm423, %v614, 0.0
  %v700 = vadd.f32 %v698, %v699
  %v701 = vsel %vm423, %v615, 0.0
  %v702 = vadd.f32 %v700, %v701
  %v703 = vsel %vm423, %v616, 0.0
  %v704 = vadd.f32 %v702, %v703
  %v705 = vsel %vm423, %v617, 0.0
  %v706 = vadd.f32 %v704, %v705
  %v707 = vsel %vm423, %v618, 0.0
  %v708 = vadd.f32 %v706, %v707
  %v709 = vsel %vm423, %v619, 0.0
  %v710 = vadd.f32 %v708, %v709
  %v711 = vsel %vm423, %v620, 0.0
  %v712 = vadd.f32 %v710, %v711
  %v713 = vsel %vm423, %v621, 0.0
  %v714 = vadd.f32 %v712, %v713
  %v715 = vsel %vm423, %v622, 0.0
  %v716 = vadd.f32 %v714, %v715
  %v717 = vsel %vm423, %v623, 0.0
  %v718 = vadd.f32 %v716, %v717
  %v719 = vsel %vm423, %v624, 0.0
  %v720 = vadd.f32 %v718, %v719
  %v721 = vsel %vm423, %v625, 0.0
  %v722 = vadd.f32 %v720, %v721
  %v723 = vrot.slane %v722, 4
  %v724 = vadd.f32 %v722, %v723
  %v725 = vrot.slane %v724, 2
  %v726 = vadd.f32 %v724, %v725
  %v727 = vrot.slane %v726, 1
  %v728 = vadd.f32 %v726, %v727
  %v729 = vmul.f32 %v728, 0.0025510204
  %v730 = vadd.f32 %v729, 1e-05
  %v731 = vrsqrt.pop %v730
  %v732 = vmul.f32 %v528, %v731
  %v733 = vmul.f32 %v529, %v731
  %v734 = vmul.f32 %v530, %v731
  %v735 = vmul.f32 %v531, %v731
  %v736 = vmul.f32 %v532, %v731
  %v737 = vmul.f32 %v533, %v731
  %v738 = vmul.f32 %v534, %v731
  %v739 = vmul.f32 %v535, %v731
  %v740 = vmul.f32 %v536, %v731
  %v741 = vmul.f32 %v537, %v731
  %v742 = vmul.f32 %v538, %v731
  %v743 = vmul.f32 %v539, %v731
  %v744 = vmul.f32 %v540, %v731
  %v745 = vmul.f32 %v541, %v731
  %v746 = vmul.f32 %v542, %v731
  %v747 = vmul.f32 %v543, %v731
  %v748 = vmul.f32 %v544, %v731
  %v749 = vmul.f32 %v545, %v731
  %v750 = vmul.f32 %v546, %v731
  %v751 = vmul.f32 %v547, %v731
  %v752 = vmul.f32 %v548, %v731
  %v753 = vmul.f32 %v549, %v731
  %v754 = vmul.f32 %v550, %v731
  %v755 = vmul.f32 %v551, %v731
  %v756 = vmul.f32 %v552, %v731
  %v757 = vmul.f32 %v553, %v731
  %v758 = vmul.f32 %v554, %v731
  %v759 = vmul.f32 %v555, %v731
  %v760 = vmul.f32 %v556, %v731
  %v761 = vmul.f32 %v557, %v731
  %v762 = vmul.f32 %v558, %v731
  %v763 = vmul.f32 %v559, %v731
  %v764 = vmul.f32 %v560, %v731
  %v765 = vmul.f32 %v561, %v731
  %v766 = vmul.f32 %v562, %v731
  %v767 = vmul.f32 %v563, %v731
  %v768 = vmul.f32 %v564, %v731
  %v769 = vmul.f32 %v565, %v731
  %v770 = vmul.f32 %v566, %v731
  %v771 = vmul.f32 %v567, %v731
  %v772 = vmul.f32 %v568, %v731
  %v773 = vmul.f32 %v569, %v731
  %v774 = vmul.f32 %v570, %v731
  %v775 = vmul.f32 %v571, %v731
  %v776 = vmul.f32 %v572, %v731
  %v777 = vmul.f32 %v573, %v731
  %v778 = vmul.f32 %v574, %v731
  %v779 = vmul.f32 %v575, %v731
  %v780 = vmul.f32 %v576, %v731
  %v781 = vld [vmem:[%s3] sm:$0x1]
  %v783 = vlaneseq
  %v784 = vshrl.u32 %v783, 7
  %v785 = vsub.s32 0, %v784
  %v786 = vrot.slane %v781, %v785
  %v788 = vmul.f32 %v732, %v786
  %v789 = vmul.f32 %v733, %v786
  %v790 = vmul.f32 %v734, %v786
  %v791 = vmul.f32 %v735, %v786
  %v792 = vmul.f32 %v736, %v786
  %v793 = vmul.f32 %v737, %v786
  %v794 = vmul.f32 %v738, %v786
  %v795 = vmul.f32 %v739, %v786
  %v796 = vmul.f32 %v740, %v786
  %v797 = vmul.f32 %v741, %v786
  %v798 = vmul.f32 %v742, %v786
  %v799 = vmul.f32 %v743, %v786
  %v800 = vmul.f32 %v744, %v786
  %v801 = vmul.f32 %v745, %v786
  %v802 = vmul.f32 %v746, %v786
  %v803 = vmul.f32 %v747, %v786
  %v804 = vmul.f32 %v748, %v786
  %v805 = vmul.f32 %v749, %v786
  %v806 = vmul.f32 %v750, %v786
  %v807 = vmul.f32 %v751, %v786
  %v808 = vmul.f32 %v752, %v786
  %v809 = vmul.f32 %v753, %v786
  %v810 = vmul.f32 %v754, %v786
  %v811 = vmul.f32 %v755, %v786
  %v812 = vmul.f32 %v756, %v786
  %v813 = vmul.f32 %v757, %v786
  %v814 = vmul.f32 %v758, %v786
  %v815 = vmul.f32 %v759, %v786
  %v816 = vmul.f32 %v760, %v786
  %v817 = vmul.f32 %v761, %v786
  %v818 = vmul.f32 %v762, %v786
  %v819 = vmul.f32 %v763, %v786
  %v820 = vmul.f32 %v764, %v786
  %v821 = vmul.f32 %v765, %v786
  %v822 = vmul.f32 %v766, %v786
  %v823 = vmul.f32 %v767, %v786
  %v824 = vmul.f32 %v768, %v786
  %v825 = vmul.f32 %v769, %v786
  %v826 = vmul.f32 %v770, %v786
  %v827 = vmul.f32 %v771, %v786
  %v828 = vmul.f32 %v772, %v786
  %v829 = vmul.f32 %v773, %v786
  %v830 = vmul.f32 %v774, %v786
  %v831 = vmul.f32 %v775, %v786
  %v832 = vmul.f32 %v776, %v786
  %v833 = vmul.f32 %v777, %v786
  %v834 = vmul.f32 %v778, %v786
  %v835 = vmul.f32 %v779, %v786
  %v836 = vmul.f32 %v780, %v786
  %v837 = vld [vmem:[%s4] sm:$0x1]
  %v839 = vlaneseq
  %v840 = vshrl.u32 %v839, 7
  %v841 = vsub.s32 0, %v840
  %v842 = vrot.slane %v837, %v841
  %v844 = vadd.f32 %v788, %v842
  %v845 = vadd.f32 %v789, %v842
  %v846 = vadd.f32 %v790, %v842
  %v847 = vadd.f32 %v791, %v842
  %v848 = vadd.f32 %v792, %v842
  %v849 = vadd.f32 %v793, %v842
  %v850 = vadd.f32 %v794, %v842
  %v851 = vadd.f32 %v795, %v842
  %v852 = vadd.f32 %v796, %v842
  %v853 = vadd.f32 %v797, %v842
  %v854 = vadd.f32 %v798, %v842
  %v855 = vadd.f32 %v799, %v842
  %v856 = vadd.f32 %v800, %v842
  %v857 = vadd.f32 %v801, %v842
  %v858 = vadd.f32 %v802, %v842
  %v859 = vadd.f32 %v803, %v842
  %v860 = vadd.f32 %v804, %v842
  %v861 = vadd.f32 %v805, %v842
  %v862 = vadd.f32 %v806, %v842
  %v863 = vadd.f32 %v807, %v842
  %v864 = vadd.f32 %v808, %v842
  %v865 = vadd.f32 %v809, %v842
  %v866 = vadd.f32 %v810, %v842
  %v867 = vadd.f32 %v811, %v842
  %v868 = vadd.f32 %v812, %v842
  %v869 = vadd.f32 %v813, %v842
  %v870 = vadd.f32 %v814, %v842
  %v871 = vadd.f32 %v815, %v842
  %v872 = vadd.f32 %v816, %v842
  %v873 = vadd.f32 %v817, %v842
  %v874 = vadd.f32 %v818, %v842
  %v875 = vadd.f32 %v819, %v842
  %v876 = vadd.f32 %v820, %v842
  %v877 = vadd.f32 %v821, %v842
  %v878 = vadd.f32 %v822, %v842
  %v879 = vadd.f32 %v823, %v842
  %v880 = vadd.f32 %v824, %v842
  %v881 = vadd.f32 %v825, %v842
  %v882 = vadd.f32 %v826, %v842
  %v883 = vadd.f32 %v827, %v842
  %v884 = vadd.f32 %v828, %v842
  %v885 = vadd.f32 %v829, %v842
  %v886 = vadd.f32 %v830, %v842
  %v887 = vadd.f32 %v831, %v842
  %v888 = vadd.f32 %v832, %v842
  %v889 = vadd.f32 %v833, %v842
  %v890 = vadd.f32 %v834, %v842
  %v891 = vadd.f32 %v835, %v842
  %v892 = vadd.f32 %v836, %v842
  %v893 = vmax.f32 %v844, 0.0
  %v894 = vmax.f32 %v845, 0.0
  %v895 = vmax.f32 %v846, 0.0
  %v896 = vmax.f32 %v847, 0.0
  %v897 = vmax.f32 %v848, 0.0
  %v898 = vmax.f32 %v849, 0.0
  %v899 = vmax.f32 %v850, 0.0
  %v900 = vmax.f32 %v851, 0.0
  %v901 = vmax.f32 %v852, 0.0
  %v902 = vmax.f32 %v853, 0.0
  %v903 = vmax.f32 %v854, 0.0
  %v904 = vmax.f32 %v855, 0.0
  %v905 = vmax.f32 %v856, 0.0
  %v906 = vmax.f32 %v857, 0.0
  %v907 = vmax.f32 %v858, 0.0
  %v908 = vmax.f32 %v859, 0.0
  %v909 = vmax.f32 %v860, 0.0
  %v910 = vmax.f32 %v861, 0.0
  %v911 = vmax.f32 %v862, 0.0
  %v912 = vmax.f32 %v863, 0.0
  %v913 = vmax.f32 %v864, 0.0
  %v914 = vmax.f32 %v865, 0.0
  %v915 = vmax.f32 %v866, 0.0
  %v916 = vmax.f32 %v867, 0.0
  %v917 = vmax.f32 %v868, 0.0
  %v918 = vmax.f32 %v869, 0.0
  %v919 = vmax.f32 %v870, 0.0
  %v920 = vmax.f32 %v871, 0.0
  %v921 = vmax.f32 %v872, 0.0
  %v922 = vmax.f32 %v873, 0.0
  %v923 = vmax.f32 %v874, 0.0
  %v924 = vmax.f32 %v875, 0.0
  %v925 = vmax.f32 %v876, 0.0
  %v926 = vmax.f32 %v877, 0.0
  %v927 = vmax.f32 %v878, 0.0
  %v928 = vmax.f32 %v879, 0.0
  %v929 = vmax.f32 %v880, 0.0
  %v930 = vmax.f32 %v881, 0.0
  %v931 = vmax.f32 %v882, 0.0
  %v932 = vmax.f32 %v883, 0.0
  %v933 = vmax.f32 %v884, 0.0
  %v934 = vmax.f32 %v885, 0.0
  %v935 = vmax.f32 %v886, 0.0
  %v936 = vmax.f32 %v887, 0.0
  %v937 = vmax.f32 %v888, 0.0
  %v938 = vmax.f32 %v889, 0.0
  %v939 = vmax.f32 %v890, 0.0
  %v940 = vmax.f32 %v891, 0.0
  %v941 = vmax.f32 %v892, 0.0
  %942 = vst.msk [vmem:[%s5] sm:$0xff] %vm423, %v893
  %943 = vst.msk [vmem:[%s5 + $0x8] sm:$0xff] %vm423, %v894
  %944 = vst.msk [vmem:[%s5 + $0x10] sm:$0xff] %vm423, %v895
  %945 = vst.msk [vmem:[%s5 + $0x18] sm:$0xff] %vm423, %v896
  %946 = vst.msk [vmem:[%s5 + $0x20] sm:$0xff] %vm423, %v897
  %947 = vst.msk [vmem:[%s5 + $0x28] sm:$0xff] %vm423, %v898
  %948 = vst.msk [vmem:[%s5 + $0x30] sm:$0xff] %vm423, %v899
  %949 = vst.msk [vmem:[%s5 + $0x38] sm:$0xff] %vm423, %v900
  %950 = vst.msk [vmem:[%s5 + $0x40] sm:$0xff] %vm423, %v901
  %951 = vst.msk [vmem:[%s5 + $0x48] sm:$0xff] %vm423, %v902
  %952 = vst.msk [vmem:[%s5 + $0x50] sm:$0xff] %vm423, %v903
  %953 = vst.msk [vmem:[%s5 + $0x58] sm:$0xff] %vm423, %v904
  %954 = vst.msk [vmem:[%s5 + $0x60] sm:$0xff] %vm423, %v905
  %955 = vst.msk [vmem:[%s5 + $0x68] sm:$0xff] %vm423, %v906
  %956 = vst.msk [vmem:[%s5 + $0x70] sm:$0xff] %vm423, %v907
  %957 = vst.msk [vmem:[%s5 + $0x78] sm:$0xff] %vm423, %v908
  %958 = vst.msk [vmem:[%s5 + $0x80] sm:$0xff] %vm423, %v909
  %959 = vst.msk [vmem:[%s5 + $0x88] sm:$0xff] %vm423, %v910
  %960 = vst.msk [vmem:[%s5 + $0x90] sm:$0xff] %vm423, %v911
  %961 = vst.msk [vmem:[%s5 + $0x98] sm:$0xff] %vm423, %v912
  %962 = vst.msk [vmem:[%s5 + $0xa0] sm:$0xff] %vm423, %v913
  %963 = vst.msk [vmem:[%s5 + $0xa8] sm:$0xff] %vm423, %v914
  %964 = vst.msk [vmem:[%s5 + $0xb0] sm:$0xff] %vm423, %v915
  %965 = vst.msk [vmem:[%s5 + $0xb8] sm:$0xff] %vm423, %v916
  %966 = vst.msk [vmem:[%s5 + $0xc0] sm:$0xff] %vm423, %v917
  %967 = vst.msk [vmem:[%s5 + $0xc8] sm:$0xff] %vm423, %v918
  %968 = vst.msk [vmem:[%s5 + $0xd0] sm:$0xff] %vm423, %v919
  %969 = vst.msk [vmem:[%s5 + $0xd8] sm:$0xff] %vm423, %v920
  %970 = vst.msk [vmem:[%s5 + $0xe0] sm:$0xff] %vm423, %v921
  %971 = vst.msk [vmem:[%s5 + $0xe8] sm:$0xff] %vm423, %v922
  %972 = vst.msk [vmem:[%s5 + $0xf0] sm:$0xff] %vm423, %v923
  %973 = vst.msk [vmem:[%s5 + $0xf8] sm:$0xff] %vm423, %v924
  %974 = vst.msk [vmem:[%s5 + $0x100] sm:$0xff] %vm423, %v925
  %975 = vst.msk [vmem:[%s5 + $0x108] sm:$0xff] %vm423, %v926
  %976 = vst.msk [vmem:[%s5 + $0x110] sm:$0xff] %vm423, %v927
  %977 = vst.msk [vmem:[%s5 + $0x118] sm:$0xff] %vm423, %v928
  %978 = vst.msk [vmem:[%s5 + $0x120] sm:$0xff] %vm423, %v929
  %979 = vst.msk [vmem:[%s5 + $0x128] sm:$0xff] %vm423, %v930
  %980 = vst.msk [vmem:[%s5 + $0x130] sm:$0xff] %vm423, %v931
  %981 = vst.msk [vmem:[%s5 + $0x138] sm:$0xff] %vm423, %v932
  %982 = vst.msk [vmem:[%s5 + $0x140] sm:$0xff] %vm423, %v933
  %983 = vst.msk [vmem:[%s5 + $0x148] sm:$0xff] %vm423, %v934
  %984 = vst.msk [vmem:[%s5 + $0x150] sm:$0xff] %vm423, %v935
  %985 = vst.msk [vmem:[%s5 + $0x158] sm:$0xff] %vm423, %v936
  %986 = vst.msk [vmem:[%s5 + $0x160] sm:$0xff] %vm423, %v937
  %987 = vst.msk [vmem:[%s5 + $0x168] sm:$0xff] %vm423, %v938
  %988 = vst.msk [vmem:[%s5 + $0x170] sm:$0xff] %vm423, %v939
  %989 = vst.msk [vmem:[%s5 + $0x178] sm:$0xff] %vm423, %v940
  %990 = vst.msk [vmem:[%s5 + $0x180] sm:$0xff] %vm423, %v941
  // Predicated region
  $region22: #{vae_forward.9} parent=0 // pred_check
    _
  $region23: #{vae_forward.9} parent=0 // pred_check_branch
    %992 = sbr.rel (0) target = $region25
  $region24: #{vae_forward.9} parent=0 // pred_region
    _
  $region25: #{vae_forward.9} parent=0 // pred_fallthru
    _
  // Predicated region
  $region26: #{vae_forward.9} parent=0 // pred_check
    _
  $region27: #{vae_forward.9} parent=0 // pred_check_branch
    %994 = sbr.rel (0) target = $region29
  $region28: #{vae_forward.9} parent=0 // pred_region
    _
  $region29: #{vae_forward.9} parent=0 // pred_fallthru
    _

// kernel: vae_forward.10
$region0: #{vae_forward.10}
  #allocation0 [shape = 'u32[]', space=smem, size = 0x4, offset = 0x4, fixed_abs, tag = 'smem constant byte address 0x4 - core index']
  #allocation1 [shape = 'u32[144,128]{1,0:T(1,128)}', space=vmem, size = 0x12000, scoped, tag = 'internal scratch']
  %s0 = inlined_call_operand.vmem [shape: f32[98,144], index: 0, kind: input, shape index: {}]
  %s1 = inlined_call_operand.vmem [shape: f32[144,32], index: 1, kind: input, shape index: {}]
  %s2 = inlined_call_operand.vmem [shape: f32[1,32], index: 2, kind: input, shape index: {}]
  %s3 = inlined_call_operand.vmem [shape: f32[1,32], index: 3, kind: input, shape index: {}]
  %s4 = inlined_call_operand.vmem [shape: f32[1,32], index: 4, kind: input, shape index: {}]
  %s5 = inlined_call_operand.vmem [shape: f32[98,32], index: 5, kind: output, shape index: {}]
  %s6 = sld [smem:[#allocation0]]
  $region30: #{vae_forward.10} parent=0
    _
  %s8 = ssub.s32 1, %s6
  %s9 = scalar_select 0, %s8, %s6
  // Predicated region
  $region2: #{vae_forward.10} parent=0 // pred_check
    _
  $region3: #{vae_forward.10} parent=0 // pred_check_branch
    %11 = sbr.rel (0) target = $region5
  $region4: #{vae_forward.10} parent=0 // pred_region
    _
  $region5: #{vae_forward.10} parent=0 // pred_fallthru
    _
  // Predicated region
  $region6: #{vae_forward.10} parent=0 // pred_check
    _
  $region7: #{vae_forward.10} parent=0 // pred_check_branch
    %13 = sbr.rel (0) target = $region9
  $region8: #{vae_forward.10} parent=0 // pred_region
    _
  $region9: #{vae_forward.10} parent=0 // pred_fallthru
    _
  // Predicated region
  $region10: #{vae_forward.10} parent=0 // pred_check
    _
  $region11: #{vae_forward.10} parent=0 // pred_check_branch
    %15 = sbr.rel (0) target = $region13
  $region12: #{vae_forward.10} parent=0 // pred_region
    _
  $region13: #{vae_forward.10} parent=0 // pred_fallthru
    _
  // Predicated region
  $region14: #{vae_forward.10} parent=0 // pred_check
    _
  $region15: #{vae_forward.10} parent=0 // pred_check_branch
    %17 = sbr.rel (0) target = $region17
  $region16: #{vae_forward.10} parent=0 // pred_region
    _
  $region17: #{vae_forward.10} parent=0 // pred_fallthru
    _
  // Predicated region
  $region18: #{vae_forward.10} parent=0 // pred_check
    _
  $region19: #{vae_forward.10} parent=0 // pred_check_branch
    %19 = sbr.rel (0) target = $region21
  $region20: #{vae_forward.10} parent=0 // pred_region
    _
  $region21: #{vae_forward.10} parent=0 // pred_fallthru
    _
  %v21 = vld [vmem:[%s0] sm:$0xff]
  %v22 = vld [vmem:[%s0 + $0x8] sm:$0xff]
  %v23 = vld [vmem:[%s0 + $0x10] sm:$0xff]
  %v24 = vld [vmem:[%s0 + $0x18] sm:$0xff]
  %v25 = vld [vmem:[%s0 + $0x20] sm:$0xff]
  %v26 = vld [vmem:[%s0 + $0x28] sm:$0xff]
  %v27 = vld [vmem:[%s0 + $0x30] sm:$0xff]
  %v28 = vld [vmem:[%s0 + $0x38] sm:$0xff]
  %v29 = vld [vmem:[%s0 + $0x40] sm:$0xff]
  %v30 = vld [vmem:[%s0 + $0x48] sm:$0xff]
  %v31 = vld [vmem:[%s0 + $0x50] sm:$0xff]
  %v32 = vld [vmem:[%s0 + $0x58] sm:$0xff]
  %v33 = vld [vmem:[%s0 + $0x60] sm:$0xff]
  %v34 = vld [vmem:[%s0 + $0x68] sm:$0xff]
  %v35 = vld [vmem:[%s0 + $0x70] sm:$0xff]
  %v36 = vld [vmem:[%s0 + $0x78] sm:$0xff]
  %v37 = vld [vmem:[%s0 + $0x80] sm:$0xff]
  %v38 = vld [vmem:[%s0 + $0x88] sm:$0xff]
  %v39 = vld [vmem:[%s0 + $0x90] sm:$0xff]
  %v40 = vld [vmem:[%s0 + $0x98] sm:$0xff]
  %v41 = vld [vmem:[%s0 + $0xa0] sm:$0xff]
  %v42 = vld [vmem:[%s0 + $0xa8] sm:$0xff]
  %v43 = vld [vmem:[%s0 + $0xb0] sm:$0xff]
  %v44 = vld [vmem:[%s0 + $0xb8] sm:$0xff]
  %v45 = vld [vmem:[%s0 + $0xc0] sm:$0x3]
  %v46 = vld [vmem:[%s0 + $0xc8] sm:$0x3]
  %v47 = vpack.c.bf16 %v23, %v21
  %v48 = vpack.c.bf16 %v24, %v22
  %v49 = vpack.c.bf16 %v27, %v25
  %v50 = vpack.c.bf16 %v28, %v26
  %v51 = vpack.c.bf16 %v31, %v29
  %v52 = vpack.c.bf16 %v32, %v30
  %v53 = vpack.c.bf16 %v35, %v33
  %v54 = vpack.c.bf16 %v36, %v34
  %v55 = vpack.c.bf16 %v39, %v37
  %v56 = vpack.c.bf16 %v40, %v38
  %v57 = vpack.c.bf16 %v43, %v41
  %v58 = vpack.c.bf16 %v44, %v42
  %v59 = vpack.c.bf16 %v45, %v45
  %v60 = vpack.c.bf16 %v46, %v46
  %v61 = vld [vmem:[%s1] sm:$0xff]
  %v62 = vld [vmem:[%s1 + $0x8] sm:$0xff]
  %v63 = vld [vmem:[%s1 + $0x10] sm:$0xff]
  %v64 = vld [vmem:[%s1 + $0x18] sm:$0xff]
  %v65 = vld [vmem:[%s1 + $0x20] sm:$0xff]
  %v66 = vld [vmem:[%s1 + $0x28] sm:$0xff]
  %v67 = vld [vmem:[%s1 + $0x30] sm:$0xff]
  %v68 = vld [vmem:[%s1 + $0x38] sm:$0xff]
  %v69 = vld [vmem:[%s1 + $0x40] sm:$0xff]
  %v70 = vld [vmem:[%s1 + $0x48] sm:$0xff]
  %v71 = vld [vmem:[%s1 + $0x50] sm:$0xff]
  %v72 = vld [vmem:[%s1 + $0x58] sm:$0xff]
  %v73 = vld [vmem:[%s1 + $0x60] sm:$0xff]
  %v74 = vld [vmem:[%s1 + $0x68] sm:$0xff]
  %v75 = vld [vmem:[%s1 + $0x70] sm:$0xff]
  %v76 = vld [vmem:[%s1 + $0x78] sm:$0xff]
  %v77 = vld [vmem:[%s1 + $0x80] sm:$0xff]
  %v78 = vld [vmem:[%s1 + $0x88] sm:$0xff]
  %v79 = vpack.c.bf16 %v62, %v61
  %v80 = vpack.c.bf16 %v64, %v63
  %v81 = vpack.c.bf16 %v66, %v65
  %v82 = vpack.c.bf16 %v68, %v67
  %v83 = vpack.c.bf16 %v70, %v69
  %v84 = vpack.c.bf16 %v72, %v71
  %v85 = vpack.c.bf16 %v74, %v73
  %v86 = vpack.c.bf16 %v76, %v75
  %v87 = vpack.c.bf16 %v78, %v77
  %v88 = vld [vmem:[%s2] sm:$0x1]
  %v90 = vlaneseq
  %v91 = vshrl.u32 %v90, 7
  %v92 = vsub.s32 0, %v91
  %v93 = vrot.slane %v88, %v92
  %vm95 = vcmask 130048
  %v97 = vsel %vm95, %v48, 0
  %v100 = vsel %vm95, %v50, 0
  %v103 = vsel %vm95, %v52, 0
  %v106 = vsel %vm95, %v54, 0
  %v109 = vsel %vm95, %v56, 0
  %v112 = vsel %vm95, %v58, 0
  %v115 = vsel %vm95, %v60, 0
  %117 = vmatprep.subr.bf16.mxu0 0
  %118 = vmatpush1.bf16.msra.mxu0 %v79
  %119 = vmatprep.subr.bf16.mxu0 0
  %120 = vmatpush1.bf16.msra.mxu0 %v80
  %121 = vmatprep.subr.bf16.mxu0 0
  %122 = vmatpush1.bf16.msra.mxu0 %v81
  %123 = vmatprep.subr.bf16.mxu0 0
  %124 = vmatpush1.bf16.msra.mxu0 %v82
  %125 = vmatprep.subr.bf16.mxu0 0
  %126 = vmatpush1.bf16.msra.mxu0 %v83
  %127 = vmatprep.subr.bf16.mxu0 0
  %128 = vmatpush1.bf16.msra.mxu0 %v84
  %129 = vmatprep.subr.bf16.mxu0 0
  %130 = vmatpush1.bf16.msra.mxu0 %v85
  %131 = vmatprep.subr.bf16.mxu0 0
  %132 = vmatpush1.bf16.msra.mxu0 %v86
  %133 = vmatprep.subr.bf16.mxu0 0
  %134 = vmatpush1.bf16.msra.mxu0 %v87
  %135 = vmatprep.subr.bf16.mxu0 0
  %136 = vmatpush1.bf16.msra.mxu0 0
  %137 = vmatprep.subr.bf16.mxu0 0
  %138 = vmatpush1.bf16.msra.mxu0 0
  %139 = vmatprep.subr.bf16.mxu0 0
  %140 = vmatpush1.bf16.msra.mxu0 0
  %141 = vmatprep.subr.bf16.mxu0 0
  %142 = vmatpush1.bf16.msra.mxu0 0
  %143 = vmatprep.subr.bf16.mxu0 0
  %144 = vmatpush1.bf16.msra.mxu0 0
  %145 = vmatprep.subr.bf16.mxu0 0
  %146 = vmatpush1.bf16.msra.mxu0 0
  %147 = vmatprep.subr.bf16.mxu0 0
  %148 = vmatpush1.bf16.msra.mxu0 0
  %149 = vmatprep.mubr.bf16.mxu0 %v97
  %150 = vmatmul.mubr.bf16.gmra.mrb[0].mxu0 %v47
  %v151 = vpop.f32.mrb[0].mxu0
  %v152 = vadd.f32 %v93, %v151
  %v153 = vpop.f32.mrb[0].mxu0
  %v154 = vpop.f32.mrb[0].mxu0
  %v155 = vadd.f32 %v93, %v154
  %v156 = vpop.f32.mrb[0].mxu0
  %157 = vmatprep.mubr.bf16.mxu0 %v100
  %158 = vmatmul.mubr.bf16.gmra.mrb[0].mxu0 %v49
  %v159 = vpop.f32.mrb[0].mxu0
  %v160 = vadd.f32 %v93, %v159
  %v161 = vpop.f32.mrb[0].mxu0
  %v162 = vpop.f32.mrb[0].mxu0
  %v163 = vadd.f32 %v93, %v162
  %v164 = vpop.f32.mrb[0].mxu0
  %165 = vmatprep.mubr.bf16.mxu0 %v103
  %166 = vmatmul.mubr.bf16.gmra.mrb[0].mxu0 %v51
  %v167 = vpop.f32.mrb[0].mxu0
  %v168 = vadd.f32 %v93, %v167
  %v169 = vpop.f32.mrb[0].mxu0
  %v170 = vpop.f32.mrb[0].mxu0
  %v171 = vadd.f32 %v93, %v170
  %v172 = vpop.f32.mrb[0].mxu0
  %173 = vmatprep.mubr.bf16.mxu0 %v106
  %174 = vmatmul.mubr.bf16.gmra.mrb[0].mxu0 %v53
  %v175 = vpop.f32.mrb[0].mxu0
  %v176 = vadd.f32 %v93, %v175
  %v177 = vpop.f32.mrb[0].mxu0
  %v178 = vpop.f32.mrb[0].mxu0
  %v179 = vadd.f32 %v93, %v178
  %v180 = vpop.f32.mrb[0].mxu0
  %181 = vmatprep.mubr.bf16.mxu0 %v109
  %182 = vmatmul.mubr.bf16.gmra.mrb[0].mxu0 %v55
  %v183 = vpop.f32.mrb[0].mxu0
  %v184 = vadd.f32 %v93, %v183
  %v185 = vpop.f32.mrb[0].mxu0
  %v186 = vpop.f32.mrb[0].mxu0
  %v187 = vadd.f32 %v93, %v186
  %v188 = vpop.f32.mrb[0].mxu0
  %189 = vmatprep.mubr.bf16.mxu0 %v112
  %190 = vmatmul.mubr.bf16.gmra.mrb[0].mxu0 %v57
  %v191 = vpop.f32.mrb[0].mxu0
  %v192 = vadd.f32 %v93, %v191
  %v193 = vpop.f32.mrb[0].mxu0
  %v194 = vpop.f32.mrb[0].mxu0
  %v195 = vadd.f32 %v93, %v194
  %v196 = vpop.f32.mrb[0].mxu0
  %197 = vmatprep.mubr.bf16.mxu0 %v115
  %198 = vmatmul.mubr.bf16.gmra.mrb[0].mxu0 %v59
  %v199 = vpop.f32.mrb[0].mxu0
  %v200 = vadd.f32 %v93, %v199
  %v201 = vpop.f32.mrb[0].mxu0
  %v202 = vpop.f32.mrb[0].mxu0
  %v203 = vpop.f32.mrb[0].mxu0
  %204 = vdwg.mxu0
  %vm205 = vcmask 261120
  %v206 = vsel %vm205, %v152, 0.0
  %v207 = vsel %vm205, %v155, 0.0
  %v208 = vadd.f32 %v206, %v207
  %v209 = vsel %vm205, %v160, 0.0
  %v210 = vadd.f32 %v208, %v209
  %v211 = vsel %vm205, %v163, 0.0
  %v212 = vadd.f32 %v210, %v211
  %v213 = vsel %vm205, %v168, 0.0
  %v214 = vadd.f32 %v212, %v213
  %v215 = vsel %vm205, %v171, 0.0
  %v216 = vadd.f32 %v214, %v215
  %v217 = vsel %vm205, %v176, 0.0
  %v218 = vadd.f32 %v216, %v217
  %v219 = vsel %vm205, %v179, 0.0
  %v220 = vadd.f32 %v218, %v219
  %v221 = vsel %vm205, %v184, 0.0
  %v222 = vadd.f32 %v220, %v221
  %v223 = vsel %vm205, %v187, 0.0
  %v224 = vadd.f32 %v222, %v223
  %v225 = vsel %vm205, %v192, 0.0
  %v226 = vadd.f32 %v224, %v225
  %v227 = vsel %vm205, %v195, 0.0
  %v228 = vadd.f32 %v226, %v227
  %vm229 = vcmask 254976
  %v230 = vsel %vm229, %v200, 0.0
  %v231 = vadd.f32 %v228, %v230
  %v232 = vrot.slane %v231, 4
  %v233 = vadd.f32 %v231, %v232
  %v234 = vrot.slane %v233, 2
  %v235 = vadd.f32 %v233, %v234
  %v236 = vrot.slane %v235, 1
  %v237 = vadd.f32 %v235, %v236
  %v238 = vmul.f32 %v237, 0.010204081
  %v239 = vsub.f32 %v152, %v238
  %v240 = vsub.f32 %v155, %v238
  %v241 = vsub.f32 %v160, %v238
  %v242 = vsub.f32 %v163, %v238
  %v243 = vsub.f32 %v168, %v238
  %v244 = vsub.f32 %v171, %v238
  %v245 = vsub.f32 %v176, %v238
  %v246 = vsub.f32 %v179, %v238
  %v247 = vsub.f32 %v184, %v238
  %v248 = vsub.f32 %v187, %v238
  %v249 = vsub.f32 %v192, %v238
  %v250 = vsub.f32 %v195, %v238
  %v251 = vsub.f32 %v200, %v238
  %v252 = vmul.f32 %v239, %v239
  %v253 = vmul.f32 %v240, %v240
  %v254 = vmul.f32 %v241, %v241
  %v255 = vmul.f32 %v242, %v242
  %v256 = vmul.f32 %v243, %v243
  %v257 = vmul.f32 %v244, %v244
  %v258 = vmul.f32 %v245, %v245
  %v259 = vmul.f32 %v246, %v246
  %v260 = vmul.f32 %v247, %v247
  %v261 = vmul.f32 %v248, %v248
  %v262 = vmul.f32 %v249, %v249
  %v263 = vmul.f32 %v250, %v250
  %v264 = vmul.f32 %v251, %v251
  %v265 = vsel %vm205, %v252, 0.0
  %v266 = vsel %vm205, %v253, 0.0
  %v267 = vadd.f32 %v265, %v266
  %v268 = vsel %vm205, %v254, 0.0
  %v269 = vadd.f32 %v267, %v268
  %v270 = vsel %vm205, %v255, 0.0
  %v271 = vadd.f32 %v269, %v270
  %v272 = vsel %vm205, %v256, 0.0
  %v273 = vadd.f32 %v271, %v272
  %v274 = vsel %vm205, %v257, 0.0
  %v275 = vadd.f32 %v273, %v274
  %v276 = vsel %vm205, %v258, 0.0
  %v277 = vadd.f32 %v275, %v276
  %v278 = vsel %vm205, %v259, 0.0
  %v279 = vadd.f32 %v277, %v278
  %v280 = vsel %vm205, %v260, 0.0
  %v281 = vadd.f32 %v279, %v280
  %v282 = vsel %vm205, %v261, 0.0
  %v283 = vadd.f32 %v281, %v282
  %v284 = vsel %vm205, %v262, 0.0
  %v285 = vadd.f32 %v283, %v284
  %v286 = vsel %vm205, %v263, 0.0
  %v287 = vadd.f32 %v285, %v286
  %v288 = vsel %vm229, %v264, 0.0
  %v289 = vadd.f32 %v287, %v288
  %v290 = vrot.slane %v289, 4
  %v291 = vadd.f32 %v289, %v290
  %v292 = vrot.slane %v291, 2
  %v293 = vadd.f32 %v291, %v292
  %v294 = vrot.slane %v293, 1
  %v295 = vadd.f32 %v293, %v294
  %v296 = vmul.f32 %v295, 0.010204081
  %v297 = vadd.f32 %v296, 1e-05
  %v298 = vrsqrt.pop %v297
  %v299 = vmul.f32 %v239, %v298
  %v300 = vmul.f32 %v240, %v298
  %v301 = vmul.f32 %v241, %v298
  %v302 = vmul.f32 %v242, %v298
  %v303 = vmul.f32 %v243, %v298
  %v304 = vmul.f32 %v244, %v298
  %v305 = vmul.f32 %v245, %v298
  %v306 = vmul.f32 %v246, %v298
  %v307 = vmul.f32 %v247, %v298
  %v308 = vmul.f32 %v248, %v298
  %v309 = vmul.f32 %v249, %v298
  %v310 = vmul.f32 %v250, %v298
  %v311 = vmul.f32 %v251, %v298
  %v312 = vld [vmem:[%s3] sm:$0x1]
  %v314 = vlaneseq
  %v315 = vshrl.u32 %v314, 7
  %v316 = vsub.s32 0, %v315
  %v317 = vrot.slane %v312, %v316
  %v319 = vmul.f32 %v299, %v317
  %v320 = vmul.f32 %v300, %v317
  %v321 = vmul.f32 %v301, %v317
  %v322 = vmul.f32 %v302, %v317
  %v323 = vmul.f32 %v303, %v317
  %v324 = vmul.f32 %v304, %v317
  %v325 = vmul.f32 %v305, %v317
  %v326 = vmul.f32 %v306, %v317
  %v327 = vmul.f32 %v307, %v317
  %v328 = vmul.f32 %v308, %v317
  %v329 = vmul.f32 %v309, %v317
  %v330 = vmul.f32 %v310, %v317
  %v331 = vmul.f32 %v311, %v317
  %v332 = vld [vmem:[%s4] sm:$0x1]
  %v334 = vlaneseq
  %v335 = vshrl.u32 %v334, 7
  %v336 = vsub.s32 0, %v335
  %v337 = vrot.slane %v332, %v336
  %v339 = vadd.f32 %v319, %v337
  %v340 = vadd.f32 %v320, %v337
  %v341 = vadd.f32 %v321, %v337
  %v342 = vadd.f32 %v322, %v337
  %v343 = vadd.f32 %v323, %v337
  %v344 = vadd.f32 %v324, %v337
  %v345 = vadd.f32 %v325, %v337
  %v346 = vadd.f32 %v326, %v337
  %v347 = vadd.f32 %v327, %v337
  %v348 = vadd.f32 %v328, %v337
  %v349 = vadd.f32 %v329, %v337
  %v350 = vadd.f32 %v330, %v337
  %v351 = vadd.f32 %v331, %v337
  %v352 = vmax.f32 %v339, 0.0
  %v353 = vmax.f32 %v340, 0.0
  %v354 = vmax.f32 %v341, 0.0
  %v355 = vmax.f32 %v342, 0.0
  %v356 = vmax.f32 %v343, 0.0
  %v357 = vmax.f32 %v344, 0.0
  %v358 = vmax.f32 %v345, 0.0
  %v359 = vmax.f32 %v346, 0.0
  %v360 = vmax.f32 %v347, 0.0
  %v361 = vmax.f32 %v348, 0.0
  %v362 = vmax.f32 %v349, 0.0
  %v363 = vmax.f32 %v350, 0.0
  %v364 = vmax.f32 %v351, 0.0
  %365 = vst.msk [vmem:[%s5] sm:$0xff] %vm205, %v352
  %366 = vst.msk [vmem:[%s5 + $0x8] sm:$0xff] %vm205, %v353
  %367 = vst.msk [vmem:[%s5 + $0x10] sm:$0xff] %vm205, %v354
  %368 = vst.msk [vmem:[%s5 + $0x18] sm:$0xff] %vm205, %v355
  %369 = vst.msk [vmem:[%s5 + $0x20] sm:$0xff] %vm205, %v356
  %370 = vst.msk [vmem:[%s5 + $0x28] sm:$0xff] %vm205, %v357
  %371 = vst.msk [vmem:[%s5 + $0x30] sm:$0xff] %vm205, %v358
  %372 = vst.msk [vmem:[%s5 + $0x38] sm:$0xff] %vm205, %v359
  %373 = vst.msk [vmem:[%s5 + $0x40] sm:$0xff] %vm205, %v360
  %374 = vst.msk [vmem:[%s5 + $0x48] sm:$0xff] %vm205, %v361
  %375 = vst.msk [vmem:[%s5 + $0x50] sm:$0xff] %vm205, %v362
  %376 = vst.msk [vmem:[%s5 + $0x58] sm:$0xff] %vm205, %v363
  %377 = vst.msk [vmem:[%s5 + $0x60] sm:$0x3] %vm229, %v364
  // Predicated region
  $region22: #{vae_forward.10} parent=0 // pred_check
    _
  $region23: #{vae_forward.10} parent=0 // pred_check_branch
    %379 = sbr.rel (0) target = $region25
  $region24: #{vae_forward.10} parent=0 // pred_region
    _
  $region25: #{vae_forward.10} parent=0 // pred_fallthru
    _
  // Predicated region
  $region26: #{vae_forward.10} parent=0 // pred_check
    _
  $region27: #{vae_forward.10} parent=0 // pred_check_branch
    %381 = sbr.rel (0) target = $region29
  $region28: #{vae_forward.10} parent=0 // pred_region
    _
  $region29: #{vae_forward.10} parent=0 // pred_fallthru
    _

// kernel: vae_forward.11
$region0: #{vae_forward.11}
  #allocation0 [shape = 'u32[]', space=smem, size = 0x4, offset = 0x4, fixed_abs, tag = 'smem constant byte address 0x4 - core index']
  #allocation1 [shape = 'u32[144,128]{1,0:T(1,128)}', space=vmem, size = 0x12000, scoped, tag = 'internal scratch']
  %s0 = inlined_call_operand.vmem [shape: f32[32,288], index: 0, kind: input, shape index: {}]
  %s1 = inlined_call_operand.vmem [shape: f32[288,64], index: 1, kind: input, shape index: {}]
  %s2 = inlined_call_operand.vmem [shape: f32[1,64], index: 2, kind: input, shape index: {}]
  %s3 = inlined_call_operand.vmem [shape: f32[1,64], index: 3, kind: input, shape index: {}]
  %s4 = inlined_call_operand.vmem [shape: f32[1,64], index: 4, kind: input, shape index: {}]
  %s5 = inlined_call_operand.vmem [shape: f32[32,64], index: 5, kind: output, shape index: {}]
  %s6 = sld [smem:[#allocation0]]
  $region30: #{vae_forward.11} parent=0
    _
  %s8 = ssub.s32 1, %s6
  %s9 = scalar_select 0, %s8, %s6
  // Predicated region
  $region2: #{vae_forward.11} parent=0 // pred_check
    _
  $region3: #{vae_forward.11} parent=0 // pred_check_branch
    %11 = sbr.rel (0) target = $region5
  $region4: #{vae_forward.11} parent=0 // pred_region
    _
  $region5: #{vae_forward.11} parent=0 // pred_fallthru
    _
  // Predicated region
  $region6: #{vae_forward.11} parent=0 // pred_check
    _
  $region7: #{vae_forward.11} parent=0 // pred_check_branch
    %13 = sbr.rel (0) target = $region9
  $region8: #{vae_forward.11} parent=0 // pred_region
    _
  $region9: #{vae_forward.11} parent=0 // pred_fallthru
    _
  // Predicated region
  $region10: #{vae_forward.11} parent=0 // pred_check
    _
  $region11: #{vae_forward.11} parent=0 // pred_check_branch
    %15 = sbr.rel (0) target = $region13
  $region12: #{vae_forward.11} parent=0 // pred_region
    _
  $region13: #{vae_forward.11} parent=0 // pred_fallthru
    _
  // Predicated region
  $region14: #{vae_forward.11} parent=0 // pred_check
    _
  $region15: #{vae_forward.11} parent=0 // pred_check_branch
    %17 = sbr.rel (0) target = $region17
  $region16: #{vae_forward.11} parent=0 // pred_region
    _
  $region17: #{vae_forward.11} parent=0 // pred_fallthru
    _
  // Predicated region
  $region18: #{vae_forward.11} parent=0 // pred_check
    _
  $region19: #{vae_forward.11} parent=0 // pred_check_branch
    %19 = sbr.rel (0) target = $region21
  $region20: #{vae_forward.11} parent=0 // pred_region
    _
  $region21: #{vae_forward.11} parent=0 // pred_fallthru
    _
  %v21 = vld [vmem:[%s0] sm:$0xff]
  %v22 = vld [vmem:[%s0 + $0x8] sm:$0xff]
  %v23 = vld [vmem:[%s0 + $0x10] sm:$0xff]
  %v24 = vld [vmem:[%s0 + $0x18] sm:$0xff]
  %v25 = vld [vmem:[%s0 + $0x20] sm:$0xff]
  %v26 = vld [vmem:[%s0 + $0x28] sm:$0xff]
  %v27 = vld [vmem:[%s0 + $0x30] sm:$0xff]
  %v28 = vld [vmem:[%s0 + $0x38] sm:$0xff]
  %v29 = vld [vmem:[%s0 + $0x40] sm:$0xff]
  %v30 = vld [vmem:[%s0 + $0x48] sm:$0xff]
  %v31 = vld [vmem:[%s0 + $0x50] sm:$0xff]
  %v32 = vld [vmem:[%s0 + $0x58] sm:$0xff]
  %v33 = vpack.c.bf16 %v24, %v21
  %v34 = vpack.c.bf16 %v25, %v22
  %v35 = vpack.c.bf16 %v26, %v23
  %v36 = vpack.c.bf16 %v30, %v27
  %v37 = vpack.c.bf16 %v31, %v28
  %v38 = vpack.c.bf16 %v32, %v29
  %v39 = vld [vmem:[%s1] sm:$0xff]
  %v40 = vld [vmem:[%s1 + $0x8] sm:$0xff]
  %v41 = vld [vmem:[%s1 + $0x10] sm:$0xff]
  %v42 = vld [vmem:[%s1 + $0x18] sm:$0xff]
  %v43 = vld [vmem:[%s1 + $0x20] sm:$0xff]
  %v44 = vld [vmem:[%s1 + $0x28] sm:$0xff]
  %v45 = vld [vmem:[%s1 + $0x30] sm:$0xff]
  %v46 = vld [vmem:[%s1 + $0x38] sm:$0xff]
  %v47 = vld [vmem:[%s1 + $0x40] sm:$0xff]
  %v48 = vld [vmem:[%s1 + $0x48] sm:$0xff]
  %v49 = vld [vmem:[%s1 + $0x50] sm:$0xff]
  %v50 = vld [vmem:[%s1 + $0x58] sm:$0xff]
  %v51 = vld [vmem:[%s1 + $0x60] sm:$0xff]
  %v52 = vld [vmem:[%s1 + $0x68] sm:$0xff]
  %v53 = vld [vmem:[%s1 + $0x70] sm:$0xff]
  %v54 = vld [vmem:[%s1 + $0x78] sm:$0xff]
  %v55 = vld [vmem:[%s1 + $0x80] sm:$0xff]
  %v56 = vld [vmem:[%s1 + $0x88] sm:$0xff]
  %v57 = vld [vmem:[%s1 + $0x90] sm:$0xff]
  %v58 = vld [vmem:[%s1 + $0x98] sm:$0xff]
  %v59 = vld [vmem:[%s1 + $0xa0] sm:$0xff]
  %v60 = vld [vmem:[%s1 + $0xa8] sm:$0xff]
  %v61 = vld [vmem:[%s1 + $0xb0] sm:$0xff]
  %v62 = vld [vmem:[%s1 + $0xb8] sm:$0xff]
  %v63 = vld [vmem:[%s1 + $0xc0] sm:$0xff]
  %v64 = vld [vmem:[%s1 + $0xc8] sm:$0xff]
  %v65 = vld [vmem:[%s1 + $0xd0] sm:$0xff]
  %v66 = vld [vmem:[%s1 + $0xd8] sm:$0xff]
  %v67 = vld [vmem:[%s1 + $0xe0] sm:$0xff]
  %v68 = vld [vmem:[%s1 + $0xe8] sm:$0xff]
  %v69 = vld [vmem:[%s1 + $0xf0] sm:$0xff]
  %v70 = vld [vmem:[%s1 + $0xf8] sm:$0xff]
  %v71 = vld [vmem:[%s1 + $0x100] sm:$0xff]
  %v72 = vld [vmem:[%s1 + $0x108] sm:$0xff]
  %v73 = vld [vmem:[%s1 + $0x110] sm:$0xff]
  %v74 = vld [vmem:[%s1 + $0x118] sm:$0xff]
  %v75 = vpack.c.bf16 %v40, %v39
  %v76 = vpack.c.bf16 %v42, %v41
  %v77 = vpack.c.bf16 %v44, %v43
  %v78 = vpack.c.bf16 %v46, %v45
  %v79 = vpack.c.bf16 %v48, %v47
  %v80 = vpack.c.bf16 %v50, %v49
  %v81 = vpack.c.bf16 %v52, %v51
  %v82 = vpack.c.bf16 %v54, %v53
  %v83 = vpack.c.bf16 %v56, %v55
  %v84 = vpack.c.bf16 %v58, %v57
  %v85 = vpack.c.bf16 %v60, %v59
  %v86 = vpack.c.bf16 %v62, %v61
  %v87 = vpack.c.bf16 %v64, %v63
  %v88 = vpack.c.bf16 %v66, %v65
  %v89 = vpack.c.bf16 %v68, %v67
  %v90 = vpack.c.bf16 %v70, %v69
  %v91 = vpack.c.bf16 %v72, %v71
  %v92 = vpack.c.bf16 %v74, %v73
  %v93 = vld [vmem:[%s2] sm:$0x1]
  %v95 = vlaneseq
  %v96 = vshrl.u32 %v95, 7
  %v97 = vsub.s32 0, %v96
  %v98 = vrot.slane %v93, %v97
  %vm100 = vcmask 261120
  %v102 = vsel %vm100, %v35, 0
  %v105 = vsel %vm100, %v38, 0
  %107 = vmatprep.subr.bf16.mxu0 0
  %108 = vmatpush1.bf16.msra.mxu0 %v75
  %109 = vmatprep.subr.bf16.mxu0 0
  %110 = vmatpush1.bf16.msra.mxu0 %v76
  %111 = vmatprep.subr.bf16.mxu0 0
  %112 = vmatpush1.bf16.msra.mxu0 %v77
  %113 = vmatprep.subr.bf16.mxu0 0
  %114 = vmatpush1.bf16.msra.mxu0 %v78
  %115 = vmatprep.subr.bf16.mxu0 0
  %116 = vmatpush1.bf16.msra.mxu0 %v79
  %117 = vmatprep.subr.bf16.mxu0 0
  %118 = vmatpush1.bf16.msra.mxu0 %v80
  %119 = vmatprep.subr.bf16.mxu0 0
  %120 = vmatpush1.bf16.msra.mxu0 %v81
  %121 = vmatprep.subr.bf16.mxu0 0
  %122 = vmatpush1.bf16.msra.mxu0 %v82
  %123 = vmatprep.subr.bf16.mxu0 0
  %124 = vmatpush1.bf16.msra.mxu0 %v83
  %125 = vmatprep.subr.bf16.mxu0 0
  %126 = vmatpush1.bf16.msra.mxu0 %v84
  %127 = vmatprep.subr.bf16.mxu0 0
  %128 = vmatpush1.bf16.msra.mxu0 %v85
  %129 = vmatprep.subr.bf16.mxu0 0
  %130 = vmatpush1.bf16.msra.mxu0 %v86
  %131 = vmatprep.subr.bf16.mxu0 0
  %132 = vmatpush1.bf16.msra.mxu0 %v87
  %133 = vmatprep.subr.bf16.mxu0 0
  %134 = vmatpush1.bf16.msra.mxu0 %v88
  %135 = vmatprep.subr.bf16.mxu0 0
  %136 = vmatpush1.bf16.msra.mxu0 %v89
  %137 = vmatprep.subr.bf16.mxu0 0
  %138 = vmatpush1.bf16.msra.mxu0 %v90
  %139 = vmatprep.mubr.bf16.mxu0 %v34
  %140 = vmatmul.mubr.bf16.gmra.mrb[0].mxu0 %v33
  %v141 = vpop.f32.mrb[0].mxu0
  %v142 = vadd.f32 %v98, %v141
  %v143 = vpop.f32.mrb[0].mxu0
  %v144 = vpop.f32.mrb[0].mxu0
  %v145 = vadd.f32 %v98, %v144
  %v146 = vpop.f32.mrb[0].mxu0
  %147 = vmatprep.mubr.bf16.mxu0 %v37
  %148 = vmatmul.mubr.bf16.gmra.mrb[0].mxu0 %v36
  %v149 = vpop.f32.mrb[0].mxu0
  %v150 = vadd.f32 %v98, %v149
  %v151 = vpop.f32.mrb[0].mxu0
  %v152 = vpop.f32.mrb[0].mxu0
  %v153 = vadd.f32 %v98, %v152
  %v154 = vpop.f32.mrb[0].mxu0
  %155 = vdwg.mxu0
  %156 = vmatprep.subr.bf16.mxu0 0
  %157 = vmatpush1.bf16.msra.mxu0 %v91
  %158 = vmatprep.subr.bf16.mxu0 0
  %159 = vmatpush1.bf16.msra.mxu0 %v92
  %160 = vmatprep.subr.bf16.mxu0 0
  %161 = vmatpush1.bf16.msra.mxu0 0
  %162 = vmatprep.subr.bf16.mxu0 0
  %163 = vmatpush1.bf16.msra.mxu0 0
  %164 = vmatprep.subr.bf16.mxu0 0
  %165 = vmatpush1.bf16.msra.mxu0 0
  %166 = vmatprep.subr.bf16.mxu0 0
  %167 = vmatpush1.bf16.msra.mxu0 0
  %168 = vmatprep.subr.bf16.mxu0 0
  %169 = vmatpush1.bf16.msra.mxu0 0
  %170 = vmatprep.subr.bf16.mxu0 0
  %171 = vmatpush1.bf16.msra.mxu0 0
  %172 = vmatprep.subr.bf16.mxu0 0
  %173 = vmatpush1.bf16.msra.mxu0 0
  %174 = vmatprep.subr.bf16.mxu0 0
  %175 = vmatpush1.bf16.msra.mxu0 0
  %176 = vmatprep.subr.bf16.mxu0 0
  %177 = vmatpush1.bf16.msra.mxu0 0
  %178 = vmatprep.subr.bf16.mxu0 0
  %179 = vmatpush1.bf16.msra.mxu0 0
  %180 = vmatprep.subr.bf16.mxu0 0
  %181 = vmatpush1.bf16.msra.mxu0 0
  %182 = vmatprep.subr.bf16.mxu0 0
  %183 = vmatpush1.bf16.msra.mxu0 0
  %184 = vmatprep.subr.bf16.mxu0 0
  %185 = vmatpush1.bf16.msra.mxu0 0
  %186 = vmatprep.subr.bf16.mxu0 0
  %187 = vmatpush1.bf16.msra.mxu0 0
  %188 = vmatprep.mubr.bf16.mxu0 0
  %189 = vmatmul.mubr.bf16.gmra.mrb[0].mxu0 %v102
  %v190 = vpop.f32.mrb[0].mxu0
  %v191 = vadd.f32 %v142, %v190
  %v192 = vpop.f32.mrb[0].mxu0
  %v193 = vpop.f32.mrb[0].mxu0
  %v194 = vadd.f32 %v145, %v193
  %v195 = vpop.f32.mrb[0].mxu0
  %196 = vmatprep.mubr.bf16.mxu0 0
  %197 = vmatmul.mubr.bf16.gmra.mrb[0].mxu0 %v105
  %v198 = vpop.f32.mrb[0].mxu0
  %v199 = vadd.f32 %v150, %v198
  %v200 = vpop.f32.mrb[0].mxu0
  %v201 = vpop.f32.mrb[0].mxu0
  %v202 = vadd.f32 %v153, %v201
  %v203 = vpop.f32.mrb[0].mxu0
  %204 = vdwg.mxu0
  %vm205 = vcmask 523264
  %v206 = vsel %vm205, %v191, 0.0
  %v207 = vsel %vm205, %v194, 0.0
  %v208 = vadd.f32 %v206, %v207
  %v209 = vsel %vm205, %v199, 0.0
  %v210 = vadd.f32 %v208, %v209
  %v211 = vsel %vm205, %v202, 0.0
  %v212 = vadd.f32 %v210, %v211
  %v213 = vrot.slane %v212, 4
  %v214 = vadd.f32 %v212, %v213
  %v215 = vrot.slane %v214, 2
  %v216 = vadd.f32 %v214, %v215
  %v217 = vrot.slane %v216, 1
  %v218 = vadd.f32 %v216, %v217
  %v219 = vmul.f32 %v218, 0.03125
  %v220 = vsub.f32 %v191, %v219
  %v221 = vsub.f32 %v194, %v219
  %v222 = vsub.f32 %v199, %v219
  %v223 = vsub.f32 %v202, %v219
  %v224 = vmul.f32 %v220, %v220
  %v225 = vmul.f32 %v221, %v221
  %v226 = vmul.f32 %v222, %v222
  %v227 = vmul.f32 %v223, %v223
  %v228 = vsel %vm205, %v224, 0.0
  %v229 = vsel %vm205, %v225, 0.0
  %v230 = vadd.f32 %v228, %v229
  %v231 = vsel %vm205, %v226, 0.0
  %v232 = vadd.f32 %v230, %v231
  %v233 = vsel %vm205, %v227, 0.0
  %v234 = vadd.f32 %v232, %v233
  %v235 = vrot.slane %v234, 4
  %v236 = vadd.f32 %v234, %v235
  %v237 = vrot.slane %v236, 2
  %v238 = vadd.f32 %v236, %v237
  %v239 = vrot.slane %v238, 1
  %v240 = vadd.f32 %v238, %v239
  %v241 = vmul.f32 %v240, 0.03125
  %v242 = vadd.f32 %v241, 1e-05
  %v243 = vrsqrt.pop %v242
  %v244 = vmul.f32 %v220, %v243
  %v245 = vmul.f32 %v221, %v243
  %v246 = vmul.f32 %v222, %v243
  %v247 = vmul.f32 %v223, %v243
  %v248 = vld [vmem:[%s3] sm:$0x1]
  %v250 = vlaneseq
  %v251 = vshrl.u32 %v250, 7
  %v252 = vsub.s32 0, %v251
  %v253 = vrot.slane %v248, %v252
  %v255 = vmul.f32 %v244, %v253
  %v256 = vmul.f32 %v245, %v253
  %v257 = vmul.f32 %v246, %v253
  %v258 = vmul.f32 %v247, %v253
  %v259 = vld [vmem:[%s4] sm:$0x1]
  %v261 = vlaneseq
  %v262 = vshrl.u32 %v261, 7
  %v263 = vsub.s32 0, %v262
  %v264 = vrot.slane %v259, %v263
  %v266 = vadd.f32 %v255, %v264
  %v267 = vadd.f32 %v256, %v264
  %v268 = vadd.f32 %v257, %v264
  %v269 = vadd.f32 %v258, %v264
  %v270 = vmax.f32 %v266, 0.0
  %v271 = vmax.f32 %v267, 0.0
  %v272 = vmax.f32 %v268, 0.0
  %v273 = vmax.f32 %v269, 0.0
  %274 = vst.msk [vmem:[%s5] sm:$0xff] %vm205, %v270
  %275 = vst.msk [vmem:[%s5 + $0x8] sm:$0xff] %vm205, %v271
  %276 = vst.msk [vmem:[%s5 + $0x10] sm:$0xff] %vm205, %v272
  %277 = vst.msk [vmem:[%s5 + $0x18] sm:$0xff] %vm205, %v273
  // Predicated region
  $region22: #{vae_forward.11} parent=0 // pred_check
    _
  $region23: #{vae_forward.11} parent=0 // pred_check_branch
    %279 = sbr.rel (0) target = $region25
  $region24: #{vae_forward.11} parent=0 // pred_region
    _
  $region25: #{vae_forward.11} parent=0 // pred_fallthru
    _
  // Predicated region
  $region26: #{vae_forward.11} parent=0 // pred_check
    _
  $region27: #{vae_forward.11} parent=0 // pred_check_branch
    %281 = sbr.rel (0) target = $region29
  $region28: #{vae_forward.11} parent=0 // pred_region
    _
  $region29: #{vae_forward.11} parent=0 // pred_fallthru
    _

// kernel: vae_forward.12
$region0: #{vae_forward.12}
  #allocation0 [shape = 'u32[]', space=smem, size = 0x4, offset = 0x4, fixed_abs, tag = 'smem constant byte address 0x4 - core index']
  #allocation1 [shape = 'u32[144,128]{1,0:T(1,128)}', space=vmem, size = 0x12000, scoped, tag = 'internal scratch']
  %s0 = inlined_call_operand.vmem [shape: f32[18,256], index: 0, kind: input, shape index: {}]
  %s1 = inlined_call_operand.vmem [shape: f32[256,128], index: 1, kind: input, shape index: {}]
  %s2 = inlined_call_operand.vmem [shape: f32[1,128], index: 2, kind: input, shape index: {}]
  %s3 = inlined_call_operand.vmem [shape: f32[1,128], index: 3, kind: input, shape index: {}]
  %s4 = inlined_call_operand.vmem [shape: f32[1,128], index: 4, kind: input, shape index: {}]
  %s5 = inlined_call_operand.vmem [shape: f32[18,128], index: 5, kind: output, shape index: {}]
  %s6 = sld [smem:[#allocation0]]
  $region30: #{vae_forward.12} parent=0
    _
  %s8 = ssub.s32 1, %s6
  %s9 = scalar_select 0, %s8, %s6
  // Predicated region
  $region2: #{vae_forward.12} parent=0 // pred_check
    _
  $region3: #{vae_forward.12} parent=0 // pred_check_branch
    %11 = sbr.rel (0) target = $region5
  $region4: #{vae_forward.12} parent=0 // pred_region
    _
  $region5: #{vae_forward.12} parent=0 // pred_fallthru
    _
  // Predicated region
  $region6: #{vae_forward.12} parent=0 // pred_check
    _
  $region7: #{vae_forward.12} parent=0 // pred_check_branch
    %13 = sbr.rel (0) target = $region9
  $region8: #{vae_forward.12} parent=0 // pred_region
    _
  $region9: #{vae_forward.12} parent=0 // pred_fallthru
    _
  // Predicated region
  $region10: #{vae_forward.12} parent=0 // pred_check
    _
  $region11: #{vae_forward.12} parent=0 // pred_check_branch
    %15 = sbr.rel (0) target = $region13
  $region12: #{vae_forward.12} parent=0 // pred_region
    _
  $region13: #{vae_forward.12} parent=0 // pred_fallthru
    _
  // Predicated region
  $region14: #{vae_forward.12} parent=0 // pred_check
    _
  $region15: #{vae_forward.12} parent=0 // pred_check_branch
    %17 = sbr.rel (0) target = $region17
  $region16: #{vae_forward.12} parent=0 // pred_region
    _
  $region17: #{vae_forward.12} parent=0 // pred_fallthru
    _
  // Predicated region
  $region18: #{vae_forward.12} parent=0 // pred_check
    _
  $region19: #{vae_forward.12} parent=0 // pred_check_branch
    %19 = sbr.rel (0) target = $region21
  $region20: #{vae_forward.12} parent=0 // pred_region
    _
  $region21: #{vae_forward.12} parent=0 // pred_fallthru
    _
  %v21 = vld [vmem:[%s0] sm:$0xff]
  %v22 = vld [vmem:[%s0 + $0x8] sm:$0xff]
  %v23 = vld [vmem:[%s0 + $0x10] sm:$0xff]
  %v24 = vld [vmem:[%s0 + $0x18] sm:$0xff]
  %v25 = vld [vmem:[%s0 + $0x20] sm:$0x3]
  %v26 = vld [vmem:[%s0 + $0x28] sm:$0x3]
  %v27 = vpack.c.bf16 %v23, %v21
  %v28 = vpack.c.bf16 %v24, %v22
  %v29 = vpack.c.bf16 %v25, %v25
  %v30 = vpack.c.bf16 %v26, %v26
  %v31 = vld [vmem:[%s1] sm:$0xff]
  %v32 = vld [vmem:[%s1 + $0x8] sm:$0xff]
  %v33 = vld [vmem:[%s1 + $0x10] sm:$0xff]
  %v34 = vld [vmem:[%s1 + $0x18] sm:$0xff]
  %v35 = vld [vmem:[%s1 + $0x20] sm:$0xff]
  %v36 = vld [vmem:[%s1 + $0x28] sm:$0xff]
  %v37 = vld [vmem:[%s1 + $0x30] sm:$0xff]
  %v38 = vld [vmem:[%s1 + $0x38] sm:$0xff]
  %v39 = vld [vmem:[%s1 + $0x40] sm:$0xff]
  %v40 = vld [vmem:[%s1 + $0x48] sm:$0xff]
  %v41 = vld [vmem:[%s1 + $0x50] sm:$0xff]
  %v42 = vld [vmem:[%s1 + $0x58] sm:$0xff]
  %v43 = vld [vmem:[%s1 + $0x60] sm:$0xff]
  %v44 = vld [vmem:[%s1 + $0x68] sm:$0xff]
  %v45 = vld [vmem:[%s1 + $0x70] sm:$0xff]
  %v46 = vld [vmem:[%s1 + $0x78] sm:$0xff]
  %v47 = vld [vmem:[%s1 + $0x80] sm:$0xff]
  %v48 = vld [vmem:[%s1 + $0x88] sm:$0xff]
  %v49 = vld [vmem:[%s1 + $0x90] sm:$0xff]
  %v50 = vld [vmem:[%s1 + $0x98] sm:$0xff]
  %v51 = vld [vmem:[%s1 + $0xa0] sm:$0xff]
  %v52 = vld [vmem:[%s1 + $0xa8] sm:$0xff]
  %v53 = vld [vmem:[%s1 + $0xb0] sm:$0xff]
  %v54 = vld [vmem:[%s1 + $0xb8] sm:$0xff]
  %v55 = vld [vmem:[%s1 + $0xc0] sm:$0xff]
  %v56 = vld [vmem:[%s1 + $0xc8] sm:$0xff]
  %v57 = vld [vmem:[%s1 + $0xd0] sm:$0xff]
  %v58 = vld [vmem:[%s1 + $0xd8] sm:$0xff]
  %v59 = vld [vmem:[%s1 + $0xe0] sm:$0xff]
  %v60 = vld [vmem:[%s1 + $0xe8] sm:$0xff]
  %v61 = vld [vmem:[%s1 + $0xf0] sm:$0xff]
  %v62 = vld [vmem:[%s1 + $0xf8] sm:$0xff]
  %v63 = vpack.c.bf16 %v32, %v31
  %v64 = vpack.c.bf16 %v34, %v33
  %v65 = vpack.c.bf16 %v36, %v35
  %v66 = vpack.c.bf16 %v38, %v37
  %v67 = vpack.c.bf16 %v40, %v39
  %v68 = vpack.c.bf16 %v42, %v41
  %v69 = vpack.c.bf16 %v44, %v43
  %v70 = vpack.c.bf16 %v46, %v45
  %v71 = vpack.c.bf16 %v48, %v47
  %v72 = vpack.c.bf16 %v50, %v49
  %v73 = vpack.c.bf16 %v52, %v51
  %v74 = vpack.c.bf16 %v54, %v53
  %v75 = vpack.c.bf16 %v56, %v55
  %v76 = vpack.c.bf16 %v58, %v57
  %v77 = vpack.c.bf16 %v60, %v59
  %v78 = vpack.c.bf16 %v62, %v61
  %v79 = vld [vmem:[%s2] sm:$0x1]
  %v81 = vlaneseq
  %v82 = vshrl.u32 %v81, 7
  %v83 = vsub.s32 0, %v82
  %v84 = vrot.slane %v79, %v83
  %86 = vmatprep.subr.bf16.mxu0 0
  %87 = vmatpush1.bf16.msra.mxu0 %v63
  %88 = vmatprep.subr.bf16.mxu0 0
  %89 = vmatpush1.bf16.msra.mxu0 %v64
  %90 = vmatprep.subr.bf16.mxu0 0
  %91 = vmatpush1.bf16.msra.mxu0 %v65
  %92 = vmatprep.subr.bf16.mxu0 0
  %93 = vmatpush1.bf16.msra.mxu0 %v66
  %94 = vmatprep.subr.bf16.mxu0 0
  %95 = vmatpush1.bf16.msra.mxu0 %v67
  %96 = vmatprep.subr.bf16.mxu0 0
  %97 = vmatpush1.bf16.msra.mxu0 %v68
  %98 = vmatprep.subr.bf16.mxu0 0
  %99 = vmatpush1.bf16.msra.mxu0 %v69
  %100 = vmatprep.subr.bf16.mxu0 0
  %101 = vmatpush1.bf16.msra.mxu0 %v70
  %102 = vmatprep.subr.bf16.mxu0 0
  %103 = vmatpush1.bf16.msra.mxu0 %v71
  %104 = vmatprep.subr.bf16.mxu0 0
  %105 = vmatpush1.bf16.msra.mxu0 %v72
  %106 = vmatprep.subr.bf16.mxu0 0
  %107 = vmatpush1.bf16.msra.mxu0 %v73
  %108 = vmatprep.subr.bf16.mxu0 0
  %109 = vmatpush1.bf16.msra.mxu0 %v74
  %110 = vmatprep.subr.bf16.mxu0 0
  %111 = vmatpush1.bf16.msra.mxu0 %v75
  %112 = vmatprep.subr.bf16.mxu0 0
  %113 = vmatpush1.bf16.msra.mxu0 %v76
  %114 = vmatprep.subr.bf16.mxu0 0
  %115 = vmatpush1.bf16.msra.mxu0 %v77
  %116 = vmatprep.subr.bf16.mxu0 0
  %117 = vmatpush1.bf16.msra.mxu0 %v78
  %118 = vmatprep.mubr.bf16.mxu0 %v28
  %119 = vmatmul.mubr.bf16.gmra.mrb[0].mxu0 %v27
  %v120 = vpop.f32.mrb[0].mxu0
  %v121 = vadd.f32 %v84, %v120
  %v122 = vpop.f32.mrb[0].mxu0
  %v123 = vpop.f32.mrb[0].mxu0
  %v124 = vadd.f32 %v84, %v123
  %v125 = vpop.f32.mrb[0].mxu0
  %126 = vmatprep.mubr.bf16.mxu0 %v30
  %127 = vmatmul.mubr.bf16.gmra.mrb[0].mxu0 %v29
  %v128 = vpop.f32.mrb[0].mxu0
  %v129 = vadd.f32 %v84, %v128
  %v130 = vpop.f32.mrb[0].mxu0
  %v131 = vpop.f32.mrb[0].mxu0
  %v132 = vpop.f32.mrb[0].mxu0
  %133 = vdwg.mxu0
  %v134 = vadd.f32 %v121, %v124
  %vm135 = vcmask 1041408
  %v136 = vsel %vm135, %v129, 0.0
  %v137 = vadd.f32 %v134, %v136
  %v138 = vrot.slane %v137, 4
  %v139 = vadd.f32 %v137, %v138
  %v140 = vrot.slane %v139, 2
  %v141 = vadd.f32 %v139, %v140
  %v142 = vrot.slane %v141, 1
  %v143 = vadd.f32 %v141, %v142
  %v144 = vmul.f32 %v143, 0.055555556
  %v145 = vsub.f32 %v121, %v144
  %v146 = vsub.f32 %v124, %v144
  %v147 = vsub.f32 %v129, %v144
  %v148 = vmul.f32 %v145, %v145
  %v149 = vmul.f32 %v146, %v146
  %v150 = vmul.f32 %v147, %v147
  %v151 = vadd.f32 %v148, %v149
  %v152 = vsel %vm135, %v150, 0.0
  %v153 = vadd.f32 %v151, %v152
  %v154 = vrot.slane %v153, 4
  %v155 = vadd.f32 %v153, %v154
  %v156 = vrot.slane %v155, 2
  %v157 = vadd.f32 %v155, %v156
  %v158 = vrot.slane %v157, 1
  %v159 = vadd.f32 %v157, %v158
  %v160 = vmul.f32 %v159, 0.055555556
  %v161 = vadd.f32 %v160, 1e-05
  %v162 = vrsqrt.pop %v161
  %v163 = vmul.f32 %v145, %v162
  %v164 = vmul.f32 %v146, %v162
  %v165 = vmul.f32 %v147, %v162
  %v166 = vld [vmem:[%s3] sm:$0x1]
  %v168 = vlaneseq
  %v169 = vshrl.u32 %v168, 7
  %v170 = vsub.s32 0, %v169
  %v171 = vrot.slane %v166, %v170
  %v173 = vmul.f32 %v163, %v171
  %v174 = vmul.f32 %v164, %v171
  %v175 = vmul.f32 %v165, %v171
  %v176 = vld [vmem:[%s4] sm:$0x1]
  %v178 = vlaneseq
  %v179 = vshrl.u32 %v178, 7
  %v180 = vsub.s32 0, %v179
  %v181 = vrot.slane %v176, %v180
  %v183 = vadd.f32 %v173, %v181
  %v184 = vadd.f32 %v174, %v181
  %v185 = vadd.f32 %v175, %v181
  %v186 = vmax.f32 %v183, 0.0
  %v187 = vmax.f32 %v184, 0.0
  %v188 = vmax.f32 %v185, 0.0
  %189 = vst [vmem:[%s5] sm:$0xff] %v186
  %190 = vst [vmem:[%s5 + $0x8] sm:$0xff] %v187
  %191 = vst [vmem:[%s5 + $0x10] sm:$0x3] %v188
  // Predicated region
  $region22: #{vae_forward.12} parent=0 // pred_check
    _
  $region23: #{vae_forward.12} parent=0 // pred_check_branch
    %193 = sbr.rel (0) target = $region25
  $region24: #{vae_forward.12} parent=0 // pred_region
    _
  $region25: #{vae_forward.12} parent=0 // pred_fallthru
    _
  // Predicated region
  $region26: #{vae_forward.12} parent=0 // pred_check
    _
  $region27: #{vae_forward.12} parent=0 // pred_check_branch
    %195 = sbr.rel (0) target = $region29
  $region28: #{vae_forward.12} parent=0 // pred_region
    _
  $region29: #{vae_forward.12} parent=0 // pred_fallthru
    _

// kernel: vae_forward.13
$region0: #{vae_forward.13}
  #allocation0 [shape = 'u32[]', space=smem, size = 0x4, offset = 0x4, fixed_abs, tag = 'smem constant byte address 0x4 - core index']
  #allocation1 [shape = 'u32[144,128]{1,0:T(1,128)}', space=vmem, size = 0x12000, scoped, tag = 'internal scratch']
  %s0 = inlined_call_operand.vmem [shape: f32[2,1152], index: 0, kind: input, shape index: {}]
  %s1 = inlined_call_operand.vmem [shape: f32[2,8], index: 1, kind: input, shape index: {}]
  %s2 = inlined_call_operand.vmem [shape: f32[1152,64], index: 2, kind: input, shape index: {}]
  %s3 = inlined_call_operand.vmem [shape: f32[1,64], index: 3, kind: input, shape index: {}]
  %s4 = inlined_call_operand.vmem [shape: f32[1,64], index: 4, kind: input, shape index: {}]
  %s5 = inlined_call_operand.vmem [shape: f32[1,64], index: 5, kind: input, shape index: {}]
  %s6 = inlined_call_operand.vmem [shape: f32[64,8], index: 6, kind: input, shape index: {}]
  %s7 = inlined_call_operand.vmem [shape: f32[1,8], index: 7, kind: input, shape index: {}]
  %s8 = inlined_call_operand.vmem [shape: f32[64,8], index: 8, kind: input, shape index: {}]
  %s9 = inlined_call_operand.vmem [shape: f32[1,8], index: 9, kind: input, shape index: {}]
  %s10 = inlined_call_operand.vmem [shape: f32[8,64], index: 10, kind: input, shape index: {}]
  %s11 = inlined_call_operand.vmem [shape: f32[1,64], index: 11, kind: input, shape index: {}]
  %s12 = inlined_call_operand.vmem [shape: f32[1,64], index: 12, kind: input, shape index: {}]
  %s13 = inlined_call_operand.vmem [shape: f32[1,64], index: 13, kind: input, shape index: {}]
  %s14 = inlined_call_operand.vmem [shape: f32[64,1152], index: 14, kind: input, shape index: {}]
  %s15 = inlined_call_operand.vmem [shape: f32[1,1152], index: 15, kind: input, shape index: {}]
  %s16 = inlined_call_operand.vmem [shape: f32[1,1152], index: 16, kind: input, shape index: {}]
  %s17 = inlined_call_operand.vmem [shape: f32[1,1152], index: 17, kind: input, shape index: {}]
  %s18 = inlined_call_operand.hbm [shape: f32[2,8], index: 18, kind: output, shape index: {0}]
  %s19 = inlined_call_operand.hbm [shape: f32[2,8], index: 19, kind: output, shape index: {1}]
  %s20 = inlined_call_operand.hbm [shape: f32[2,8], index: 20, kind: output, shape index: {2}]
  %s21 = inlined_call_operand.vmem [shape: f32[2,1152], index: 21, kind: output, shape index: {3}]
  %22 = xla_tuple %s18, %s19, %s20, %s21
  %s23 = sld [smem:[#allocation0]]
  $region106: #{vae_forward.13} parent=0
    _
  %s25 = ssub.s32 1, %s23
  %s26 = scalar_select 0, %s25, %s23
  $region1: #{vae_forward.13} parent=0
    #allocation2 [shape = 'u8[1024]{0}', space=vmem, size = 0x400, scoped, tag = 'output window, operand 0, single buffered']
    #allocation3 [shape = 's32[1]{0}', space=sflag, size = 0x4, scoped, tag = 'scoped memory for vae_forward.13']
    #allocation4 [shape = 'u8[1024]{0}', space=vmem, size = 0x400, scoped, tag = 'output window, operand 1, single buffered']
    #allocation5 [shape = 's32[1]{0}', space=sflag, size = 0x4, scoped, tag = 'scoped memory for vae_forward.13']
    #allocation6 [shape = 'u8[1024]{0}', space=vmem, size = 0x400, scoped, tag = 'output window, operand 2, single buffered']
    %27 = vsyncpa [#allocation3], 0
    %28 = vsyncpa [#allocation5], 0
    // Predicated region
    $region2: #{vae_forward.13} parent=1 // pred_check
      _
    $region3: #{vae_forward.13} parent=1 // pred_check_branch
      %30 = sbr.rel (0) target = $region5
    $region4: #{vae_forward.13} parent=1 // pred_region
      _
    $region5: #{vae_forward.13} parent=1 // pred_fallthru
      _
    // Predicated region
    $region6: #{vae_forward.13} parent=1 // pred_check
      _
    $region7: #{vae_forward.13} parent=1 // pred_check_branch
      %32 = sbr.rel (0) target = $region9
    $region8: #{vae_forward.13} parent=1 // pred_region
      _
    $region9: #{vae_forward.13} parent=1 // pred_fallthru
      _
    // Predicated region
    $region10: #{vae_forward.13} parent=1 // pred_check
      _
    $region11: #{vae_forward.13} parent=1 // pred_check_branch
      %34 = sbr.rel (0) target = $region13
    $region12: #{vae_forward.13} parent=1 // pred_region
      _
    $region13: #{vae_forward.13} parent=1 // pred_fallthru
      _
    // Predicated region
    $region14: #{vae_forward.13} parent=1 // pred_check
      _
    $region15: #{vae_forward.13} parent=1 // pred_check_branch
      %36 = sbr.rel (0) target = $region17
    $region16: #{vae_forward.13} parent=1 // pred_region
      _
    $region17: #{vae_forward.13} parent=1 // pred_fallthru
      _
    // Predicated region
    $region18: #{vae_forward.13} parent=1 // pred_check
      _
    $region19: #{vae_forward.13} parent=1 // pred_check_branch
      %38 = sbr.rel (0) target = $region21
    $region20: #{vae_forward.13} parent=1 // pred_region
      _
    $region21: #{vae_forward.13} parent=1 // pred_fallthru
      _
    // Predicated region
    $region22: #{vae_forward.13} parent=1 // pred_check
      _
    $region23: #{vae_forward.13} parent=1 // pred_check_branch
      %40 = sbr.rel (0) target = $region25
    $region24: #{vae_forward.13} parent=1 // pred_region
      _
    $region25: #{vae_forward.13} parent=1 // pred_fallthru
      _
    // Predicated region
    $region26: #{vae_forward.13} parent=1 // pred_check
      _
    $region27: #{vae_forward.13} parent=1 // pred_check_branch
      %42 = sbr.rel (0) target = $region29
    $region28: #{vae_forward.13} parent=1 // pred_region
      _
    $region29: #{vae_forward.13} parent=1 // pred_fallthru
      _
    // Predicated region
    $region30: #{vae_forward.13} parent=1 // pred_check
      _
    $region31: #{vae_forward.13} parent=1 // pred_check_branch
      %44 = sbr.rel (0) target = $region33
    $region32: #{vae_forward.13} parent=1 // pred_region
      _
    $region33: #{vae_forward.13} parent=1 // pred_fallthru
      _
    // Predicated region
    $region34: #{vae_forward.13} parent=1 // pred_check
      _
    $region35: #{vae_forward.13} parent=1 // pred_check_branch
      %46 = sbr.rel (0) target = $region37
    $region36: #{vae_forward.13} parent=1 // pred_region
      _
    $region37: #{vae_forward.13} parent=1 // pred_fallthru
      _
    // Predicated region
    $region38: #{vae_forward.13} parent=1 // pred_check
      _
    $region39: #{vae_forward.13} parent=1 // pred_check_branch
      %48 = sbr.rel (0) target = $region41
    $region40: #{vae_forward.13} parent=1 // pred_region
      _
    $region41: #{vae_forward.13} parent=1 // pred_fallthru
      _
    // Predicated region
    $region42: #{vae_forward.13} parent=1 // pred_check
      _
    $region43: #{vae_forward.13} parent=1 // pred_check_branch
      %50 = sbr.rel (0) target = $region45
    $region44: #{vae_forward.13} parent=1 // pred_region
      _
    $region45: #{vae_forward.13} parent=1 // pred_fallthru
      _
    // Predicated region
    $region46: #{vae_forward.13} parent=1 // pred_check
      _
    $region47: #{vae_forward.13} parent=1 // pred_check_branch
      %52 = sbr.rel (0) target = $region49
    $region48: #{vae_forward.13} parent=1 // pred_region
      _
    $region49: #{vae_forward.13} parent=1 // pred_fallthru
      _
    // Predicated region
    $region50: #{vae_forward.13} parent=1 // pred_check
      _
    $region51: #{vae_forward.13} parent=1 // pred_check_branch
      %54 = sbr.rel (0) target = $region53
    $region52: #{vae_forward.13} parent=1 // pred_region
      _
    $region53: #{vae_forward.13} parent=1 // pred_fallthru
      _
    // Predicated region
    $region54: #{vae_forward.13} parent=1 // pred_check
      _
    $region55: #{vae_forward.13} parent=1 // pred_check_branch
      %56 = sbr.rel (0) target = $region57
    $region56: #{vae_forward.13} parent=1 // pred_region
      _
    $region57: #{vae_forward.13} parent=1 // pred_fallthru
      _
    // Predicated region
    $region58: #{vae_forward.13} parent=1 // pred_check
      _
    $region59: #{vae_forward.13} parent=1 // pred_check_branch
      %58 = sbr.rel (0) target = $region61
    $region60: #{vae_forward.13} parent=1 // pred_region
      _
    $region61: #{vae_forward.13} parent=1 // pred_fallthru
      _
    // Predicated region
    $region62: #{vae_forward.13} parent=1 // pred_check
      _
    $region63: #{vae_forward.13} parent=1 // pred_check_branch
      %60 = sbr.rel (0) target = $region65
    $region64: #{vae_forward.13} parent=1 // pred_region
      _
    $region65: #{vae_forward.13} parent=1 // pred_fallthru
      _
    // Predicated region
    $region66: #{vae_forward.13} parent=1 // pred_check
      _
    $region67: #{vae_forward.13} parent=1 // pred_check_branch
      %62 = sbr.rel (0) target = $region69
    $region68: #{vae_forward.13} parent=1 // pred_region
      _
    $region69: #{vae_forward.13} parent=1 // pred_fallthru
      _
    // Predicated region
    $region70: #{vae_forward.13} parent=1 // pred_check
      _
    $region71: #{vae_forward.13} parent=1 // pred_check_branch
      %64 = sbr.rel (0) target = $region73
    $region72: #{vae_forward.13} parent=1 // pred_region
      _
    $region73: #{vae_forward.13} parent=1 // pred_fallthru
      _
    %v65 = vld [vmem:[%s0] sm:$0xff]
    %v66 = vld [vmem:[%s0 + $0x8] sm:$0xff]
    %v67 = vld [vmem:[%s0 + $0x10] sm:$0x3]
    %v68 = vld [vmem:[%s2] sm:$0xff]
    %v69 = vld [vmem:[%s2 + $0x8] sm:$0xff]
    %v70 = vld [vmem:[%s2 + $0x10] sm:$0xff]
    %v71 = vld [vmem:[%s2 + $0x18] sm:$0xff]
    %v72 = vld [vmem:[%s2 + $0x20] sm:$0xff]
    %v73 = vld [vmem:[%s2 + $0x28] sm:$0xff]
    %v74 = vld [vmem:[%s2 + $0x30] sm:$0xff]
    %v75 = vld [vmem:[%s2 + $0x38] sm:$0xff]
    %v76 = vld [vmem:[%s2 + $0x40] sm:$0xff]
    %v77 = vld [vmem:[%s2 + $0x48] sm:$0xff]
    %v78 = vld [vmem:[%s2 + $0x50] sm:$0xff]
    %v79 = vld [vmem:[%s2 + $0x58] sm:$0xff]
    %v80 = vld [vmem:[%s2 + $0x60] sm:$0xff]
    %v81 = vld [vmem:[%s2 + $0x68] sm:$0xff]
    %v82 = vld [vmem:[%s2 + $0x70] sm:$0xff]
    %v83 = vld [vmem:[%s2 + $0x78] sm:$0xff]
    %v84 = vld [vmem:[%s2 + $0x80] sm:$0xff]
    %v85 = vld [vmem:[%s2 + $0x88] sm:$0xff]
    %v86 = vld [vmem:[%s2 + $0x90] sm:$0xff]
    %v87 = vld [vmem:[%s2 + $0x98] sm:$0xff]
    %v88 = vld [vmem:[%s2 + $0xa0] sm:$0xff]
    %v89 = vld [vmem:[%s2 + $0xa8] sm:$0xff]
    %v90 = vld [vmem:[%s2 + $0xb0] sm:$0xff]
    %v91 = vld [vmem:[%s2 + $0xb8] sm:$0xff]
    %v92 = vld [vmem:[%s2 + $0xc0] sm:$0xff]
    %v93 = vld [vmem:[%s2 + $0xc8] sm:$0xff]
    %v94 = vld [vmem:[%s2 + $0xd0] sm:$0xff]
    %v95 = vld [vmem:[%s2 + $0xd8] sm:$0xff]
    %v96 = vld [vmem:[%s2 + $0xe0] sm:$0xff]
    %v97 = vld [vmem:[%s2 + $0xe8] sm:$0xff]
    %v98 = vld [vmem:[%s2 + $0xf0] sm:$0xff]
    %v99 = vld [vmem:[%s2 + $0xf8] sm:$0xff]
    %v100 = vld [vmem:[%s2 + $0x100] sm:$0xff]
    %v101 = vld [vmem:[%s2 + $0x108] sm:$0xff]
    %v102 = vld [vmem:[%s2 + $0x110] sm:$0xff]
    %v103 = vld [vmem:[%s2 + $0x118] sm:$0xff]
    %v104 = vld [vmem:[%s2 + $0x120] sm:$0xff]
    %v105 = vld [vmem:[%s2 + $0x128] sm:$0xff]
    %v106 = vld [vmem:[%s2 + $0x130] sm:$0xff]
    %v107 = vld [vmem:[%s2 + $0x138] sm:$0xff]
    %v108 = vld [vmem:[%s2 + $0x140] sm:$0xff]
    %v109 = vld [vmem:[%s2 + $0x148] sm:$0xff]
    %v110 = vld [vmem:[%s2 + $0x150] sm:$0xff]
    %v111 = vld [vmem:[%s2 + $0x158] sm:$0xff]
    %v112 = vld [vmem:[%s2 + $0x160] sm:$0xff]
    %v113 = vld [vmem:[%s2 + $0x168] sm:$0xff]
    %v114 = vld [vmem:[%s2 + $0x170] sm:$0xff]
    %v115 = vld [vmem:[%s2 + $0x178] sm:$0xff]
    %v116 = vld [vmem:[%s2 + $0x180] sm:$0xff]
    %v117 = vld [vmem:[%s2 + $0x188] sm:$0xff]
    %v118 = vld [vmem:[%s2 + $0x190] sm:$0xff]
    %v119 = vld [vmem:[%s2 + $0x198] sm:$0xff]
    %v120 = vld [vmem:[%s2 + $0x1a0] sm:$0xff]
    %v121 = vld [vmem:[%s2 + $0x1a8] sm:$0xff]
    %v122 = vld [vmem:[%s2 + $0x1b0] sm:$0xff]
    %v123 = vld [vmem:[%s2 + $0x1b8] sm:$0xff]
    %v124 = vld [vmem:[%s2 + $0x1c0] sm:$0xff]
    %v125 = vld [vmem:[%s2 + $0x1c8] sm:$0xff]
    %v126 = vld [vmem:[%s2 + $0x1d0] sm:$0xff]
    %v127 = vld [vmem:[%s2 + $0x1d8] sm:$0xff]
    %v128 = vld [vmem:[%s2 + $0x1e0] sm:$0xff]
    %v129 = vld [vmem:[%s2 + $0x1e8] sm:$0xff]
    %v130 = vld [vmem:[%s2 + $0x1f0] sm:$0xff]
    %v131 = vld [vmem:[%s2 + $0x1f8] sm:$0xff]
    %v132 = vld [vmem:[%s2 + $0x200] sm:$0xff]
    %v133 = vld [vmem:[%s2 + $0x208] sm:$0xff]
    %v134 = vld [vmem:[%s2 + $0x210] sm:$0xff]
    %v135 = vld [vmem:[%s2 + $0x218] sm:$0xff]
    %v136 = vld [vmem:[%s2 + $0x220] sm:$0xff]
    %v137 = vld [vmem:[%s2 + $0x228] sm:$0xff]
    %v138 = vld [vmem:[%s2 + $0x230] sm:$0xff]
    %v139 = vld [vmem:[%s2 + $0x238] sm:$0xff]
    %v140 = vld [vmem:[%s2 + $0x240] sm:$0xff]
    %v141 = vld [vmem:[%s2 + $0x248] sm:$0xff]
    %v142 = vld [vmem:[%s2 + $0x250] sm:$0xff]
    %v143 = vld [vmem:[%s2 + $0x258] sm:$0xff]
    %v144 = vld [vmem:[%s2 + $0x260] sm:$0xff]
    %v145 = vld [vmem:[%s2 + $0x268] sm:$0xff]
    %v146 = vld [vmem:[%s2 + $0x270] sm:$0xff]
    %v147 = vld [vmem:[%s2 + $0x278] sm:$0xff]
    %v148 = vld [vmem:[%s2 + $0x280] sm:$0xff]
    %v149 = vld [vmem:[%s2 + $0x288] sm:$0xff]
    %v150 = vld [vmem:[%s2 + $0x290] sm:$0xff]
    %v151 = vld [vmem:[%s2 + $0x298] sm:$0xff]
    %v152 = vld [vmem:[%s2 + $0x2a0] sm:$0xff]
    %v153 = vld [vmem:[%s2 + $0x2a8] sm:$0xff]
    %v154 = vld [vmem:[%s2 + $0x2b0] sm:$0xff]
    %v155 = vld [vmem:[%s2 + $0x2b8] sm:$0xff]
    %v156 = vld [vmem:[%s2 + $0x2c0] sm:$0xff]
    %v157 = vld [vmem:[%s2 + $0x2c8] sm:$0xff]
    %v158 = vld [vmem:[%s2 + $0x2d0] sm:$0xff]
    %v159 = vld [vmem:[%s2 + $0x2d8] sm:$0xff]
    %v160 = vld [vmem:[%s2 + $0x2e0] sm:$0xff]
    %v161 = vld [vmem:[%s2 + $0x2e8] sm:$0xff]
    %v162 = vld [vmem:[%s2 + $0x2f0] sm:$0xff]
    %v163 = vld [vmem:[%s2 + $0x2f8] sm:$0xff]
    %v164 = vld [vmem:[%s2 + $0x300] sm:$0xff]
    %v165 = vld [vmem:[%s2 + $0x308] sm:$0xff]
    %v166 = vld [vmem:[%s2 + $0x310] sm:$0xff]
    %v167 = vld [vmem:[%s2 + $0x318] sm:$0xff]
    %v168 = vld [vmem:[%s2 + $0x320] sm:$0xff]
    %v169 = vld [vmem:[%s2 + $0x328] sm:$0xff]
    %v170 = vld [vmem:[%s2 + $0x330] sm:$0xff]
    %v171 = vld [vmem:[%s2 + $0x338] sm:$0xff]
    %v172 = vld [vmem:[%s2 + $0x340] sm:$0xff]
    %v173 = vld [vmem:[%s2 + $0x348] sm:$0xff]
    %v174 = vld [vmem:[%s2 + $0x350] sm:$0xff]
    %v175 = vld [vmem:[%s2 + $0x358] sm:$0xff]
    %v176 = vld [vmem:[%s2 + $0x360] sm:$0xff]
    %v177 = vld [vmem:[%s2 + $0x368] sm:$0xff]
    %v178 = vld [vmem:[%s2 + $0x370] sm:$0xff]
    %v179 = vld [vmem:[%s2 + $0x378] sm:$0xff]
    %v180 = vld [vmem:[%s2 + $0x380] sm:$0xff]
    %v181 = vld [vmem:[%s2 + $0x388] sm:$0xff]
    %v182 = vld [vmem:[%s2 + $0x390] sm:$0xff]
    %v183 = vld [vmem:[%s2 + $0x398] sm:$0xff]
    %v184 = vld [vmem:[%s2 + $0x3a0] sm:$0xff]
    %v185 = vld [vmem:[%s2 + $0x3a8] sm:$0xff]
    %v186 = vld [vmem:[%s2 + $0x3b0] sm:$0xff]
    %v187 = vld [vmem:[%s2 + $0x3b8] sm:$0xff]
    %v188 = vld [vmem:[%s2 + $0x3c0] sm:$0xff]
    %v189 = vld [vmem:[%s2 + $0x3c8] sm:$0xff]
    %v190 = vld [vmem:[%s2 + $0x3d0] sm:$0xff]
    %v191 = vld [vmem:[%s2 + $0x3d8] sm:$0xff]
    %v192 = vld [vmem:[%s2 + $0x3e0] sm:$0xff]
    %v193 = vld [vmem:[%s2 + $0x3e8] sm:$0xff]
    %v194 = vld [vmem:[%s2 + $0x3f0] sm:$0xff]
    %v195 = vld [vmem:[%s2 + $0x3f8] sm:$0xff]
    %v196 = vld [vmem:[%s2 + $0x400] sm:$0xff]
    %v197 = vld [vmem:[%s2 + $0x408] sm:$0xff]
    %v198 = vld [vmem:[%s2 + $0x410] sm:$0xff]
    %v199 = vld [vmem:[%s2 + $0x418] sm:$0xff]
    %v200 = vld [vmem:[%s2 + $0x420] sm:$0xff]
    %v201 = vld [vmem:[%s2 + $0x428] sm:$0xff]
    %v202 = vld [vmem:[%s2 + $0x430] sm:$0xff]
    %v203 = vld [vmem:[%s2 + $0x438] sm:$0xff]
    %v204 = vld [vmem:[%s2 + $0x440] sm:$0xff]
    %v205 = vld [vmem:[%s2 + $0x448] sm:$0xff]
    %v206 = vld [vmem:[%s2 + $0x450] sm:$0xff]
    %v207 = vld [vmem:[%s2 + $0x458] sm:$0xff]
    %v208 = vld [vmem:[%s2 + $0x460] sm:$0xff]
    %v209 = vld [vmem:[%s2 + $0x468] sm:$0xff]
    %v210 = vld [vmem:[%s2 + $0x470] sm:$0xff]
    %v211 = vld [vmem:[%s2 + $0x478] sm:$0xff]
    %v212 = vld [vmem:[%s3] sm:$0x1]
    %v214 = vlaneseq
    %v215 = vshrl.u32 %v214, 7
    %v216 = vsub.s32 0, %v215
    %v217 = vrot.slane %v212, %v216
    %v222 = vcombine.high %v65, %v65
    %v224 = vunpack.c.l.s4 1983009808
    %v225 = vunpack.c.0.s8 %v224
    %v226 = vlaneseq
    %v227 = vshrl.u32 %v226, 7
    %v228 = vsub.s32 %v225, %v227
    %v229 = vrot.slane %v65, %v228
    %v231 = vunpack.c.l.s4 1983009808
    %v232 = vunpack.c.0.s8 %v231
    %v233 = vlaneseq
    %v234 = vshrl.u32 %v233, 7
    %v235 = vsub.s32 %v232, %v234
    %v236 = vrot.slane %v222, %v235
    %v237 = vcombine.high %v229, %v229
    %v238 = vcombine.high %v236, %v236
    %v239 = vcombine.high %v66, %v66
    %v241 = vunpack.c.l.s4 1983009808
    %v242 = vunpack.c.0.s8 %v241
    %v243 = vlaneseq
    %v244 = vshrl.u32 %v243, 7
    %v245 = vsub.s32 %v242, %v244
    %v246 = vrot.slane %v66, %v245
    %v248 = vunpack.c.l.s4 1983009808
    %v249 = vunpack.c.0.s8 %v248
    %v250 = vlaneseq
    %v251 = vshrl.u32 %v250, 7
    %v252 = vsub.s32 %v249, %v251
    %v253 = vrot.slane %v239, %v252
    %v254 = vcombine.high %v246, %v246
    %v255 = vcombine.high %v253, %v253
    %v257 = vunpack.c.l.s4 1983009808
    %v258 = vunpack.c.0.s8 %v257
    %v259 = vlaneseq
    %v260 = vshrl.u32 %v259, 7
    %v261 = vsub.s32 %v258, %v260
    %v262 = vrot.slane %v67, %v261
    %272 = vmatprep.subr.mxu0 0.0
    %273 = vmatpush1.msra.mxu0 %v68
    %274 = vmatprep.subr.mxu0 0.0
    %275 = vmatpush1.msra.mxu0 %v69
    %276 = vmatprep.subr.mxu0 0.0
    %277 = vmatpush1.msra.mxu0 %v70
    %278 = vmatprep.subr.mxu0 0.0
    %279 = vmatpush1.msra.mxu0 %v71
    %280 = vmatprep.subr.mxu0 0.0
    %281 = vmatpush1.msra.mxu0 %v72
    %282 = vmatprep.subr.mxu0 0.0
    %283 = vmatpush1.msra.mxu0 %v73
    %284 = vmatprep.subr.mxu0 0.0
    %285 = vmatpush1.msra.mxu0 %v74
    %286 = vmatprep.subr.mxu0 0.0
    %287 = vmatpush1.msra.mxu0 %v75
    %288 = vmatprep.subr.mxu0 0.0
    %289 = vmatpush1.msra.mxu0 %v76
    %290 = vmatprep.subr.mxu0 0.0
    %291 = vmatpush1.msra.mxu0 %v77
    %292 = vmatprep.subr.mxu0 0.0
    %293 = vmatpush1.msra.mxu0 %v78
    %294 = vmatprep.subr.mxu0 0.0
    %295 = vmatpush1.msra.mxu0 %v79
    %296 = vmatprep.subr.mxu0 0.0
    %297 = vmatpush1.msra.mxu0 %v80
    %298 = vmatprep.subr.mxu0 0.0
    %299 = vmatpush1.msra.mxu0 %v81
    %300 = vmatprep.subr.mxu0 0.0
    %301 = vmatpush1.msra.mxu0 %v82
    %302 = vmatprep.subr.mxu0 0.0
    %303 = vmatpush1.msra.mxu0 %v83
    %304 = vmatprep.subr.mxu0 0.0
    %305 = vmatpush1.msra.mxu0 %v84
    %306 = vmatprep.subr.mxu0 0.0
    %307 = vmatpush1.msra.mxu0 %v85
    %308 = vmatprep.subr.mxu0 0.0
    %309 = vmatpush1.msra.mxu0 %v86
    %310 = vmatprep.subr.mxu0 0.0
    %311 = vmatpush1.msra.mxu0 %v87
    %312 = vmatprep.subr.mxu0 0.0
    %313 = vmatpush1.msra.mxu0 %v88
    %314 = vmatprep.subr.mxu0 0.0
    %315 = vmatpush1.msra.mxu0 %v89
    %316 = vmatprep.subr.mxu0 0.0
    %317 = vmatpush1.msra.mxu0 %v90
    %318 = vmatprep.subr.mxu0 0.0
    %319 = vmatpush1.msra.mxu0 %v91
    %320 = vmatprep.subr.mxu0 0.0
    %321 = vmatpush1.msra.mxu0 %v92
    %322 = vmatprep.subr.mxu0 0.0
    %323 = vmatpush1.msra.mxu0 %v93
    %324 = vmatprep.subr.mxu0 0.0
    %325 = vmatpush1.msra.mxu0 %v94
    %326 = vmatprep.subr.mxu0 0.0
    %327 = vmatpush1.msra.mxu0 %v95
    %328 = vmatprep.subr.mxu0 0.0
    %329 = vmatpush1.msra.mxu0 %v96
    %330 = vmatprep.subr.mxu0 0.0
    %331 = vmatpush1.msra.mxu0 %v97
    %332 = vmatprep.subr.mxu0 0.0
    %333 = vmatpush1.msra.mxu0 %v98
    %334 = vmatprep.subr.mxu0 0.0
    %335 = vmatpush1.msra.mxu0 %v99
    %336 = vmatprep.mubr.f32.mxu0 %v237
    %337 = vmatmul.mubr.f32.gmra.mrb[0].mxu0 %v229
    %v338 = vpop.f32.mrb[0].mxu0
    %v339 = vadd.f32 %v217, %v338
    %v340 = vpop.f32.mrb[0].mxu0
    %341 = vdwg.mxu0
    %342 = vmatprep.subr.mxu0 0.0
    %343 = vmatpush1.msra.mxu0 %v100
    %344 = vmatprep.subr.mxu0 0.0
    %345 = vmatpush1.msra.mxu0 %v101
    %346 = vmatprep.subr.mxu0 0.0
    %347 = vmatpush1.msra.mxu0 %v102
    %348 = vmatprep.subr.mxu0 0.0
    %349 = vmatpush1.msra.mxu0 %v103
    %350 = vmatprep.subr.mxu0 0.0
    %351 = vmatpush1.msra.mxu0 %v104
    %352 = vmatprep.subr.mxu0 0.0
    %353 = vmatpush1.msra.mxu0 %v105
    %354 = vmatprep.subr.mxu0 0.0
    %355 = vmatpush1.msra.mxu0 %v106
    %356 = vmatprep.subr.mxu0 0.0
    %357 = vmatpush1.msra.mxu0 %v107
    %358 = vmatprep.subr.mxu0 0.0
    %359 = vmatpush1.msra.mxu0 %v108
    %360 = vmatprep.subr.mxu0 0.0
    %361 = vmatpush1.msra.mxu0 %v109
    %362 = vmatprep.subr.mxu0 0.0
    %363 = vmatpush1.msra.mxu0 %v110
    %364 = vmatprep.subr.mxu0 0.0
    %365 = vmatpush1.msra.mxu0 %v111
    %366 = vmatprep.subr.mxu0 0.0
    %367 = vmatpush1.msra.mxu0 %v112
    %368 = vmatprep.subr.mxu0 0.0
    %369 = vmatpush1.msra.mxu0 %v113
    %370 = vmatprep.subr.mxu0 0.0
    %371 = vmatpush1.msra.mxu0 %v114
    %372 = vmatprep.subr.mxu0 0.0
    %373 = vmatpush1.msra.mxu0 %v115
    %374 = vmatprep.subr.mxu0 0.0
    %375 = vmatpush1.msra.mxu0 %v116
    %376 = vmatprep.subr.mxu0 0.0
    %377 = vmatpush1.msra.mxu0 %v117
    %378 = vmatprep.subr.mxu0 0.0
    %379 = vmatpush1.msra.mxu0 %v118
    %380 = vmatprep.subr.mxu0 0.0
    %381 = vmatpush1.msra.mxu0 %v119
    %382 = vmatprep.subr.mxu0 0.0
    %383 = vmatpush1.msra.mxu0 %v120
    %384 = vmatprep.subr.mxu0 0.0
    %385 = vmatpush1.msra.mxu0 %v121
    %386 = vmatprep.subr.mxu0 0.0
    %387 = vmatpush1.msra.mxu0 %v122
    %388 = vmatprep.subr.mxu0 0.0
    %389 = vmatpush1.msra.mxu0 %v123
    %390 = vmatprep.subr.mxu0 0.0
    %391 = vmatpush1.msra.mxu0 %v124
    %392 = vmatprep.subr.mxu0 0.0
    %393 = vmatpush1.msra.mxu0 %v125
    %394 = vmatprep.subr.mxu0 0.0
    %395 = vmatpush1.msra.mxu0 %v126
    %396 = vmatprep.subr.mxu0 0.0
    %397 = vmatpush1.msra.mxu0 %v127
    %398 = vmatprep.subr.mxu0 0.0
    %399 = vmatpush1.msra.mxu0 %v128
    %400 = vmatprep.subr.mxu0 0.0
    %401 = vmatpush1.msra.mxu0 %v129
    %402 = vmatprep.subr.mxu0 0.0
    %403 = vmatpush1.msra.mxu0 %v130
    %404 = vmatprep.subr.mxu0 0.0
    %405 = vmatpush1.msra.mxu0 %v131
    %406 = vmatprep.mubr.f32.mxu0 %v238
    %407 = vmatmul.mubr.f32.gmra.mrb[0].mxu0 %v236
    %v408 = vpop.f32.mrb[0].mxu0
    %v409 = vadd.f32 %v339, %v408
    %v410 = vpop.f32.mrb[0].mxu0
    %411 = vdwg.mxu0
    %412 = vmatprep.subr.mxu0 0.0
    %413 = vmatpush1.msra.mxu0 %v132
    %414 = vmatprep.subr.mxu0 0.0
    %415 = vmatpush1.msra.mxu0 %v133
    %416 = vmatprep.subr.mxu0 0.0
    %417 = vmatpush1.msra.mxu0 %v134
    %418 = vmatprep.subr.mxu0 0.0
    %419 = vmatpush1.msra.mxu0 %v135
    %420 = vmatprep.subr.mxu0 0.0
    %421 = vmatpush1.msra.mxu0 %v136
    %422 = vmatprep.subr.mxu0 0.0
    %423 = vmatpush1.msra.mxu0 %v137
    %424 = vmatprep.subr.mxu0 0.0
    %425 = vmatpush1.msra.mxu0 %v138
    %426 = vmatprep.subr.mxu0 0.0
    %427 = vmatpush1.msra.mxu0 %v139
    %428 = vmatprep.subr.mxu0 0.0
    %429 = vmatpush1.msra.mxu0 %v140
    %430 = vmatprep.subr.mxu0 0.0
    %431 = vmatpush1.msra.mxu0 %v141
    %432 = vmatprep.subr.mxu0 0.0
    %433 = vmatpush1.msra.mxu0 %v142
    %434 = vmatprep.subr.mxu0 0.0
    %435 = vmatpush1.msra.mxu0 %v143
    %436 = vmatprep.subr.mxu0 0.0
    %437 = vmatpush1.msra.mxu0 %v144
    %438 = vmatprep.subr.mxu0 0.0
    %439 = vmatpush1.msra.mxu0 %v145
    %440 = vmatprep.subr.mxu0 0.0
    %441 = vmatpush1.msra.mxu0 %v146
    %442 = vmatprep.subr.mxu0 0.0
    %443 = vmatpush1.msra.mxu0 %v147
    %444 = vmatprep.subr.mxu0 0.0
    %445 = vmatpush1.msra.mxu0 %v148
    %446 = vmatprep.subr.mxu0 0.0
    %447 = vmatpush1.msra.mxu0 %v149
    %448 = vmatprep.subr.mxu0 0.0
    %449 = vmatpush1.msra.mxu0 %v150
    %450 = vmatprep.subr.mxu0 0.0
    %451 = vmatpush1.msra.mxu0 %v151
    %452 = vmatprep.subr.mxu0 0.0
    %453 = vmatpush1.msra.mxu0 %v152
    %454 = vmatprep.subr.mxu0 0.0
    %455 = vmatpush1.msra.mxu0 %v153
    %456 = vmatprep.subr.mxu0 0.0
    %457 = vmatpush1.msra.mxu0 %v154
    %458 = vmatprep.subr.mxu0 0.0
    %459 = vmatpush1.msra.mxu0 %v155
    %460 = vmatprep.subr.mxu0 0.0
    %461 = vmatpush1.msra.mxu0 %v156
    %462 = vmatprep.subr.mxu0 0.0
    %463 = vmatpush1.msra.mxu0 %v157
    %464 = vmatprep.subr.mxu0 0.0
    %465 = vmatpush1.msra.mxu0 %v158
    %466 = vmatprep.subr.mxu0 0.0
    %467 = vmatpush1.msra.mxu0 %v159
    %468 = vmatprep.subr.mxu0 0.0
    %469 = vmatpush1.msra.mxu0 %v160
    %470 = vmatprep.subr.mxu0 0.0
    %471 = vmatpush1.msra.mxu0 %v161
    %472 = vmatprep.subr.mxu0 0.0
    %473 = vmatpush1.msra.mxu0 %v162
    %474 = vmatprep.subr.mxu0 0.0
    %475 = vmatpush1.msra.mxu0 %v163
    %476 = vmatprep.mubr.f32.mxu0 %v254
    %477 = vmatmul.mubr.f32.gmra.mrb[0].mxu0 %v246
    %v478 = vpop.f32.mrb[0].mxu0
    %v479 = vadd.f32 %v409, %v478
    %v480 = vpop.f32.mrb[0].mxu0
    %481 = vdwg.mxu0
    %482 = vmatprep.subr.mxu0 0.0
    %483 = vmatpush1.msra.mxu0 %v164
    %484 = vmatprep.subr.mxu0 0.0
    %485 = vmatpush1.msra.mxu0 %v165
    %486 = vmatprep.subr.mxu0 0.0
    %487 = vmatpush1.msra.mxu0 %v166
    %488 = vmatprep.subr.mxu0 0.0
    %489 = vmatpush1.msra.mxu0 %v167
    %490 = vmatprep.subr.mxu0 0.0
    %491 = vmatpush1.msra.mxu0 %v168
    %492 = vmatprep.subr.mxu0 0.0
    %493 = vmatpush1.msra.mxu0 %v169
    %494 = vmatprep.subr.mxu0 0.0
    %495 = vmatpush1.msra.mxu0 %v170
    %496 = vmatprep.subr.mxu0 0.0
    %497 = vmatpush1.msra.mxu0 %v171
    %498 = vmatprep.subr.mxu0 0.0
    %499 = vmatpush1.msra.mxu0 %v172
    %500 = vmatprep.subr.mxu0 0.0
    %501 = vmatpush1.msra.mxu0 %v173
    %502 = vmatprep.subr.mxu0 0.0
    %503 = vmatpush1.msra.mxu0 %v174
    %504 = vmatprep.subr.mxu0 0.0
    %505 = vmatpush1.msra.mxu0 %v175
    %506 = vmatprep.subr.mxu0 0.0
    %507 = vmatpush1.msra.mxu0 %v176
    %508 = vmatprep.subr.mxu0 0.0
    %509 = vmatpush1.msra.mxu0 %v177
    %510 = vmatprep.subr.mxu0 0.0
    %511 = vmatpush1.msra.mxu0 %v178
    %512 = vmatprep.subr.mxu0 0.0
    %513 = vmatpush1.msra.mxu0 %v179
    %514 = vmatprep.subr.mxu0 0.0
    %515 = vmatpush1.msra.mxu0 %v180
    %516 = vmatprep.subr.mxu0 0.0
    %517 = vmatpush1.msra.mxu0 %v181
    %518 = vmatprep.subr.mxu0 0.0
    %519 = vmatpush1.msra.mxu0 %v182
    %520 = vmatprep.subr.mxu0 0.0
    %521 = vmatpush1.msra.mxu0 %v183
    %522 = vmatprep.subr.mxu0 0.0
    %523 = vmatpush1.msra.mxu0 %v184
    %524 = vmatprep.subr.mxu0 0.0
    %525 = vmatpush1.msra.mxu0 %v185
    %526 = vmatprep.subr.mxu0 0.0
    %527 = vmatpush1.msra.mxu0 %v186
    %528 = vmatprep.subr.mxu0 0.0
    %529 = vmatpush1.msra.mxu0 %v187
    %530 = vmatprep.subr.mxu0 0.0
    %531 = vmatpush1.msra.mxu0 %v188
    %532 = vmatprep.subr.mxu0 0.0
    %533 = vmatpush1.msra.mxu0 %v189
    %534 = vmatprep.subr.mxu0 0.0
    %535 = vmatpush1.msra.mxu0 %v190
    %536 = vmatprep.subr.mxu0 0.0
    %537 = vmatpush1.msra.mxu0 %v191
    %538 = vmatprep.subr.mxu0 0.0
    %539 = vmatpush1.msra.mxu0 %v192
    %540 = vmatprep.subr.mxu0 0.0
    %541 = vmatpush1.msra.mxu0 %v193
    %542 = vmatprep.subr.mxu0 0.0
    %543 = vmatpush1.msra.mxu0 %v194
    %544 = vmatprep.subr.mxu0 0.0
    %545 = vmatpush1.msra.mxu0 %v195
    %546 = vmatprep.mubr.f32.mxu0 %v255
    %547 = vmatmul.mubr.f32.gmra.mrb[0].mxu0 %v253
    %v548 = vpop.f32.mrb[0].mxu0
    %v549 = vadd.f32 %v479, %v548
    %v550 = vpop.f32.mrb[0].mxu0
    %551 = vdwg.mxu0
    %552 = vmatprep.subr.mxu0 0.0
    %553 = vmatpush1.msra.mxu0 %v196
    %554 = vmatprep.subr.mxu0 0.0
    %555 = vmatpush1.msra.mxu0 %v197
    %556 = vmatprep.subr.mxu0 0.0
    %557 = vmatpush1.msra.mxu0 %v198
    %558 = vmatprep.subr.mxu0 0.0
    %559 = vmatpush1.msra.mxu0 %v199
    %560 = vmatprep.subr.mxu0 0.0
    %561 = vmatpush1.msra.mxu0 %v200
    %562 = vmatprep.subr.mxu0 0.0
    %563 = vmatpush1.msra.mxu0 %v201
    %564 = vmatprep.subr.mxu0 0.0
    %565 = vmatpush1.msra.mxu0 %v202
    %566 = vmatprep.subr.mxu0 0.0
    %567 = vmatpush1.msra.mxu0 %v203
    %568 = vmatprep.subr.mxu0 0.0
    %569 = vmatpush1.msra.mxu0 %v204
    %570 = vmatprep.subr.mxu0 0.0
    %571 = vmatpush1.msra.mxu0 %v205
    %572 = vmatprep.subr.mxu0 0.0
    %573 = vmatpush1.msra.mxu0 %v206
    %574 = vmatprep.subr.mxu0 0.0
    %575 = vmatpush1.msra.mxu0 %v207
    %576 = vmatprep.subr.mxu0 0.0
    %577 = vmatpush1.msra.mxu0 %v208
    %578 = vmatprep.subr.mxu0 0.0
    %579 = vmatpush1.msra.mxu0 %v209
    %580 = vmatprep.subr.mxu0 0.0
    %581 = vmatpush1.msra.mxu0 %v210
    %582 = vmatprep.subr.mxu0 0.0
    %583 = vmatpush1.msra.mxu0 %v211
    %584 = vmatprep.subr.mxu0 0.0
    %585 = vmatpush1.msra.mxu0 0.0
    %586 = vmatprep.subr.mxu0 0.0
    %587 = vmatpush1.msra.mxu0 0.0
    %588 = vmatprep.subr.mxu0 0.0
    %589 = vmatpush1.msra.mxu0 0.0
    %590 = vmatprep.subr.mxu0 0.0
    %591 = vmatpush1.msra.mxu0 0.0
    %592 = vmatprep.subr.mxu0 0.0
    %593 = vmatpush1.msra.mxu0 0.0
    %594 = vmatprep.subr.mxu0 0.0
    %595 = vmatpush1.msra.mxu0 0.0
    %596 = vmatprep.subr.mxu0 0.0
    %597 = vmatpush1.msra.mxu0 0.0
    %598 = vmatprep.subr.mxu0 0.0
    %599 = vmatpush1.msra.mxu0 0.0
    %600 = vmatprep.subr.mxu0 0.0
    %601 = vmatpush1.msra.mxu0 0.0
    %602 = vmatprep.subr.mxu0 0.0
    %603 = vmatpush1.msra.mxu0 0.0
    %604 = vmatprep.subr.mxu0 0.0
    %605 = vmatpush1.msra.mxu0 0.0
    %606 = vmatprep.subr.mxu0 0.0
    %607 = vmatpush1.msra.mxu0 0.0
    %608 = vmatprep.subr.mxu0 0.0
    %609 = vmatpush1.msra.mxu0 0.0
    %610 = vmatprep.subr.mxu0 0.0
    %611 = vmatpush1.msra.mxu0 0.0
    %612 = vmatprep.subr.mxu0 0.0
    %613 = vmatpush1.msra.mxu0 0.0
    %614 = vmatprep.subr.mxu0 0.0
    %615 = vmatpush1.msra.mxu0 0.0
    %616 = vmatprep.mubr.f32.mxu0 0.0
    %617 = vmatmul.mubr.f32.gmra.mrb[0].mxu0 %v262
    %v618 = vpop.f32.mrb[0].mxu0
    %v619 = vadd.f32 %v549, %v618
    %v620 = vpop.f32.mrb[0].mxu0
    %621 = vdwg.mxu0
    %v622 = vld [vmem:[%s4] sm:$0x1]
    %v623 = vld [vmem:[%s5] sm:$0x1]
    %vm624 = vcmask 517120
    %v625 = vsel %vm624, %v619, 0.0
    %v626 = vrot.slane %v625, 4
    %v627 = vadd.f32 %v625, %v626
    %v628 = vrot.slane %v627, 2
    %v629 = vadd.f32 %v627, %v628
    %v630 = vrot.slane %v629, 1
    %v631 = vadd.f32 %v629, %v630
    %v632 = vmul.f32 %v631, 0.5
    %v633 = vsub.f32 %v619, %v632
    %v634 = vmul.f32 %v633, %v633
    %v635 = vsel %vm624, %v634, 0.0
    %v636 = vrot.slane %v635, 4
    %v637 = vadd.f32 %v635, %v636
    %v638 = vrot.slane %v637, 2
    %v639 = vadd.f32 %v637, %v638
    %v640 = vrot.slane %v639, 1
    %v641 = vadd.f32 %v639, %v640
    %v642 = vmul.f32 %v641, 0.5
    %v643 = vadd.f32 %v642, 1e-05
    %v644 = vrsqrt.pop %v643
    %v645 = vmul.f32 %v633, %v644
    %v647 = vlaneseq
    %v648 = vshrl.u32 %v647, 7
    %v649 = vsub.s32 0, %v648
    %v650 = vrot.slane %v622, %v649
    %v652 = vmul.f32 %v645, %v650
    %v654 = vlaneseq
    %v655 = vshrl.u32 %v654, 7
    %v656 = vsub.s32 0, %v655
    %v657 = vrot.slane %v623, %v656
    %v659 = vadd.f32 %v652, %v657
    %v660 = vmax.f32 %v659, 0.0
    %v661 = vld [vmem:[%s6] sm:$0xff]
    %v662 = vld [vmem:[%s6 + $0x8] sm:$0xff]
    %v663 = vld [vmem:[%s6 + $0x10] sm:$0xff]
    %v664 = vld [vmem:[%s6 + $0x18] sm:$0xff]
    %v665 = vld [vmem:[%s6 + $0x20] sm:$0xff]
    %v666 = vld [vmem:[%s6 + $0x28] sm:$0xff]
    %v667 = vld [vmem:[%s6 + $0x30] sm:$0xff]
    %v668 = vld [vmem:[%s6 + $0x38] sm:$0xff]
    %v669 = vld [vmem:[%s7] sm:$0x1]
    %v671 = vlaneseq
    %v672 = vshrl.u32 %v671, 7
    %v673 = vsub.s32 0, %v672
    %v674 = vrot.slane %v669, %v673
    %vm676 = vcmask 523264
    %v678 = vsel %vm676, %v660, 0
    %680 = vmatprep.subr.mxu0 0.0
    %681 = vmatpush1.msra.mxu0 %v661
    %682 = vmatprep.subr.mxu0 0.0
    %683 = vmatpush1.msra.mxu0 %v662
    %684 = vmatprep.subr.mxu0 0.0
    %685 = vmatpush1.msra.mxu0 %v663
    %686 = vmatprep.subr.mxu0 0.0
    %687 = vmatpush1.msra.mxu0 %v664
    %688 = vmatprep.subr.mxu0 0.0
    %689 = vmatpush1.msra.mxu0 %v665
    %690 = vmatprep.subr.mxu0 0.0
    %691 = vmatpush1.msra.mxu0 %v666
    %692 = vmatprep.subr.mxu0 0.0
    %693 = vmatpush1.msra.mxu0 %v667
    %694 = vmatprep.subr.mxu0 0.0
    %695 = vmatpush1.msra.mxu0 %v668
    %696 = vmatprep.subr.mxu0 0.0
    %697 = vmatpush1.msra.mxu0 0.0
    %698 = vmatprep.subr.mxu0 0.0
    %699 = vmatpush1.msra.mxu0 0.0
    %700 = vmatprep.subr.mxu0 0.0
    %701 = vmatpush1.msra.mxu0 0.0
    %702 = vmatprep.subr.mxu0 0.0
    %703 = vmatpush1.msra.mxu0 0.0
    %704 = vmatprep.subr.mxu0 0.0
    %705 = vmatpush1.msra.mxu0 0.0
    %706 = vmatprep.subr.mxu0 0.0
    %707 = vmatpush1.msra.mxu0 0.0
    %708 = vmatprep.subr.mxu0 0.0
    %709 = vmatpush1.msra.mxu0 0.0
    %710 = vmatprep.subr.mxu0 0.0
    %711 = vmatpush1.msra.mxu0 0.0
    %712 = vmatprep.subr.mxu0 0.0
    %713 = vmatpush1.msra.mxu0 0.0
    %714 = vmatprep.subr.mxu0 0.0
    %715 = vmatpush1.msra.mxu0 0.0
    %716 = vmatprep.subr.mxu0 0.0
    %717 = vmatpush1.msra.mxu0 0.0
    %718 = vmatprep.subr.mxu0 0.0
    %719 = vmatpush1.msra.mxu0 0.0
    %720 = vmatprep.subr.mxu0 0.0
    %721 = vmatpush1.msra.mxu0 0.0
    %722 = vmatprep.subr.mxu0 0.0
    %723 = vmatpush1.msra.mxu0 0.0
    %724 = vmatprep.subr.mxu0 0.0
    %725 = vmatpush1.msra.mxu0 0.0
    %726 = vmatprep.subr.mxu0 0.0
    %727 = vmatpush1.msra.mxu0 0.0
    %728 = vmatprep.subr.mxu0 0.0
    %729 = vmatpush1.msra.mxu0 0.0
    %730 = vmatprep.subr.mxu0 0.0
    %731 = vmatpush1.msra.mxu0 0.0
    %732 = vmatprep.subr.mxu0 0.0
    %733 = vmatpush1.msra.mxu0 0.0
    %734 = vmatprep.subr.mxu0 0.0
    %735 = vmatpush1.msra.mxu0 0.0
    %736 = vmatprep.subr.mxu0 0.0
    %737 = vmatpush1.msra.mxu0 0.0
    %738 = vmatprep.subr.mxu0 0.0
    %739 = vmatpush1.msra.mxu0 0.0
    %740 = vmatprep.subr.mxu0 0.0
    %741 = vmatpush1.msra.mxu0 0.0
    %742 = vmatprep.subr.mxu0 0.0
    %743 = vmatpush1.msra.mxu0 0.0
    %744 = vmatprep.mubr.f32.mxu0 0.0
    %745 = vmatmul.mubr.f32.gmra.mrb[0].mxu0 %v678
    %v746 = vpop.f32.mrb[0].mxu0
    %v747 = vadd.f32 %v674, %v746
    %v748 = vpop.f32.mrb[0].mxu0
    %749 = vdwg.mxu0
    %v750 = vld [vmem:[%s8] sm:$0xff]
    %v751 = vld [vmem:[%s8 + $0x8] sm:$0xff]
    %v752 = vld [vmem:[%s8 + $0x10] sm:$0xff]
    %v753 = vld [vmem:[%s8 + $0x18] sm:$0xff]
    %v754 = vld [vmem:[%s8 + $0x20] sm:$0xff]
    %v755 = vld [vmem:[%s8 + $0x28] sm:$0xff]
    %v756 = vld [vmem:[%s8 + $0x30] sm:$0xff]
    %v757 = vld [vmem:[%s8 + $0x38] sm:$0xff]
    %v758 = vld [vmem:[%s9] sm:$0x1]
    %v760 = vlaneseq
    %v761 = vshrl.u32 %v760, 7
    %v762 = vsub.s32 0, %v761
    %v763 = vrot.slane %v758, %v762
    %765 = vmatprep.subr.mxu0 0.0
    %766 = vmatpush1.msra.mxu0 %v750
    %767 = vmatprep.subr.mxu0 0.0
    %768 = vmatpush1.msra.mxu0 %v751
    %769 = vmatprep.subr.mxu0 0.0
    %770 = vmatpush1.msra.mxu0 %v752
    %771 = vmatprep.subr.mxu0 0.0
    %772 = vmatpush1.msra.mxu0 %v753
    %773 = vmatprep.subr.mxu0 0.0
    %774 = vmatpush1.msra.mxu0 %v754
    %775 = vmatprep.subr.mxu0 0.0
    %776 = vmatpush1.msra.mxu0 %v755
    %777 = vmatprep.subr.mxu0 0.0
    %778 = vmatpush1.msra.mxu0 %v756
    %779 = vmatprep.subr.mxu0 0.0
    %780 = vmatpush1.msra.mxu0 %v757
    %781 = vmatprep.subr.mxu0 0.0
    %782 = vmatpush1.msra.mxu0 0.0
    %783 = vmatprep.subr.mxu0 0.0
    %784 = vmatpush1.msra.mxu0 0.0
    %785 = vmatprep.subr.mxu0 0.0
    %786 = vmatpush1.msra.mxu0 0.0
    %787 = vmatprep.subr.mxu0 0.0
    %788 = vmatpush1.msra.mxu0 0.0
    %789 = vmatprep.subr.mxu0 0.0
    %790 = vmatpush1.msra.mxu0 0.0
    %791 = vmatprep.subr.mxu0 0.0
    %792 = vmatpush1.msra.mxu0 0.0
    %793 = vmatprep.subr.mxu0 0.0
    %794 = vmatpush1.msra.mxu0 0.0
    %795 = vmatprep.subr.mxu0 0.0
    %796 = vmatpush1.msra.mxu0 0.0
    %797 = vmatprep.subr.mxu0 0.0
    %798 = vmatpush1.msra.mxu0 0.0
    %799 = vmatprep.subr.mxu0 0.0
    %800 = vmatpush1.msra.mxu0 0.0
    %801 = vmatprep.subr.mxu0 0.0
    %802 = vmatpush1.msra.mxu0 0.0
    %803 = vmatprep.subr.mxu0 0.0
    %804 = vmatpush1.msra.mxu0 0.0
    %805 = vmatprep.subr.mxu0 0.0
    %806 = vmatpush1.msra.mxu0 0.0
    %807 = vmatprep.subr.mxu0 0.0
    %808 = vmatpush1.msra.mxu0 0.0
    %809 = vmatprep.subr.mxu0 0.0
    %810 = vmatpush1.msra.mxu0 0.0
    %811 = vmatprep.subr.mxu0 0.0
    %812 = vmatpush1.msra.mxu0 0.0
    %813 = vmatprep.subr.mxu0 0.0
    %814 = vmatpush1.msra.mxu0 0.0
    %815 = vmatprep.subr.mxu0 0.0
    %816 = vmatpush1.msra.mxu0 0.0
    %817 = vmatprep.subr.mxu0 0.0
    %818 = vmatpush1.msra.mxu0 0.0
    %819 = vmatprep.subr.mxu0 0.0
    %820 = vmatpush1.msra.mxu0 0.0
    %821 = vmatprep.subr.mxu0 0.0
    %822 = vmatpush1.msra.mxu0 0.0
    %823 = vmatprep.subr.mxu0 0.0
    %824 = vmatpush1.msra.mxu0 0.0
    %825 = vmatprep.subr.mxu0 0.0
    %826 = vmatpush1.msra.mxu0 0.0
    %827 = vmatprep.subr.mxu0 0.0
    %828 = vmatpush1.msra.mxu0 0.0
    %829 = vmatprep.mubr.f32.mxu0 0.0
    %830 = vmatmul.mubr.f32.gmra.mrb[0].mxu0 %v678
    %v831 = vpop.f32.mrb[0].mxu0
    %v832 = vadd.f32 %v763, %v831
    %v833 = vpop.f32.mrb[0].mxu0
    %834 = vdwg.mxu0
    %v835 = vld [vmem:[%s1] sm:$0x3]
    %v836 = vmul.f32 %v832, 0.5
    %v837 = vmul.f32 %v836, 1.442695
    %v838 = vpow.pop %v837
    %v839 = vmul.f32 %v835, %v838
    %v840 = vadd.f32 %v747, %v839
    %v841 = vld [vmem:[%s10] sm:$0xff]
    %v842 = vld [vmem:[%s11] sm:$0x1]
    %v844 = vlaneseq
    %v845 = vshrl.u32 %v844, 7
    %v846 = vsub.s32 0, %v845
    %v847 = vrot.slane %v842, %v846
    %vm849 = vcmask 64512
    %v851 = vsel %vm849, %v840, 0
    %853 = vmatprep.subr.mxu0 0.0
    %854 = vmatpush1.msra.mxu0 %v841
    %855 = vmatprep.subr.mxu0 0.0
    %856 = vmatpush1.msra.mxu0 0.0
    %857 = vmatprep.subr.mxu0 0.0
    %858 = vmatpush1.msra.mxu0 0.0
    %859 = vmatprep.subr.mxu0 0.0
    %860 = vmatpush1.msra.mxu0 0.0
    %861 = vmatprep.subr.mxu0 0.0
    %862 = vmatpush1.msra.mxu0 0.0
    %863 = vmatprep.subr.mxu0 0.0
    %864 = vmatpush1.msra.mxu0 0.0
    %865 = vmatprep.subr.mxu0 0.0
    %866 = vmatpush1.msra.mxu0 0.0
    %867 = vmatprep.subr.mxu0 0.0
    %868 = vmatpush1.msra.mxu0 0.0
    %869 = vmatprep.subr.mxu0 0.0
    %870 = vmatpush1.msra.mxu0 0.0
    %871 = vmatprep.subr.mxu0 0.0
    %872 = vmatpush1.msra.mxu0 0.0
    %873 = vmatprep.subr.mxu0 0.0
    %874 = vmatpush1.msra.mxu0 0.0
    %875 = vmatprep.subr.mxu0 0.0
    %876 = vmatpush1.msra.mxu0 0.0
    %877 = vmatprep.subr.mxu0 0.0
    %878 = vmatpush1.msra.mxu0 0.0
    %879 = vmatprep.subr.mxu0 0.0
    %880 = vmatpush1.msra.mxu0 0.0
    %881 = vmatprep.subr.mxu0 0.0
    %882 = vmatpush1.msra.mxu0 0.0
    %883 = vmatprep.subr.mxu0 0.0
    %884 = vmatpush1.msra.mxu0 0.0
    %885 = vmatprep.subr.mxu0 0.0
    %886 = vmatpush1.msra.mxu0 0.0
    %887 = vmatprep.subr.mxu0 0.0
    %888 = vmatpush1.msra.mxu0 0.0
    %889 = vmatprep.subr.mxu0 0.0
    %890 = vmatpush1.msra.mxu0 0.0
    %891 = vmatprep.subr.mxu0 0.0
    %892 = vmatpush1.msra.mxu0 0.0
    %893 = vmatprep.subr.mxu0 0.0
    %894 = vmatpush1.msra.mxu0 0.0
    %895 = vmatprep.subr.mxu0 0.0
    %896 = vmatpush1.msra.mxu0 0.0
    %897 = vmatprep.subr.mxu0 0.0
    %898 = vmatpush1.msra.mxu0 0.0
    %899 = vmatprep.subr.mxu0 0.0
    %900 = vmatpush1.msra.mxu0 0.0
    %901 = vmatprep.subr.mxu0 0.0
    %902 = vmatpush1.msra.mxu0 0.0
    %903 = vmatprep.subr.mxu0 0.0
    %904 = vmatpush1.msra.mxu0 0.0
    %905 = vmatprep.subr.mxu0 0.0
    %906 = vmatpush1.msra.mxu0 0.0
    %907 = vmatprep.subr.mxu0 0.0
    %908 = vmatpush1.msra.mxu0 0.0
    %909 = vmatprep.subr.mxu0 0.0
    %910 = vmatpush1.msra.mxu0 0.0
    %911 = vmatprep.subr.mxu0 0.0
    %912 = vmatpush1.msra.mxu0 0.0
    %913 = vmatprep.subr.mxu0 0.0
    %914 = vmatpush1.msra.mxu0 0.0
    %915 = vmatprep.subr.mxu0 0.0
    %916 = vmatpush1.msra.mxu0 0.0
    %917 = vmatprep.mubr.f32.mxu0 0.0
    %918 = vmatmul.mubr.f32.gmra.mrb[0].mxu0 %v851
    %v919 = vpop.f32.mrb[0].mxu0
    %v920 = vadd.f32 %v847, %v919
    %v921 = vpop.f32.mrb[0].mxu0
    %922 = vdwg.mxu0
    %v923 = vld [vmem:[%s12] sm:$0x1]
    %v924 = vld [vmem:[%s13] sm:$0x1]
    %v925 = vsel %vm624, %v920, 0.0
    %v926 = vrot.slane %v925, 4
    %v927 = vadd.f32 %v925, %v926
    %v928 = vrot.slane %v927, 2
    %v929 = vadd.f32 %v927, %v928
    %v930 = vrot.slane %v929, 1
    %v931 = vadd.f32 %v929, %v930
    %v932 = vmul.f32 %v931, 0.5
    %v933 = vsub.f32 %v920, %v932
    %v934 = vmul.f32 %v933, %v933
    %v935 = vsel %vm624, %v934, 0.0
    %v936 = vrot.slane %v935, 4
    %v937 = vadd.f32 %v935, %v936
    %v938 = vrot.slane %v937, 2
    %v939 = vadd.f32 %v937, %v938
    %v940 = vrot.slane %v939, 1
    %v941 = vadd.f32 %v939, %v940
    %v942 = vmul.f32 %v941, 0.5
    %v943 = vadd.f32 %v942, 1e-05
    %v944 = vrsqrt.pop %v943
    %v945 = vmul.f32 %v933, %v944
    %v947 = vlaneseq
    %v948 = vshrl.u32 %v947, 7
    %v949 = vsub.s32 0, %v948
    %v950 = vrot.slane %v923, %v949
    %v952 = vmul.f32 %v945, %v950
    %v954 = vlaneseq
    %v955 = vshrl.u32 %v954, 7
    %v956 = vsub.s32 0, %v955
    %v957 = vrot.slane %v924, %v956
    %v959 = vadd.f32 %v952, %v957
    %v960 = vmax.f32 %v959, 0.0
    %v961 = vld [vmem:[%s14] sm:$0xff]
    %v962 = vld [vmem:[%s14 + $0x8] sm:$0xff]
    %v963 = vld [vmem:[%s14 + $0x10] sm:$0xff]
    %v964 = vld [vmem:[%s14 + $0x18] sm:$0xff]
    %v965 = vld [vmem:[%s14 + $0x20] sm:$0xff]
    %v966 = vld [vmem:[%s14 + $0x28] sm:$0xff]
    %v967 = vld [vmem:[%s14 + $0x30] sm:$0xff]
    %v968 = vld [vmem:[%s14 + $0x38] sm:$0xff]
    %v969 = vld [vmem:[%s14 + $0x40] sm:$0xff]
    %v970 = vld [vmem:[%s14 + $0x48] sm:$0xff]
    %v971 = vld [vmem:[%s14 + $0x50] sm:$0xff]
    %v972 = vld [vmem:[%s14 + $0x58] sm:$0xff]
    %v973 = vld [vmem:[%s14 + $0x60] sm:$0xff]
    %v974 = vld [vmem:[%s14 + $0x68] sm:$0xff]
    %v975 = vld [vmem:[%s14 + $0x70] sm:$0xff]
    %v976 = vld [vmem:[%s14 + $0x78] sm:$0xff]
    %v977 = vld [vmem:[%s14 + $0x80] sm:$0xff]
    %v978 = vld [vmem:[%s14 + $0x88] sm:$0xff]
    %v979 = vld [vmem:[%s14 + $0x90] sm:$0xff]
    %v980 = vld [vmem:[%s14 + $0x98] sm:$0xff]
    %v981 = vld [vmem:[%s14 + $0xa0] sm:$0xff]
    %v982 = vld [vmem:[%s14 + $0xa8] sm:$0xff]
    %v983 = vld [vmem:[%s14 + $0xb0] sm:$0xff]
    %v984 = vld [vmem:[%s14 + $0xb8] sm:$0xff]
    %v985 = vld [vmem:[%s14 + $0xc0] sm:$0xff]
    %v986 = vld [vmem:[%s14 + $0xc8] sm:$0xff]
    %v987 = vld [vmem:[%s14 + $0xd0] sm:$0xff]
    %v988 = vld [vmem:[%s14 + $0xd8] sm:$0xff]
    %v989 = vld [vmem:[%s14 + $0xe0] sm:$0xff]
    %v990 = vld [vmem:[%s14 + $0xe8] sm:$0xff]
    %v991 = vld [vmem:[%s14 + $0xf0] sm:$0xff]
    %v992 = vld [vmem:[%s14 + $0xf8] sm:$0xff]
    %v993 = vld [vmem:[%s14 + $0x100] sm:$0xff]
    %v994 = vld [vmem:[%s14 + $0x108] sm:$0xff]
    %v995 = vld [vmem:[%s14 + $0x110] sm:$0xff]
    %v996 = vld [vmem:[%s14 + $0x118] sm:$0xff]
    %v997 = vld [vmem:[%s14 + $0x120] sm:$0xff]
    %v998 = vld [vmem:[%s14 + $0x128] sm:$0xff]
    %v999 = vld [vmem:[%s14 + $0x130] sm:$0xff]
    %v1000 = vld [vmem:[%s14 + $0x138] sm:$0xff]
    %v1001 = vld [vmem:[%s14 + $0x140] sm:$0xff]
    %v1002 = vld [vmem:[%s14 + $0x148] sm:$0xff]
    %v1003 = vld [vmem:[%s14 + $0x150] sm:$0xff]
    %v1004 = vld [vmem:[%s14 + $0x158] sm:$0xff]
    %v1005 = vld [vmem:[%s14 + $0x160] sm:$0xff]
    %v1006 = vld [vmem:[%s14 + $0x168] sm:$0xff]
    %v1007 = vld [vmem:[%s14 + $0x170] sm:$0xff]
    %v1008 = vld [vmem:[%s14 + $0x178] sm:$0xff]
    %v1009 = vld [vmem:[%s14 + $0x180] sm:$0xff]
    %v1010 = vld [vmem:[%s14 + $0x188] sm:$0xff]
    %v1011 = vld [vmem:[%s14 + $0x190] sm:$0xff]
    %v1012 = vld [vmem:[%s14 + $0x198] sm:$0xff]
    %v1013 = vld [vmem:[%s14 + $0x1a0] sm:$0xff]
    %v1014 = vld [vmem:[%s14 + $0x1a8] sm:$0xff]
    %v1015 = vld [vmem:[%s14 + $0x1b0] sm:$0xff]
    %v1016 = vld [vmem:[%s14 + $0x1b8] sm:$0xff]
    %v1017 = vld [vmem:[%s14 + $0x1c0] sm:$0xff]
    %v1018 = vld [vmem:[%s14 + $0x1c8] sm:$0xff]
    %v1019 = vld [vmem:[%s14 + $0x1d0] sm:$0xff]
    %v1020 = vld [vmem:[%s14 + $0x1d8] sm:$0xff]
    %v1021 = vld [vmem:[%s14 + $0x1e0] sm:$0xff]
    %v1022 = vld [vmem:[%s14 + $0x1e8] sm:$0xff]
    %v1023 = vld [vmem:[%s14 + $0x1f0] sm:$0xff]
    %v1024 = vld [vmem:[%s14 + $0x1f8] sm:$0xff]
    %v1025 = vld [vmem:[%s14 + $0x200] sm:$0xff]
    %v1026 = vld [vmem:[%s14 + $0x208] sm:$0xff]
    %v1027 = vld [vmem:[%s14 + $0x210] sm:$0xff]
    %v1028 = vld [vmem:[%s14 + $0x218] sm:$0xff]
    %v1029 = vld [vmem:[%s14 + $0x220] sm:$0xff]
    %v1030 = vld [vmem:[%s14 + $0x228] sm:$0xff]
    %v1031 = vld [vmem:[%s14 + $0x230] sm:$0xff]
    %v1032 = vld [vmem:[%s14 + $0x238] sm:$0xff]
    %v1033 = vld [vmem:[%s15] sm:$0xff]
    %v1034 = vld [vmem:[%s15 + $0x8] sm:$0x1]
    %v1037 = vlaneseq
    %v1038 = vshrl.u32 %v1037, 7
    %v1039 = vsub.s32 0, %v1038
    %v1040 = vrot.slane %v1033, %v1039
    %v1041 = vlaneseq
    %v1042 = vshrl.u32 %v1041, 7
    %v1043 = vsub.s32 1, %v1042
    %v1044 = vrot.slane %v1033, %v1043
    %v1045 = vlaneseq
    %v1046 = vshrl.u32 %v1045, 7
    %v1047 = vsub.s32 2, %v1046
    %v1048 = vrot.slane %v1033, %v1047
    %v1049 = vlaneseq
    %v1050 = vshrl.u32 %v1049, 7
    %v1051 = vsub.s32 3, %v1050
    %v1052 = vrot.slane %v1033, %v1051
    %v1053 = vlaneseq
    %v1054 = vshrl.u32 %v1053, 7
    %v1055 = vsub.s32 4, %v1054
    %v1056 = vrot.slane %v1033, %v1055
    %v1057 = vlaneseq
    %v1058 = vshrl.u32 %v1057, 7
    %v1059 = vsub.s32 5, %v1058
    %v1060 = vrot.slane %v1033, %v1059
    %v1061 = vlaneseq
    %v1062 = vshrl.u32 %v1061, 7
    %v1063 = vsub.s32 6, %v1062
    %v1064 = vrot.slane %v1033, %v1063
    %v1065 = vlaneseq
    %v1066 = vshrl.u32 %v1065, 7
    %v1067 = vsub.s32 7, %v1066
    %v1068 = vrot.slane %v1033, %v1067
    %v1069 = vlaneseq
    %v1070 = vshrl.u32 %v1069, 7
    %v1071 = vsub.s32 0, %v1070
    %v1072 = vrot.slane %v1034, %v1071
    %v1083 = vsel %vm676, %v960, 0
    %1085 = vmatprep.subr.mxu0 %v962
    %1086 = vmatpush1.msra.mxu0 %v961
    %1087 = vmatprep.subr.mxu0 %v971
    %1088 = vmatpush1.msra.mxu0 %v970
    %1089 = vmatprep.subr.mxu0 %v980
    %1090 = vmatpush1.msra.mxu0 %v979
    %1091 = vmatprep.subr.mxu0 %v989
    %1092 = vmatpush1.msra.mxu0 %v988
    %1093 = vmatprep.subr.mxu0 %v998
    %1094 = vmatpush1.msra.mxu0 %v997
    %1095 = vmatprep.subr.mxu0 %v1007
    %1096 = vmatpush1.msra.mxu0 %v1006
    %1097 = vmatprep.subr.mxu0 %v1016
    %1098 = vmatpush1.msra.mxu0 %v1015
    %1099 = vmatprep.subr.mxu0 %v1025
    %1100 = vmatpush1.msra.mxu0 %v1024
    %1101 = vmatprep.subr.mxu0 0.0
    %1102 = vmatpush1.msra.mxu0 0.0
    %1103 = vmatprep.subr.mxu0 0.0
    %1104 = vmatpush1.msra.mxu0 0.0
    %1105 = vmatprep.subr.mxu0 0.0
    %1106 = vmatpush1.msra.mxu0 0.0
    %1107 = vmatprep.subr.mxu0 0.0
    %1108 = vmatpush1.msra.mxu0 0.0
    %1109 = vmatprep.subr.mxu0 0.0
    %1110 = vmatpush1.msra.mxu0 0.0
    %1111 = vmatprep.subr.mxu0 0.0
    %1112 = vmatpush1.msra.mxu0 0.0
    %1113 = vmatprep.subr.mxu0 0.0
    %1114 = vmatpush1.msra.mxu0 0.0
    %1115 = vmatprep.subr.mxu0 0.0
    %1116 = vmatpush1.msra.mxu0 0.0
    %1117 = vmatprep.subr.mxu0 0.0
    %1118 = vmatpush1.msra.mxu0 0.0
    %1119 = vmatprep.subr.mxu0 0.0
    %1120 = vmatpush1.msra.mxu0 0.0
    %1121 = vmatprep.subr.mxu0 0.0
    %1122 = vmatpush1.msra.mxu0 0.0
    %1123 = vmatprep.subr.mxu0 0.0
    %1124 = vmatpush1.msra.mxu0 0.0
    %1125 = vmatprep.subr.mxu0 0.0
    %1126 = vmatpush1.msra.mxu0 0.0
    %1127 = vmatprep.subr.mxu0 0.0
    %1128 = vmatpush1.msra.mxu0 0.0
    %1129 = vmatprep.subr.mxu0 0.0
    %1130 = vmatpush1.msra.mxu0 0.0
    %1131 = vmatprep.subr.mxu0 0.0
    %1132 = vmatpush1.msra.mxu0 0.0
    %1133 = vmatprep.subr.mxu0 0.0
    %1134 = vmatpush1.msra.mxu0 0.0
    %1135 = vmatprep.subr.mxu0 0.0
    %1136 = vmatpush1.msra.mxu0 0.0
    %1137 = vmatprep.subr.mxu0 0.0
    %1138 = vmatpush1.msra.mxu0 0.0
    %1139 = vmatprep.subr.mxu0 0.0
    %1140 = vmatpush1.msra.mxu0 0.0
    %1141 = vmatprep.subr.mxu0 0.0
    %1142 = vmatpush1.msra.mxu0 0.0
    %1143 = vmatprep.subr.mxu0 0.0
    %1144 = vmatpush1.msra.mxu0 0.0
    %1145 = vmatprep.subr.mxu0 0.0
    %1146 = vmatpush1.msra.mxu0 0.0
    %1147 = vmatprep.subr.mxu0 0.0
    %1148 = vmatpush1.msra.mxu0 0.0
    %1149 = vmatprep.mubr.f32.mxu0 0.0
    %1150 = vmatmul.mubr.f32.gmra.mrb[0].mxu0 %v1083
    %v1151 = vpop.f32.mrb[0].mxu0
    %v1152 = vadd.f32 %v1040, %v1151
    %v1153 = vpop.f32.mrb[0].mxu0
    %v1154 = vadd.f32 %v1044, %v1153
    %1155 = vdwg.mxu0
    %1156 = vmatprep.subr.mxu0 %v964
    %1157 = vmatpush1.msra.mxu0 %v963
    %1158 = vmatprep.subr.mxu0 %v973
    %1159 = vmatpush1.msra.mxu0 %v972
    %1160 = vmatprep.subr.mxu0 %v982
    %1161 = vmatpush1.msra.mxu0 %v981
    %1162 = vmatprep.subr.mxu0 %v991
    %1163 = vmatpush1.msra.mxu0 %v990
    %1164 = vmatprep.subr.mxu0 %v1000
    %1165 = vmatpush1.msra.mxu0 %v999
    %1166 = vmatprep.subr.mxu0 %v1009
    %1167 = vmatpush1.msra.mxu0 %v1008
    %1168 = vmatprep.subr.mxu0 %v1018
    %1169 = vmatpush1.msra.mxu0 %v1017
    %1170 = vmatprep.subr.mxu0 %v1027
    %1171 = vmatpush1.msra.mxu0 %v1026
    %1172 = vmatprep.subr.mxu0 0.0
    %1173 = vmatpush1.msra.mxu0 0.0
    %1174 = vmatprep.subr.mxu0 0.0
    %1175 = vmatpush1.msra.mxu0 0.0
    %1176 = vmatprep.subr.mxu0 0.0
    %1177 = vmatpush1.msra.mxu0 0.0
    %1178 = vmatprep.subr.mxu0 0.0
    %1179 = vmatpush1.msra.mxu0 0.0
    %1180 = vmatprep.subr.mxu0 0.0
    %1181 = vmatpush1.msra.mxu0 0.0
    %1182 = vmatprep.subr.mxu0 0.0
    %1183 = vmatpush1.msra.mxu0 0.0
    %1184 = vmatprep.subr.mxu0 0.0
    %1185 = vmatpush1.msra.mxu0 0.0
    %1186 = vmatprep.subr.mxu0 0.0
    %1187 = vmatpush1.msra.mxu0 0.0
    %1188 = vmatprep.subr.mxu0 0.0
    %1189 = vmatpush1.msra.mxu0 0.0
    %1190 = vmatprep.subr.mxu0 0.0
    %1191 = vmatpush1.msra.mxu0 0.0
    %1192 = vmatprep.subr.mxu0 0.0
    %1193 = vmatpush1.msra.mxu0 0.0
    %1194 = vmatprep.subr.mxu0 0.0
    %1195 = vmatpush1.msra.mxu0 0.0
    %1196 = vmatprep.subr.mxu0 0.0
    %1197 = vmatpush1.msra.mxu0 0.0
    %1198 = vmatprep.subr.mxu0 0.0
    %1199 = vmatpush1.msra.mxu0 0.0
    %1200 = vmatprep.subr.mxu0 0.0
    %1201 = vmatpush1.msra.mxu0 0.0
    %1202 = vmatprep.subr.mxu0 0.0
    %1203 = vmatpush1.msra.mxu0 0.0
    %1204 = vmatprep.subr.mxu0 0.0
    %1205 = vmatpush1.msra.mxu0 0.0
    %1206 = vmatprep.subr.mxu0 0.0
    %1207 = vmatpush1.msra.mxu0 0.0
    %1208 = vmatprep.subr.mxu0 0.0
    %1209 = vmatpush1.msra.mxu0 0.0
    %1210 = vmatprep.subr.mxu0 0.0
    %1211 = vmatpush1.msra.mxu0 0.0
    %1212 = vmatprep.subr.mxu0 0.0
    %1213 = vmatpush1.msra.mxu0 0.0
    %1214 = vmatprep.subr.mxu0 0.0
    %1215 = vmatpush1.msra.mxu0 0.0
    %1216 = vmatprep.subr.mxu0 0.0
    %1217 = vmatpush1.msra.mxu0 0.0
    %1218 = vmatprep.subr.mxu0 0.0
    %1219 = vmatpush1.msra.mxu0 0.0
    %1220 = vmatprep.mubr.f32.mxu0 0.0
    %1221 = vmatmul.mubr.f32.gmra.mrb[0].mxu0 %v1083
    %v1222 = vpop.f32.mrb[0].mxu0
    %v1223 = vadd.f32 %v1048, %v1222
    %v1224 = vpop.f32.mrb[0].mxu0
    %v1225 = vadd.f32 %v1052, %v1224
    %1226 = vdwg.mxu0
    %1227 = vmatprep.subr.mxu0 %v966
    %1228 = vmatpush1.msra.mxu0 %v965
    %1229 = vmatprep.subr.mxu0 %v975
    %1230 = vmatpush1.msra.mxu0 %v974
    %1231 = vmatprep.subr.mxu0 %v984
    %1232 = vmatpush1.msra.mxu0 %v983
    %1233 = vmatprep.subr.mxu0 %v993
    %1234 = vmatpush1.msra.mxu0 %v992
    %1235 = vmatprep.subr.mxu0 %v1002
    %1236 = vmatpush1.msra.mxu0 %v1001
    %1237 = vmatprep.subr.mxu0 %v1011
    %1238 = vmatpush1.msra.mxu0 %v1010
    %1239 = vmatprep.subr.mxu0 %v1020
    %1240 = vmatpush1.msra.mxu0 %v1019
    %1241 = vmatprep.subr.mxu0 %v1029
    %1242 = vmatpush1.msra.mxu0 %v1028
    %1243 = vmatprep.subr.mxu0 0.0
    %1244 = vmatpush1.msra.mxu0 0.0
    %1245 = vmatprep.subr.mxu0 0.0
    %1246 = vmatpush1.msra.mxu0 0.0
    %1247 = vmatprep.subr.mxu0 0.0
    %1248 = vmatpush1.msra.mxu0 0.0
    %1249 = vmatprep.subr.mxu0 0.0
    %1250 = vmatpush1.msra.mxu0 0.0
    %1251 = vmatprep.subr.mxu0 0.0
    %1252 = vmatpush1.msra.mxu0 0.0
    %1253 = vmatprep.subr.mxu0 0.0
    %1254 = vmatpush1.msra.mxu0 0.0
    %1255 = vmatprep.subr.mxu0 0.0
    %1256 = vmatpush1.msra.mxu0 0.0
    %1257 = vmatprep.subr.mxu0 0.0
    %1258 = vmatpush1.msra.mxu0 0.0
    %1259 = vmatprep.subr.mxu0 0.0
    %1260 = vmatpush1.msra.mxu0 0.0
    %1261 = vmatprep.subr.mxu0 0.0
    %1262 = vmatpush1.msra.mxu0 0.0
    %1263 = vmatprep.subr.mxu0 0.0
    %1264 = vmatpush1.msra.mxu0 0.0
    %1265 = vmatprep.subr.mxu0 0.0
    %1266 = vmatpush1.msra.mxu0 0.0
    %1267 = vmatprep.subr.mxu0 0.0
    %1268 = vmatpush1.msra.mxu0 0.0
    %1269 = vmatprep.subr.mxu0 0.0
    %1270 = vmatpush1.msra.mxu0 0.0
    %1271 = vmatprep.subr.mxu0 0.0
    %1272 = vmatpush1.msra.mxu0 0.0
    %1273 = vmatprep.subr.mxu0 0.0
    %1274 = vmatpush1.msra.mxu0 0.0
    %1275 = vmatprep.subr.mxu0 0.0
    %1276 = vmatpush1.msra.mxu0 0.0
    %1277 = vmatprep.subr.mxu0 0.0
    %1278 = vmatpush1.msra.mxu0 0.0
    %1279 = vmatprep.subr.mxu0 0.0
    %1280 = vmatpush1.msra.mxu0 0.0
    %1281 = vmatprep.subr.mxu0 0.0
    %1282 = vmatpush1.msra.mxu0 0.0
    %1283 = vmatprep.subr.mxu0 0.0
    %1284 = vmatpush1.msra.mxu0 0.0
    %1285 = vmatprep.subr.mxu0 0.0
    %1286 = vmatpush1.msra.mxu0 0.0
    %1287 = vmatprep.subr.mxu0 0.0
    %1288 = vmatpush1.msra.mxu0 0.0
    %1289 = vmatprep.subr.mxu0 0.0
    %1290 = vmatpush1.msra.mxu0 0.0
    %1291 = vmatprep.mubr.f32.mxu0 0.0
    %1292 = vmatmul.mubr.f32.gmra.mrb[0].mxu0 %v1083
    %v1293 = vpop.f32.mrb[0].mxu0
    %v1294 = vadd.f32 %v1056, %v1293
    %v1295 = vpop.f32.mrb[0].mxu0
    %v1296 = vadd.f32 %v1060, %v1295
    %1297 = vdwg.mxu0
    %1298 = vmatprep.subr.mxu0 %v968
    %1299 = vmatpush1.msra.mxu0 %v967
    %1300 = vmatprep.subr.mxu0 %v977
    %1301 = vmatpush1.msra.mxu0 %v976
    %1302 = vmatprep.subr.mxu0 %v986
    %1303 = vmatpush1.msra.mxu0 %v985
    %1304 = vmatprep.subr.mxu0 %v995
    %1305 = vmatpush1.msra.mxu0 %v994
    %1306 = vmatprep.subr.mxu0 %v1004
    %1307 = vmatpush1.msra.mxu0 %v1003
    %1308 = vmatprep.subr.mxu0 %v1013
    %1309 = vmatpush1.msra.mxu0 %v1012
    %1310 = vmatprep.subr.mxu0 %v1022
    %1311 = vmatpush1.msra.mxu0 %v1021
    %1312 = vmatprep.subr.mxu0 %v1031
    %1313 = vmatpush1.msra.mxu0 %v1030
    %1314 = vmatprep.subr.mxu0 0.0
    %1315 = vmatpush1.msra.mxu0 0.0
    %1316 = vmatprep.subr.mxu0 0.0
    %1317 = vmatpush1.msra.mxu0 0.0
    %1318 = vmatprep.subr.mxu0 0.0
    %1319 = vmatpush1.msra.mxu0 0.0
    %1320 = vmatprep.subr.mxu0 0.0
    %1321 = vmatpush1.msra.mxu0 0.0
    %1322 = vmatprep.subr.mxu0 0.0
    %1323 = vmatpush1.msra.mxu0 0.0
    %1324 = vmatprep.subr.mxu0 0.0
    %1325 = vmatpush1.msra.mxu0 0.0
    %1326 = vmatprep.subr.mxu0 0.0
    %1327 = vmatpush1.msra.mxu0 0.0
    %1328 = vmatprep.subr.mxu0 0.0
    %1329 = vmatpush1.msra.mxu0 0.0
    %1330 = vmatprep.subr.mxu0 0.0
    %1331 = vmatpush1.msra.mxu0 0.0
    %1332 = vmatprep.subr.mxu0 0.0
    %1333 = vmatpush1.msra.mxu0 0.0
    %1334 = vmatprep.subr.mxu0 0.0
    %1335 = vmatpush1.msra.mxu0 0.0
    %1336 = vmatprep.subr.mxu0 0.0
    %1337 = vmatpush1.msra.mxu0 0.0
    %1338 = vmatprep.subr.mxu0 0.0
    %1339 = vmatpush1.msra.mxu0 0.0
    %1340 = vmatprep.subr.mxu0 0.0
    %1341 = vmatpush1.msra.mxu0 0.0
    %1342 = vmatprep.subr.mxu0 0.0
    %1343 = vmatpush1.msra.mxu0 0.0
    %1344 = vmatprep.subr.mxu0 0.0
    %1345 = vmatpush1.msra.mxu0 0.0
    %1346 = vmatprep.subr.mxu0 0.0
    %1347 = vmatpush1.msra.mxu0 0.0
    %1348 = vmatprep.subr.mxu0 0.0
    %1349 = vmatpush1.msra.mxu0 0.0
    %1350 = vmatprep.subr.mxu0 0.0
    %1351 = vmatpush1.msra.mxu0 0.0
    %1352 = vmatprep.subr.mxu0 0.0
    %1353 = vmatpush1.msra.mxu0 0.0
    %1354 = vmatprep.subr.mxu0 0.0
    %1355 = vmatpush1.msra.mxu0 0.0
    %1356 = vmatprep.subr.mxu0 0.0
    %1357 = vmatpush1.msra.mxu0 0.0
    %1358 = vmatprep.subr.mxu0 0.0
    %1359 = vmatpush1.msra.mxu0 0.0
    %1360 = vmatprep.subr.mxu0 0.0
    %1361 = vmatpush1.msra.mxu0 0.0
    %1362 = vmatprep.mubr.f32.mxu0 0.0
    %1363 = vmatmul.mubr.f32.gmra.mrb[0].mxu0 %v1083
    %v1364 = vpop.f32.mrb[0].mxu0
    %v1365 = vadd.f32 %v1064, %v1364
    %v1366 = vpop.f32.mrb[0].mxu0
    %v1367 = vadd.f32 %v1068, %v1366
    %1368 = vdwg.mxu0
    %1369 = vmatprep.subr.mxu0 0.0
    %1370 = vmatpush1.msra.mxu0 %v969
    %1371 = vmatprep.subr.mxu0 0.0
    %1372 = vmatpush1.msra.mxu0 %v978
    %1373 = vmatprep.subr.mxu0 0.0
    %1374 = vmatpush1.msra.mxu0 %v987
    %1375 = vmatprep.subr.mxu0 0.0
    %1376 = vmatpush1.msra.mxu0 %v996
    %1377 = vmatprep.subr.mxu0 0.0
    %1378 = vmatpush1.msra.mxu0 %v1005
    %1379 = vmatprep.subr.mxu0 0.0
    %1380 = vmatpush1.msra.mxu0 %v1014
    %1381 = vmatprep.subr.mxu0 0.0
    %1382 = vmatpush1.msra.mxu0 %v1023
    %1383 = vmatprep.subr.mxu0 0.0
    %1384 = vmatpush1.msra.mxu0 %v1032
    %1385 = vmatprep.subr.mxu0 0.0
    %1386 = vmatpush1.msra.mxu0 0.0
    %1387 = vmatprep.subr.mxu0 0.0
    %1388 = vmatpush1.msra.mxu0 0.0
    %1389 = vmatprep.subr.mxu0 0.0
    %1390 = vmatpush1.msra.mxu0 0.0
    %1391 = vmatprep.subr.mxu0 0.0
    %1392 = vmatpush1.msra.mxu0 0.0
    %1393 = vmatprep.subr.mxu0 0.0
    %1394 = vmatpush1.msra.mxu0 0.0
    %1395 = vmatprep.subr.mxu0 0.0
    %1396 = vmatpush1.msra.mxu0 0.0
    %1397 = vmatprep.subr.mxu0 0.0
    %1398 = vmatpush1.msra.mxu0 0.0
    %1399 = vmatprep.subr.mxu0 0.0
    %1400 = vmatpush1.msra.mxu0 0.0
    %1401 = vmatprep.subr.mxu0 0.0
    %1402 = vmatpush1.msra.mxu0 0.0
    %1403 = vmatprep.subr.mxu0 0.0
    %1404 = vmatpush1.msra.mxu0 0.0
    %1405 = vmatprep.subr.mxu0 0.0
    %1406 = vmatpush1.msra.mxu0 0.0
    %1407 = vmatprep.subr.mxu0 0.0
    %1408 = vmatpush1.msra.mxu0 0.0
    %1409 = vmatprep.subr.mxu0 0.0
    %1410 = vmatpush1.msra.mxu0 0.0
    %1411 = vmatprep.subr.mxu0 0.0
    %1412 = vmatpush1.msra.mxu0 0.0
    %1413 = vmatprep.subr.mxu0 0.0
    %1414 = vmatpush1.msra.mxu0 0.0
    %1415 = vmatprep.subr.mxu0 0.0
    %1416 = vmatpush1.msra.mxu0 0.0
    %1417 = vmatprep.subr.mxu0 0.0
    %1418 = vmatpush1.msra.mxu0 0.0
    %1419 = vmatprep.subr.mxu0 0.0
    %1420 = vmatpush1.msra.mxu0 0.0
    %1421 = vmatprep.subr.mxu0 0.0
    %1422 = vmatpush1.msra.mxu0 0.0
    %1423 = vmatprep.subr.mxu0 0.0
    %1424 = vmatpush1.msra.mxu0 0.0
    %1425 = vmatprep.subr.mxu0 0.0
    %1426 = vmatpush1.msra.mxu0 0.0
    %1427 = vmatprep.subr.mxu0 0.0
    %1428 = vmatpush1.msra.mxu0 0.0
    %1429 = vmatprep.subr.mxu0 0.0
    %1430 = vmatpush1.msra.mxu0 0.0
    %1431 = vmatprep.subr.mxu0 0.0
    %1432 = vmatpush1.msra.mxu0 0.0
    %1433 = vmatprep.mubr.f32.mxu0 0.0
    %1434 = vmatmul.mubr.f32.gmra.mrb[0].mxu0 %v1083
    %v1435 = vpop.f32.mrb[0].mxu0
    %v1436 = vadd.f32 %v1072, %v1435
    %v1437 = vpop.f32.mrb[0].mxu0
    %1438 = vdwg.mxu0
    %v1439 = vld [vmem:[%s16] sm:$0xff]
    %v1440 = vld [vmem:[%s16 + $0x8] sm:$0x1]
    %v1441 = vld [vmem:[%s17] sm:$0xff]
    %v1442 = vld [vmem:[%s17 + $0x8] sm:$0x1]
    %vm1443 = vcmask 1041408
    %v1444 = vsel %vm1443, %v1152, 0.0
    %v1445 = vrot.slane %v1444, 4
    %v1446 = vadd.f32 %v1444, %v1445
    %v1447 = vrot.slane %v1446, 2
    %v1448 = vadd.f32 %v1446, %v1447
    %v1449 = vrot.slane %v1448, 1
    %v1450 = vadd.f32 %v1448, %v1449
    %v1451 = vsel %vm1443, %v1154, 0.0
    %v1452 = vrot.slane %v1451, 4
    %v1453 = vadd.f32 %v1451, %v1452
    %v1454 = vrot.slane %v1453, 2
    %v1455 = vadd.f32 %v1453, %v1454
    %v1456 = vrot.slane %v1455, 1
    %v1457 = vadd.f32 %v1455, %v1456
    %v1458 = vsel %vm1443, %v1223, 0.0
    %v1459 = vrot.slane %v1458, 4
    %v1460 = vadd.f32 %v1458, %v1459
    %v1461 = vrot.slane %v1460, 2
    %v1462 = vadd.f32 %v1460, %v1461
    %v1463 = vrot.slane %v1462, 1
    %v1464 = vadd.f32 %v1462, %v1463
    %v1465 = vsel %vm1443, %v1225, 0.0
    %v1466 = vrot.slane %v1465, 4
    %v1467 = vadd.f32 %v1465, %v1466
    %v1468 = vrot.slane %v1467, 2
    %v1469 = vadd.f32 %v1467, %v1468
    %v1470 = vrot.slane %v1469, 1
    %v1471 = vadd.f32 %v1469, %v1470
    %v1472 = vsel %vm1443, %v1294, 0.0
    %v1473 = vrot.slane %v1472, 4
    %v1474 = vadd.f32 %v1472, %v1473
    %v1475 = vrot.slane %v1474, 2
    %v1476 = vadd.f32 %v1474, %v1475
    %v1477 = vrot.slane %v1476, 1
    %v1478 = vadd.f32 %v1476, %v1477
    %v1479 = vsel %vm1443, %v1296, 0.0
    %v1480 = vrot.slane %v1479, 4
    %v1481 = vadd.f32 %v1479, %v1480
    %v1482 = vrot.slane %v1481, 2
    %v1483 = vadd.f32 %v1481, %v1482
    %v1484 = vrot.slane %v1483, 1
    %v1485 = vadd.f32 %v1483, %v1484
    %v1486 = vsel %vm1443, %v1365, 0.0
    %v1487 = vrot.slane %v1486, 4
    %v1488 = vadd.f32 %v1486, %v1487
    %v1489 = vrot.slane %v1488, 2
    %v1490 = vadd.f32 %v1488, %v1489
    %v1491 = vrot.slane %v1490, 1
    %v1492 = vadd.f32 %v1490, %v1491
    %v1493 = vsel %vm1443, %v1367, 0.0
    %v1494 = vrot.slane %v1493, 4
    %v1495 = vadd.f32 %v1493, %v1494
    %v1496 = vrot.slane %v1495, 2
    %v1497 = vadd.f32 %v1495, %v1496
    %v1498 = vrot.slane %v1497, 1
    %v1499 = vadd.f32 %v1497, %v1498
    %v1500 = vsel %vm1443, %v1436, 0.0
    %v1501 = vrot.slane %v1500, 4
    %v1502 = vadd.f32 %v1500, %v1501
    %v1503 = vrot.slane %v1502, 2
    %v1504 = vadd.f32 %v1502, %v1503
    %v1505 = vrot.slane %v1504, 1
    %v1506 = vadd.f32 %v1504, %v1505
    %v1507 = vmul.f32 %v1450, 0.5
    %v1508 = vmul.f32 %v1457, 0.5
    %v1509 = vmul.f32 %v1464, 0.5
    %v1510 = vmul.f32 %v1471, 0.5
    %v1511 = vmul.f32 %v1478, 0.5
    %v1512 = vmul.f32 %v1485, 0.5
    %v1513 = vmul.f32 %v1492, 0.5
    %v1514 = vmul.f32 %v1499, 0.5
    %v1515 = vmul.f32 %v1506, 0.5
    %v1516 = vsub.f32 %v1152, %v1507
    %v1517 = vsub.f32 %v1154, %v1508
    %v1518 = vsub.f32 %v1223, %v1509
    %v1519 = vsub.f32 %v1225, %v1510
    %v1520 = vsub.f32 %v1294, %v1511
    %v1521 = vsub.f32 %v1296, %v1512
    %v1522 = vsub.f32 %v1365, %v1513
    %v1523 = vsub.f32 %v1367, %v1514
    %v1524 = vsub.f32 %v1436, %v1515
    %v1525 = vmul.f32 %v1516, %v1516
    %v1526 = vmul.f32 %v1517, %v1517
    %v1527 = vmul.f32 %v1518, %v1518
    %v1528 = vmul.f32 %v1519, %v1519
    %v1529 = vmul.f32 %v1520, %v1520
    %v1530 = vmul.f32 %v1521, %v1521
    %v1531 = vmul.f32 %v1522, %v1522
    %v1532 = vmul.f32 %v1523, %v1523
    %v1533 = vmul.f32 %v1524, %v1524
    %v1534 = vsel %vm1443, %v1525, 0.0
    %v1535 = vrot.slane %v1534, 4
    %v1536 = vadd.f32 %v1534, %v1535
    %v1537 = vrot.slane %v1536, 2
    %v1538 = vadd.f32 %v1536, %v1537
    %v1539 = vrot.slane %v1538, 1
    %v1540 = vadd.f32 %v1538, %v1539
    %v1541 = vsel %vm1443, %v1526, 0.0
    %v1542 = vrot.slane %v1541, 4
    %v1543 = vadd.f32 %v1541, %v1542
    %v1544 = vrot.slane %v1543, 2
    %v1545 = vadd.f32 %v1543, %v1544
    %v1546 = vrot.slane %v1545, 1
    %v1547 = vadd.f32 %v1545, %v1546
    %v1548 = vsel %vm1443, %v1527, 0.0
    %v1549 = vrot.slane %v1548, 4
    %v1550 = vadd.f32 %v1548, %v1549
    %v1551 = vrot.slane %v1550, 2
    %v1552 = vadd.f32 %v1550, %v1551
    %v1553 = vrot.slane %v1552, 1
    %v1554 = vadd.f32 %v1552, %v1553
    %v1555 = vsel %vm1443, %v1528, 0.0
    %v1556 = vrot.slane %v1555, 4
    %v1557 = vadd.f32 %v1555, %v1556
    %v1558 = vrot.slane %v1557, 2
    %v1559 = vadd.f32 %v1557, %v1558
    %v1560 = vrot.slane %v1559, 1
    %v1561 = vadd.f32 %v1559, %v1560
    %v1562 = vsel %vm1443, %v1529, 0.0
    %v1563 = vrot.slane %v1562, 4
    %v1564 = vadd.f32 %v1562, %v1563
    %v1565 = vrot.slane %v1564, 2
    %v1566 = vadd.f32 %v1564, %v1565
    %v1567 = vrot.slane %v1566, 1
    %v1568 = vadd.f32 %v1566, %v1567
    %v1569 = vsel %vm1443, %v1530, 0.0
    %v1570 = vrot.slane %v1569, 4
    %v1571 = vadd.f32 %v1569, %v1570
    %v1572 = vrot.slane %v1571, 2
    %v1573 = vadd.f32 %v1571, %v1572
    %v1574 = vrot.slane %v1573, 1
    %v1575 = vadd.f32 %v1573, %v1574
    %v1576 = vsel %vm1443, %v1531, 0.0
    %v1577 = vrot.slane %v1576, 4
    %v1578 = vadd.f32 %v1576, %v1577
    %v1579 = vrot.slane %v1578, 2
    %v1580 = vadd.f32 %v1578, %v1579
    %v1581 = vrot.slane %v1580, 1
    %v1582 = vadd.f32 %v1580, %v1581
    %v1583 = vsel %vm1443, %v1532, 0.0
    %v1584 = vrot.slane %v1583, 4
    %v1585 = vadd.f32 %v1583, %v1584
    %v1586 = vrot.slane %v1585, 2
    %v1587 = vadd.f32 %v1585, %v1586
    %v1588 = vrot.slane %v1587, 1
    %v1589 = vadd.f32 %v1587, %v1588
    %v1590 = vsel %vm1443, %v1533, 0.0
    %v1591 = vrot.slane %v1590, 4
    %v1592 = vadd.f32 %v1590, %v1591
    %v1593 = vrot.slane %v1592, 2
    %v1594 = vadd.f32 %v1592, %v1593
    %v1595 = vrot.slane %v1594, 1
    %v1596 = vadd.f32 %v1594, %v1595
    %v1597 = vmul.f32 %v1540, 0.5
    %v1598 = vmul.f32 %v1547, 0.5
    %v1599 = vmul.f32 %v1554, 0.5
    %v1600 = vmul.f32 %v1561, 0.5
    %v1601 = vmul.f32 %v1568, 0.5
    %v1602 = vmul.f32 %v1575, 0.5
    %v1603 = vmul.f32 %v1582, 0.5
    %v1604 = vmul.f32 %v1589, 0.5
    %v1605 = vmul.f32 %v1596, 0.5
    %v1606 = vadd.f32 %v1597, 1e-05
    %v1607 = vadd.f32 %v1598, 1e-05
    %v1608 = vadd.f32 %v1599, 1e-05
    %v1609 = vadd.f32 %v1600, 1e-05
    %v1610 = vadd.f32 %v1601, 1e-05
    %v1611 = vadd.f32 %v1602, 1e-05
    %v1612 = vadd.f32 %v1603, 1e-05
    %v1613 = vadd.f32 %v1604, 1e-05
    %v1614 = vadd.f32 %v1605, 1e-05
    %v1615 = vrsqrt.pop %v1606
    %v1616 = vrsqrt.pop %v1607
    %v1617 = vrsqrt.pop %v1608
    %v1618 = vrsqrt.pop %v1609
    %v1619 = vrsqrt.pop %v1610
    %v1620 = vrsqrt.pop %v1611
    %v1621 = vrsqrt.pop %v1612
    %v1622 = vrsqrt.pop %v1613
    %v1623 = vrsqrt.pop %v1614
    %v1624 = vmul.f32 %v1516, %v1615
    %v1625 = vmul.f32 %v1517, %v1616
    %v1626 = vmul.f32 %v1518, %v1617
    %v1627 = vmul.f32 %v1519, %v1618
    %v1628 = vmul.f32 %v1520, %v1619
    %v1629 = vmul.f32 %v1521, %v1620
    %v1630 = vmul.f32 %v1522, %v1621
    %v1631 = vmul.f32 %v1523, %v1622
    %v1632 = vmul.f32 %v1524, %v1623
    %v1635 = vlaneseq
    %v1636 = vshrl.u32 %v1635, 7
    %v1637 = vsub.s32 0, %v1636
    %v1638 = vrot.slane %v1439, %v1637
    %v1639 = vlaneseq
    %v1640 = vshrl.u32 %v1639, 7
    %v1641 = vsub.s32 1, %v1640
    %v1642 = vrot.slane %v1439, %v1641
    %v1643 = vlaneseq
    %v1644 = vshrl.u32 %v1643, 7
    %v1645 = vsub.s32 2, %v1644
    %v1646 = vrot.slane %v1439, %v1645
    %v1647 = vlaneseq
    %v1648 = vshrl.u32 %v1647, 7
    %v1649 = vsub.s32 3, %v1648
    %v1650 = vrot.slane %v1439, %v1649
    %v1651 = vlaneseq
    %v1652 = vshrl.u32 %v1651, 7
    %v1653 = vsub.s32 4, %v1652
    %v1654 = vrot.slane %v1439, %v1653
    %v1655 = vlaneseq
    %v1656 = vshrl.u32 %v1655, 7
    %v1657 = vsub.s32 5, %v1656
    %v1658 = vrot.slane %v1439, %v1657
    %v1659 = vlaneseq
    %v1660 = vshrl.u32 %v1659, 7
    %v1661 = vsub.s32 6, %v1660
    %v1662 = vrot.slane %v1439, %v1661
    %v1663 = vlaneseq
    %v1664 = vshrl.u32 %v1663, 7
    %v1665 = vsub.s32 7, %v1664
    %v1666 = vrot.slane %v1439, %v1665
    %v1667 = vlaneseq
    %v1668 = vshrl.u32 %v1667, 7
    %v1669 = vsub.s32 0, %v1668
    %v1670 = vrot.slane %v1440, %v1669
    %v1680 = vmul.f32 %v1624, %v1638
    %v1681 = vmul.f32 %v1625, %v1642
    %v1682 = vmul.f32 %v1626, %v1646
    %v1683 = vmul.f32 %v1627, %v1650
    %v1684 = vmul.f32 %v1628, %v1654
    %v1685 = vmul.f32 %v1629, %v1658
    %v1686 = vmul.f32 %v1630, %v1662
    %v1687 = vmul.f32 %v1631, %v1666
    %v1688 = vmul.f32 %v1632, %v1670
    %v1691 = vlaneseq
    %v1692 = vshrl.u32 %v1691, 7
    %v1693 = vsub.s32 0, %v1692
    %v1694 = vrot.slane %v1441, %v1693
    %v1695 = vlaneseq
    %v1696 = vshrl.u32 %v1695, 7
    %v1697 = vsub.s32 1, %v1696
    %v1698 = vrot.slane %v1441, %v1697
    %v1699 = vlaneseq
    %v1700 = vshrl.u32 %v1699, 7
    %v1701 = vsub.s32 2, %v1700
    %v1702 = vrot.slane %v1441, %v1701
    %v1703 = vlaneseq
    %v1704 = vshrl.u32 %v1703, 7
    %v1705 = vsub.s32 3, %v1704
    %v1706 = vrot.slane %v1441, %v1705
    %v1707 = vlaneseq
    %v1708 = vshrl.u32 %v1707, 7
    %v1709 = vsub.s32 4, %v1708
    %v1710 = vrot.slane %v1441, %v1709
    %v1711 = vlaneseq
    %v1712 = vshrl.u32 %v1711, 7
    %v1713 = vsub.s32 5, %v1712
    %v1714 = vrot.slane %v1441, %v1713
    %v1715 = vlaneseq
    %v1716 = vshrl.u32 %v1715, 7
    %v1717 = vsub.s32 6, %v1716
    %v1718 = vrot.slane %v1441, %v1717
    %v1719 = vlaneseq
    %v1720 = vshrl.u32 %v1719, 7
    %v1721 = vsub.s32 7, %v1720
    %v1722 = vrot.slane %v1441, %v1721
    %v1723 = vlaneseq
    %v1724 = vshrl.u32 %v1723, 7
    %v1725 = vsub.s32 0, %v1724
    %v1726 = vrot.slane %v1442, %v1725
    %v1736 = vadd.f32 %v1680, %v1694
    %v1737 = vadd.f32 %v1681, %v1698
    %v1738 = vadd.f32 %v1682, %v1702
    %v1739 = vadd.f32 %v1683, %v1706
    %v1740 = vadd.f32 %v1684, %v1710
    %v1741 = vadd.f32 %v1685, %v1714
    %v1742 = vadd.f32 %v1686, %v1718
    %v1743 = vadd.f32 %v1687, %v1722
    %v1744 = vadd.f32 %v1688, %v1726
    %v1745 = vmax.f32 %v1736, 0.0
    %v1746 = vmax.f32 %v1737, 0.0
    %v1747 = vmax.f32 %v1738, 0.0
    %v1748 = vmax.f32 %v1739, 0.0
    %v1749 = vmax.f32 %v1740, 0.0
    %v1750 = vmax.f32 %v1741, 0.0
    %v1751 = vmax.f32 %v1742, 0.0
    %v1752 = vmax.f32 %v1743, 0.0
    %v1753 = vmax.f32 %v1744, 0.0
    %vm1754 = vcmask 58368
    %1755 = vst.msk [vmem:[#allocation2] sm:$0x3] %vm1754, %v747
    %1756 = vst.msk [vmem:[#allocation4] sm:$0x3] %vm1754, %v832
    %1757 = vst.msk [vmem:[#allocation6] sm:$0x3] %vm1754, %v840
    %v1767 = vcombine.low %v1745, %v1746
    %v1768 = vcombine.low %v1747, %v1748
    %v1770 = vunpack.c.l.s4 1983009808
    %v1771 = vunpack.c.0.s8 %v1770
    %v1772 = vlaneseq
    %v1773 = vshrl.u32 %v1772, 7
    %v1774 = vsub.s32 %v1771, %v1773
    %v1775 = vrot.slane %v1767, %v1774
    %v1777 = vunpack.c.l.s4 1983009808
    %v1778 = vunpack.c.0.s8 %v1777
    %v1779 = vlaneseq
    %v1780 = vshrl.u32 %v1779, 7
    %v1781 = vsub.s32 %v1778, %v1780
    %v1782 = vrot.slane %v1768, %v1781
    %v1783 = vcombine.low %v1775, %v1782
    %v1784 = vcombine.low %v1749, %v1750
    %v1785 = vcombine.low %v1751, %v1752
    %v1787 = vunpack.c.l.s4 1983009808
    %v1788 = vunpack.c.0.s8 %v1787
    %v1789 = vlaneseq
    %v1790 = vshrl.u32 %v1789, 7
    %v1791 = vsub.s32 %v1788, %v1790
    %v1792 = vrot.slane %v1784, %v1791
    %v1794 = vunpack.c.l.s4 1983009808
    %v1795 = vunpack.c.0.s8 %v1794
    %v1796 = vlaneseq
    %v1797 = vshrl.u32 %v1796, 7
    %v1798 = vsub.s32 %v1795, %v1797
    %v1799 = vrot.slane %v1785, %v1798
    %v1800 = vcombine.low %v1792, %v1799
    %v1802 = vunpack.c.l.s4 1983009808
    %v1803 = vunpack.c.0.s8 %v1802
    %v1804 = vlaneseq
    %v1805 = vshrl.u32 %v1804, 7
    %v1806 = vsub.s32 %v1803, %v1805
    %v1807 = vrot.slane %v1753, %v1806
    %1811 = vst [vmem:[%s21] sm:$0xff] %v1783
    %1812 = vst [vmem:[%s21 + $0x8] sm:$0xff] %v1800
    %1813 = vst [vmem:[%s21 + $0x10] sm:$0x3] %v1807
    // Predicated region
    $region74: #{vae_forward.13} parent=1 // pred_check
      _
    $region75: #{vae_forward.13} parent=1 // pred_check_branch
      %1815 = sbr.rel (0) target = $region77
    $region76: #{vae_forward.13} parent=1 // pred_region
      %s1817 = ssub.s32 32, 32
      %1818 = vsyncadd [#allocation3], %s1817
      %s1820 = sshll.u32 [#allocation2], 4
      %s1821 = int_to_ptr.vmem [resolvable:$true] %s1820
      %1823 = dma.vmem_to_hbm [thread:$0]  %s1821, 32, %s18, [#allocation3]
    $region77: #{vae_forward.13} parent=1 // pred_fallthru
      _
    // Predicated region
    $region78: #{vae_forward.13} parent=1 // pred_check
      _
    $region79: #{vae_forward.13} parent=1 // pred_check_branch
      %1825 = sbr.rel (0) target = $region81
    $region80: #{vae_forward.13} parent=1 // pred_region
      %s1827 = ssub.s32 32, 32
      %1828 = vsyncadd [#allocation5], %s1827
      %s1830 = sshll.u32 [#allocation4], 4
      %s1831 = int_to_ptr.vmem [resolvable:$true] %s1830
      %1833 = dma.vmem_to_hbm [thread:$0]  %s1831, 32, %s19, [#allocation5]
    $region81: #{vae_forward.13} parent=1 // pred_fallthru
      _
    // Predicated region
    $region82: #{vae_forward.13} parent=1 // pred_check
      _
    $region83: #{vae_forward.13} parent=1 // pred_check_branch
      %1835 = sbr.rel (0) target = $region85
    $region84: #{vae_forward.13} parent=1 // pred_region
      %s1837 = ssub.s32 32, 32
      %1838 = vsyncadd [#allocation5], %s1837
      %s1840 = sshll.u32 [#allocation6], 4
      %s1841 = int_to_ptr.vmem [resolvable:$true] %s1840
      %1843 = dma.vmem_to_hbm [thread:$0]  %s1841, 32, %s20, [#allocation5]
    $region85: #{vae_forward.13} parent=1 // pred_fallthru
      _
    // Predicated region
    $region86: #{vae_forward.13} parent=1 // pred_check
      _
    $region87: #{vae_forward.13} parent=1 // pred_check_branch
      %1845 = sbr.rel (0) target = $region89
    $region88: #{vae_forward.13} parent=1 // pred_region
      _
    $region89: #{vae_forward.13} parent=1 // pred_fallthru
      _
    // Predicated region
    $region90: #{vae_forward.13} parent=1 // pred_check
      _
    $region91: #{vae_forward.13} parent=1 // pred_check_branch
      %1847 = sbr.rel (0) target = $region93
    $region92: #{vae_forward.13} parent=1 // pred_region
      %1848 = dma.done [#allocation3], 32
    $region93: #{vae_forward.13} parent=1 // pred_fallthru
      _
    // Predicated region
    $region94: #{vae_forward.13} parent=1 // pred_check
      _
    $region95: #{vae_forward.13} parent=1 // pred_check_branch
      %1850 = sbr.rel (0) target = $region97
    $region96: #{vae_forward.13} parent=1 // pred_region
      %1851 = dma.done [#allocation5], 32
    $region97: #{vae_forward.13} parent=1 // pred_fallthru
      _
    // Predicated region
    $region98: #{vae_forward.13} parent=1 // pred_check
      _
    $region99: #{vae_forward.13} parent=1 // pred_check_branch
      %1853 = sbr.rel (0) target = $region101
    $region100: #{vae_forward.13} parent=1 // pred_region
      %1854 = dma.done [#allocation5], 32
    $region101: #{vae_forward.13} parent=1 // pred_fallthru
      _
    // Predicated region
    $region102: #{vae_forward.13} parent=1 // pred_check
      _
    $region103: #{vae_forward.13} parent=1 // pred_check_branch
      %1856 = sbr.rel (0) target = $region105
    $region104: #{vae_forward.13} parent=1 // pred_region
      _
    $region105: #{vae_forward.13} parent=1 // pred_fallthru
      _
    %1857 = vsyncpa [#allocation3], 1
    %1858 = vsyncpa [#allocation5], 1

// kernel: vae_forward.14
$region0: #{vae_forward.14}
  #allocation0 [shape = 'u32[]', space=smem, size = 0x4, offset = 0x4, fixed_abs, tag = 'smem constant byte address 0x4 - core index']
  #allocation1 [shape = 'u32[144,128]{1,0:T(1,128)}', space=vmem, size = 0x12000, scoped, tag = 'internal scratch']
  %s0 = inlined_call_operand.vmem [shape: f32[32,512], index: 0, kind: input, shape index: {}]
  %s1 = inlined_call_operand.vmem [shape: f32[512,64], index: 1, kind: input, shape index: {}]
  %s2 = inlined_call_operand.vmem [shape: f32[1,64], index: 2, kind: input, shape index: {}]
  %s3 = inlined_call_operand.vmem [shape: f32[1,64], index: 3, kind: input, shape index: {}]
  %s4 = inlined_call_operand.vmem [shape: f32[1,64], index: 4, kind: input, shape index: {}]
  %s5 = inlined_call_operand.vmem [shape: f32[32,64], index: 5, kind: output, shape index: {}]
  %s6 = sld [smem:[#allocation0]]
  $region30: #{vae_forward.14} parent=0
    _
  %s8 = ssub.s32 1, %s6
  %s9 = scalar_select 0, %s8, %s6
  // Predicated region
  $region2: #{vae_forward.14} parent=0 // pred_check
    _
  $region3: #{vae_forward.14} parent=0 // pred_check_branch
    %11 = sbr.rel (0) target = $region5
  $region4: #{vae_forward.14} parent=0 // pred_region
    _
  $region5: #{vae_forward.14} parent=0 // pred_fallthru
    _
  // Predicated region
  $region6: #{vae_forward.14} parent=0 // pred_check
    _
  $region7: #{vae_forward.14} parent=0 // pred_check_branch
    %13 = sbr.rel (0) target = $region9
  $region8: #{vae_forward.14} parent=0 // pred_region
    _
  $region9: #{vae_forward.14} parent=0 // pred_fallthru
    _
  // Predicated region
  $region10: #{vae_forward.14} parent=0 // pred_check
    _
  $region11: #{vae_forward.14} parent=0 // pred_check_branch
    %15 = sbr.rel (0) target = $region13
  $region12: #{vae_forward.14} parent=0 // pred_region
    _
  $region13: #{vae_forward.14} parent=0 // pred_fallthru
    _
  // Predicated region
  $region14: #{vae_forward.14} parent=0 // pred_check
    _
  $region15: #{vae_forward.14} parent=0 // pred_check_branch
    %17 = sbr.rel (0) target = $region17
  $region16: #{vae_forward.14} parent=0 // pred_region
    _
  $region17: #{vae_forward.14} parent=0 // pred_fallthru
    _
  // Predicated region
  $region18: #{vae_forward.14} parent=0 // pred_check
    _
  $region19: #{vae_forward.14} parent=0 // pred_check_branch
    %19 = sbr.rel (0) target = $region21
  $region20: #{vae_forward.14} parent=0 // pred_region
    _
  $region21: #{vae_forward.14} parent=0 // pred_fallthru
    _
  %v21 = vld [vmem:[%s0] sm:$0xff]
  %v22 = vld [vmem:[%s0 + $0x8] sm:$0xff]
  %v23 = vld [vmem:[%s0 + $0x10] sm:$0xff]
  %v24 = vld [vmem:[%s0 + $0x18] sm:$0xff]
  %v25 = vld [vmem:[%s0 + $0x20] sm:$0xff]
  %v26 = vld [vmem:[%s0 + $0x28] sm:$0xff]
  %v27 = vld [vmem:[%s0 + $0x30] sm:$0xff]
  %v28 = vld [vmem:[%s0 + $0x38] sm:$0xff]
  %v29 = vld [vmem:[%s0 + $0x40] sm:$0xff]
  %v30 = vld [vmem:[%s0 + $0x48] sm:$0xff]
  %v31 = vld [vmem:[%s0 + $0x50] sm:$0xff]
  %v32 = vld [vmem:[%s0 + $0x58] sm:$0xff]
  %v33 = vld [vmem:[%s0 + $0x60] sm:$0xff]
  %v34 = vld [vmem:[%s0 + $0x68] sm:$0xff]
  %v35 = vld [vmem:[%s0 + $0x70] sm:$0xff]
  %v36 = vld [vmem:[%s0 + $0x78] sm:$0xff]
  %v37 = vpack.c.bf16 %v25, %v21
  %v38 = vpack.c.bf16 %v26, %v22
  %v39 = vpack.c.bf16 %v27, %v23
  %v40 = vpack.c.bf16 %v28, %v24
  %v41 = vpack.c.bf16 %v33, %v29
  %v42 = vpack.c.bf16 %v34, %v30
  %v43 = vpack.c.bf16 %v35, %v31
  %v44 = vpack.c.bf16 %v36, %v32
  %v45 = vld [vmem:[%s1] sm:$0xff]
  %v46 = vld [vmem:[%s1 + $0x8] sm:$0xff]
  %v47 = vld [vmem:[%s1 + $0x10] sm:$0xff]
  %v48 = vld [vmem:[%s1 + $0x18] sm:$0xff]
  %v49 = vld [vmem:[%s1 + $0x20] sm:$0xff]
  %v50 = vld [vmem:[%s1 + $0x28] sm:$0xff]
  %v51 = vld [vmem:[%s1 + $0x30] sm:$0xff]
  %v52 = vld [vmem:[%s1 + $0x38] sm:$0xff]
  %v53 = vld [vmem:[%s1 + $0x40] sm:$0xff]
  %v54 = vld [vmem:[%s1 + $0x48] sm:$0xff]
  %v55 = vld [vmem:[%s1 + $0x50] sm:$0xff]
  %v56 = vld [vmem:[%s1 + $0x58] sm:$0xff]
  %v57 = vld [vmem:[%s1 + $0x60] sm:$0xff]
  %v58 = vld [vmem:[%s1 + $0x68] sm:$0xff]
  %v59 = vld [vmem:[%s1 + $0x70] sm:$0xff]
  %v60 = vld [vmem:[%s1 + $0x78] sm:$0xff]
  %v61 = vld [vmem:[%s1 + $0x80] sm:$0xff]
  %v62 = vld [vmem:[%s1 + $0x88] sm:$0xff]
  %v63 = vld [vmem:[%s1 + $0x90] sm:$0xff]
  %v64 = vld [vmem:[%s1 + $0x98] sm:$0xff]
  %v65 = vld [vmem:[%s1 + $0xa0] sm:$0xff]
  %v66 = vld [vmem:[%s1 + $0xa8] sm:$0xff]
  %v67 = vld [vmem:[%s1 + $0xb0] sm:$0xff]
  %v68 = vld [vmem:[%s1 + $0xb8] sm:$0xff]
  %v69 = vld [vmem:[%s1 + $0xc0] sm:$0xff]
  %v70 = vld [vmem:[%s1 + $0xc8] sm:$0xff]
  %v71 = vld [vmem:[%s1 + $0xd0] sm:$0xff]
  %v72 = vld [vmem:[%s1 + $0xd8] sm:$0xff]
  %v73 = vld [vmem:[%s1 + $0xe0] sm:$0xff]
  %v74 = vld [vmem:[%s1 + $0xe8] sm:$0xff]
  %v75 = vld [vmem:[%s1 + $0xf0] sm:$0xff]
  %v76 = vld [vmem:[%s1 + $0xf8] sm:$0xff]
  %v77 = vld [vmem:[%s1 + $0x100] sm:$0xff]
  %v78 = vld [vmem:[%s1 + $0x108] sm:$0xff]
  %v79 = vld [vmem:[%s1 + $0x110] sm:$0xff]
  %v80 = vld [vmem:[%s1 + $0x118] sm:$0xff]
  %v81 = vld [vmem:[%s1 + $0x120] sm:$0xff]
  %v82 = vld [vmem:[%s1 + $0x128] sm:$0xff]
  %v83 = vld [vmem:[%s1 + $0x130] sm:$0xff]
  %v84 = vld [vmem:[%s1 + $0x138] sm:$0xff]
  %v85 = vld [vmem:[%s1 + $0x140] sm:$0xff]
  %v86 = vld [vmem:[%s1 + $0x148] sm:$0xff]
  %v87 = vld [vmem:[%s1 + $0x150] sm:$0xff]
  %v88 = vld [vmem:[%s1 + $0x158] sm:$0xff]
  %v89 = vld [vmem:[%s1 + $0x160] sm:$0xff]
  %v90 = vld [vmem:[%s1 + $0x168] sm:$0xff]
  %v91 = vld [vmem:[%s1 + $0x170] sm:$0xff]
  %v92 = vld [vmem:[%s1 + $0x178] sm:$0xff]
  %v93 = vld [vmem:[%s1 + $0x180] sm:$0xff]
  %v94 = vld [vmem:[%s1 + $0x188] sm:$0xff]
  %v95 = vld [vmem:[%s1 + $0x190] sm:$0xff]
  %v96 = vld [vmem:[%s1 + $0x198] sm:$0xff]
  %v97 = vld [vmem:[%s1 + $0x1a0] sm:$0xff]
  %v98 = vld [vmem:[%s1 + $0x1a8] sm:$0xff]
  %v99 = vld [vmem:[%s1 + $0x1b0] sm:$0xff]
  %v100 = vld [vmem:[%s1 + $0x1b8] sm:$0xff]
  %v101 = vld [vmem:[%s1 + $0x1c0] sm:$0xff]
  %v102 = vld [vmem:[%s1 + $0x1c8] sm:$0xff]
  %v103 = vld [vmem:[%s1 + $0x1d0] sm:$0xff]
  %v104 = vld [vmem:[%s1 + $0x1d8] sm:$0xff]
  %v105 = vld [vmem:[%s1 + $0x1e0] sm:$0xff]
  %v106 = vld [vmem:[%s1 + $0x1e8] sm:$0xff]
  %v107 = vld [vmem:[%s1 + $0x1f0] sm:$0xff]
  %v108 = vld [vmem:[%s1 + $0x1f8] sm:$0xff]
  %v109 = vpack.c.bf16 %v46, %v45
  %v110 = vpack.c.bf16 %v48, %v47
  %v111 = vpack.c.bf16 %v50, %v49
  %v112 = vpack.c.bf16 %v52, %v51
  %v113 = vpack.c.bf16 %v54, %v53
  %v114 = vpack.c.bf16 %v56, %v55
  %v115 = vpack.c.bf16 %v58, %v57
  %v116 = vpack.c.bf16 %v60, %v59
  %v117 = vpack.c.bf16 %v62, %v61
  %v118 = vpack.c.bf16 %v64, %v63
  %v119 = vpack.c.bf16 %v66, %v65
  %v120 = vpack.c.bf16 %v68, %v67
  %v121 = vpack.c.bf16 %v70, %v69
  %v122 = vpack.c.bf16 %v72, %v71
  %v123 = vpack.c.bf16 %v74, %v73
  %v124 = vpack.c.bf16 %v76, %v75
  %v125 = vpack.c.bf16 %v78, %v77
  %v126 = vpack.c.bf16 %v80, %v79
  %v127 = vpack.c.bf16 %v82, %v81
  %v128 = vpack.c.bf16 %v84, %v83
  %v129 = vpack.c.bf16 %v86, %v85
  %v130 = vpack.c.bf16 %v88, %v87
  %v131 = vpack.c.bf16 %v90, %v89
  %v132 = vpack.c.bf16 %v92, %v91
  %v133 = vpack.c.bf16 %v94, %v93
  %v134 = vpack.c.bf16 %v96, %v95
  %v135 = vpack.c.bf16 %v98, %v97
  %v136 = vpack.c.bf16 %v100, %v99
  %v137 = vpack.c.bf16 %v102, %v101
  %v138 = vpack.c.bf16 %v104, %v103
  %v139 = vpack.c.bf16 %v106, %v105
  %v140 = vpack.c.bf16 %v108, %v107
  %v141 = vld [vmem:[%s2] sm:$0x1]
  %v143 = vlaneseq
  %v144 = vshrl.u32 %v143, 7
  %v145 = vsub.s32 0, %v144
  %v146 = vrot.slane %v141, %v145
  %148 = vmatprep.subr.bf16.mxu0 0
  %149 = vmatpush1.bf16.msra.mxu0 %v109
  %150 = vmatprep.subr.bf16.mxu0 0
  %151 = vmatpush1.bf16.msra.mxu0 %v110
  %152 = vmatprep.subr.bf16.mxu0 0
  %153 = vmatpush1.bf16.msra.mxu0 %v111
  %154 = vmatprep.subr.bf16.mxu0 0
  %155 = vmatpush1.bf16.msra.mxu0 %v112
  %156 = vmatprep.subr.bf16.mxu0 0
  %157 = vmatpush1.bf16.msra.mxu0 %v113
  %158 = vmatprep.subr.bf16.mxu0 0
  %159 = vmatpush1.bf16.msra.mxu0 %v114
  %160 = vmatprep.subr.bf16.mxu0 0
  %161 = vmatpush1.bf16.msra.mxu0 %v115
  %162 = vmatprep.subr.bf16.mxu0 0
  %163 = vmatpush1.bf16.msra.mxu0 %v116
  %164 = vmatprep.subr.bf16.mxu0 0
  %165 = vmatpush1.bf16.msra.mxu0 %v117
  %166 = vmatprep.subr.bf16.mxu0 0
  %167 = vmatpush1.bf16.msra.mxu0 %v118
  %168 = vmatprep.subr.bf16.mxu0 0
  %169 = vmatpush1.bf16.msra.mxu0 %v119
  %170 = vmatprep.subr.bf16.mxu0 0
  %171 = vmatpush1.bf16.msra.mxu0 %v120
  %172 = vmatprep.subr.bf16.mxu0 0
  %173 = vmatpush1.bf16.msra.mxu0 %v121
  %174 = vmatprep.subr.bf16.mxu0 0
  %175 = vmatpush1.bf16.msra.mxu0 %v122
  %176 = vmatprep.subr.bf16.mxu0 0
  %177 = vmatpush1.bf16.msra.mxu0 %v123
  %178 = vmatprep.subr.bf16.mxu0 0
  %179 = vmatpush1.bf16.msra.mxu0 %v124
  %180 = vmatprep.mubr.bf16.mxu0 %v38
  %181 = vmatmul.mubr.bf16.gmra.mrb[0].mxu0 %v37
  %v182 = vpop.f32.mrb[0].mxu0
  %v183 = vadd.f32 %v146, %v182
  %v184 = vpop.f32.mrb[0].mxu0
  %v185 = vpop.f32.mrb[0].mxu0
  %v186 = vadd.f32 %v146, %v185
  %v187 = vpop.f32.mrb[0].mxu0
  %188 = vmatprep.mubr.bf16.mxu0 %v42
  %189 = vmatmul.mubr.bf16.gmra.mrb[0].mxu0 %v41
  %v190 = vpop.f32.mrb[0].mxu0
  %v191 = vadd.f32 %v146, %v190
  %v192 = vpop.f32.mrb[0].mxu0
  %v193 = vpop.f32.mrb[0].mxu0
  %v194 = vadd.f32 %v146, %v193
  %v195 = vpop.f32.mrb[0].mxu0
  %196 = vdwg.mxu0
  %197 = vmatprep.subr.bf16.mxu0 0
  %198 = vmatpush1.bf16.msra.mxu0 %v125
  %199 = vmatprep.subr.bf16.mxu0 0
  %200 = vmatpush1.bf16.msra.mxu0 %v126
  %201 = vmatprep.subr.bf16.mxu0 0
  %202 = vmatpush1.bf16.msra.mxu0 %v127
  %203 = vmatprep.subr.bf16.mxu0 0
  %204 = vmatpush1.bf16.msra.mxu0 %v128
  %205 = vmatprep.subr.bf16.mxu0 0
  %206 = vmatpush1.bf16.msra.mxu0 %v129
  %207 = vmatprep.subr.bf16.mxu0 0
  %208 = vmatpush1.bf16.msra.mxu0 %v130
  %209 = vmatprep.subr.bf16.mxu0 0
  %210 = vmatpush1.bf16.msra.mxu0 %v131
  %211 = vmatprep.subr.bf16.mxu0 0
  %212 = vmatpush1.bf16.msra.mxu0 %v132
  %213 = vmatprep.subr.bf16.mxu0 0
  %214 = vmatpush1.bf16.msra.mxu0 %v133
  %215 = vmatprep.subr.bf16.mxu0 0
  %216 = vmatpush1.bf16.msra.mxu0 %v134
  %217 = vmatprep.subr.bf16.mxu0 0
  %218 = vmatpush1.bf16.msra.mxu0 %v135
  %219 = vmatprep.subr.bf16.mxu0 0
  %220 = vmatpush1.bf16.msra.mxu0 %v136
  %221 = vmatprep.subr.bf16.mxu0 0
  %222 = vmatpush1.bf16.msra.mxu0 %v137
  %223 = vmatprep.subr.bf16.mxu0 0
  %224 = vmatpush1.bf16.msra.mxu0 %v138
  %225 = vmatprep.subr.bf16.mxu0 0
  %226 = vmatpush1.bf16.msra.mxu0 %v139
  %227 = vmatprep.subr.bf16.mxu0 0
  %228 = vmatpush1.bf16.msra.mxu0 %v140
  %229 = vmatprep.mubr.bf16.mxu0 %v40
  %230 = vmatmul.mubr.bf16.gmra.mrb[0].mxu0 %v39
  %v231 = vpop.f32.mrb[0].mxu0
  %v232 = vadd.f32 %v183, %v231
  %v233 = vpop.f32.mrb[0].mxu0
  %v234 = vpop.f32.mrb[0].mxu0
  %v235 = vadd.f32 %v186, %v234
  %v236 = vpop.f32.mrb[0].mxu0
  %237 = vmatprep.mubr.bf16.mxu0 %v44
  %238 = vmatmul.mubr.bf16.gmra.mrb[0].mxu0 %v43
  %v239 = vpop.f32.mrb[0].mxu0
  %v240 = vadd.f32 %v191, %v239
  %v241 = vpop.f32.mrb[0].mxu0
  %v242 = vpop.f32.mrb[0].mxu0
  %v243 = vadd.f32 %v194, %v242
  %v244 = vpop.f32.mrb[0].mxu0
  %245 = vdwg.mxu0
  %vm246 = vcmask 523264
  %v247 = vsel %vm246, %v232, 0.0
  %v248 = vsel %vm246, %v235, 0.0
  %v249 = vadd.f32 %v247, %v248
  %v250 = vsel %vm246, %v240, 0.0
  %v251 = vadd.f32 %v249, %v250
  %v252 = vsel %vm246, %v243, 0.0
  %v253 = vadd.f32 %v251, %v252
  %v254 = vrot.slane %v253, 4
  %v255 = vadd.f32 %v253, %v254
  %v256 = vrot.slane %v255, 2
  %v257 = vadd.f32 %v255, %v256
  %v258 = vrot.slane %v257, 1
  %v259 = vadd.f32 %v257, %v258
  %v260 = vmul.f32 %v259, 0.03125
  %v261 = vsub.f32 %v232, %v260
  %v262 = vsub.f32 %v235, %v260
  %v263 = vsub.f32 %v240, %v260
  %v264 = vsub.f32 %v243, %v260
  %v265 = vmul.f32 %v261, %v261
  %v266 = vmul.f32 %v262, %v262
  %v267 = vmul.f32 %v263, %v263
  %v268 = vmul.f32 %v264, %v264
  %v269 = vsel %vm246, %v265, 0.0
  %v270 = vsel %vm246, %v266, 0.0
  %v271 = vadd.f32 %v269, %v270
  %v272 = vsel %vm246, %v267, 0.0
  %v273 = vadd.f32 %v271, %v272
  %v274 = vsel %vm246, %v268, 0.0
  %v275 = vadd.f32 %v273, %v274
  %v276 = vrot.slane %v275, 4
  %v277 = vadd.f32 %v275, %v276
  %v278 = vrot.slane %v277, 2
  %v279 = vadd.f32 %v277, %v278
  %v280 = vrot.slane %v279, 1
  %v281 = vadd.f32 %v279, %v280
  %v282 = vmul.f32 %v281, 0.03125
  %v283 = vadd.f32 %v282, 1e-05
  %v284 = vrsqrt.pop %v283
  %v285 = vmul.f32 %v261, %v284
  %v286 = vmul.f32 %v262, %v284
  %v287 = vmul.f32 %v263, %v284
  %v288 = vmul.f32 %v264, %v284
  %v289 = vld [vmem:[%s3] sm:$0x1]
  %v291 = vlaneseq
  %v292 = vshrl.u32 %v291, 7
  %v293 = vsub.s32 0, %v292
  %v294 = vrot.slane %v289, %v293
  %v296 = vmul.f32 %v285, %v294
  %v297 = vmul.f32 %v286, %v294
  %v298 = vmul.f32 %v287, %v294
  %v299 = vmul.f32 %v288, %v294
  %v300 = vld [vmem:[%s4] sm:$0x1]
  %v302 = vlaneseq
  %v303 = vshrl.u32 %v302, 7
  %v304 = vsub.s32 0, %v303
  %v305 = vrot.slane %v300, %v304
  %v307 = vadd.f32 %v296, %v305
  %v308 = vadd.f32 %v297, %v305
  %v309 = vadd.f32 %v298, %v305
  %v310 = vadd.f32 %v299, %v305
  %v311 = vmax.f32 %v307, 0.0
  %v312 = vmax.f32 %v308, 0.0
  %v313 = vmax.f32 %v309, 0.0
  %v314 = vmax.f32 %v310, 0.0
  %315 = vst.msk [vmem:[%s5] sm:$0xff] %vm246, %v311
  %316 = vst.msk [vmem:[%s5 + $0x8] sm:$0xff] %vm246, %v312
  %317 = vst.msk [vmem:[%s5 + $0x10] sm:$0xff] %vm246, %v313
  %318 = vst.msk [vmem:[%s5 + $0x18] sm:$0xff] %vm246, %v314
  // Predicated region
  $region22: #{vae_forward.14} parent=0 // pred_check
    _
  $region23: #{vae_forward.14} parent=0 // pred_check_branch
    %320 = sbr.rel (0) target = $region25
  $region24: #{vae_forward.14} parent=0 // pred_region
    _
  $region25: #{vae_forward.14} parent=0 // pred_fallthru
    _
  // Predicated region
  $region26: #{vae_forward.14} parent=0 // pred_check
    _
  $region27: #{vae_forward.14} parent=0 // pred_check_branch
    %322 = sbr.rel (0) target = $region29
  $region28: #{vae_forward.14} parent=0 // pred_region
    _
  $region29: #{vae_forward.14} parent=0 // pred_fallthru
    _

// kernel: vae_forward.15
$region0: #{vae_forward.15}
  #allocation0 [shape = 'u32[]', space=smem, size = 0x4, offset = 0x4, fixed_abs, tag = 'smem constant byte address 0x4 - core index']
  #allocation1 [shape = 'u32[144,128]{1,0:T(1,128)}', space=vmem, size = 0x12000, scoped, tag = 'internal scratch']
  %s0 = inlined_call_operand.vmem [shape: f32[98,576], index: 0, kind: input, shape index: {}]
  %s1 = inlined_call_operand.vmem [shape: f32[576,32], index: 1, kind: input, shape index: {}]
  %s2 = inlined_call_operand.vmem [shape: f32[1,32], index: 2, kind: input, shape index: {}]
  %s3 = inlined_call_operand.vmem [shape: f32[1,32], index: 3, kind: input, shape index: {}]
  %s4 = inlined_call_operand.vmem [shape: f32[1,32], index: 4, kind: input, shape index: {}]
  %s5 = inlined_call_operand.vmem [shape: f32[98,32], index: 5, kind: output, shape index: {}]
  %s6 = sld [smem:[#allocation0]]
  $region30: #{vae_forward.15} parent=0
    _
  %s8 = ssub.s32 1, %s6
  %s9 = scalar_select 0, %s8, %s6
  // Predicated region
  $region2: #{vae_forward.15} parent=0 // pred_check
    _
  $region3: #{vae_forward.15} parent=0 // pred_check_branch
    %11 = sbr.rel (0) target = $region5
  $region4: #{vae_forward.15} parent=0 // pred_region
    _
  $region5: #{vae_forward.15} parent=0 // pred_fallthru
    _
  // Predicated region
  $region6: #{vae_forward.15} parent=0 // pred_check
    _
  $region7: #{vae_forward.15} parent=0 // pred_check_branch
    %13 = sbr.rel (0) target = $region9
  $region8: #{vae_forward.15} parent=0 // pred_region
    _
  $region9: #{vae_forward.15} parent=0 // pred_fallthru
    _
  // Predicated region
  $region10: #{vae_forward.15} parent=0 // pred_check
    _
  $region11: #{vae_forward.15} parent=0 // pred_check_branch
    %15 = sbr.rel (0) target = $region13
  $region12: #{vae_forward.15} parent=0 // pred_region
    _
  $region13: #{vae_forward.15} parent=0 // pred_fallthru
    _
  // Predicated region
  $region14: #{vae_forward.15} parent=0 // pred_check
    _
  $region15: #{vae_forward.15} parent=0 // pred_check_branch
    %17 = sbr.rel (0) target = $region17
  $region16: #{vae_forward.15} parent=0 // pred_region
    _
  $region17: #{vae_forward.15} parent=0 // pred_fallthru
    _
  // Predicated region
  $region18: #{vae_forward.15} parent=0 // pred_check
    _
  $region19: #{vae_forward.15} parent=0 // pred_check_branch
    %19 = sbr.rel (0) target = $region21
  $region20: #{vae_forward.15} parent=0 // pred_region
    _
  $region21: #{vae_forward.15} parent=0 // pred_fallthru
    _
  %v21 = vld [vmem:[%s0] sm:$0xff]
  %v22 = vld [vmem:[%s0 + $0x8] sm:$0xff]
  %v23 = vld [vmem:[%s0 + $0x10] sm:$0xff]
  %v24 = vld [vmem:[%s0 + $0x18] sm:$0xff]
  %v25 = vld [vmem:[%s0 + $0x20] sm:$0xff]
  %v26 = vld [vmem:[%s0 + $0x28] sm:$0xff]
  %v27 = vld [vmem:[%s0 + $0x30] sm:$0xff]
  %v28 = vld [vmem:[%s0 + $0x38] sm:$0xff]
  %v29 = vld [vmem:[%s0 + $0x40] sm:$0xff]
  %v30 = vld [vmem:[%s0 + $0x48] sm:$0xff]
  %v31 = vld [vmem:[%s0 + $0x50] sm:$0xff]
  %v32 = vld [vmem:[%s0 + $0x58] sm:$0xff]
  %v33 = vld [vmem:[%s0 + $0x60] sm:$0xff]
  %v34 = vld [vmem:[%s0 + $0x68] sm:$0xff]
  %v35 = vld [vmem:[%s0 + $0x70] sm:$0xff]
  %v36 = vld [vmem:[%s0 + $0x78] sm:$0xff]
  %v37 = vld [vmem:[%s0 + $0x80] sm:$0xff]
  %v38 = vld [vmem:[%s0 + $0x88] sm:$0xff]
  %v39 = vld [vmem:[%s0 + $0x90] sm:$0xff]
  %v40 = vld [vmem:[%s0 + $0x98] sm:$0xff]
  %v41 = vld [vmem:[%s0 + $0xa0] sm:$0xff]
  %v42 = vld [vmem:[%s0 + $0xa8] sm:$0xff]
  %v43 = vld [vmem:[%s0 + $0xb0] sm:$0xff]
  %v44 = vld [vmem:[%s0 + $0xb8] sm:$0xff]
  %v45 = vld [vmem:[%s0 + $0xc0] sm:$0xff]
  %v46 = vld [vmem:[%s0 + $0xc8] sm:$0xff]
  %v47 = vld [vmem:[%s0 + $0xd0] sm:$0xff]
  %v48 = vld [vmem:[%s0 + $0xd8] sm:$0xff]
  %v49 = vld [vmem:[%s0 + $0xe0] sm:$0xff]
  %v50 = vld [vmem:[%s0 + $0xe8] sm:$0xff]
  %v51 = vld [vmem:[%s0 + $0xf0] sm:$0xff]
  %v52 = vld [vmem:[%s0 + $0xf8] sm:$0xff]
  %v53 = vld [vmem:[%s0 + $0x100] sm:$0xff]
  %v54 = vld [vmem:[%s0 + $0x108] sm:$0xff]
  %v55 = vld [vmem:[%s0 + $0x110] sm:$0xff]
  %v56 = vld [vmem:[%s0 + $0x118] sm:$0xff]
  %v57 = vld [vmem:[%s0 + $0x120] sm:$0xff]
  %v58 = vld [vmem:[%s0 + $0x128] sm:$0xff]
  %v59 = vld [vmem:[%s0 + $0x130] sm:$0xff]
  %v60 = vld [vmem:[%s0 + $0x138] sm:$0xff]
  %v61 = vld [vmem:[%s0 + $0x140] sm:$0xff]
  %v62 = vld [vmem:[%s0 + $0x148] sm:$0xff]
  %v63 = vld [vmem:[%s0 + $0x150] sm:$0xff]
  %v64 = vld [vmem:[%s0 + $0x158] sm:$0xff]
  %v65 = vld [vmem:[%s0 + $0x160] sm:$0xff]
  %v66 = vld [vmem:[%s0 + $0x168] sm:$0xff]
  %v67 = vld [vmem:[%s0 + $0x170] sm:$0xff]
  %v68 = vld [vmem:[%s0 + $0x178] sm:$0xff]
  %v69 = vld [vmem:[%s0 + $0x180] sm:$0xff]
  %v70 = vld [vmem:[%s0 + $0x188] sm:$0xff]
  %v71 = vld [vmem:[%s0 + $0x190] sm:$0xff]
  %v72 = vld [vmem:[%s0 + $0x198] sm:$0xff]
  %v73 = vld [vmem:[%s0 + $0x1a0] sm:$0xff]
  %v74 = vld [vmem:[%s0 + $0x1a8] sm:$0xff]
  %v75 = vld [vmem:[%s0 + $0x1b0] sm:$0xff]
  %v76 = vld [vmem:[%s0 + $0x1b8] sm:$0xff]
  %v77 = vld [vmem:[%s0 + $0x1c0] sm:$0xff]
  %v78 = vld [vmem:[%s0 + $0x1c8] sm:$0xff]
  %v79 = vld [vmem:[%s0 + $0x1d0] sm:$0xff]
  %v80 = vld [vmem:[%s0 + $0x1d8] sm:$0xff]
  %v81 = vld [vmem:[%s0 + $0x1e0] sm:$0x3]
  %v82 = vld [vmem:[%s0 + $0x1e8] sm:$0x3]
  %v83 = vld [vmem:[%s0 + $0x1f0] sm:$0x3]
  %v84 = vld [vmem:[%s0 + $0x1f8] sm:$0x3]
  %v85 = vld [vmem:[%s0 + $0x200] sm:$0x3]
  %v86 = vpack.c.bf16 %v26, %v21
  %v87 = vpack.c.bf16 %v27, %v22
  %v88 = vpack.c.bf16 %v28, %v23
  %v89 = vpack.c.bf16 %v29, %v24
  %v90 = vpack.c.bf16 %v30, %v25
  %v91 = vpack.c.bf16 %v36, %v31
  %v92 = vpack.c.bf16 %v37, %v32
  %v93 = vpack.c.bf16 %v38, %v33
  %v94 = vpack.c.bf16 %v39, %v34
  %v95 = vpack.c.bf16 %v40, %v35
  %v96 = vpack.c.bf16 %v46, %v41
  %v97 = vpack.c.bf16 %v47, %v42
  %v98 = vpack.c.bf16 %v48, %v43
  %v99 = vpack.c.bf16 %v49, %v44
  %v100 = vpack.c.bf16 %v50, %v45
  %v101 = vpack.c.bf16 %v56, %v51
  %v102 = vpack.c.bf16 %v57, %v52
  %v103 = vpack.c.bf16 %v58, %v53
  %v104 = vpack.c.bf16 %v59, %v54
  %v105 = vpack.c.bf16 %v60, %v55
  %v106 = vpack.c.bf16 %v66, %v61
  %v107 = vpack.c.bf16 %v67, %v62
  %v108 = vpack.c.bf16 %v68, %v63
  %v109 = vpack.c.bf16 %v69, %v64
  %v110 = vpack.c.bf16 %v70, %v65
  %v111 = vpack.c.bf16 %v76, %v71
  %v112 = vpack.c.bf16 %v77, %v72
  %v113 = vpack.c.bf16 %v78, %v73
  %v114 = vpack.c.bf16 %v79, %v74
  %v115 = vpack.c.bf16 %v80, %v75
  %v116 = vpack.c.bf16 %v81, %v81
  %v117 = vpack.c.bf16 %v82, %v82
  %v118 = vpack.c.bf16 %v83, %v83
  %v119 = vpack.c.bf16 %v84, %v84
  %v120 = vpack.c.bf16 %v85, %v85
  %v121 = vld [vmem:[%s1] sm:$0xff]
  %v122 = vld [vmem:[%s1 + $0x8] sm:$0xff]
  %v123 = vld [vmem:[%s1 + $0x10] sm:$0xff]
  %v124 = vld [vmem:[%s1 + $0x18] sm:$0xff]
  %v125 = vld [vmem:[%s1 + $0x20] sm:$0xff]
  %v126 = vld [vmem:[%s1 + $0x28] sm:$0xff]
  %v127 = vld [vmem:[%s1 + $0x30] sm:$0xff]
  %v128 = vld [vmem:[%s1 + $0x38] sm:$0xff]
  %v129 = vld [vmem:[%s1 + $0x40] sm:$0xff]
  %v130 = vld [vmem:[%s1 + $0x48] sm:$0xff]
  %v131 = vld [vmem:[%s1 + $0x50] sm:$0xff]
  %v132 = vld [vmem:[%s1 + $0x58] sm:$0xff]
  %v133 = vld [vmem:[%s1 + $0x60] sm:$0xff]
  %v134 = vld [vmem:[%s1 + $0x68] sm:$0xff]
  %v135 = vld [vmem:[%s1 + $0x70] sm:$0xff]
  %v136 = vld [vmem:[%s1 + $0x78] sm:$0xff]
  %v137 = vld [vmem:[%s1 + $0x80] sm:$0xff]
  %v138 = vld [vmem:[%s1 + $0x88] sm:$0xff]
  %v139 = vld [vmem:[%s1 + $0x90] sm:$0xff]
  %v140 = vld [vmem:[%s1 + $0x98] sm:$0xff]
  %v141 = vld [vmem:[%s1 + $0xa0] sm:$0xff]
  %v142 = vld [vmem:[%s1 + $0xa8] sm:$0xff]
  %v143 = vld [vmem:[%s1 + $0xb0] sm:$0xff]
  %v144 = vld [vmem:[%s1 + $0xb8] sm:$0xff]
  %v145 = vld [vmem:[%s1 + $0xc0] sm:$0xff]
  %v146 = vld [vmem:[%s1 + $0xc8] sm:$0xff]
  %v147 = vld [vmem:[%s1 + $0xd0] sm:$0xff]
  %v148 = vld [vmem:[%s1 + $0xd8] sm:$0xff]
  %v149 = vld [vmem:[%s1 + $0xe0] sm:$0xff]
  %v150 = vld [vmem:[%s1 + $0xe8] sm:$0xff]
  %v151 = vld [vmem:[%s1 + $0xf0] sm:$0xff]
  %v152 = vld [vmem:[%s1 + $0xf8] sm:$0xff]
  %v153 = vld [vmem:[%s1 + $0x100] sm:$0xff]
  %v154 = vld [vmem:[%s1 + $0x108] sm:$0xff]
  %v155 = vld [vmem:[%s1 + $0x110] sm:$0xff]
  %v156 = vld [vmem:[%s1 + $0x118] sm:$0xff]
  %v157 = vld [vmem:[%s1 + $0x120] sm:$0xff]
  %v158 = vld [vmem:[%s1 + $0x128] sm:$0xff]
  %v159 = vld [vmem:[%s1 + $0x130] sm:$0xff]
  %v160 = vld [vmem:[%s1 + $0x138] sm:$0xff]
  %v161 = vld [vmem:[%s1 + $0x140] sm:$0xff]
  %v162 = vld [vmem:[%s1 + $0x148] sm:$0xff]
  %v163 = vld [vmem:[%s1 + $0x150] sm:$0xff]
  %v164 = vld [vmem:[%s1 + $0x158] sm:$0xff]
  %v165 = vld [vmem:[%s1 + $0x160] sm:$0xff]
  %v166 = vld [vmem:[%s1 + $0x168] sm:$0xff]
  %v167 = vld [vmem:[%s1 + $0x170] sm:$0xff]
  %v168 = vld [vmem:[%s1 + $0x178] sm:$0xff]
  %v169 = vld [vmem:[%s1 + $0x180] sm:$0xff]
  %v170 = vld [vmem:[%s1 + $0x188] sm:$0xff]
  %v171 = vld [vmem:[%s1 + $0x190] sm:$0xff]
  %v172 = vld [vmem:[%s1 + $0x198] sm:$0xff]
  %v173 = vld [vmem:[%s1 + $0x1a0] sm:$0xff]
  %v174 = vld [vmem:[%s1 + $0x1a8] sm:$0xff]
  %v175 = vld [vmem:[%s1 + $0x1b0] sm:$0xff]
  %v176 = vld [vmem:[%s1 + $0x1b8] sm:$0xff]
  %v177 = vld [vmem:[%s1 + $0x1c0] sm:$0xff]
  %v178 = vld [vmem:[%s1 + $0x1c8] sm:$0xff]
  %v179 = vld [vmem:[%s1 + $0x1d0] sm:$0xff]
  %v180 = vld [vmem:[%s1 + $0x1d8] sm:$0xff]
  %v181 = vld [vmem:[%s1 + $0x1e0] sm:$0xff]
  %v182 = vld [vmem:[%s1 + $0x1e8] sm:$0xff]
  %v183 = vld [vmem:[%s1 + $0x1f0] sm:$0xff]
  %v184 = vld [vmem:[%s1 + $0x1f8] sm:$0xff]
  %v185 = vld [vmem:[%s1 + $0x200] sm:$0xff]
  %v186 = vld [vmem:[%s1 + $0x208] sm:$0xff]
  %v187 = vld [vmem:[%s1 + $0x210] sm:$0xff]
  %v188 = vld [vmem:[%s1 + $0x218] sm:$0xff]
  %v189 = vld [vmem:[%s1 + $0x220] sm:$0xff]
  %v190 = vld [vmem:[%s1 + $0x228] sm:$0xff]
  %v191 = vld [vmem:[%s1 + $0x230] sm:$0xff]
  %v192 = vld [vmem:[%s1 + $0x238] sm:$0xff]
  %v193 = vpack.c.bf16 %v122, %v121
  %v194 = vpack.c.bf16 %v124, %v123
  %v195 = vpack.c.bf16 %v126, %v125
  %v196 = vpack.c.bf16 %v128, %v127
  %v197 = vpack.c.bf16 %v130, %v129
  %v198 = vpack.c.bf16 %v132, %v131
  %v199 = vpack.c.bf16 %v134, %v133
  %v200 = vpack.c.bf16 %v136, %v135
  %v201 = vpack.c.bf16 %v138, %v137
  %v202 = vpack.c.bf16 %v140, %v139
  %v203 = vpack.c.bf16 %v142, %v141
  %v204 = vpack.c.bf16 %v144, %v143
  %v205 = vpack.c.bf16 %v146, %v145
  %v206 = vpack.c.bf16 %v148, %v147
  %v207 = vpack.c.bf16 %v150, %v149
  %v208 = vpack.c.bf16 %v152, %v151
  %v209 = vpack.c.bf16 %v154, %v153
  %v210 = vpack.c.bf16 %v156, %v155
  %v211 = vpack.c.bf16 %v158, %v157
  %v212 = vpack.c.bf16 %v160, %v159
  %v213 = vpack.c.bf16 %v162, %v161
  %v214 = vpack.c.bf16 %v164, %v163
  %v215 = vpack.c.bf16 %v166, %v165
  %v216 = vpack.c.bf16 %v168, %v167
  %v217 = vpack.c.bf16 %v170, %v169
  %v218 = vpack.c.bf16 %v172, %v171
  %v219 = vpack.c.bf16 %v174, %v173
  %v220 = vpack.c.bf16 %v176, %v175
  %v221 = vpack.c.bf16 %v178, %v177
  %v222 = vpack.c.bf16 %v180, %v179
  %v223 = vpack.c.bf16 %v182, %v181
  %v224 = vpack.c.bf16 %v184, %v183
  %v225 = vpack.c.bf16 %v186, %v185
  %v226 = vpack.c.bf16 %v188, %v187
  %v227 = vpack.c.bf16 %v190, %v189
  %v228 = vpack.c.bf16 %v192, %v191
  %v229 = vld [vmem:[%s2] sm:$0x1]
  %v231 = vlaneseq
  %v232 = vshrl.u32 %v231, 7
  %v233 = vsub.s32 0, %v232
  %v234 = vrot.slane %v229, %v233
  %vm236 = vcmask 523264
  %v238 = vsel %vm236, %v90, 0
  %v241 = vsel %vm236, %v95, 0
  %v244 = vsel %vm236, %v100, 0
  %v247 = vsel %vm236, %v105, 0
  %v250 = vsel %vm236, %v110, 0
  %v253 = vsel %vm236, %v115, 0
  %v256 = vsel %vm236, %v120, 0
  %258 = vmatprep.subr.bf16.mxu0 0
  %259 = vmatpush1.bf16.msra.mxu0 %v193
  %260 = vmatprep.subr.bf16.mxu0 0
  %261 = vmatpush1.bf16.msra.mxu0 %v194
  %262 = vmatprep.subr.bf16.mxu0 0
  %263 = vmatpush1.bf16.msra.mxu0 %v195
  %264 = vmatprep.subr.bf16.mxu0 0
  %265 = vmatpush1.bf16.msra.mxu0 %v196
  %266 = vmatprep.subr.bf16.mxu0 0
  %267 = vmatpush1.bf16.msra.mxu0 %v197
  %268 = vmatprep.subr.bf16.mxu0 0
  %269 = vmatpush1.bf16.msra.mxu0 %v198
  %270 = vmatprep.subr.bf16.mxu0 0
  %271 = vmatpush1.bf16.msra.mxu0 %v199
  %272 = vmatprep.subr.bf16.mxu0 0
  %273 = vmatpush1.bf16.msra.mxu0 %v200
  %274 = vmatprep.subr.bf16.mxu0 0
  %275 = vmatpush1.bf16.msra.mxu0 %v201
  %276 = vmatprep.subr.bf16.mxu0 0
  %277 = vmatpush1.bf16.msra.mxu0 %v202
  %278 = vmatprep.subr.bf16.mxu0 0
  %279 = vmatpush1.bf16.msra.mxu0 %v203
  %280 = vmatprep.subr.bf16.mxu0 0
  %281 = vmatpush1.bf16.msra.mxu0 %v204
  %282 = vmatprep.subr.bf16.mxu0 0
  %283 = vmatpush1.bf16.msra.mxu0 %v205
  %284 = vmatprep.subr.bf16.mxu0 0
  %285 = vmatpush1.bf16.msra.mxu0 %v206
  %286 = vmatprep.subr.bf16.mxu0 0
  %287 = vmatpush1.bf16.msra.mxu0 %v207
  %288 = vmatprep.subr.bf16.mxu0 0
  %289 = vmatpush1.bf16.msra.mxu0 %v208
  %290 = vmatprep.mubr.bf16.mxu0 %v87
  %291 = vmatmul.mubr.bf16.gmra.mrb[0].mxu0 %v86
  %v292 = vpop.f32.mrb[0].mxu0
  %v293 = vadd.f32 %v234, %v292
  %v294 = vpop.f32.mrb[0].mxu0
  %v295 = vpop.f32.mrb[0].mxu0
  %v296 = vadd.f32 %v234, %v295
  %v297 = vpop.f32.mrb[0].mxu0
  %298 = vmatprep.mubr.bf16.mxu0 %v92
  %299 = vmatmul.mubr.bf16.gmra.mrb[0].mxu0 %v91
  %v300 = vpop.f32.mrb[0].mxu0
  %v301 = vadd.f32 %v234, %v300
  %v302 = vpop.f32.mrb[0].mxu0
  %v303 = vpop.f32.mrb[0].mxu0
  %v304 = vadd.f32 %v234, %v303
  %v305 = vpop.f32.mrb[0].mxu0
  %306 = vmatprep.mubr.bf16.mxu0 %v97
  %307 = vmatmul.mubr.bf16.gmra.mrb[0].mxu0 %v96
  %v308 = vpop.f32.mrb[0].mxu0
  %v309 = vadd.f32 %v234, %v308
  %v310 = vpop.f32.mrb[0].mxu0
  %v311 = vpop.f32.mrb[0].mxu0
  %v312 = vadd.f32 %v234, %v311
  %v313 = vpop.f32.mrb[0].mxu0
  %314 = vmatprep.mubr.bf16.mxu0 %v102
  %315 = vmatmul.mubr.bf16.gmra.mrb[0].mxu0 %v101
  %v316 = vpop.f32.mrb[0].mxu0
  %v317 = vadd.f32 %v234, %v316
  %v318 = vpop.f32.mrb[0].mxu0
  %v319 = vpop.f32.mrb[0].mxu0
  %v320 = vadd.f32 %v234, %v319
  %v321 = vpop.f32.mrb[0].mxu0
  %322 = vmatprep.mubr.bf16.mxu0 %v107
  %323 = vmatmul.mubr.bf16.gmra.mrb[0].mxu0 %v106
  %v324 = vpop.f32.mrb[0].mxu0
  %v325 = vadd.f32 %v234, %v324
  %v326 = vpop.f32.mrb[0].mxu0
  %v327 = vpop.f32.mrb[0].mxu0
  %v328 = vadd.f32 %v234, %v327
  %v329 = vpop.f32.mrb[0].mxu0
  %330 = vmatprep.mubr.bf16.mxu0 %v112
  %331 = vmatmul.mubr.bf16.gmra.mrb[0].mxu0 %v111
  %v332 = vpop.f32.mrb[0].mxu0
  %v333 = vadd.f32 %v234, %v332
  %v334 = vpop.f32.mrb[0].mxu0
  %v335 = vpop.f32.mrb[0].mxu0
  %v336 = vadd.f32 %v234, %v335
  %v337 = vpop.f32.mrb[0].mxu0
  %338 = vmatprep.mubr.bf16.mxu0 %v117
  %339 = vmatmul.mubr.bf16.gmra.mrb[0].mxu0 %v116
  %v340 = vpop.f32.mrb[0].mxu0
  %v341 = vadd.f32 %v234, %v340
  %v342 = vpop.f32.mrb[0].mxu0
  %v343 = vpop.f32.mrb[0].mxu0
  %v344 = vpop.f32.mrb[0].mxu0
  %345 = vdwg.mxu0
  %346 = vmatprep.subr.bf16.mxu0 0
  %347 = vmatpush1.bf16.msra.mxu0 %v209
  %348 = vmatprep.subr.bf16.mxu0 0
  %349 = vmatpush1.bf16.msra.mxu0 %v210
  %350 = vmatprep.subr.bf16.mxu0 0
  %351 = vmatpush1.bf16.msra.mxu0 %v211
  %352 = vmatprep.subr.bf16.mxu0 0
  %353 = vmatpush1.bf16.msra.mxu0 %v212
  %354 = vmatprep.subr.bf16.mxu0 0
  %355 = vmatpush1.bf16.msra.mxu0 %v213
  %356 = vmatprep.subr.bf16.mxu0 0
  %357 = vmatpush1.bf16.msra.mxu0 %v214
  %358 = vmatprep.subr.bf16.mxu0 0
  %359 = vmatpush1.bf16.msra.mxu0 %v215
  %360 = vmatprep.subr.bf16.mxu0 0
  %361 = vmatpush1.bf16.msra.mxu0 %v216
  %362 = vmatprep.subr.bf16.mxu0 0
  %363 = vmatpush1.bf16.msra.mxu0 %v217
  %364 = vmatprep.subr.bf16.mxu0 0
  %365 = vmatpush1.bf16.msra.mxu0 %v218
  %366 = vmatprep.subr.bf16.mxu0 0
  %367 = vmatpush1.bf16.msra.mxu0 %v219
  %368 = vmatprep.subr.bf16.mxu0 0
  %369 = vmatpush1.bf16.msra.mxu0 %v220
  %370 = vmatprep.subr.bf16.mxu0 0
  %371 = vmatpush1.bf16.msra.mxu0 %v221
  %372 = vmatprep.subr.bf16.mxu0 0
  %373 = vmatpush1.bf16.msra.mxu0 %v222
  %374 = vmatprep.subr.bf16.mxu0 0
  %375 = vmatpush1.bf16.msra.mxu0 %v223
  %376 = vmatprep.subr.bf16.mxu0 0
  %377 = vmatpush1.bf16.msra.mxu0 %v224
  %378 = vmatprep.mubr.bf16.mxu0 %v89
  %379 = vmatmul.mubr.bf16.gmra.mrb[0].mxu0 %v88
  %v380 = vpop.f32.mrb[0].mxu0
  %v381 = vadd.f32 %v293, %v380
  %v382 = vpop.f32.mrb[0].mxu0
  %v383 = vpop.f32.mrb[0].mxu0
  %v384 = vadd.f32 %v296, %v383
  %v385 = vpop.f32.mrb[0].mxu0
  %386 = vmatprep.mubr.bf16.mxu0 %v94
  %387 = vmatmul.mubr.bf16.gmra.mrb[0].mxu0 %v93
  %v388 = vpop.f32.mrb[0].mxu0
  %v389 = vadd.f32 %v301, %v388
  %v390 = vpop.f32.mrb[0].mxu0
  %v391 = vpop.f32.mrb[0].mxu0
  %v392 = vadd.f32 %v304, %v391
  %v393 = vpop.f32.mrb[0].mxu0
  %394 = vmatprep.mubr.bf16.mxu0 %v99
  %395 = vmatmul.mubr.bf16.gmra.mrb[0].mxu0 %v98
  %v396 = vpop.f32.mrb[0].mxu0
  %v397 = vadd.f32 %v309, %v396
  %v398 = vpop.f32.mrb[0].mxu0
  %v399 = vpop.f32.mrb[0].mxu0
  %v400 = vadd.f32 %v312, %v399
  %v401 = vpop.f32.mrb[0].mxu0
  %402 = vmatprep.mubr.bf16.mxu0 %v104
  %403 = vmatmul.mubr.bf16.gmra.mrb[0].mxu0 %v103
  %v404 = vpop.f32.mrb[0].mxu0
  %v405 = vadd.f32 %v317, %v404
  %v406 = vpop.f32.mrb[0].mxu0
  %v407 = vpop.f32.mrb[0].mxu0
  %v408 = vadd.f32 %v320, %v407
  %v409 = vpop.f32.mrb[0].mxu0
  %410 = vmatprep.mubr.bf16.mxu0 %v109
  %411 = vmatmul.mubr.bf16.gmra.mrb[0].mxu0 %v108
  %v412 = vpop.f32.mrb[0].mxu0
  %v413 = vadd.f32 %v325, %v412
  %v414 = vpop.f32.mrb[0].mxu0
  %v415 = vpop.f32.mrb[0].mxu0
  %v416 = vadd.f32 %v328, %v415
  %v417 = vpop.f32.mrb[0].mxu0
  %418 = vmatprep.mubr.bf16.mxu0 %v114
  %419 = vmatmul.mubr.bf16.gmra.mrb[0].mxu0 %v113
  %v420 = vpop.f32.mrb[0].mxu0
  %v421 = vadd.f32 %v333, %v420
  %v422 = vpop.f32.mrb[0].mxu0
  %v423 = vpop.f32.mrb[0].mxu0
  %v424 = vadd.f32 %v336, %v423
  %v425 = vpop.f32.mrb[0].mxu0
  %426 = vmatprep.mubr.bf16.mxu0 %v119
  %427 = vmatmul.mubr.bf16.gmra.mrb[0].mxu0 %v118
  %v428 = vpop.f32.mrb[0].mxu0
  %v429 = vadd.f32 %v341, %v428
  %v430 = vpop.f32.mrb[0].mxu0
  %v431 = vpop.f32.mrb[0].mxu0
  %v432 = vpop.f32.mrb[0].mxu0
  %433 = vdwg.mxu0
  %434 = vmatprep.subr.bf16.mxu0 0
  %435 = vmatpush1.bf16.msra.mxu0 %v225
  %436 = vmatprep.subr.bf16.mxu0 0
  %437 = vmatpush1.bf16.msra.mxu0 %v226
  %438 = vmatprep.subr.bf16.mxu0 0
  %439 = vmatpush1.bf16.msra.mxu0 %v227
  %440 = vmatprep.subr.bf16.mxu0 0
  %441 = vmatpush1.bf16.msra.mxu0 %v228
  %442 = vmatprep.subr.bf16.mxu0 0
  %443 = vmatpush1.bf16.msra.mxu0 0
  %444 = vmatprep.subr.bf16.mxu0 0
  %445 = vmatpush1.bf16.msra.mxu0 0
  %446 = vmatprep.subr.bf16.mxu0 0
  %447 = vmatpush1.bf16.msra.mxu0 0
  %448 = vmatprep.subr.bf16.mxu0 0
  %449 = vmatpush1.bf16.msra.mxu0 0
  %450 = vmatprep.subr.bf16.mxu0 0
  %451 = vmatpush1.bf16.msra.mxu0 0
  %452 = vmatprep.subr.bf16.mxu0 0
  %453 = vmatpush1.bf16.msra.mxu0 0
  %454 = vmatprep.subr.bf16.mxu0 0
  %455 = vmatpush1.bf16.msra.mxu0 0
  %456 = vmatprep.subr.bf16.mxu0 0
  %457 = vmatpush1.bf16.msra.mxu0 0
  %458 = vmatprep.subr.bf16.mxu0 0
  %459 = vmatpush1.bf16.msra.mxu0 0
  %460 = vmatprep.subr.bf16.mxu0 0
  %461 = vmatpush1.bf16.msra.mxu0 0
  %462 = vmatprep.subr.bf16.mxu0 0
  %463 = vmatpush1.bf16.msra.mxu0 0
  %464 = vmatprep.subr.bf16.mxu0 0
  %465 = vmatpush1.bf16.msra.mxu0 0
  %466 = vmatprep.mubr.bf16.mxu0 0
  %467 = vmatmul.mubr.bf16.gmra.mrb[0].mxu0 %v238
  %v468 = vpop.f32.mrb[0].mxu0
  %v469 = vadd.f32 %v381, %v468
  %v470 = vpop.f32.mrb[0].mxu0
  %v471 = vpop.f32.mrb[0].mxu0
  %v472 = vadd.f32 %v384, %v471
  %v473 = vpop.f32.mrb[0].mxu0
  %474 = vmatprep.mubr.bf16.mxu0 0
  %475 = vmatmul.mubr.bf16.gmra.mrb[0].mxu0 %v241
  %v476 = vpop.f32.mrb[0].mxu0
  %v477 = vadd.f32 %v389, %v476
  %v478 = vpop.f32.mrb[0].mxu0
  %v479 = vpop.f32.mrb[0].mxu0
  %v480 = vadd.f32 %v392, %v479
  %v481 = vpop.f32.mrb[0].mxu0
  %482 = vmatprep.mubr.bf16.mxu0 0
  %483 = vmatmul.mubr.bf16.gmra.mrb[0].mxu0 %v244
  %v484 = vpop.f32.mrb[0].mxu0
  %v485 = vadd.f32 %v397, %v484
  %v486 = vpop.f32.mrb[0].mxu0
  %v487 = vpop.f32.mrb[0].mxu0
  %v488 = vadd.f32 %v400, %v487
  %v489 = vpop.f32.mrb[0].mxu0
  %490 = vmatprep.mubr.bf16.mxu0 0
  %491 = vmatmul.mubr.bf16.gmra.mrb[0].mxu0 %v247
  %v492 = vpop.f32.mrb[0].mxu0
  %v493 = vadd.f32 %v405, %v492
  %v494 = vpop.f32.mrb[0].mxu0
  %v495 = vpop.f32.mrb[0].mxu0
  %v496 = vadd.f32 %v408, %v495
  %v497 = vpop.f32.mrb[0].mxu0
  %498 = vmatprep.mubr.bf16.mxu0 0
  %499 = vmatmul.mubr.bf16.gmra.mrb[0].mxu0 %v250
  %v500 = vpop.f32.mrb[0].mxu0
  %v501 = vadd.f32 %v413, %v500
  %v502 = vpop.f32.mrb[0].mxu0
  %v503 = vpop.f32.mrb[0].mxu0
  %v504 = vadd.f32 %v416, %v503
  %v505 = vpop.f32.mrb[0].mxu0
  %506 = vmatprep.mubr.bf16.mxu0 0
  %507 = vmatmul.mubr.bf16.gmra.mrb[0].mxu0 %v253
  %v508 = vpop.f32.mrb[0].mxu0
  %v509 = vadd.f32 %v421, %v508
  %v510 = vpop.f32.mrb[0].mxu0
  %v511 = vpop.f32.mrb[0].mxu0
  %v512 = vadd.f32 %v424, %v511
  %v513 = vpop.f32.mrb[0].mxu0
  %514 = vmatprep.mubr.bf16.mxu0 0
  %515 = vmatmul.mubr.bf16.gmra.mrb[0].mxu0 %v256
  %v516 = vpop.f32.mrb[0].mxu0
  %v517 = vadd.f32 %v429, %v516
  %v518 = vpop.f32.mrb[0].mxu0
  %v519 = vpop.f32.mrb[0].mxu0
  %v520 = vpop.f32.mrb[0].mxu0
  %521 = vdwg.mxu0
  %vm522 = vcmask 261120
  %v523 = vsel %vm522, %v469, 0.0
  %v524 = vsel %vm522, %v472, 0.0
  %v525 = vadd.f32 %v523, %v524
  %v526 = vsel %vm522, %v477, 0.0
  %v527 = vadd.f32 %v525, %v526
  %v528 = vsel %vm522, %v480, 0.0
  %v529 = vadd.f32 %v527, %v528
  %v530 = vsel %vm522, %v485, 0.0
  %v531 = vadd.f32 %v529, %v530
  %v532 = vsel %vm522, %v488, 0.0
  %v533 = vadd.f32 %v531, %v532
  %v534 = vsel %vm522, %v493, 0.0
  %v535 = vadd.f32 %v533, %v534
  %v536 = vsel %vm522, %v496, 0.0
  %v537 = vadd.f32 %v535, %v536
  %v538 = vsel %vm522, %v501, 0.0
  %v539 = vadd.f32 %v537, %v538
  %v540 = vsel %vm522, %v504, 0.0
  %v541 = vadd.f32 %v539, %v540
  %v542 = vsel %vm522, %v509, 0.0
  %v543 = vadd.f32 %v541, %v542
  %v544 = vsel %vm522, %v512, 0.0
  %v545 = vadd.f32 %v543, %v544
  %vm546 = vcmask 254976
  %v547 = vsel %vm546, %v517, 0.0
  %v548 = vadd.f32 %v545, %v547
  %v549 = vrot.slane %v548, 4
  %v550 = vadd.f32 %v548, %v549
  %v551 = vrot.slane %v550, 2
  %v552 = vadd.f32 %v550, %v551
  %v553 = vrot.slane %v552, 1
  %v554 = vadd.f32 %v552, %v553
  %v555 = vmul.f32 %v554, 0.010204081
  %v556 = vsub.f32 %v469, %v555
  %v557 = vsub.f32 %v472, %v555
  %v558 = vsub.f32 %v477, %v555
  %v559 = vsub.f32 %v480, %v555
  %v560 = vsub.f32 %v485, %v555
  %v561 = vsub.f32 %v488, %v555
  %v562 = vsub.f32 %v493, %v555
  %v563 = vsub.f32 %v496, %v555
  %v564 = vsub.f32 %v501, %v555
  %v565 = vsub.f32 %v504, %v555
  %v566 = vsub.f32 %v509, %v555
  %v567 = vsub.f32 %v512, %v555
  %v568 = vsub.f32 %v517, %v555
  %v569 = vmul.f32 %v556, %v556
  %v570 = vmul.f32 %v557, %v557
  %v571 = vmul.f32 %v558, %v558
  %v572 = vmul.f32 %v559, %v559
  %v573 = vmul.f32 %v560, %v560
  %v574 = vmul.f32 %v561, %v561
  %v575 = vmul.f32 %v562, %v562
  %v576 = vmul.f32 %v563, %v563
  %v577 = vmul.f32 %v564, %v564
  %v578 = vmul.f32 %v565, %v565
  %v579 = vmul.f32 %v566, %v566
  %v580 = vmul.f32 %v567, %v567
  %v581 = vmul.f32 %v568, %v568
  %v582 = vsel %vm522, %v569, 0.0
  %v583 = vsel %vm522, %v570, 0.0
  %v584 = vadd.f32 %v582, %v583
  %v585 = vsel %vm522, %v571, 0.0
  %v586 = vadd.f32 %v584, %v585
  %v587 = vsel %vm522, %v572, 0.0
  %v588 = vadd.f32 %v586, %v587
  %v589 = vsel %vm522, %v573, 0.0
  %v590 = vadd.f32 %v588, %v589
  %v591 = vsel %vm522, %v574, 0.0
  %v592 = vadd.f32 %v590, %v591
  %v593 = vsel %vm522, %v575, 0.0
  %v594 = vadd.f32 %v592, %v593
  %v595 = vsel %vm522, %v576, 0.0
  %v596 = vadd.f32 %v594, %v595
  %v597 = vsel %vm522, %v577, 0.0
  %v598 = vadd.f32 %v596, %v597
  %v599 = vsel %vm522, %v578, 0.0
  %v600 = vadd.f32 %v598, %v599
  %v601 = vsel %vm522, %v579, 0.0
  %v602 = vadd.f32 %v600, %v601
  %v603 = vsel %vm522, %v580, 0.0
  %v604 = vadd.f32 %v602, %v603
  %v605 = vsel %vm546, %v581, 0.0
  %v606 = vadd.f32 %v604, %v605
  %v607 = vrot.slane %v606, 4
  %v608 = vadd.f32 %v606, %v607
  %v609 = vrot.slane %v608, 2
  %v610 = vadd.f32 %v608, %v609
  %v611 = vrot.slane %v610, 1
  %v612 = vadd.f32 %v610, %v611
  %v613 = vmul.f32 %v612, 0.010204081
  %v614 = vadd.f32 %v613, 1e-05
  %v615 = vrsqrt.pop %v614
  %v616 = vmul.f32 %v556, %v615
  %v617 = vmul.f32 %v557, %v615
  %v618 = vmul.f32 %v558, %v615
  %v619 = vmul.f32 %v559, %v615
  %v620 = vmul.f32 %v560, %v615
  %v621 = vmul.f32 %v561, %v615
  %v622 = vmul.f32 %v562, %v615
  %v623 = vmul.f32 %v563, %v615
  %v624 = vmul.f32 %v564, %v615
  %v625 = vmul.f32 %v565, %v615
  %v626 = vmul.f32 %v566, %v615
  %v627 = vmul.f32 %v567, %v615
  %v628 = vmul.f32 %v568, %v615
  %v629 = vld [vmem:[%s3] sm:$0x1]
  %v631 = vlaneseq
  %v632 = vshrl.u32 %v631, 7
  %v633 = vsub.s32 0, %v632
  %v634 = vrot.slane %v629, %v633
  %v636 = vmul.f32 %v616, %v634
  %v637 = vmul.f32 %v617, %v634
  %v638 = vmul.f32 %v618, %v634
  %v639 = vmul.f32 %v619, %v634
  %v640 = vmul.f32 %v620, %v634
  %v641 = vmul.f32 %v621, %v634
  %v642 = vmul.f32 %v622, %v634
  %v643 = vmul.f32 %v623, %v634
  %v644 = vmul.f32 %v624, %v634
  %v645 = vmul.f32 %v625, %v634
  %v646 = vmul.f32 %v626, %v634
  %v647 = vmul.f32 %v627, %v634
  %v648 = vmul.f32 %v628, %v634
  %v649 = vld [vmem:[%s4] sm:$0x1]
  %v651 = vlaneseq
  %v652 = vshrl.u32 %v651, 7
  %v653 = vsub.s32 0, %v652
  %v654 = vrot.slane %v649, %v653
  %v656 = vadd.f32 %v636, %v654
  %v657 = vadd.f32 %v637, %v654
  %v658 = vadd.f32 %v638, %v654
  %v659 = vadd.f32 %v639, %v654
  %v660 = vadd.f32 %v640, %v654
  %v661 = vadd.f32 %v641, %v654
  %v662 = vadd.f32 %v642, %v654
  %v663 = vadd.f32 %v643, %v654
  %v664 = vadd.f32 %v644, %v654
  %v665 = vadd.f32 %v645, %v654
  %v666 = vadd.f32 %v646, %v654
  %v667 = vadd.f32 %v647, %v654
  %v668 = vadd.f32 %v648, %v654
  %v669 = vmax.f32 %v656, 0.0
  %v670 = vmax.f32 %v657, 0.0
  %v671 = vmax.f32 %v658, 0.0
  %v672 = vmax.f32 %v659, 0.0
  %v673 = vmax.f32 %v660, 0.0
  %v674 = vmax.f32 %v661, 0.0
  %v675 = vmax.f32 %v662, 0.0
  %v676 = vmax.f32 %v663, 0.0
  %v677 = vmax.f32 %v664, 0.0
  %v678 = vmax.f32 %v665, 0.0
  %v679 = vmax.f32 %v666, 0.0
  %v680 = vmax.f32 %v667, 0.0
  %v681 = vmax.f32 %v668, 0.0
  %682 = vst.msk [vmem:[%s5] sm:$0xff] %vm522, %v669
  %683 = vst.msk [vmem:[%s5 + $0x8] sm:$0xff] %vm522, %v670
  %684 = vst.msk [vmem:[%s5 + $0x10] sm:$0xff] %vm522, %v671
  %685 = vst.msk [vmem:[%s5 + $0x18] sm:$0xff] %vm522, %v672
  %686 = vst.msk [vmem:[%s5 + $0x20] sm:$0xff] %vm522, %v673
  %687 = vst.msk [vmem:[%s5 + $0x28] sm:$0xff] %vm522, %v674
  %688 = vst.msk [vmem:[%s5 + $0x30] sm:$0xff] %vm522, %v675
  %689 = vst.msk [vmem:[%s5 + $0x38] sm:$0xff] %vm522, %v676
  %690 = vst.msk [vmem:[%s5 + $0x40] sm:$0xff] %vm522, %v677
  %691 = vst.msk [vmem:[%s5 + $0x48] sm:$0xff] %vm522, %v678
  %692 = vst.msk [vmem:[%s5 + $0x50] sm:$0xff] %vm522, %v679
  %693 = vst.msk [vmem:[%s5 + $0x58] sm:$0xff] %vm522, %v680
  %694 = vst.msk [vmem:[%s5 + $0x60] sm:$0x3] %vm546, %v681
  // Predicated region
  $region22: #{vae_forward.15} parent=0 // pred_check
    _
  $region23: #{vae_forward.15} parent=0 // pred_check_branch
    %696 = sbr.rel (0) target = $region25
  $region24: #{vae_forward.15} parent=0 // pred_region
    _
  $region25: #{vae_forward.15} parent=0 // pred_fallthru
    _
  // Predicated region
  $region26: #{vae_forward.15} parent=0 // pred_check
    _
  $region27: #{vae_forward.15} parent=0 // pred_check_branch
    %698 = sbr.rel (0) target = $region29
  $region28: #{vae_forward.15} parent=0 // pred_region
    _
  $region29: #{vae_forward.15} parent=0 // pred_fallthru
    _

// kernel: vae_forward.16
$region0: #{vae_forward.16}
  #allocation0 [shape = 'u32[]', space=smem, size = 0x4, offset = 0x4, fixed_abs, tag = 'smem constant byte address 0x4 - core index']
  #allocation1 [shape = 'u32[144,128]{1,0:T(1,128)}', space=vmem, size = 0x12000, scoped, tag = 'internal scratch']
  %s0 = inlined_call_operand.vmem [shape: f32[392,288], index: 0, kind: input, shape index: {}]
  %s1 = inlined_call_operand.vmem [shape: f32[288,16], index: 1, kind: input, shape index: {}]
  %s2 = inlined_call_operand.vmem [shape: f32[1,16], index: 2, kind: input, shape index: {}]
  %s3 = inlined_call_operand.vmem [shape: f32[1,16], index: 3, kind: input, shape index: {}]
  %s4 = inlined_call_operand.vmem [shape: f32[1,16], index: 4, kind: input, shape index: {}]
  %s5 = inlined_call_operand.vmem [shape: f32[392,16], index: 5, kind: output, shape index: {}]
  %s6 = sld [smem:[#allocation0]]
  $region30: #{vae_forward.16} parent=0
    _
  %s8 = ssub.s32 1, %s6
  %s9 = scalar_select 0, %s8, %s6
  // Predicated region
  $region2: #{vae_forward.16} parent=0 // pred_check
    _
  $region3: #{vae_forward.16} parent=0 // pred_check_branch
    %11 = sbr.rel (0) target = $region5
  $region4: #{vae_forward.16} parent=0 // pred_region
    _
  $region5: #{vae_forward.16} parent=0 // pred_fallthru
    _
  // Predicated region
  $region6: #{vae_forward.16} parent=0 // pred_check
    _
  $region7: #{vae_forward.16} parent=0 // pred_check_branch
    %13 = sbr.rel (0) target = $region9
  $region8: #{vae_forward.16} parent=0 // pred_region
    _
  $region9: #{vae_forward.16} parent=0 // pred_fallthru
    _
  // Predicated region
  $region10: #{vae_forward.16} parent=0 // pred_check
    _
  $region11: #{vae_forward.16} parent=0 // pred_check_branch
    %15 = sbr.rel (0) target = $region13
  $region12: #{vae_forward.16} parent=0 // pred_region
    _
  $region13: #{vae_forward.16} parent=0 // pred_fallthru
    _
  // Predicated region
  $region14: #{vae_forward.16} parent=0 // pred_check
    _
  $region15: #{vae_forward.16} parent=0 // pred_check_branch
    %17 = sbr.rel (0) target = $region17
  $region16: #{vae_forward.16} parent=0 // pred_region
    _
  $region17: #{vae_forward.16} parent=0 // pred_fallthru
    _
  // Predicated region
  $region18: #{vae_forward.16} parent=0 // pred_check
    _
  $region19: #{vae_forward.16} parent=0 // pred_check_branch
    %19 = sbr.rel (0) target = $region21
  $region20: #{vae_forward.16} parent=0 // pred_region
    _
  $region21: #{vae_forward.16} parent=0 // pred_fallthru
    _
  %v21 = vld [vmem:[%s0] sm:$0xff]
  %v22 = vld [vmem:[%s0 + $0x8] sm:$0xff]
  %v23 = vld [vmem:[%s0 + $0x10] sm:$0xff]
  %v24 = vld [vmem:[%s0 + $0x18] sm:$0xff]
  %v25 = vld [vmem:[%s0 + $0x20] sm:$0xff]
  %v26 = vld [vmem:[%s0 + $0x28] sm:$0xff]
  %v27 = vld [vmem:[%s0 + $0x30] sm:$0xff]
  %v28 = vld [vmem:[%s0 + $0x38] sm:$0xff]
  %v29 = vld [vmem:[%s0 + $0x40] sm:$0xff]
  %v30 = vld [vmem:[%s0 + $0x48] sm:$0xff]
  %v31 = vld [vmem:[%s0 + $0x50] sm:$0xff]
  %v32 = vld [vmem:[%s0 + $0x58] sm:$0xff]
  %v33 = vld [vmem:[%s0 + $0x60] sm:$0xff]
  %v34 = vld [vmem:[%s0 + $0x68] sm:$0xff]
  %v35 = vld [vmem:[%s0 + $0x70] sm:$0xff]
  %v36 = vld [vmem:[%s0 + $0x78] sm:$0xff]
  %v37 = vld [vmem:[%s0 + $0x80] sm:$0xff]
  %v38 = vld [vmem:[%s0 + $0x88] sm:$0xff]
  %v39 = vld [vmem:[%s0 + $0x90] sm:$0xff]
  %v40 = vld [vmem:[%s0 + $0x98] sm:$0xff]
  %v41 = vld [vmem:[%s0 + $0xa0] sm:$0xff]
  %v42 = vld [vmem:[%s0 + $0xa8] sm:$0xff]
  %v43 = vld [vmem:[%s0 + $0xb0] sm:$0xff]
  %v44 = vld [vmem:[%s0 + $0xb8] sm:$0xff]
  %v45 = vld [vmem:[%s0 + $0xc0] sm:$0xff]
  %v46 = vld [vmem:[%s0 + $0xc8] sm:$0xff]
  %v47 = vld [vmem:[%s0 + $0xd0] sm:$0xff]
  %v48 = vld [vmem:[%s0 + $0xd8] sm:$0xff]
  %v49 = vld [vmem:[%s0 + $0xe0] sm:$0xff]
  %v50 = vld [vmem:[%s0 + $0xe8] sm:$0xff]
  %v51 = vld [vmem:[%s0 + $0xf0] sm:$0xff]
  %v52 = vld [vmem:[%s0 + $0xf8] sm:$0xff]
  %v53 = vld [vmem:[%s0 + $0x100] sm:$0xff]
  %v54 = vld [vmem:[%s0 + $0x108] sm:$0xff]
  %v55 = vld [vmem:[%s0 + $0x110] sm:$0xff]
  %v56 = vld [vmem:[%s0 + $0x118] sm:$0xff]
  %v57 = vld [vmem:[%s0 + $0x120] sm:$0xff]
  %v58 = vld [vmem:[%s0 + $0x128] sm:$0xff]
  %v59 = vld [vmem:[%s0 + $0x130] sm:$0xff]
  %v60 = vld [vmem:[%s0 + $0x138] sm:$0xff]
  %v61 = vld [vmem:[%s0 + $0x140] sm:$0xff]
  %v62 = vld [vmem:[%s0 + $0x148] sm:$0xff]
  %v63 = vld [vmem:[%s0 + $0x150] sm:$0xff]
  %v64 = vld [vmem:[%s0 + $0x158] sm:$0xff]
  %v65 = vld [vmem:[%s0 + $0x160] sm:$0xff]
  %v66 = vld [vmem:[%s0 + $0x168] sm:$0xff]
  %v67 = vld [vmem:[%s0 + $0x170] sm:$0xff]
  %v68 = vld [vmem:[%s0 + $0x178] sm:$0xff]
  %v69 = vld [vmem:[%s0 + $0x180] sm:$0xff]
  %v70 = vld [vmem:[%s0 + $0x188] sm:$0xff]
  %v71 = vld [vmem:[%s0 + $0x190] sm:$0xff]
  %v72 = vld [vmem:[%s0 + $0x198] sm:$0xff]
  %v73 = vld [vmem:[%s0 + $0x1a0] sm:$0xff]
  %v74 = vld [vmem:[%s0 + $0x1a8] sm:$0xff]
  %v75 = vld [vmem:[%s0 + $0x1b0] sm:$0xff]
  %v76 = vld [vmem:[%s0 + $0x1b8] sm:$0xff]
  %v77 = vld [vmem:[%s0 + $0x1c0] sm:$0xff]
  %v78 = vld [vmem:[%s0 + $0x1c8] sm:$0xff]
  %v79 = vld [vmem:[%s0 + $0x1d0] sm:$0xff]
  %v80 = vld [vmem:[%s0 + $0x1d8] sm:$0xff]
  %v81 = vld [vmem:[%s0 + $0x1e0] sm:$0xff]
  %v82 = vld [vmem:[%s0 + $0x1e8] sm:$0xff]
  %v83 = vld [vmem:[%s0 + $0x1f0] sm:$0xff]
  %v84 = vld [vmem:[%s0 + $0x1f8] sm:$0xff]
  %v85 = vld [vmem:[%s0 + $0x200] sm:$0xff]
  %v86 = vld [vmem:[%s0 + $0x208] sm:$0xff]
  %v87 = vld [vmem:[%s0 + $0x210] sm:$0xff]
  %v88 = vld [vmem:[%s0 + $0x218] sm:$0xff]
  %v89 = vld [vmem:[%s0 + $0x220] sm:$0xff]
  %v90 = vld [vmem:[%s0 + $0x228] sm:$0xff]
  %v91 = vld [vmem:[%s0 + $0x230] sm:$0xff]
  %v92 = vld [vmem:[%s0 + $0x238] sm:$0xff]
  %v93 = vld [vmem:[%s0 + $0x240] sm:$0xff]
  %v94 = vld [vmem:[%s0 + $0x248] sm:$0xff]
  %v95 = vld [vmem:[%s0 + $0x250] sm:$0xff]
  %v96 = vld [vmem:[%s0 + $0x258] sm:$0xff]
  %v97 = vld [vmem:[%s0 + $0x260] sm:$0xff]
  %v98 = vld [vmem:[%s0 + $0x268] sm:$0xff]
  %v99 = vld [vmem:[%s0 + $0x270] sm:$0xff]
  %v100 = vld [vmem:[%s0 + $0x278] sm:$0xff]
  %v101 = vld [vmem:[%s0 + $0x280] sm:$0xff]
  %v102 = vld [vmem:[%s0 + $0x288] sm:$0xff]
  %v103 = vld [vmem:[%s0 + $0x290] sm:$0xff]
  %v104 = vld [vmem:[%s0 + $0x298] sm:$0xff]
  %v105 = vld [vmem:[%s0 + $0x2a0] sm:$0xff]
  %v106 = vld [vmem:[%s0 + $0x2a8] sm:$0xff]
  %v107 = vld [vmem:[%s0 + $0x2b0] sm:$0xff]
  %v108 = vld [vmem:[%s0 + $0x2b8] sm:$0xff]
  %v109 = vld [vmem:[%s0 + $0x2c0] sm:$0xff]
  %v110 = vld [vmem:[%s0 + $0x2c8] sm:$0xff]
  %v111 = vld [vmem:[%s0 + $0x2d0] sm:$0xff]
  %v112 = vld [vmem:[%s0 + $0x2d8] sm:$0xff]
  %v113 = vld [vmem:[%s0 + $0x2e0] sm:$0xff]
  %v114 = vld [vmem:[%s0 + $0x2e8] sm:$0xff]
  %v115 = vld [vmem:[%s0 + $0x2f0] sm:$0xff]
  %v116 = vld [vmem:[%s0 + $0x2f8] sm:$0xff]
  %v117 = vld [vmem:[%s0 + $0x300] sm:$0xff]
  %v118 = vld [vmem:[%s0 + $0x308] sm:$0xff]
  %v119 = vld [vmem:[%s0 + $0x310] sm:$0xff]
  %v120 = vld [vmem:[%s0 + $0x318] sm:$0xff]
  %v121 = vld [vmem:[%s0 + $0x320] sm:$0xff]
  %v122 = vld [vmem:[%s0 + $0x328] sm:$0xff]
  %v123 = vld [vmem:[%s0 + $0x330] sm:$0xff]
  %v124 = vld [vmem:[%s0 + $0x338] sm:$0xff]
  %v125 = vld [vmem:[%s0 + $0x340] sm:$0xff]
  %v126 = vld [vmem:[%s0 + $0x348] sm:$0xff]
  %v127 = vld [vmem:[%s0 + $0x350] sm:$0xff]
  %v128 = vld [vmem:[%s0 + $0x358] sm:$0xff]
  %v129 = vld [vmem:[%s0 + $0x360] sm:$0xff]
  %v130 = vld [vmem:[%s0 + $0x368] sm:$0xff]
  %v131 = vld [vmem:[%s0 + $0x370] sm:$0xff]
  %v132 = vld [vmem:[%s0 + $0x378] sm:$0xff]
  %v133 = vld [vmem:[%s0 + $0x380] sm:$0xff]
  %v134 = vld [vmem:[%s0 + $0x388] sm:$0xff]
  %v135 = vld [vmem:[%s0 + $0x390] sm:$0xff]
  %v136 = vld [vmem:[%s0 + $0x398] sm:$0xff]
  %v137 = vld [vmem:[%s0 + $0x3a0] sm:$0xff]
  %v138 = vld [vmem:[%s0 + $0x3a8] sm:$0xff]
  %v139 = vld [vmem:[%s0 + $0x3b0] sm:$0xff]
  %v140 = vld [vmem:[%s0 + $0x3b8] sm:$0xff]
  %v141 = vld [vmem:[%s0 + $0x3c0] sm:$0xff]
  %v142 = vld [vmem:[%s0 + $0x3c8] sm:$0xff]
  %v143 = vld [vmem:[%s0 + $0x3d0] sm:$0xff]
  %v144 = vld [vmem:[%s0 + $0x3d8] sm:$0xff]
  %v145 = vld [vmem:[%s0 + $0x3e0] sm:$0xff]
  %v146 = vld [vmem:[%s0 + $0x3e8] sm:$0xff]
  %v147 = vld [vmem:[%s0 + $0x3f0] sm:$0xff]
  %v148 = vld [vmem:[%s0 + $0x3f8] sm:$0xff]
  %v149 = vld [vmem:[%s0 + $0x400] sm:$0xff]
  %v150 = vld [vmem:[%s0 + $0x408] sm:$0xff]
  %v151 = vld [vmem:[%s0 + $0x410] sm:$0xff]
  %v152 = vld [vmem:[%s0 + $0x418] sm:$0xff]
  %v153 = vld [vmem:[%s0 + $0x420] sm:$0xff]
  %v154 = vld [vmem:[%s0 + $0x428] sm:$0xff]
  %v155 = vld [vmem:[%s0 + $0x430] sm:$0xff]
  %v156 = vld [vmem:[%s0 + $0x438] sm:$0xff]
  %v157 = vld [vmem:[%s0 + $0x440] sm:$0xff]
  %v158 = vld [vmem:[%s0 + $0x448] sm:$0xff]
  %v159 = vld [vmem:[%s0 + $0x450] sm:$0xff]
  %v160 = vld [vmem:[%s0 + $0x458] sm:$0xff]
  %v161 = vld [vmem:[%s0 + $0x460] sm:$0xff]
  %v162 = vld [vmem:[%s0 + $0x468] sm:$0xff]
  %v163 = vld [vmem:[%s0 + $0x470] sm:$0xff]
  %v164 = vld [vmem:[%s0 + $0x478] sm:$0xff]
  %v165 = vld [vmem:[%s0 + $0x480] sm:$0xff]
  %v166 = vld [vmem:[%s0 + $0x488] sm:$0xff]
  %v167 = vld [vmem:[%s0 + $0x490] sm:$0xff]
  %v168 = vpack.c.bf16 %v24, %v21
  %v169 = vpack.c.bf16 %v25, %v22
  %v170 = vpack.c.bf16 %v26, %v23
  %v171 = vpack.c.bf16 %v30, %v27
  %v172 = vpack.c.bf16 %v31, %v28
  %v173 = vpack.c.bf16 %v32, %v29
  %v174 = vpack.c.bf16 %v36, %v33
  %v175 = vpack.c.bf16 %v37, %v34
  %v176 = vpack.c.bf16 %v38, %v35
  %v177 = vpack.c.bf16 %v42, %v39
  %v178 = vpack.c.bf16 %v43, %v40
  %v179 = vpack.c.bf16 %v44, %v41
  %v180 = vpack.c.bf16 %v48, %v45
  %v181 = vpack.c.bf16 %v49, %v46
  %v182 = vpack.c.bf16 %v50, %v47
  %v183 = vpack.c.bf16 %v54, %v51
  %v184 = vpack.c.bf16 %v55, %v52
  %v185 = vpack.c.bf16 %v56, %v53
  %v186 = vpack.c.bf16 %v60, %v57
  %v187 = vpack.c.bf16 %v61, %v58
  %v188 = vpack.c.bf16 %v62, %v59
  %v189 = vpack.c.bf16 %v66, %v63
  %v190 = vpack.c.bf16 %v67, %v64
  %v191 = vpack.c.bf16 %v68, %v65
  %v192 = vpack.c.bf16 %v72, %v69
  %v193 = vpack.c.bf16 %v73, %v70
  %v194 = vpack.c.bf16 %v74, %v71
  %v195 = vpack.c.bf16 %v78, %v75
  %v196 = vpack.c.bf16 %v79, %v76
  %v197 = vpack.c.bf16 %v80, %v77
  %v198 = vpack.c.bf16 %v84, %v81
  %v199 = vpack.c.bf16 %v85, %v82
  %v200 = vpack.c.bf16 %v86, %v83
  %v201 = vpack.c.bf16 %v90, %v87
  %v202 = vpack.c.bf16 %v91, %v88
  %v203 = vpack.c.bf16 %v92, %v89
  %v204 = vpack.c.bf16 %v96, %v93
  %v205 = vpack.c.bf16 %v97, %v94
  %v206 = vpack.c.bf16 %v98, %v95
  %v207 = vpack.c.bf16 %v102, %v99
  %v208 = vpack.c.bf16 %v103, %v100
  %v209 = vpack.c.bf16 %v104, %v101
  %v210 = vpack.c.bf16 %v108, %v105
  %v211 = vpack.c.bf16 %v109, %v106
  %v212 = vpack.c.bf16 %v110, %v107
  %v213 = vpack.c.bf16 %v114, %v111
  %v214 = vpack.c.bf16 %v115, %v112
  %v215 = vpack.c.bf16 %v116, %v113
  %v216 = vpack.c.bf16 %v120, %v117
  %v217 = vpack.c.bf16 %v121, %v118
  %v218 = vpack.c.bf16 %v122, %v119
  %v219 = vpack.c.bf16 %v126, %v123
  %v220 = vpack.c.bf16 %v127, %v124
  %v221 = vpack.c.bf16 %v128, %v125
  %v222 = vpack.c.bf16 %v132, %v129
  %v223 = vpack.c.bf16 %v133, %v130
  %v224 = vpack.c.bf16 %v134, %v131
  %v225 = vpack.c.bf16 %v138, %v135
  %v226 = vpack.c.bf16 %v139, %v136
  %v227 = vpack.c.bf16 %v140, %v137
  %v228 = vpack.c.bf16 %v144, %v141
  %v229 = vpack.c.bf16 %v145, %v142
  %v230 = vpack.c.bf16 %v146, %v143
  %v231 = vpack.c.bf16 %v150, %v147
  %v232 = vpack.c.bf16 %v151, %v148
  %v233 = vpack.c.bf16 %v152, %v149
  %v234 = vpack.c.bf16 %v156, %v153
  %v235 = vpack.c.bf16 %v157, %v154
  %v236 = vpack.c.bf16 %v158, %v155
  %v237 = vpack.c.bf16 %v162, %v159
  %v238 = vpack.c.bf16 %v163, %v160
  %v239 = vpack.c.bf16 %v164, %v161
  %v240 = vpack.c.bf16 %v165, %v165
  %v241 = vpack.c.bf16 %v166, %v166
  %v242 = vpack.c.bf16 %v167, %v167
  %v243 = vld [vmem:[%s1] sm:$0xff]
  %v244 = vld [vmem:[%s1 + $0x8] sm:$0xff]
  %v245 = vld [vmem:[%s1 + $0x10] sm:$0xff]
  %v246 = vld [vmem:[%s1 + $0x18] sm:$0xff]
  %v247 = vld [vmem:[%s1 + $0x20] sm:$0xff]
  %v248 = vld [vmem:[%s1 + $0x28] sm:$0xff]
  %v249 = vld [vmem:[%s1 + $0x30] sm:$0xff]
  %v250 = vld [vmem:[%s1 + $0x38] sm:$0xff]
  %v251 = vld [vmem:[%s1 + $0x40] sm:$0xff]
  %v252 = vld [vmem:[%s1 + $0x48] sm:$0xff]
  %v253 = vld [vmem:[%s1 + $0x50] sm:$0xff]
  %v254 = vld [vmem:[%s1 + $0x58] sm:$0xff]
  %v255 = vld [vmem:[%s1 + $0x60] sm:$0xff]
  %v256 = vld [vmem:[%s1 + $0x68] sm:$0xff]
  %v257 = vld [vmem:[%s1 + $0x70] sm:$0xff]
  %v258 = vld [vmem:[%s1 + $0x78] sm:$0xff]
  %v259 = vld [vmem:[%s1 + $0x80] sm:$0xff]
  %v260 = vld [vmem:[%s1 + $0x88] sm:$0xff]
  %v261 = vld [vmem:[%s1 + $0x90] sm:$0xff]
  %v262 = vld [vmem:[%s1 + $0x98] sm:$0xff]
  %v263 = vld [vmem:[%s1 + $0xa0] sm:$0xff]
  %v264 = vld [vmem:[%s1 + $0xa8] sm:$0xff]
  %v265 = vld [vmem:[%s1 + $0xb0] sm:$0xff]
  %v266 = vld [vmem:[%s1 + $0xb8] sm:$0xff]
  %v267 = vld [vmem:[%s1 + $0xc0] sm:$0xff]
  %v268 = vld [vmem:[%s1 + $0xc8] sm:$0xff]
  %v269 = vld [vmem:[%s1 + $0xd0] sm:$0xff]
  %v270 = vld [vmem:[%s1 + $0xd8] sm:$0xff]
  %v271 = vld [vmem:[%s1 + $0xe0] sm:$0xff]
  %v272 = vld [vmem:[%s1 + $0xe8] sm:$0xff]
  %v273 = vld [vmem:[%s1 + $0xf0] sm:$0xff]
  %v274 = vld [vmem:[%s1 + $0xf8] sm:$0xff]
  %v275 = vld [vmem:[%s1 + $0x100] sm:$0xff]
  %v276 = vld [vmem:[%s1 + $0x108] sm:$0xff]
  %v277 = vld [vmem:[%s1 + $0x110] sm:$0xff]
  %v278 = vld [vmem:[%s1 + $0x118] sm:$0xff]
  %v279 = vpack.c.bf16 %v244, %v243
  %v280 = vpack.c.bf16 %v246, %v245
  %v281 = vpack.c.bf16 %v248, %v247
  %v282 = vpack.c.bf16 %v250, %v249
  %v283 = vpack.c.bf16 %v252, %v251
  %v284 = vpack.c.bf16 %v254, %v253
  %v285 = vpack.c.bf16 %v256, %v255
  %v286 = vpack.c.bf16 %v258, %v257
  %v287 = vpack.c.bf16 %v260, %v259
  %v288 = vpack.c.bf16 %v262, %v261
  %v289 = vpack.c.bf16 %v264, %v263
  %v290 = vpack.c.bf16 %v266, %v265
  %v291 = vpack.c.bf16 %v268, %v267
  %v292 = vpack.c.bf16 %v270, %v269
  %v293 = vpack.c.bf16 %v272, %v271
  %v294 = vpack.c.bf16 %v274, %v273
  %v295 = vpack.c.bf16 %v276, %v275
  %v296 = vpack.c.bf16 %v278, %v277
  %v297 = vld [vmem:[%s2] sm:$0x1]
  %v299 = vlaneseq
  %v300 = vshrl.u32 %v299, 7
  %v301 = vsub.s32 0, %v300
  %v302 = vrot.slane %v297, %v301
  %vm304 = vcmask 261120
  %v306 = vsel %vm304, %v170, 0
  %v309 = vsel %vm304, %v173, 0
  %v312 = vsel %vm304, %v176, 0
  %v315 = vsel %vm304, %v179, 0
  %v318 = vsel %vm304, %v182, 0
  %v321 = vsel %vm304, %v185, 0
  %v324 = vsel %vm304, %v188, 0
  %v327 = vsel %vm304, %v191, 0
  %v330 = vsel %vm304, %v194, 0
  %v333 = vsel %vm304, %v197, 0
  %v336 = vsel %vm304, %v200, 0
  %v339 = vsel %vm304, %v203, 0
  %v342 = vsel %vm304, %v206, 0
  %v345 = vsel %vm304, %v209, 0
  %v348 = vsel %vm304, %v212, 0
  %v351 = vsel %vm304, %v215, 0
  %v354 = vsel %vm304, %v218, 0
  %v357 = vsel %vm304, %v221, 0
  %v360 = vsel %vm304, %v224, 0
  %v363 = vsel %vm304, %v227, 0
  %v366 = vsel %vm304, %v230, 0
  %v369 = vsel %vm304, %v233, 0
  %v372 = vsel %vm304, %v236, 0
  %v375 = vsel %vm304, %v239, 0
  %v378 = vsel %vm304, %v242, 0
  %380 = vmatprep.subr.bf16.mxu0 0
  %381 = vmatpush1.bf16.msra.mxu0 %v279
  %382 = vmatprep.subr.bf16.mxu0 0
  %383 = vmatpush1.bf16.msra.mxu0 %v280
  %384 = vmatprep.subr.bf16.mxu0 0
  %385 = vmatpush1.bf16.msra.mxu0 %v281
  %386 = vmatprep.subr.bf16.mxu0 0
  %387 = vmatpush1.bf16.msra.mxu0 %v282
  %388 = vmatprep.subr.bf16.mxu0 0
  %389 = vmatpush1.bf16.msra.mxu0 %v283
  %390 = vmatprep.subr.bf16.mxu0 0
  %391 = vmatpush1.bf16.msra.mxu0 %v284
  %392 = vmatprep.subr.bf16.mxu0 0
  %393 = vmatpush1.bf16.msra.mxu0 %v285
  %394 = vmatprep.subr.bf16.mxu0 0
  %395 = vmatpush1.bf16.msra.mxu0 %v286
  %396 = vmatprep.subr.bf16.mxu0 0
  %397 = vmatpush1.bf16.msra.mxu0 %v287
  %398 = vmatprep.subr.bf16.mxu0 0
  %399 = vmatpush1.bf16.msra.mxu0 %v288
  %400 = vmatprep.subr.bf16.mxu0 0
  %401 = vmatpush1.bf16.msra.mxu0 %v289
  %402 = vmatprep.subr.bf16.mxu0 0
  %403 = vmatpush1.bf16.msra.mxu0 %v290
  %404 = vmatprep.subr.bf16.mxu0 0
  %405 = vmatpush1.bf16.msra.mxu0 %v291
  %406 = vmatprep.subr.bf16.mxu0 0
  %407 = vmatpush1.bf16.msra.mxu0 %v292
  %408 = vmatprep.subr.bf16.mxu0 0
  %409 = vmatpush1.bf16.msra.mxu0 %v293
  %410 = vmatprep.subr.bf16.mxu0 0
  %411 = vmatpush1.bf16.msra.mxu0 %v294
  %412 = vmatprep.mubr.bf16.mxu0 %v169
  %413 = vmatmul.mubr.bf16.gmra.mrb[0].mxu0 %v168
  %v414 = vpop.f32.mrb[0].mxu0
  %v415 = vadd.f32 %v302, %v414
  %v416 = vpop.f32.mrb[0].mxu0
  %v417 = vpop.f32.mrb[0].mxu0
  %v418 = vadd.f32 %v302, %v417
  %v419 = vpop.f32.mrb[0].mxu0
  %420 = vmatprep.mubr.bf16.mxu0 %v172
  %421 = vmatmul.mubr.bf16.gmra.mrb[0].mxu0 %v171
  %v422 = vpop.f32.mrb[0].mxu0
  %v423 = vadd.f32 %v302, %v422
  %v424 = vpop.f32.mrb[0].mxu0
  %v425 = vpop.f32.mrb[0].mxu0
  %v426 = vadd.f32 %v302, %v425
  %v427 = vpop.f32.mrb[0].mxu0
  %428 = vmatprep.mubr.bf16.mxu0 %v175
  %429 = vmatmul.mubr.bf16.gmra.mrb[0].mxu0 %v174
  %v430 = vpop.f32.mrb[0].mxu0
  %v431 = vadd.f32 %v302, %v430
  %v432 = vpop.f32.mrb[0].mxu0
  %v433 = vpop.f32.mrb[0].mxu0
  %v434 = vadd.f32 %v302, %v433
  %v435 = vpop.f32.mrb[0].mxu0
  %436 = vmatprep.mubr.bf16.mxu0 %v178
  %437 = vmatmul.mubr.bf16.gmra.mrb[0].mxu0 %v177
  %v438 = vpop.f32.mrb[0].mxu0
  %v439 = vadd.f32 %v302, %v438
  %v440 = vpop.f32.mrb[0].mxu0
  %v441 = vpop.f32.mrb[0].mxu0
  %v442 = vadd.f32 %v302, %v441
  %v443 = vpop.f32.mrb[0].mxu0
  %444 = vmatprep.mubr.bf16.mxu0 %v181
  %445 = vmatmul.mubr.bf16.gmra.mrb[0].mxu0 %v180
  %v446 = vpop.f32.mrb[0].mxu0
  %v447 = vadd.f32 %v302, %v446
  %v448 = vpop.f32.mrb[0].mxu0
  %v449 = vpop.f32.mrb[0].mxu0
  %v450 = vadd.f32 %v302, %v449
  %v451 = vpop.f32.mrb[0].mxu0
  %452 = vmatprep.mubr.bf16.mxu0 %v184
  %453 = vmatmul.mubr.bf16.gmra.mrb[0].mxu0 %v183
  %v454 = vpop.f32.mrb[0].mxu0
  %v455 = vadd.f32 %v302, %v454
  %v456 = vpop.f32.mrb[0].mxu0
  %v457 = vpop.f32.mrb[0].mxu0
  %v458 = vadd.f32 %v302, %v457
  %v459 = vpop.f32.mrb[0].mxu0
  %460 = vmatprep.mubr.bf16.mxu0 %v187
  %461 = vmatmul.mubr.bf16.gmra.mrb[0].mxu0 %v186
  %v462 = vpop.f32.mrb[0].mxu0
  %v463 = vadd.f32 %v302, %v462
  %v464 = vpop.f32.mrb[0].mxu0
  %v465 = vpop.f32.mrb[0].mxu0
  %v466 = vadd.f32 %v302, %v465
  %v467 = vpop.f32.mrb[0].mxu0
  %468 = vmatprep.mubr.bf16.mxu0 %v190
  %469 = vmatmul.mubr.bf16.gmra.mrb[0].mxu0 %v189
  %v470 = vpop.f32.mrb[0].mxu0
  %v471 = vadd.f32 %v302, %v470
  %v472 = vpop.f32.mrb[0].mxu0
  %v473 = vpop.f32.mrb[0].mxu0
  %v474 = vadd.f32 %v302, %v473
  %v475 = vpop.f32.mrb[0].mxu0
  %476 = vmatprep.mubr.bf16.mxu0 %v193
  %477 = vmatmul.mubr.bf16.gmra.mrb[0].mxu0 %v192
  %v478 = vpop.f32.mrb[0].mxu0
  %v479 = vadd.f32 %v302, %v478
  %v480 = vpop.f32.mrb[0].mxu0
  %v481 = vpop.f32.mrb[0].mxu0
  %v482 = vadd.f32 %v302, %v481
  %v483 = vpop.f32.mrb[0].mxu0
  %484 = vmatprep.mubr.bf16.mxu0 %v196
  %485 = vmatmul.mubr.bf16.gmra.mrb[0].mxu0 %v195
  %v486 = vpop.f32.mrb[0].mxu0
  %v487 = vadd.f32 %v302, %v486
  %v488 = vpop.f32.mrb[0].mxu0
  %v489 = vpop.f32.mrb[0].mxu0
  %v490 = vadd.f32 %v302, %v489
  %v491 = vpop.f32.mrb[0].mxu0
  %492 = vmatprep.mubr.bf16.mxu0 %v199
  %493 = vmatmul.mubr.bf16.gmra.mrb[0].mxu0 %v198
  %v494 = vpop.f32.mrb[0].mxu0
  %v495 = vadd.f32 %v302, %v494
  %v496 = vpop.f32.mrb[0].mxu0
  %v497 = vpop.f32.mrb[0].mxu0
  %v498 = vadd.f32 %v302, %v497
  %v499 = vpop.f32.mrb[0].mxu0
  %500 = vmatprep.mubr.bf16.mxu0 %v202
  %501 = vmatmul.mubr.bf16.gmra.mrb[0].mxu0 %v201
  %v502 = vpop.f32.mrb[0].mxu0
  %v503 = vadd.f32 %v302, %v502
  %v504 = vpop.f32.mrb[0].mxu0
  %v505 = vpop.f32.mrb[0].mxu0
  %v506 = vadd.f32 %v302, %v505
  %v507 = vpop.f32.mrb[0].mxu0
  %508 = vmatprep.mubr.bf16.mxu0 %v205
  %509 = vmatmul.mubr.bf16.gmra.mrb[0].mxu0 %v204
  %v510 = vpop.f32.mrb[0].mxu0
  %v511 = vadd.f32 %v302, %v510
  %v512 = vpop.f32.mrb[0].mxu0
  %v513 = vpop.f32.mrb[0].mxu0
  %v514 = vadd.f32 %v302, %v513
  %v515 = vpop.f32.mrb[0].mxu0
  %516 = vmatprep.mubr.bf16.mxu0 %v208
  %517 = vmatmul.mubr.bf16.gmra.mrb[0].mxu0 %v207
  %v518 = vpop.f32.mrb[0].mxu0
  %v519 = vadd.f32 %v302, %v518
  %v520 = vpop.f32.mrb[0].mxu0
  %v521 = vpop.f32.mrb[0].mxu0
  %v522 = vadd.f32 %v302, %v521
  %v523 = vpop.f32.mrb[0].mxu0
  %524 = vmatprep.mubr.bf16.mxu0 %v211
  %525 = vmatmul.mubr.bf16.gmra.mrb[0].mxu0 %v210
  %v526 = vpop.f32.mrb[0].mxu0
  %v527 = vadd.f32 %v302, %v526
  %v528 = vpop.f32.mrb[0].mxu0
  %v529 = vpop.f32.mrb[0].mxu0
  %v530 = vadd.f32 %v302, %v529
  %v531 = vpop.f32.mrb[0].mxu0
  %532 = vmatprep.mubr.bf16.mxu0 %v214
  %533 = vmatmul.mubr.bf16.gmra.mrb[0].mxu0 %v213
  %v534 = vpop.f32.mrb[0].mxu0
  %v535 = vadd.f32 %v302, %v534
  %v536 = vpop.f32.mrb[0].mxu0
  %v537 = vpop.f32.mrb[0].mxu0
  %v538 = vadd.f32 %v302, %v537
  %v539 = vpop.f32.mrb[0].mxu0
  %540 = vmatprep.mubr.bf16.mxu0 %v217
  %541 = vmatmul.mubr.bf16.gmra.mrb[0].mxu0 %v216
  %v542 = vpop.f32.mrb[0].mxu0
  %v543 = vadd.f32 %v302, %v542
  %v544 = vpop.f32.mrb[0].mxu0
  %v545 = vpop.f32.mrb[0].mxu0
  %v546 = vadd.f32 %v302, %v545
  %v547 = vpop.f32.mrb[0].mxu0
  %548 = vmatprep.mubr.bf16.mxu0 %v220
  %549 = vmatmul.mubr.bf16.gmra.mrb[0].mxu0 %v219
  %v550 = vpop.f32.mrb[0].mxu0
  %v551 = vadd.f32 %v302, %v550
  %v552 = vpop.f32.mrb[0].mxu0
  %v553 = vpop.f32.mrb[0].mxu0
  %v554 = vadd.f32 %v302, %v553
  %v555 = vpop.f32.mrb[0].mxu0
  %556 = vmatprep.mubr.bf16.mxu0 %v223
  %557 = vmatmul.mubr.bf16.gmra.mrb[0].mxu0 %v222
  %v558 = vpop.f32.mrb[0].mxu0
  %v559 = vadd.f32 %v302, %v558
  %v560 = vpop.f32.mrb[0].mxu0
  %v561 = vpop.f32.mrb[0].mxu0
  %v562 = vadd.f32 %v302, %v561
  %v563 = vpop.f32.mrb[0].mxu0
  %564 = vmatprep.mubr.bf16.mxu0 %v226
  %565 = vmatmul.mubr.bf16.gmra.mrb[0].mxu0 %v225
  %v566 = vpop.f32.mrb[0].mxu0
  %v567 = vadd.f32 %v302, %v566
  %v568 = vpop.f32.mrb[0].mxu0
  %v569 = vpop.f32.mrb[0].mxu0
  %v570 = vadd.f32 %v302, %v569
  %v571 = vpop.f32.mrb[0].mxu0
  %572 = vmatprep.mubr.bf16.mxu0 %v229
  %573 = vmatmul.mubr.bf16.gmra.mrb[0].mxu0 %v228
  %v574 = vpop.f32.mrb[0].mxu0
  %v575 = vadd.f32 %v302, %v574
  %v576 = vpop.f32.mrb[0].mxu0
  %v577 = vpop.f32.mrb[0].mxu0
  %v578 = vadd.f32 %v302, %v577
  %v579 = vpop.f32.mrb[0].mxu0
  %580 = vmatprep.mubr.bf16.mxu0 %v232
  %581 = vmatmul.mubr.bf16.gmra.mrb[0].mxu0 %v231
  %v582 = vpop.f32.mrb[0].mxu0
  %v583 = vadd.f32 %v302, %v582
  %v584 = vpop.f32.mrb[0].mxu0
  %v585 = vpop.f32.mrb[0].mxu0
  %v586 = vadd.f32 %v302, %v585
  %v587 = vpop.f32.mrb[0].mxu0
  %588 = vmatprep.mubr.bf16.mxu0 %v235
  %589 = vmatmul.mubr.bf16.gmra.mrb[0].mxu0 %v234
  %v590 = vpop.f32.mrb[0].mxu0
  %v591 = vadd.f32 %v302, %v590
  %v592 = vpop.f32.mrb[0].mxu0
  %v593 = vpop.f32.mrb[0].mxu0
  %v594 = vadd.f32 %v302, %v593
  %v595 = vpop.f32.mrb[0].mxu0
  %596 = vmatprep.mubr.bf16.mxu0 %v238
  %597 = vmatmul.mubr.bf16.gmra.mrb[0].mxu0 %v237
  %v598 = vpop.f32.mrb[0].mxu0
  %v599 = vadd.f32 %v302, %v598
  %v600 = vpop.f32.mrb[0].mxu0
  %v601 = vpop.f32.mrb[0].mxu0
  %v602 = vadd.f32 %v302, %v601
  %v603 = vpop.f32.mrb[0].mxu0
  %604 = vmatprep.mubr.bf16.mxu0 %v241
  %605 = vmatmul.mubr.bf16.gmra.mrb[0].mxu0 %v240
  %v606 = vpop.f32.mrb[0].mxu0
  %v607 = vadd.f32 %v302, %v606
  %v608 = vpop.f32.mrb[0].mxu0
  %v609 = vpop.f32.mrb[0].mxu0
  %v610 = vpop.f32.mrb[0].mxu0
  %611 = vdwg.mxu0
  %612 = vmatprep.subr.bf16.mxu0 0
  %613 = vmatpush1.bf16.msra.mxu0 %v295
  %614 = vmatprep.subr.bf16.mxu0 0
  %615 = vmatpush1.bf16.msra.mxu0 %v296
  %616 = vmatprep.subr.bf16.mxu0 0
  %617 = vmatpush1.bf16.msra.mxu0 0
  %618 = vmatprep.subr.bf16.mxu0 0
  %619 = vmatpush1.bf16.msra.mxu0 0
  %620 = vmatprep.subr.bf16.mxu0 0
  %621 = vmatpush1.bf16.msra.mxu0 0
  %622 = vmatprep.subr.bf16.mxu0 0
  %623 = vmatpush1.bf16.msra.mxu0 0
  %624 = vmatprep.subr.bf16.mxu0 0
  %625 = vmatpush1.bf16.msra.mxu0 0
  %626 = vmatprep.subr.bf16.mxu0 0
  %627 = vmatpush1.bf16.msra.mxu0 0
  %628 = vmatprep.subr.bf16.mxu0 0
  %629 = vmatpush1.bf16.msra.mxu0 0
  %630 = vmatprep.subr.bf16.mxu0 0
  %631 = vmatpush1.bf16.msra.mxu0 0
  %632 = vmatprep.subr.bf16.mxu0 0
  %633 = vmatpush1.bf16.msra.mxu0 0
  %634 = vmatprep.subr.bf16.mxu0 0
  %635 = vmatpush1.bf16.msra.mxu0 0
  %636 = vmatprep.subr.bf16.mxu0 0
  %637 = vmatpush1.bf16.msra.mxu0 0
  %638 = vmatprep.subr.bf16.mxu0 0
  %639 = vmatpush1.bf16.msra.mxu0 0
  %640 = vmatprep.subr.bf16.mxu0 0
  %641 = vmatpush1.bf16.msra.mxu0 0
  %642 = vmatprep.subr.bf16.mxu0 0
  %643 = vmatpush1.bf16.msra.mxu0 0
  %644 = vmatprep.mubr.bf16.mxu0 0
  %645 = vmatmul.mubr.bf16.gmra.mrb[0].mxu0 %v306
  %v646 = vpop.f32.mrb[0].mxu0
  %v647 = vadd.f32 %v415, %v646
  %v648 = vpop.f32.mrb[0].mxu0
  %v649 = vpop.f32.mrb[0].mxu0
  %v650 = vadd.f32 %v418, %v649
  %v651 = vpop.f32.mrb[0].mxu0
  %652 = vmatprep.mubr.bf16.mxu0 0
  %653 = vmatmul.mubr.bf16.gmra.mrb[0].mxu0 %v309
  %v654 = vpop.f32.mrb[0].mxu0
  %v655 = vadd.f32 %v423, %v654
  %v656 = vpop.f32.mrb[0].mxu0
  %v657 = vpop.f32.mrb[0].mxu0
  %v658 = vadd.f32 %v426, %v657
  %v659 = vpop.f32.mrb[0].mxu0
  %660 = vmatprep.mubr.bf16.mxu0 0
  %661 = vmatmul.mubr.bf16.gmra.mrb[0].mxu0 %v312
  %v662 = vpop.f32.mrb[0].mxu0
  %v663 = vadd.f32 %v431, %v662
  %v664 = vpop.f32.mrb[0].mxu0
  %v665 = vpop.f32.mrb[0].mxu0
  %v666 = vadd.f32 %v434, %v665
  %v667 = vpop.f32.mrb[0].mxu0
  %668 = vmatprep.mubr.bf16.mxu0 0
  %669 = vmatmul.mubr.bf16.gmra.mrb[0].mxu0 %v315
  %v670 = vpop.f32.mrb[0].mxu0
  %v671 = vadd.f32 %v439, %v670
  %v672 = vpop.f32.mrb[0].mxu0
  %v673 = vpop.f32.mrb[0].mxu0
  %v674 = vadd.f32 %v442, %v673
  %v675 = vpop.f32.mrb[0].mxu0
  %676 = vmatprep.mubr.bf16.mxu0 0
  %677 = vmatmul.mubr.bf16.gmra.mrb[0].mxu0 %v318
  %v678 = vpop.f32.mrb[0].mxu0
  %v679 = vadd.f32 %v447, %v678
  %v680 = vpop.f32.mrb[0].mxu0
  %v681 = vpop.f32.mrb[0].mxu0
  %v682 = vadd.f32 %v450, %v681
  %v683 = vpop.f32.mrb[0].mxu0
  %684 = vmatprep.mubr.bf16.mxu0 0
  %685 = vmatmul.mubr.bf16.gmra.mrb[0].mxu0 %v321
  %v686 = vpop.f32.mrb[0].mxu0
  %v687 = vadd.f32 %v455, %v686
  %v688 = vpop.f32.mrb[0].mxu0
  %v689 = vpop.f32.mrb[0].mxu0
  %v690 = vadd.f32 %v458, %v689
  %v691 = vpop.f32.mrb[0].mxu0
  %692 = vmatprep.mubr.bf16.mxu0 0
  %693 = vmatmul.mubr.bf16.gmra.mrb[0].mxu0 %v324
  %v694 = vpop.f32.mrb[0].mxu0
  %v695 = vadd.f32 %v463, %v694
  %v696 = vpop.f32.mrb[0].mxu0
  %v697 = vpop.f32.mrb[0].mxu0
  %v698 = vadd.f32 %v466, %v697
  %v699 = vpop.f32.mrb[0].mxu0
  %700 = vmatprep.mubr.bf16.mxu0 0
  %701 = vmatmul.mubr.bf16.gmra.mrb[0].mxu0 %v327
  %v702 = vpop.f32.mrb[0].mxu0
  %v703 = vadd.f32 %v471, %v702
  %v704 = vpop.f32.mrb[0].mxu0
  %v705 = vpop.f32.mrb[0].mxu0
  %v706 = vadd.f32 %v474, %v705
  %v707 = vpop.f32.mrb[0].mxu0
  %708 = vmatprep.mubr.bf16.mxu0 0
  %709 = vmatmul.mubr.bf16.gmra.mrb[0].mxu0 %v330
  %v710 = vpop.f32.mrb[0].mxu0
  %v711 = vadd.f32 %v479, %v710
  %v712 = vpop.f32.mrb[0].mxu0
  %v713 = vpop.f32.mrb[0].mxu0
  %v714 = vadd.f32 %v482, %v713
  %v715 = vpop.f32.mrb[0].mxu0
  %716 = vmatprep.mubr.bf16.mxu0 0
  %717 = vmatmul.mubr.bf16.gmra.mrb[0].mxu0 %v333
  %v718 = vpop.f32.mrb[0].mxu0
  %v719 = vadd.f32 %v487, %v718
  %v720 = vpop.f32.mrb[0].mxu0
  %v721 = vpop.f32.mrb[0].mxu0
  %v722 = vadd.f32 %v490, %v721
  %v723 = vpop.f32.mrb[0].mxu0
  %724 = vmatprep.mubr.bf16.mxu0 0
  %725 = vmatmul.mubr.bf16.gmra.mrb[0].mxu0 %v336
  %v726 = vpop.f32.mrb[0].mxu0
  %v727 = vadd.f32 %v495, %v726
  %v728 = vpop.f32.mrb[0].mxu0
  %v729 = vpop.f32.mrb[0].mxu0
  %v730 = vadd.f32 %v498, %v729
  %v731 = vpop.f32.mrb[0].mxu0
  %732 = vmatprep.mubr.bf16.mxu0 0
  %733 = vmatmul.mubr.bf16.gmra.mrb[0].mxu0 %v339
  %v734 = vpop.f32.mrb[0].mxu0
  %v735 = vadd.f32 %v503, %v734
  %v736 = vpop.f32.mrb[0].mxu0
  %v737 = vpop.f32.mrb[0].mxu0
  %v738 = vadd.f32 %v506, %v737
  %v739 = vpop.f32.mrb[0].mxu0
  %740 = vmatprep.mubr.bf16.mxu0 0
  %741 = vmatmul.mubr.bf16.gmra.mrb[0].mxu0 %v342
  %v742 = vpop.f32.mrb[0].mxu0
  %v743 = vadd.f32 %v511, %v742
  %v744 = vpop.f32.mrb[0].mxu0
  %v745 = vpop.f32.mrb[0].mxu0
  %v746 = vadd.f32 %v514, %v745
  %v747 = vpop.f32.mrb[0].mxu0
  %748 = vmatprep.mubr.bf16.mxu0 0
  %749 = vmatmul.mubr.bf16.gmra.mrb[0].mxu0 %v345
  %v750 = vpop.f32.mrb[0].mxu0
  %v751 = vadd.f32 %v519, %v750
  %v752 = vpop.f32.mrb[0].mxu0
  %v753 = vpop.f32.mrb[0].mxu0
  %v754 = vadd.f32 %v522, %v753
  %v755 = vpop.f32.mrb[0].mxu0
  %756 = vmatprep.mubr.bf16.mxu0 0
  %757 = vmatmul.mubr.bf16.gmra.mrb[0].mxu0 %v348
  %v758 = vpop.f32.mrb[0].mxu0
  %v759 = vadd.f32 %v527, %v758
  %v760 = vpop.f32.mrb[0].mxu0
  %v761 = vpop.f32.mrb[0].mxu0
  %v762 = vadd.f32 %v530, %v761
  %v763 = vpop.f32.mrb[0].mxu0
  %764 = vmatprep.mubr.bf16.mxu0 0
  %765 = vmatmul.mubr.bf16.gmra.mrb[0].mxu0 %v351
  %v766 = vpop.f32.mrb[0].mxu0
  %v767 = vadd.f32 %v535, %v766
  %v768 = vpop.f32.mrb[0].mxu0
  %v769 = vpop.f32.mrb[0].mxu0
  %v770 = vadd.f32 %v538, %v769
  %v771 = vpop.f32.mrb[0].mxu0
  %772 = vmatprep.mubr.bf16.mxu0 0
  %773 = vmatmul.mubr.bf16.gmra.mrb[0].mxu0 %v354
  %v774 = vpop.f32.mrb[0].mxu0
  %v775 = vadd.f32 %v543, %v774
  %v776 = vpop.f32.mrb[0].mxu0
  %v777 = vpop.f32.mrb[0].mxu0
  %v778 = vadd.f32 %v546, %v777
  %v779 = vpop.f32.mrb[0].mxu0
  %780 = vmatprep.mubr.bf16.mxu0 0
  %781 = vmatmul.mubr.bf16.gmra.mrb[0].mxu0 %v357
  %v782 = vpop.f32.mrb[0].mxu0
  %v783 = vadd.f32 %v551, %v782
  %v784 = vpop.f32.mrb[0].mxu0
  %v785 = vpop.f32.mrb[0].mxu0
  %v786 = vadd.f32 %v554, %v785
  %v787 = vpop.f32.mrb[0].mxu0
  %788 = vmatprep.mubr.bf16.mxu0 0
  %789 = vmatmul.mubr.bf16.gmra.mrb[0].mxu0 %v360
  %v790 = vpop.f32.mrb[0].mxu0
  %v791 = vadd.f32 %v559, %v790
  %v792 = vpop.f32.mrb[0].mxu0
  %v793 = vpop.f32.mrb[0].mxu0
  %v794 = vadd.f32 %v562, %v793
  %v795 = vpop.f32.mrb[0].mxu0
  %796 = vmatprep.mubr.bf16.mxu0 0
  %797 = vmatmul.mubr.bf16.gmra.mrb[0].mxu0 %v363
  %v798 = vpop.f32.mrb[0].mxu0
  %v799 = vadd.f32 %v567, %v798
  %v800 = vpop.f32.mrb[0].mxu0
  %v801 = vpop.f32.mrb[0].mxu0
  %v802 = vadd.f32 %v570, %v801
  %v803 = vpop.f32.mrb[0].mxu0
  %804 = vmatprep.mubr.bf16.mxu0 0
  %805 = vmatmul.mubr.bf16.gmra.mrb[0].mxu0 %v366
  %v806 = vpop.f32.mrb[0].mxu0
  %v807 = vadd.f32 %v575, %v806
  %v808 = vpop.f32.mrb[0].mxu0
  %v809 = vpop.f32.mrb[0].mxu0
  %v810 = vadd.f32 %v578, %v809
  %v811 = vpop.f32.mrb[0].mxu0
  %812 = vmatprep.mubr.bf16.mxu0 0
  %813 = vmatmul.mubr.bf16.gmra.mrb[0].mxu0 %v369
  %v814 = vpop.f32.mrb[0].mxu0
  %v815 = vadd.f32 %v583, %v814
  %v816 = vpop.f32.mrb[0].mxu0
  %v817 = vpop.f32.mrb[0].mxu0
  %v818 = vadd.f32 %v586, %v817
  %v819 = vpop.f32.mrb[0].mxu0
  %820 = vmatprep.mubr.bf16.mxu0 0
  %821 = vmatmul.mubr.bf16.gmra.mrb[0].mxu0 %v372
  %v822 = vpop.f32.mrb[0].mxu0
  %v823 = vadd.f32 %v591, %v822
  %v824 = vpop.f32.mrb[0].mxu0
  %v825 = vpop.f32.mrb[0].mxu0
  %v826 = vadd.f32 %v594, %v825
  %v827 = vpop.f32.mrb[0].mxu0
  %828 = vmatprep.mubr.bf16.mxu0 0
  %829 = vmatmul.mubr.bf16.gmra.mrb[0].mxu0 %v375
  %v830 = vpop.f32.mrb[0].mxu0
  %v831 = vadd.f32 %v599, %v830
  %v832 = vpop.f32.mrb[0].mxu0
  %v833 = vpop.f32.mrb[0].mxu0
  %v834 = vadd.f32 %v602, %v833
  %v835 = vpop.f32.mrb[0].mxu0
  %836 = vmatprep.mubr.bf16.mxu0 0
  %837 = vmatmul.mubr.bf16.gmra.mrb[0].mxu0 %v378
  %v838 = vpop.f32.mrb[0].mxu0
  %v839 = vadd.f32 %v607, %v838
  %v840 = vpop.f32.mrb[0].mxu0
  %v841 = vpop.f32.mrb[0].mxu0
  %v842 = vpop.f32.mrb[0].mxu0
  %843 = vdwg.mxu0
  %vm844 = vcmask 130048
  %v845 = vsel %vm844, %v647, 0.0
  %v846 = vsel %vm844, %v650, 0.0
  %v847 = vadd.f32 %v845, %v846
  %v848 = vsel %vm844, %v655, 0.0
  %v849 = vadd.f32 %v847, %v848
  %v850 = vsel %vm844, %v658, 0.0
  %v851 = vadd.f32 %v849, %v850
  %v852 = vsel %vm844, %v663, 0.0
  %v853 = vadd.f32 %v851, %v852
  %v854 = vsel %vm844, %v666, 0.0
  %v855 = vadd.f32 %v853, %v854
  %v856 = vsel %vm844, %v671, 0.0
  %v857 = vadd.f32 %v855, %v856
  %v858 = vsel %vm844, %v674, 0.0
  %v859 = vadd.f32 %v857, %v858
  %v860 = vsel %vm844, %v679, 0.0
  %v861 = vadd.f32 %v859, %v860
  %v862 = vsel %vm844, %v682, 0.0
  %v863 = vadd.f32 %v861, %v862
  %v864 = vsel %vm844, %v687, 0.0
  %v865 = vadd.f32 %v863, %v864
  %v866 = vsel %vm844, %v690, 0.0
  %v867 = vadd.f32 %v865, %v866
  %v868 = vsel %vm844, %v695, 0.0
  %v869 = vadd.f32 %v867, %v868
  %v870 = vsel %vm844, %v698, 0.0
  %v871 = vadd.f32 %v869, %v870
  %v872 = vsel %vm844, %v703, 0.0
  %v873 = vadd.f32 %v871, %v872
  %v874 = vsel %vm844, %v706, 0.0
  %v875 = vadd.f32 %v873, %v874
  %v876 = vsel %vm844, %v711, 0.0
  %v877 = vadd.f32 %v875, %v876
  %v878 = vsel %vm844, %v714, 0.0
  %v879 = vadd.f32 %v877, %v878
  %v880 = vsel %vm844, %v719, 0.0
  %v881 = vadd.f32 %v879, %v880
  %v882 = vsel %vm844, %v722, 0.0
  %v883 = vadd.f32 %v881, %v882
  %v884 = vsel %vm844, %v727, 0.0
  %v885 = vadd.f32 %v883, %v884
  %v886 = vsel %vm844, %v730, 0.0
  %v887 = vadd.f32 %v885, %v886
  %v888 = vsel %vm844, %v735, 0.0
  %v889 = vadd.f32 %v887, %v888
  %v890 = vsel %vm844, %v738, 0.0
  %v891 = vadd.f32 %v889, %v890
  %v892 = vsel %vm844, %v743, 0.0
  %v893 = vadd.f32 %v891, %v892
  %v894 = vsel %vm844, %v746, 0.0
  %v895 = vadd.f32 %v893, %v894
  %v896 = vsel %vm844, %v751, 0.0
  %v897 = vadd.f32 %v895, %v896
  %v898 = vsel %vm844, %v754, 0.0
  %v899 = vadd.f32 %v897, %v898
  %v900 = vsel %vm844, %v759, 0.0
  %v901 = vadd.f32 %v899, %v900
  %v902 = vsel %vm844, %v762, 0.0
  %v903 = vadd.f32 %v901, %v902
  %v904 = vsel %vm844, %v767, 0.0
  %v905 = vadd.f32 %v903, %v904
  %v906 = vsel %vm844, %v770, 0.0
  %v907 = vadd.f32 %v905, %v906
  %v908 = vsel %vm844, %v775, 0.0
  %v909 = vadd.f32 %v907, %v908
  %v910 = vsel %vm844, %v778, 0.0
  %v911 = vadd.f32 %v909, %v910
  %v912 = vsel %vm844, %v783, 0.0
  %v913 = vadd.f32 %v911, %v912
  %v914 = vsel %vm844, %v786, 0.0
  %v915 = vadd.f32 %v913, %v914
  %v916 = vsel %vm844, %v791, 0.0
  %v917 = vadd.f32 %v915, %v916
  %v918 = vsel %vm844, %v794, 0.0
  %v919 = vadd.f32 %v917, %v918
  %v920 = vsel %vm844, %v799, 0.0
  %v921 = vadd.f32 %v919, %v920
  %v922 = vsel %vm844, %v802, 0.0
  %v923 = vadd.f32 %v921, %v922
  %v924 = vsel %vm844, %v807, 0.0
  %v925 = vadd.f32 %v923, %v924
  %v926 = vsel %vm844, %v810, 0.0
  %v927 = vadd.f32 %v925, %v926
  %v928 = vsel %vm844, %v815, 0.0
  %v929 = vadd.f32 %v927, %v928
  %v930 = vsel %vm844, %v818, 0.0
  %v931 = vadd.f32 %v929, %v930
  %v932 = vsel %vm844, %v823, 0.0
  %v933 = vadd.f32 %v931, %v932
  %v934 = vsel %vm844, %v826, 0.0
  %v935 = vadd.f32 %v933, %v934
  %v936 = vsel %vm844, %v831, 0.0
  %v937 = vadd.f32 %v935, %v936
  %v938 = vsel %vm844, %v834, 0.0
  %v939 = vadd.f32 %v937, %v938
  %v940 = vsel %vm844, %v839, 0.0
  %v941 = vadd.f32 %v939, %v940
  %v942 = vrot.slane %v941, 4
  %v943 = vadd.f32 %v941, %v942
  %v944 = vrot.slane %v943, 2
  %v945 = vadd.f32 %v943, %v944
  %v946 = vrot.slane %v945, 1
  %v947 = vadd.f32 %v945, %v946
  %v948 = vmul.f32 %v947, 0.0025510204
  %v949 = vsub.f32 %v647, %v948
  %v950 = vsub.f32 %v650, %v948
  %v951 = vsub.f32 %v655, %v948
  %v952 = vsub.f32 %v658, %v948
  %v953 = vsub.f32 %v663, %v948
  %v954 = vsub.f32 %v666, %v948
  %v955 = vsub.f32 %v671, %v948
  %v956 = vsub.f32 %v674, %v948
  %v957 = vsub.f32 %v679, %v948
  %v958 = vsub.f32 %v682, %v948
  %v959 = vsub.f32 %v687, %v948
  %v960 = vsub.f32 %v690, %v948
  %v961 = vsub.f32 %v695, %v948
  %v962 = vsub.f32 %v698, %v948
  %v963 = vsub.f32 %v703, %v948
  %v964 = vsub.f32 %v706, %v948
  %v965 = vsub.f32 %v711, %v948
  %v966 = vsub.f32 %v714, %v948
  %v967 = vsub.f32 %v719, %v948
  %v968 = vsub.f32 %v722, %v948
  %v969 = vsub.f32 %v727, %v948
  %v970 = vsub.f32 %v730, %v948
  %v971 = vsub.f32 %v735, %v948
  %v972 = vsub.f32 %v738, %v948
  %v973 = vsub.f32 %v743, %v948
  %v974 = vsub.f32 %v746, %v948
  %v975 = vsub.f32 %v751, %v948
  %v976 = vsub.f32 %v754, %v948
  %v977 = vsub.f32 %v759, %v948
  %v978 = vsub.f32 %v762, %v948
  %v979 = vsub.f32 %v767, %v948
  %v980 = vsub.f32 %v770, %v948
  %v981 = vsub.f32 %v775, %v948
  %v982 = vsub.f32 %v778, %v948
  %v983 = vsub.f32 %v783, %v948
  %v984 = vsub.f32 %v786, %v948
  %v985 = vsub.f32 %v791, %v948
  %v986 = vsub.f32 %v794, %v948
  %v987 = vsub.f32 %v799, %v948
  %v988 = vsub.f32 %v802, %v948
  %v989 = vsub.f32 %v807, %v948
  %v990 = vsub.f32 %v810, %v948
  %v991 = vsub.f32 %v815, %v948
  %v992 = vsub.f32 %v818, %v948
  %v993 = vsub.f32 %v823, %v948
  %v994 = vsub.f32 %v826, %v948
  %v995 = vsub.f32 %v831, %v948
  %v996 = vsub.f32 %v834, %v948
  %v997 = vsub.f32 %v839, %v948
  %v998 = vmul.f32 %v949, %v949
  %v999 = vmul.f32 %v950, %v950
  %v1000 = vmul.f32 %v951, %v951
  %v1001 = vmul.f32 %v952, %v952
  %v1002 = vmul.f32 %v953, %v953
  %v1003 = vmul.f32 %v954, %v954
  %v1004 = vmul.f32 %v955, %v955
  %v1005 = vmul.f32 %v956, %v956
  %v1006 = vmul.f32 %v957, %v957
  %v1007 = vmul.f32 %v958, %v958
  %v1008 = vmul.f32 %v959, %v959
  %v1009 = vmul.f32 %v960, %v960
  %v1010 = vmul.f32 %v961, %v961
  %v1011 = vmul.f32 %v962, %v962
  %v1012 = vmul.f32 %v963, %v963
  %v1013 = vmul.f32 %v964, %v964
  %v1014 = vmul.f32 %v965, %v965
  %v1015 = vmul.f32 %v966, %v966
  %v1016 = vmul.f32 %v967, %v967
  %v1017 = vmul.f32 %v968, %v968
  %v1018 = vmul.f32 %v969, %v969
  %v1019 = vmul.f32 %v970, %v970
  %v1020 = vmul.f32 %v971, %v971
  %v1021 = vmul.f32 %v972, %v972
  %v1022 = vmul.f32 %v973, %v973
  %v1023 = vmul.f32 %v974, %v974
  %v1024 = vmul.f32 %v975, %v975
  %v1025 = vmul.f32 %v976, %v976
  %v1026 = vmul.f32 %v977, %v977
  %v1027 = vmul.f32 %v978, %v978
  %v1028 = vmul.f32 %v979, %v979
  %v1029 = vmul.f32 %v980, %v980
  %v1030 = vmul.f32 %v981, %v981
  %v1031 = vmul.f32 %v982, %v982
  %v1032 = vmul.f32 %v983, %v983
  %v1033 = vmul.f32 %v984, %v984
  %v1034 = vmul.f32 %v985, %v985
  %v1035 = vmul.f32 %v986, %v986
  %v1036 = vmul.f32 %v987, %v987
  %v1037 = vmul.f32 %v988, %v988
  %v1038 = vmul.f32 %v989, %v989
  %v1039 = vmul.f32 %v990, %v990
  %v1040 = vmul.f32 %v991, %v991
  %v1041 = vmul.f32 %v992, %v992
  %v1042 = vmul.f32 %v993, %v993
  %v1043 = vmul.f32 %v994, %v994
  %v1044 = vmul.f32 %v995, %v995
  %v1045 = vmul.f32 %v996, %v996
  %v1046 = vmul.f32 %v997, %v997
  %v1047 = vsel %vm844, %v998, 0.0
  %v1048 = vsel %vm844, %v999, 0.0
  %v1049 = vadd.f32 %v1047, %v1048
  %v1050 = vsel %vm844, %v1000, 0.0
  %v1051 = vadd.f32 %v1049, %v1050
  %v1052 = vsel %vm844, %v1001, 0.0
  %v1053 = vadd.f32 %v1051, %v1052
  %v1054 = vsel %vm844, %v1002, 0.0
  %v1055 = vadd.f32 %v1053, %v1054
  %v1056 = vsel %vm844, %v1003, 0.0
  %v1057 = vadd.f32 %v1055, %v1056
  %v1058 = vsel %vm844, %v1004, 0.0
  %v1059 = vadd.f32 %v1057, %v1058
  %v1060 = vsel %vm844, %v1005, 0.0
  %v1061 = vadd.f32 %v1059, %v1060
  %v1062 = vsel %vm844, %v1006, 0.0
  %v1063 = vadd.f32 %v1061, %v1062
  %v1064 = vsel %vm844, %v1007, 0.0
  %v1065 = vadd.f32 %v1063, %v1064
  %v1066 = vsel %vm844, %v1008, 0.0
  %v1067 = vadd.f32 %v1065, %v1066
  %v1068 = vsel %vm844, %v1009, 0.0
  %v1069 = vadd.f32 %v1067, %v1068
  %v1070 = vsel %vm844, %v1010, 0.0
  %v1071 = vadd.f32 %v1069, %v1070
  %v1072 = vsel %vm844, %v1011, 0.0
  %v1073 = vadd.f32 %v1071, %v1072
  %v1074 = vsel %vm844, %v1012, 0.0
  %v1075 = vadd.f32 %v1073, %v1074
  %v1076 = vsel %vm844, %v1013, 0.0
  %v1077 = vadd.f32 %v1075, %v1076
  %v1078 = vsel %vm844, %v1014, 0.0
  %v1079 = vadd.f32 %v1077, %v1078
  %v1080 = vsel %vm844, %v1015, 0.0
  %v1081 = vadd.f32 %v1079, %v1080
  %v1082 = vsel %vm844, %v1016, 0.0
  %v1083 = vadd.f32 %v1081, %v1082
  %v1084 = vsel %vm844, %v1017, 0.0
  %v1085 = vadd.f32 %v1083, %v1084
  %v1086 = vsel %vm844, %v1018, 0.0
  %v1087 = vadd.f32 %v1085, %v1086
  %v1088 = vsel %vm844, %v1019, 0.0
  %v1089 = vadd.f32 %v1087, %v1088
  %v1090 = vsel %vm844, %v1020, 0.0
  %v1091 = vadd.f32 %v1089, %v1090
  %v1092 = vsel %vm844, %v1021, 0.0
  %v1093 = vadd.f32 %v1091, %v1092
  %v1094 = vsel %vm844, %v1022, 0.0
  %v1095 = vadd.f32 %v1093, %v1094
  %v1096 = vsel %vm844, %v1023, 0.0
  %v1097 = vadd.f32 %v1095, %v1096
  %v1098 = vsel %vm844, %v1024, 0.0
  %v1099 = vadd.f32 %v1097, %v1098
  %v1100 = vsel %vm844, %v1025, 0.0
  %v1101 = vadd.f32 %v1099, %v1100
  %v1102 = vsel %vm844, %v1026, 0.0
  %v1103 = vadd.f32 %v1101, %v1102
  %v1104 = vsel %vm844, %v1027, 0.0
  %v1105 = vadd.f32 %v1103, %v1104
  %v1106 = vsel %vm844, %v1028, 0.0
  %v1107 = vadd.f32 %v1105, %v1106
  %v1108 = vsel %vm844, %v1029, 0.0
  %v1109 = vadd.f32 %v1107, %v1108
  %v1110 = vsel %vm844, %v1030, 0.0
  %v1111 = vadd.f32 %v1109, %v1110
  %v1112 = vsel %vm844, %v1031, 0.0
  %v1113 = vadd.f32 %v1111, %v1112
  %v1114 = vsel %vm844, %v1032, 0.0
  %v1115 = vadd.f32 %v1113, %v1114
  %v1116 = vsel %vm844, %v1033, 0.0
  %v1117 = vadd.f32 %v1115, %v1116
  %v1118 = vsel %vm844, %v1034, 0.0
  %v1119 = vadd.f32 %v1117, %v1118
  %v1120 = vsel %vm844, %v1035, 0.0
  %v1121 = vadd.f32 %v1119, %v1120
  %v1122 = vsel %vm844, %v1036, 0.0
  %v1123 = vadd.f32 %v1121, %v1122
  %v1124 = vsel %vm844, %v1037, 0.0
  %v1125 = vadd.f32 %v1123, %v1124
  %v1126 = vsel %vm844, %v1038, 0.0
  %v1127 = vadd.f32 %v1125, %v1126
  %v1128 = vsel %vm844, %v1039, 0.0
  %v1129 = vadd.f32 %v1127, %v1128
  %v1130 = vsel %vm844, %v1040, 0.0
  %v1131 = vadd.f32 %v1129, %v1130
  %v1132 = vsel %vm844, %v1041, 0.0
  %v1133 = vadd.f32 %v1131, %v1132
  %v1134 = vsel %vm844, %v1042, 0.0
  %v1135 = vadd.f32 %v1133, %v1134
  %v1136 = vsel %vm844, %v1043, 0.0
  %v1137 = vadd.f32 %v1135, %v1136
  %v1138 = vsel %vm844, %v1044, 0.0
  %v1139 = vadd.f32 %v1137, %v1138
  %v1140 = vsel %vm844, %v1045, 0.0
  %v1141 = vadd.f32 %v1139, %v1140
  %v1142 = vsel %vm844, %v1046, 0.0
  %v1143 = vadd.f32 %v1141, %v1142
  %v1144 = vrot.slane %v1143, 4
  %v1145 = vadd.f32 %v1143, %v1144
  %v1146 = vrot.slane %v1145, 2
  %v1147 = vadd.f32 %v1145, %v1146
  %v1148 = vrot.slane %v1147, 1
  %v1149 = vadd.f32 %v1147, %v1148
  %v1150 = vmul.f32 %v1149, 0.0025510204
  %v1151 = vadd.f32 %v1150, 1e-05
  %v1152 = vrsqrt.pop %v1151
  %v1153 = vmul.f32 %v949, %v1152
  %v1154 = vmul.f32 %v950, %v1152
  %v1155 = vmul.f32 %v951, %v1152
  %v1156 = vmul.f32 %v952, %v1152
  %v1157 = vmul.f32 %v953, %v1152
  %v1158 = vmul.f32 %v954, %v1152
  %v1159 = vmul.f32 %v955, %v1152
  %v1160 = vmul.f32 %v956, %v1152
  %v1161 = vmul.f32 %v957, %v1152
  %v1162 = vmul.f32 %v958, %v1152
  %v1163 = vmul.f32 %v959, %v1152
  %v1164 = vmul.f32 %v960, %v1152
  %v1165 = vmul.f32 %v961, %v1152
  %v1166 = vmul.f32 %v962, %v1152
  %v1167 = vmul.f32 %v963, %v1152
  %v1168 = vmul.f32 %v964, %v1152
  %v1169 = vmul.f32 %v965, %v1152
  %v1170 = vmul.f32 %v966, %v1152
  %v1171 = vmul.f32 %v967, %v1152
  %v1172 = vmul.f32 %v968, %v1152
  %v1173 = vmul.f32 %v969, %v1152
  %v1174 = vmul.f32 %v970, %v1152
  %v1175 = vmul.f32 %v971, %v1152
  %v1176 = vmul.f32 %v972, %v1152
  %v1177 = vmul.f32 %v973, %v1152
  %v1178 = vmul.f32 %v974, %v1152
  %v1179 = vmul.f32 %v975, %v1152
  %v1180 = vmul.f32 %v976, %v1152
  %v1181 = vmul.f32 %v977, %v1152
  %v1182 = vmul.f32 %v978, %v1152
  %v1183 = vmul.f32 %v979, %v1152
  %v1184 = vmul.f32 %v980, %v1152
  %v1185 = vmul.f32 %v981, %v1152
  %v1186 = vmul.f32 %v982, %v1152
  %v1187 = vmul.f32 %v983, %v1152
  %v1188 = vmul.f32 %v984, %v1152
  %v1189 = vmul.f32 %v985, %v1152
  %v1190 = vmul.f32 %v986, %v1152
  %v1191 = vmul.f32 %v987, %v1152
  %v1192 = vmul.f32 %v988, %v1152
  %v1193 = vmul.f32 %v989, %v1152
  %v1194 = vmul.f32 %v990, %v1152
  %v1195 = vmul.f32 %v991, %v1152
  %v1196 = vmul.f32 %v992, %v1152
  %v1197 = vmul.f32 %v993, %v1152
  %v1198 = vmul.f32 %v994, %v1152
  %v1199 = vmul.f32 %v995, %v1152
  %v1200 = vmul.f32 %v996, %v1152
  %v1201 = vmul.f32 %v997, %v1152
  %v1202 = vld [vmem:[%s3] sm:$0x1]
  %v1204 = vlaneseq
  %v1205 = vshrl.u32 %v1204, 7
  %v1206 = vsub.s32 0, %v1205
  %v1207 = vrot.slane %v1202, %v1206
  %v1209 = vmul.f32 %v1153, %v1207
  %v1210 = vmul.f32 %v1154, %v1207
  %v1211 = vmul.f32 %v1155, %v1207
  %v1212 = vmul.f32 %v1156, %v1207
  %v1213 = vmul.f32 %v1157, %v1207
  %v1214 = vmul.f32 %v1158, %v1207
  %v1215 = vmul.f32 %v1159, %v1207
  %v1216 = vmul.f32 %v1160, %v1207
  %v1217 = vmul.f32 %v1161, %v1207
  %v1218 = vmul.f32 %v1162, %v1207
  %v1219 = vmul.f32 %v1163, %v1207
  %v1220 = vmul.f32 %v1164, %v1207
  %v1221 = vmul.f32 %v1165, %v1207
  %v1222 = vmul.f32 %v1166, %v1207
  %v1223 = vmul.f32 %v1167, %v1207
  %v1224 = vmul.f32 %v1168, %v1207
  %v1225 = vmul.f32 %v1169, %v1207
  %v1226 = vmul.f32 %v1170, %v1207
  %v1227 = vmul.f32 %v1171, %v1207
  %v1228 = vmul.f32 %v1172, %v1207
  %v1229 = vmul.f32 %v1173, %v1207
  %v1230 = vmul.f32 %v1174, %v1207
  %v1231 = vmul.f32 %v1175, %v1207
  %v1232 = vmul.f32 %v1176, %v1207
  %v1233 = vmul.f32 %v1177, %v1207
  %v1234 = vmul.f32 %v1178, %v1207
  %v1235 = vmul.f32 %v1179, %v1207
  %v1236 = vmul.f32 %v1180, %v1207
  %v1237 = vmul.f32 %v1181, %v1207
  %v1238 = vmul.f32 %v1182, %v1207
  %v1239 = vmul.f32 %v1183, %v1207
  %v1240 = vmul.f32 %v1184, %v1207
  %v1241 = vmul.f32 %v1185, %v1207
  %v1242 = vmul.f32 %v1186, %v1207
  %v1243 = vmul.f32 %v1187, %v1207
  %v1244 = vmul.f32 %v1188, %v1207
  %v1245 = vmul.f32 %v1189, %v1207
  %v1246 = vmul.f32 %v1190, %v1207
  %v1247 = vmul.f32 %v1191, %v1207
  %v1248 = vmul.f32 %v1192, %v1207
  %v1249 = vmul.f32 %v1193, %v1207
  %v1250 = vmul.f32 %v1194, %v1207
  %v1251 = vmul.f32 %v1195, %v1207
  %v1252 = vmul.f32 %v1196, %v1207
  %v1253 = vmul.f32 %v1197, %v1207
  %v1254 = vmul.f32 %v1198, %v1207
  %v1255 = vmul.f32 %v1199, %v1207
  %v1256 = vmul.f32 %v1200, %v1207
  %v1257 = vmul.f32 %v1201, %v1207
  %v1258 = vld [vmem:[%s4] sm:$0x1]
  %v1260 = vlaneseq
  %v1261 = vshrl.u32 %v1260, 7
  %v1262 = vsub.s32 0, %v1261
  %v1263 = vrot.slane %v1258, %v1262
  %v1265 = vadd.f32 %v1209, %v1263
  %v1266 = vadd.f32 %v1210, %v1263
  %v1267 = vadd.f32 %v1211, %v1263
  %v1268 = vadd.f32 %v1212, %v1263
  %v1269 = vadd.f32 %v1213, %v1263
  %v1270 = vadd.f32 %v1214, %v1263
  %v1271 = vadd.f32 %v1215, %v1263
  %v1272 = vadd.f32 %v1216, %v1263
  %v1273 = vadd.f32 %v1217, %v1263
  %v1274 = vadd.f32 %v1218, %v1263
  %v1275 = vadd.f32 %v1219, %v1263
  %v1276 = vadd.f32 %v1220, %v1263
  %v1277 = vadd.f32 %v1221, %v1263
  %v1278 = vadd.f32 %v1222, %v1263
  %v1279 = vadd.f32 %v1223, %v1263
  %v1280 = vadd.f32 %v1224, %v1263
  %v1281 = vadd.f32 %v1225, %v1263
  %v1282 = vadd.f32 %v1226, %v1263
  %v1283 = vadd.f32 %v1227, %v1263
  %v1284 = vadd.f32 %v1228, %v1263
  %v1285 = vadd.f32 %v1229, %v1263
  %v1286 = vadd.f32 %v1230, %v1263
  %v1287 = vadd.f32 %v1231, %v1263
  %v1288 = vadd.f32 %v1232, %v1263
  %v1289 = vadd.f32 %v1233, %v1263
  %v1290 = vadd.f32 %v1234, %v1263
  %v1291 = vadd.f32 %v1235, %v1263
  %v1292 = vadd.f32 %v1236, %v1263
  %v1293 = vadd.f32 %v1237, %v1263
  %v1294 = vadd.f32 %v1238, %v1263
  %v1295 = vadd.f32 %v1239, %v1263
  %v1296 = vadd.f32 %v1240, %v1263
  %v1297 = vadd.f32 %v1241, %v1263
  %v1298 = vadd.f32 %v1242, %v1263
  %v1299 = vadd.f32 %v1243, %v1263
  %v1300 = vadd.f32 %v1244, %v1263
  %v1301 = vadd.f32 %v1245, %v1263
  %v1302 = vadd.f32 %v1246, %v1263
  %v1303 = vadd.f32 %v1247, %v1263
  %v1304 = vadd.f32 %v1248, %v1263
  %v1305 = vadd.f32 %v1249, %v1263
  %v1306 = vadd.f32 %v1250, %v1263
  %v1307 = vadd.f32 %v1251, %v1263
  %v1308 = vadd.f32 %v1252, %v1263
  %v1309 = vadd.f32 %v1253, %v1263
  %v1310 = vadd.f32 %v1254, %v1263
  %v1311 = vadd.f32 %v1255, %v1263
  %v1312 = vadd.f32 %v1256, %v1263
  %v1313 = vadd.f32 %v1257, %v1263
  %v1314 = vmax.f32 %v1265, 0.0
  %v1315 = vmax.f32 %v1266, 0.0
  %v1316 = vmax.f32 %v1267, 0.0
  %v1317 = vmax.f32 %v1268, 0.0
  %v1318 = vmax.f32 %v1269, 0.0
  %v1319 = vmax.f32 %v1270, 0.0
  %v1320 = vmax.f32 %v1271, 0.0
  %v1321 = vmax.f32 %v1272, 0.0
  %v1322 = vmax.f32 %v1273, 0.0
  %v1323 = vmax.f32 %v1274, 0.0
  %v1324 = vmax.f32 %v1275, 0.0
  %v1325 = vmax.f32 %v1276, 0.0
  %v1326 = vmax.f32 %v1277, 0.0
  %v1327 = vmax.f32 %v1278, 0.0
  %v1328 = vmax.f32 %v1279, 0.0
  %v1329 = vmax.f32 %v1280, 0.0
  %v1330 = vmax.f32 %v1281, 0.0
  %v1331 = vmax.f32 %v1282, 0.0
  %v1332 = vmax.f32 %v1283, 0.0
  %v1333 = vmax.f32 %v1284, 0.0
  %v1334 = vmax.f32 %v1285, 0.0
  %v1335 = vmax.f32 %v1286, 0.0
  %v1336 = vmax.f32 %v1287, 0.0
  %v1337 = vmax.f32 %v1288, 0.0
  %v1338 = vmax.f32 %v1289, 0.0
  %v1339 = vmax.f32 %v1290, 0.0
  %v1340 = vmax.f32 %v1291, 0.0
  %v1341 = vmax.f32 %v1292, 0.0
  %v1342 = vmax.f32 %v1293, 0.0
  %v1343 = vmax.f32 %v1294, 0.0
  %v1344 = vmax.f32 %v1295, 0.0
  %v1345 = vmax.f32 %v1296, 0.0
  %v1346 = vmax.f32 %v1297, 0.0
  %v1347 = vmax.f32 %v1298, 0.0
  %v1348 = vmax.f32 %v1299, 0.0
  %v1349 = vmax.f32 %v1300, 0.0
  %v1350 = vmax.f32 %v1301, 0.0
  %v1351 = vmax.f32 %v1302, 0.0
  %v1352 = vmax.f32 %v1303, 0.0
  %v1353 = vmax.f32 %v1304, 0.0
  %v1354 = vmax.f32 %v1305, 0.0
  %v1355 = vmax.f32 %v1306, 0.0
  %v1356 = vmax.f32 %v1307, 0.0
  %v1357 = vmax.f32 %v1308, 0.0
  %v1358 = vmax.f32 %v1309, 0.0
  %v1359 = vmax.f32 %v1310, 0.0
  %v1360 = vmax.f32 %v1311, 0.0
  %v1361 = vmax.f32 %v1312, 0.0
  %v1362 = vmax.f32 %v1313, 0.0
  %1363 = vst.msk [vmem:[%s5] sm:$0xff] %vm844, %v1314
  %1364 = vst.msk [vmem:[%s5 + $0x8] sm:$0xff] %vm844, %v1315
  %1365 = vst.msk [vmem:[%s5 + $0x10] sm:$0xff] %vm844, %v1316
  %1366 = vst.msk [vmem:[%s5 + $0x18] sm:$0xff] %vm844, %v1317
  %1367 = vst.msk [vmem:[%s5 + $0x20] sm:$0xff] %vm844, %v1318
  %1368 = vst.msk [vmem:[%s5 + $0x28] sm:$0xff] %vm844, %v1319
  %1369 = vst.msk [vmem:[%s5 + $0x30] sm:$0xff] %vm844, %v1320
  %1370 = vst.msk [vmem:[%s5 + $0x38] sm:$0xff] %vm844, %v1321
  %1371 = vst.msk [vmem:[%s5 + $0x40] sm:$0xff] %vm844, %v1322
  %1372 = vst.msk [vmem:[%s5 + $0x48] sm:$0xff] %vm844, %v1323
  %1373 = vst.msk [vmem:[%s5 + $0x50] sm:$0xff] %vm844, %v1324
  %1374 = vst.msk [vmem:[%s5 + $0x58] sm:$0xff] %vm844, %v1325
  %1375 = vst.msk [vmem:[%s5 + $0x60] sm:$0xff] %vm844, %v1326
  %1376 = vst.msk [vmem:[%s5 + $0x68] sm:$0xff] %vm844, %v1327
  %1377 = vst.msk [vmem:[%s5 + $0x70] sm:$0xff] %vm844, %v1328
  %1378 = vst.msk [vmem:[%s5 + $0x78] sm:$0xff] %vm844, %v1329
  %1379 = vst.msk [vmem:[%s5 + $0x80] sm:$0xff] %vm844, %v1330
  %1380 = vst.msk [vmem:[%s5 + $0x88] sm:$0xff] %vm844, %v1331
  %1381 = vst.msk [vmem:[%s5 + $0x90] sm:$0xff] %vm844, %v1332
  %1382 = vst.msk [vmem:[%s5 + $0x98] sm:$0xff] %vm844, %v1333
  %1383 = vst.msk [vmem:[%s5 + $0xa0] sm:$0xff] %vm844, %v1334
  %1384 = vst.msk [vmem:[%s5 + $0xa8] sm:$0xff] %vm844, %v1335
  %1385 = vst.msk [vmem:[%s5 + $0xb0] sm:$0xff] %vm844, %v1336
  %1386 = vst.msk [vmem:[%s5 + $0xb8] sm:$0xff] %vm844, %v1337
  %1387 = vst.msk [vmem:[%s5 + $0xc0] sm:$0xff] %vm844, %v1338
  %1388 = vst.msk [vmem:[%s5 + $0xc8] sm:$0xff] %vm844, %v1339
  %1389 = vst.msk [vmem:[%s5 + $0xd0] sm:$0xff] %vm844, %v1340
  %1390 = vst.msk [vmem:[%s5 + $0xd8] sm:$0xff] %vm844, %v1341
  %1391 = vst.msk [vmem:[%s5 + $0xe0] sm:$0xff] %vm844, %v1342
  %1392 = vst.msk [vmem:[%s5 + $0xe8] sm:$0xff] %vm844, %v1343
  %1393 = vst.msk [vmem:[%s5 + $0xf0] sm:$0xff] %vm844, %v1344
  %1394 = vst.msk [vmem:[%s5 + $0xf8] sm:$0xff] %vm844, %v1345
  %1395 = vst.msk [vmem:[%s5 + $0x100] sm:$0xff] %vm844, %v1346
  %1396 = vst.msk [vmem:[%s5 + $0x108] sm:$0xff] %vm844, %v1347
  %1397 = vst.msk [vmem:[%s5 + $0x110] sm:$0xff] %vm844, %v1348
  %1398 = vst.msk [vmem:[%s5 + $0x118] sm:$0xff] %vm844, %v1349
  %1399 = vst.msk [vmem:[%s5 + $0x120] sm:$0xff] %vm844, %v1350
  %1400 = vst.msk [vmem:[%s5 + $0x128] sm:$0xff] %vm844, %v1351
  %1401 = vst.msk [vmem:[%s5 + $0x130] sm:$0xff] %vm844, %v1352
  %1402 = vst.msk [vmem:[%s5 + $0x138] sm:$0xff] %vm844, %v1353
  %1403 = vst.msk [vmem:[%s5 + $0x140] sm:$0xff] %vm844, %v1354
  %1404 = vst.msk [vmem:[%s5 + $0x148] sm:$0xff] %vm844, %v1355
  %1405 = vst.msk [vmem:[%s5 + $0x150] sm:$0xff] %vm844, %v1356
  %1406 = vst.msk [vmem:[%s5 + $0x158] sm:$0xff] %vm844, %v1357
  %1407 = vst.msk [vmem:[%s5 + $0x160] sm:$0xff] %vm844, %v1358
  %1408 = vst.msk [vmem:[%s5 + $0x168] sm:$0xff] %vm844, %v1359
  %1409 = vst.msk [vmem:[%s5 + $0x170] sm:$0xff] %vm844, %v1360
  %1410 = vst.msk [vmem:[%s5 + $0x178] sm:$0xff] %vm844, %v1361
  %1411 = vst.msk [vmem:[%s5 + $0x180] sm:$0xff] %vm844, %v1362
  // Predicated region
  $region22: #{vae_forward.16} parent=0 // pred_check
    _
  $region23: #{vae_forward.16} parent=0 // pred_check_branch
    %1413 = sbr.rel (0) target = $region25
  $region24: #{vae_forward.16} parent=0 // pred_region
    _
  $region25: #{vae_forward.16} parent=0 // pred_fallthru
    _
  // Predicated region
  $region26: #{vae_forward.16} parent=0 // pred_check
    _
  $region27: #{vae_forward.16} parent=0 // pred_check_branch
    %1415 = sbr.rel (0) target = $region29
  $region28: #{vae_forward.16} parent=0 // pred_region
    _
  $region29: #{vae_forward.16} parent=0 // pred_fallthru
    _

// kernel: vae_forward.17
$region0: #{vae_forward.17}
  #allocation0 [shape = 'u32[]', space=smem, size = 0x4, offset = 0x4, fixed_abs, tag = 'smem constant byte address 0x4 - core index']
  #allocation1 [shape = 'u32[144,128]{1,0:T(1,128)}', space=vmem, size = 0x12000, scoped, tag = 'internal scratch']
  %s0 = inlined_call_operand.vmem [shape: f32[1568,144], index: 0, kind: input, shape index: {}]
  %s1 = inlined_call_operand.vmem [shape: f32[144,3], index: 1, kind: input, shape index: {}]
  %s2 = inlined_call_operand.vmem [shape: f32[1,3], index: 2, kind: input, shape index: {}]
  %s3 = inlined_call_operand.vmem [shape: f32[1568,3], index: 3, kind: output, shape index: {}]
  %s4 = sld [smem:[#allocation0]]
  $region45: #{vae_forward.17} parent=0
    _
  %s6 = ssub.s32 1, %s4
  %s7 = scalar_select 0, %s6, %s4
  loop: start=0, step=1, limit=4
  $region2: #{vae_forward.17} parent=0 // loop_pre_header
    _
  $region3: #{vae_forward.17} parent=0 // loop_header
    %s9 = sphi 0, %s13
    %p10 = scmp.ge.s32.totalorder %s9, 4
    %s19 = sphi 0, %s21
    %s22 = sphi 0, %s19
    %s23 = sphi 0, %s22
    %s39 = sphi 0, %s23
    %s43 = sphi 0, %s43
    %s45 = sphi 0, %s43
    %s46 = sphi 0, %s45
    %s60 = sphi 0, %s46
    %s64 = sphi 0, %s64
    %s66 = sphi 0, %s64
    %s67 = sphi 0, %s66
    %s81 = sphi 0, %s67
    %s87 = sphi 0, %s89
    %s90 = sphi 0, %s87
    %s91 = sphi 0, %s90
    %s107 = sphi 0, %s91
  $region4: #{vae_forward.17} parent=0 // loop_header_branch
    %12 = sbr.rel (%p10) target = $region8
  $region5: #{vae_forward.17} parent=0 // loop_body
    %s14 = ssub.s32 %s9, 1
    %s15 = ssub.s32 %s9, 2
    %s16 = sadd.s32 %s9, 1
    %s17 = ssub.s32 %s9, %s16
    %p18 = scmp.eq.s32.totalorder %s17, 0
    %s20 = sadd.s32 %s19, 1
    %s21 = scalar_select %p18, %s19, %s20
    %p24 = pneg %p18
    %p25 = scmp.eq.s32.totalorder %s9, 1
    %p26 = por %p24, %p25
    %p27 = scmp.ne.s32.totalorder %s19, %s22
    %p28 = scmp.eq.s32.totalorder %s9, 0
    %p29 = por %p27, %p28
    %p30 = scmp.ne.s32.totalorder %s19, %s22
    %p31 = scmp.eq.s32.totalorder %s14, 1
    %p32 = por %p30, %p31
    %p33 = scmp.ne.s32.totalorder %s22, %s23
    %p34 = scmp.eq.s32.totalorder %s14, 0
    %p35 = por %p33, %p34
    %p36 = scmp.ne.s32.totalorder %s22, %s23
    %p37 = scmp.eq.s32.totalorder %s15, 1
    %p38 = por %p36, %p37
    %p40 = scmp.ne.s32.totalorder %s23, %s39
    %p41 = scmp.eq.s32.totalorder %s15, 0
    %p42 = por %p40, %p41
    %s44 = sadd.s32 %s43, 1
    %p47 = scmp.eq.s32.totalorder %s9, 1
    %p48 = scmp.ne.s32.totalorder %s43, %s45
    %p49 = scmp.eq.s32.totalorder %s9, 0
    %p50 = por %p48, %p49
    %p51 = scmp.ne.s32.totalorder %s43, %s45
    %p52 = scmp.eq.s32.totalorder %s14, 1
    %p53 = por %p51, %p52
    %p54 = scmp.ne.s32.totalorder %s45, %s46
    %p55 = scmp.eq.s32.totalorder %s14, 0
    %p56 = por %p54, %p55
    %p57 = scmp.ne.s32.totalorder %s45, %s46
    %p58 = scmp.eq.s32.totalorder %s15, 1
    %p59 = por %p57, %p58
    %p61 = scmp.ne.s32.totalorder %s46, %s60
    %p62 = scmp.eq.s32.totalorder %s15, 0
    %p63 = por %p61, %p62
    %s65 = sadd.s32 %s64, 1
    %p68 = scmp.eq.s32.totalorder %s9, 1
    %p69 = scmp.ne.s32.totalorder %s64, %s66
    %p70 = scmp.eq.s32.totalorder %s9, 0
    %p71 = por %p69, %p70
    %p72 = scmp.ne.s32.totalorder %s64, %s66
    %p73 = scmp.eq.s32.totalorder %s14, 1
    %p74 = por %p72, %p73
    %p75 = scmp.ne.s32.totalorder %s66, %s67
    %p76 = scmp.eq.s32.totalorder %s14, 0
    %p77 = por %p75, %p76
    %p78 = scmp.ne.s32.totalorder %s66, %s67
    %p79 = scmp.eq.s32.totalorder %s15, 1
    %p80 = por %p78, %p79
    %p82 = scmp.ne.s32.totalorder %s67, %s81
    %p83 = scmp.eq.s32.totalorder %s15, 0
    %p84 = por %p82, %p83
    %s85 = ssub.s32 %s9, %s16
    %p86 = scmp.eq.s32.totalorder %s85, 0
    %s88 = sadd.s32 %s87, 1
    %s89 = scalar_select %p86, %s87, %s88
    %p92 = pneg %p86
    %p93 = scmp.eq.s32.totalorder %s9, 1
    %p94 = por %p92, %p93
    %p95 = scmp.ne.s32.totalorder %s87, %s90
    %p96 = scmp.eq.s32.totalorder %s9, 0
    %p97 = por %p95, %p96
    %p98 = scmp.ne.s32.totalorder %s87, %s90
    %p99 = scmp.eq.s32.totalorder %s14, 1
    %p100 = por %p98, %p99
    %p101 = scmp.ne.s32.totalorder %s90, %s91
    %p102 = scmp.eq.s32.totalorder %s14, 0
    %p103 = por %p101, %p102
    %p104 = scmp.ne.s32.totalorder %s90, %s91
    %p105 = scmp.eq.s32.totalorder %s15, 1
    %p106 = por %p104, %p105
    %p108 = scmp.ne.s32.totalorder %s91, %s107
    %p109 = scmp.eq.s32.totalorder %s15, 0
    %p110 = por %p108, %p109
    %p111 = scmp.le.s32.totalorder 1, %s9
    %p112 = scmp.lt.s32.totalorder %s9, 3
    %p113 = pnand %p111, %p112
    %p114 = pneg %p113
    // Predicated region
    $region9: #{vae_forward.17} parent=5 // pred_check
      _
    $region10: #{vae_forward.17} parent=5 // pred_check_branch
      %116 = sbr.rel (%p113) target = $region12
    $region11: #{vae_forward.17} parent=5 // pred_region
      %s117 = ssub.s32 %s9, 1
      // Predicated region
      $region13: #{vae_forward.17} parent=11 // pred_check
        %p118 = pneg %p56
      $region14: #{vae_forward.17} parent=11 // pred_check_branch
        %120 = sbr.rel (%p118) target = $region16
      $region15: #{vae_forward.17} parent=11 // pred_region
        _
      $region16: #{vae_forward.17} parent=11 // pred_fallthru
        _
      // Predicated region
      $region17: #{vae_forward.17} parent=11 // pred_check
        %p121 = pneg %p77
      $region18: #{vae_forward.17} parent=11 // pred_check_branch
        %123 = sbr.rel (%p121) target = $region20
      $region19: #{vae_forward.17} parent=11 // pred_region
        _
      $region20: #{vae_forward.17} parent=11 // pred_fallthru
        _
    $region12: #{vae_forward.17} parent=5 // pred_fallthru
      _
    %p124 = scmp.lt.s32.totalorder %s9, 2
    // Predicated region
    $region21: #{vae_forward.17} parent=5 // pred_check
      %p125 = pneg %p124
    $region22: #{vae_forward.17} parent=5 // pred_check_branch
      %127 = sbr.rel (%p125) target = $region24
    $region23: #{vae_forward.17} parent=5 // pred_region
      // Predicated region
      $region25: #{vae_forward.17} parent=23 // pred_check
        %p128 = pneg %p29
      $region26: #{vae_forward.17} parent=23 // pred_check_branch
        %130 = sbr.rel (%p128) target = $region28
      $region27: #{vae_forward.17} parent=23 // pred_region
        %s131 = smul.u32 98, %s9
        %p132 = scmp.lt.s32.totalorder %s131, 195
        %s133 = scalar_select %p132, %s131, 195
        %s134 = smul.addr %s133, 2
        %s135 = smul.addr %s134, 8
        %s136 = scalar_lea.vmem %s0, %s135
        %s137 = smul.u32 98, %s9
      $region28: #{vae_forward.17} parent=23 // pred_fallthru
        _
    $region24: #{vae_forward.17} parent=5 // pred_fallthru
      _
    %p138 = scmp.le.s32.totalorder 1, %s9
    %p139 = scmp.lt.s32.totalorder %s9, 3
    %p140 = pnand %p138, %p139
    %p141 = pneg %p140
    // Predicated region
    $region29: #{vae_forward.17} parent=5 // pred_check
      _
    $region30: #{vae_forward.17} parent=5 // pred_check_branch
      %143 = sbr.rel (%p140) target = $region32
    $region31: #{vae_forward.17} parent=5 // pred_region
      %s144 = ssub.s32 %s9, 1
      %s145 = smul.u32 98, %s14
      %p146 = scmp.lt.s32.totalorder %s145, 195
      %s147 = scalar_select %p146, %s145, 195
      %s148 = smul.addr %s147, 2
      %s149 = smul.addr %s148, 8
      %s150 = scalar_lea.vmem %s0, %s149
      %p151 = pneg %p35
      %p152 = pneg %p32
      %p153 = pneg %p56
      %p154 = pneg %p53
      %p155 = pneg %p77
      %p156 = pneg %p74
      %p157 = pneg %p103
      %p158 = pneg %p100
      %s159 = smul.u32 98, %s14
      %p160 = scmp.lt.s32.totalorder %s159, 195
      %s161 = scalar_select %p160, %s159, 195
      %s162 = smul.addr %s161, 8
      %s163 = scalar_lea.vmem %s3, %s162
      %s164 = smul.u32 98, %s14
      %p165 = scmp.lt.s32.totalorder %s164, 195
      %s166 = scalar_select %p165, %s164, 195
      %s167 = smul.addr %s166, 2
      %s168 = smul.addr %s167, 8
      %s169 = scalar_lea.vmem %s0, %s168
      %s170 = smul.u32 98, %s14
      %s171 = smul.u32 98, %s14
      %p172 = scmp.lt.s32.totalorder %s171, 195
      %s173 = scalar_select %p172, %s171, 195
      %s174 = smul.addr %s173, 8
      %s175 = scalar_lea.vmem %s3, %s174
      %s176 = smul.u32 98, %s14
      %v178 = vld [vmem:[%s169] sm:$0xff]
      %v179 = vld [vmem:[%s169 + $0x8] sm:$0xff]
      %v180 = vld [vmem:[%s169 + $0x10] sm:$0xff]
      %v181 = vld [vmem:[%s169 + $0x18] sm:$0xff]
      %v182 = vld [vmem:[%s169 + $0x20] sm:$0xff]
      %v183 = vld [vmem:[%s169 + $0x28] sm:$0xff]
      %v184 = vld [vmem:[%s169 + $0x30] sm:$0xff]
      %v185 = vld [vmem:[%s169 + $0x38] sm:$0xff]
      %v186 = vld [vmem:[%s169 + $0x40] sm:$0xff]
      %v187 = vld [vmem:[%s169 + $0x48] sm:$0xff]
      %v188 = vld [vmem:[%s169 + $0x50] sm:$0xff]
      %v189 = vld [vmem:[%s169 + $0x58] sm:$0xff]
      %v190 = vld [vmem:[%s169 + $0x60] sm:$0xff]
      %v191 = vld [vmem:[%s169 + $0x68] sm:$0xff]
      %v192 = vld [vmem:[%s169 + $0x70] sm:$0xff]
      %v193 = vld [vmem:[%s169 + $0x78] sm:$0xff]
      %v194 = vld [vmem:[%s169 + $0x80] sm:$0xff]
      %v195 = vld [vmem:[%s169 + $0x88] sm:$0xff]
      %v196 = vld [vmem:[%s169 + $0x90] sm:$0xff]
      %v197 = vld [vmem:[%s169 + $0x98] sm:$0xff]
      %v198 = vld [vmem:[%s169 + $0xa0] sm:$0xff]
      %v199 = vld [vmem:[%s169 + $0xa8] sm:$0xff]
      %v200 = vld [vmem:[%s169 + $0xb0] sm:$0xff]
      %v201 = vld [vmem:[%s169 + $0xb8] sm:$0xff]
      %v202 = vld [vmem:[%s169 + $0xc0] sm:$0xff]
      %v203 = vld [vmem:[%s169 + $0xc8] sm:$0xff]
      %v204 = vld [vmem:[%s169 + $0xd0] sm:$0xff]
      %v205 = vld [vmem:[%s169 + $0xd8] sm:$0xff]
      %v206 = vld [vmem:[%s169 + $0xe0] sm:$0xff]
      %v207 = vld [vmem:[%s169 + $0xe8] sm:$0xff]
      %v208 = vld [vmem:[%s169 + $0xf0] sm:$0xff]
      %v209 = vld [vmem:[%s169 + $0xf8] sm:$0xff]
      %v210 = vld [vmem:[%s169 + $0x100] sm:$0xff]
      %v211 = vld [vmem:[%s169 + $0x108] sm:$0xff]
      %v212 = vld [vmem:[%s169 + $0x110] sm:$0xff]
      %v213 = vld [vmem:[%s169 + $0x118] sm:$0xff]
      %v214 = vld [vmem:[%s169 + $0x120] sm:$0xff]
      %v215 = vld [vmem:[%s169 + $0x128] sm:$0xff]
      %v216 = vld [vmem:[%s169 + $0x130] sm:$0xff]
      %v217 = vld [vmem:[%s169 + $0x138] sm:$0xff]
      %v218 = vld [vmem:[%s169 + $0x140] sm:$0xff]
      %v219 = vld [vmem:[%s169 + $0x148] sm:$0xff]
      %v220 = vld [vmem:[%s169 + $0x150] sm:$0xff]
      %v221 = vld [vmem:[%s169 + $0x158] sm:$0xff]
      %v222 = vld [vmem:[%s169 + $0x160] sm:$0xff]
      %v223 = vld [vmem:[%s169 + $0x168] sm:$0xff]
      %v224 = vld [vmem:[%s169 + $0x170] sm:$0xff]
      %v225 = vld [vmem:[%s169 + $0x178] sm:$0xff]
      %v226 = vld [vmem:[%s169 + $0x180] sm:$0xff]
      %v227 = vld [vmem:[%s169 + $0x188] sm:$0xff]
      %v228 = vld [vmem:[%s169 + $0x190] sm:$0xff]
      %v229 = vld [vmem:[%s169 + $0x198] sm:$0xff]
      %v230 = vld [vmem:[%s169 + $0x1a0] sm:$0xff]
      %v231 = vld [vmem:[%s169 + $0x1a8] sm:$0xff]
      %v232 = vld [vmem:[%s169 + $0x1b0] sm:$0xff]
      %v233 = vld [vmem:[%s169 + $0x1b8] sm:$0xff]
      %v234 = vld [vmem:[%s169 + $0x1c0] sm:$0xff]
      %v235 = vld [vmem:[%s169 + $0x1c8] sm:$0xff]
      %v236 = vld [vmem:[%s169 + $0x1d0] sm:$0xff]
      %v237 = vld [vmem:[%s169 + $0x1d8] sm:$0xff]
      %v238 = vld [vmem:[%s169 + $0x1e0] sm:$0xff]
      %v239 = vld [vmem:[%s169 + $0x1e8] sm:$0xff]
      %v240 = vld [vmem:[%s169 + $0x1f0] sm:$0xff]
      %v241 = vld [vmem:[%s169 + $0x1f8] sm:$0xff]
      %v242 = vld [vmem:[%s169 + $0x200] sm:$0xff]
      %v243 = vld [vmem:[%s169 + $0x208] sm:$0xff]
      %v244 = vld [vmem:[%s169 + $0x210] sm:$0xff]
      %v245 = vld [vmem:[%s169 + $0x218] sm:$0xff]
      %v246 = vld [vmem:[%s169 + $0x220] sm:$0xff]
      %v247 = vld [vmem:[%s169 + $0x228] sm:$0xff]
      %v248 = vld [vmem:[%s169 + $0x230] sm:$0xff]
      %v249 = vld [vmem:[%s169 + $0x238] sm:$0xff]
      %v250 = vld [vmem:[%s169 + $0x240] sm:$0xff]
      %v251 = vld [vmem:[%s169 + $0x248] sm:$0xff]
      %v252 = vld [vmem:[%s169 + $0x250] sm:$0xff]
      %v253 = vld [vmem:[%s169 + $0x258] sm:$0xff]
      %v254 = vld [vmem:[%s169 + $0x260] sm:$0xff]
      %v255 = vld [vmem:[%s169 + $0x268] sm:$0xff]
      %v256 = vld [vmem:[%s169 + $0x270] sm:$0xff]
      %v257 = vld [vmem:[%s169 + $0x278] sm:$0xff]
      %v258 = vld [vmem:[%s169 + $0x280] sm:$0xff]
      %v259 = vld [vmem:[%s169 + $0x288] sm:$0xff]
      %v260 = vld [vmem:[%s169 + $0x290] sm:$0xff]
      %v261 = vld [vmem:[%s169 + $0x298] sm:$0xff]
      %v262 = vld [vmem:[%s169 + $0x2a0] sm:$0xff]
      %v263 = vld [vmem:[%s169 + $0x2a8] sm:$0xff]
      %v264 = vld [vmem:[%s169 + $0x2b0] sm:$0xff]
      %v265 = vld [vmem:[%s169 + $0x2b8] sm:$0xff]
      %v266 = vld [vmem:[%s169 + $0x2c0] sm:$0xff]
      %v267 = vld [vmem:[%s169 + $0x2c8] sm:$0xff]
      %v268 = vld [vmem:[%s169 + $0x2d0] sm:$0xff]
      %v269 = vld [vmem:[%s169 + $0x2d8] sm:$0xff]
      %v270 = vld [vmem:[%s169 + $0x2e0] sm:$0xff]
      %v271 = vld [vmem:[%s169 + $0x2e8] sm:$0xff]
      %v272 = vld [vmem:[%s169 + $0x2f0] sm:$0xff]
      %v273 = vld [vmem:[%s169 + $0x2f8] sm:$0xff]
      %v274 = vld [vmem:[%s169 + $0x300] sm:$0xff]
      %v275 = vld [vmem:[%s169 + $0x308] sm:$0xff]
      %v276 = vld [vmem:[%s169 + $0x310] sm:$0xff]
      %v277 = vld [vmem:[%s169 + $0x318] sm:$0xff]
      %v278 = vld [vmem:[%s169 + $0x320] sm:$0xff]
      %v279 = vld [vmem:[%s169 + $0x328] sm:$0xff]
      %v280 = vld [vmem:[%s169 + $0x330] sm:$0xff]
      %v281 = vld [vmem:[%s169 + $0x338] sm:$0xff]
      %v282 = vld [vmem:[%s169 + $0x340] sm:$0xff]
      %v283 = vld [vmem:[%s169 + $0x348] sm:$0xff]
      %v284 = vld [vmem:[%s169 + $0x350] sm:$0xff]
      %v285 = vld [vmem:[%s169 + $0x358] sm:$0xff]
      %v286 = vld [vmem:[%s169 + $0x360] sm:$0xff]
      %v287 = vld [vmem:[%s169 + $0x368] sm:$0xff]
      %v288 = vld [vmem:[%s169 + $0x370] sm:$0xff]
      %v289 = vld [vmem:[%s169 + $0x378] sm:$0xff]
      %v290 = vld [vmem:[%s169 + $0x380] sm:$0xff]
      %v291 = vld [vmem:[%s169 + $0x388] sm:$0xff]
      %v292 = vld [vmem:[%s169 + $0x390] sm:$0xff]
      %v293 = vld [vmem:[%s169 + $0x398] sm:$0xff]
      %v294 = vld [vmem:[%s169 + $0x3a0] sm:$0xff]
      %v295 = vld [vmem:[%s169 + $0x3a8] sm:$0xff]
      %v296 = vld [vmem:[%s169 + $0x3b0] sm:$0xff]
      %v297 = vld [vmem:[%s169 + $0x3b8] sm:$0xff]
      %v298 = vld [vmem:[%s169 + $0x3c0] sm:$0xff]
      %v299 = vld [vmem:[%s169 + $0x3c8] sm:$0xff]
      %v300 = vld [vmem:[%s169 + $0x3d0] sm:$0xff]
      %v301 = vld [vmem:[%s169 + $0x3d8] sm:$0xff]
      %v302 = vld [vmem:[%s169 + $0x3e0] sm:$0xff]
      %v303 = vld [vmem:[%s169 + $0x3e8] sm:$0xff]
      %v304 = vld [vmem:[%s169 + $0x3f0] sm:$0xff]
      %v305 = vld [vmem:[%s169 + $0x3f8] sm:$0xff]
      %v306 = vld [vmem:[%s169 + $0x400] sm:$0xff]
      %v307 = vld [vmem:[%s169 + $0x408] sm:$0xff]
      %v308 = vld [vmem:[%s169 + $0x410] sm:$0xff]
      %v309 = vld [vmem:[%s169 + $0x418] sm:$0xff]
      %v310 = vld [vmem:[%s169 + $0x420] sm:$0xff]
      %v311 = vld [vmem:[%s169 + $0x428] sm:$0xff]
      %v312 = vld [vmem:[%s169 + $0x430] sm:$0xff]
      %v313 = vld [vmem:[%s169 + $0x438] sm:$0xff]
      %v314 = vld [vmem:[%s169 + $0x440] sm:$0xff]
      %v315 = vld [vmem:[%s169 + $0x448] sm:$0xff]
      %v316 = vld [vmem:[%s169 + $0x450] sm:$0xff]
      %v317 = vld [vmem:[%s169 + $0x458] sm:$0xff]
      %v318 = vld [vmem:[%s169 + $0x460] sm:$0xff]
      %v319 = vld [vmem:[%s169 + $0x468] sm:$0xff]
      %v320 = vld [vmem:[%s169 + $0x470] sm:$0xff]
      %v321 = vld [vmem:[%s169 + $0x478] sm:$0xff]
      %v322 = vld [vmem:[%s169 + $0x480] sm:$0xff]
      %v323 = vld [vmem:[%s169 + $0x488] sm:$0xff]
      %v324 = vld [vmem:[%s169 + $0x490] sm:$0xff]
      %v325 = vld [vmem:[%s169 + $0x498] sm:$0xff]
      %v326 = vld [vmem:[%s169 + $0x4a0] sm:$0xff]
      %v327 = vld [vmem:[%s169 + $0x4a8] sm:$0xff]
      %v328 = vld [vmem:[%s169 + $0x4b0] sm:$0xff]
      %v329 = vld [vmem:[%s169 + $0x4b8] sm:$0xff]
      %v330 = vld [vmem:[%s169 + $0x4c0] sm:$0xff]
      %v331 = vld [vmem:[%s169 + $0x4c8] sm:$0xff]
      %v332 = vld [vmem:[%s169 + $0x4d0] sm:$0xff]
      %v333 = vld [vmem:[%s169 + $0x4d8] sm:$0xff]
      %v334 = vld [vmem:[%s169 + $0x4e0] sm:$0xff]
      %v335 = vld [vmem:[%s169 + $0x4e8] sm:$0xff]
      %v336 = vld [vmem:[%s169 + $0x4f0] sm:$0xff]
      %v337 = vld [vmem:[%s169 + $0x4f8] sm:$0xff]
      %v338 = vld [vmem:[%s169 + $0x500] sm:$0xff]
      %v339 = vld [vmem:[%s169 + $0x508] sm:$0xff]
      %v340 = vld [vmem:[%s169 + $0x510] sm:$0xff]
      %v341 = vld [vmem:[%s169 + $0x518] sm:$0xff]
      %v342 = vld [vmem:[%s169 + $0x520] sm:$0xff]
      %v343 = vld [vmem:[%s169 + $0x528] sm:$0xff]
      %v344 = vld [vmem:[%s169 + $0x530] sm:$0xff]
      %v345 = vld [vmem:[%s169 + $0x538] sm:$0xff]
      %v346 = vld [vmem:[%s169 + $0x540] sm:$0xff]
      %v347 = vld [vmem:[%s169 + $0x548] sm:$0xff]
      %v348 = vld [vmem:[%s169 + $0x550] sm:$0xff]
      %v349 = vld [vmem:[%s169 + $0x558] sm:$0xff]
      %v350 = vld [vmem:[%s169 + $0x560] sm:$0xff]
      %v351 = vld [vmem:[%s169 + $0x568] sm:$0xff]
      %v352 = vld [vmem:[%s169 + $0x570] sm:$0xff]
      %v353 = vld [vmem:[%s169 + $0x578] sm:$0xff]
      %v354 = vld [vmem:[%s169 + $0x580] sm:$0xff]
      %v355 = vld [vmem:[%s169 + $0x588] sm:$0xff]
      %v356 = vld [vmem:[%s169 + $0x590] sm:$0xff]
      %v357 = vld [vmem:[%s169 + $0x598] sm:$0xff]
      %v358 = vld [vmem:[%s169 + $0x5a0] sm:$0xff]
      %v359 = vld [vmem:[%s169 + $0x5a8] sm:$0xff]
      %v360 = vld [vmem:[%s169 + $0x5b0] sm:$0xff]
      %v361 = vld [vmem:[%s169 + $0x5b8] sm:$0xff]
      %v362 = vld [vmem:[%s169 + $0x5c0] sm:$0xff]
      %v363 = vld [vmem:[%s169 + $0x5c8] sm:$0xff]
      %v364 = vld [vmem:[%s169 + $0x5d0] sm:$0xff]
      %v365 = vld [vmem:[%s169 + $0x5d8] sm:$0xff]
      %v366 = vld [vmem:[%s169 + $0x5e0] sm:$0xff]
      %v367 = vld [vmem:[%s169 + $0x5e8] sm:$0xff]
      %v368 = vld [vmem:[%s169 + $0x5f0] sm:$0xff]
      %v369 = vld [vmem:[%s169 + $0x5f8] sm:$0xff]
      %v370 = vld [vmem:[%s169 + $0x600] sm:$0xff]
      %v371 = vld [vmem:[%s169 + $0x608] sm:$0xff]
      %v372 = vld [vmem:[%s169 + $0x610] sm:$0xff]
      %v373 = vld [vmem:[%s169 + $0x618] sm:$0xff]
      %v374 = vpack.c.bf16 %v180, %v178
      %v375 = vpack.c.bf16 %v181, %v179
      %v376 = vpack.c.bf16 %v184, %v182
      %v377 = vpack.c.bf16 %v185, %v183
      %v378 = vpack.c.bf16 %v188, %v186
      %v379 = vpack.c.bf16 %v189, %v187
      %v380 = vpack.c.bf16 %v192, %v190
      %v381 = vpack.c.bf16 %v193, %v191
      %v382 = vpack.c.bf16 %v196, %v194
      %v383 = vpack.c.bf16 %v197, %v195
      %v384 = vpack.c.bf16 %v200, %v198
      %v385 = vpack.c.bf16 %v201, %v199
      %v386 = vpack.c.bf16 %v204, %v202
      %v387 = vpack.c.bf16 %v205, %v203
      %v388 = vpack.c.bf16 %v208, %v206
      %v389 = vpack.c.bf16 %v209, %v207
      %v390 = vpack.c.bf16 %v212, %v210
      %v391 = vpack.c.bf16 %v213, %v211
      %v392 = vpack.c.bf16 %v216, %v214
      %v393 = vpack.c.bf16 %v217, %v215
      %v394 = vpack.c.bf16 %v220, %v218
      %v395 = vpack.c.bf16 %v221, %v219
      %v396 = vpack.c.bf16 %v224, %v222
      %v397 = vpack.c.bf16 %v225, %v223
      %v398 = vpack.c.bf16 %v228, %v226
      %v399 = vpack.c.bf16 %v229, %v227
      %v400 = vpack.c.bf16 %v232, %v230
      %v401 = vpack.c.bf16 %v233, %v231
      %v402 = vpack.c.bf16 %v236, %v234
      %v403 = vpack.c.bf16 %v237, %v235
      %v404 = vpack.c.bf16 %v240, %v238
      %v405 = vpack.c.bf16 %v241, %v239
      %v406 = vpack.c.bf16 %v244, %v242
      %v407 = vpack.c.bf16 %v245, %v243
      %v408 = vpack.c.bf16 %v248, %v246
      %v409 = vpack.c.bf16 %v249, %v247
      %v410 = vpack.c.bf16 %v252, %v250
      %v411 = vpack.c.bf16 %v253, %v251
      %v412 = vpack.c.bf16 %v256, %v254
      %v413 = vpack.c.bf16 %v257, %v255
      %v414 = vpack.c.bf16 %v260, %v258
      %v415 = vpack.c.bf16 %v261, %v259
      %v416 = vpack.c.bf16 %v264, %v262
      %v417 = vpack.c.bf16 %v265, %v263
      %v418 = vpack.c.bf16 %v268, %v266
      %v419 = vpack.c.bf16 %v269, %v267
      %v420 = vpack.c.bf16 %v272, %v270
      %v421 = vpack.c.bf16 %v273, %v271
      %v422 = vpack.c.bf16 %v276, %v274
      %v423 = vpack.c.bf16 %v277, %v275
      %v424 = vpack.c.bf16 %v280, %v278
      %v425 = vpack.c.bf16 %v281, %v279
      %v426 = vpack.c.bf16 %v284, %v282
      %v427 = vpack.c.bf16 %v285, %v283
      %v428 = vpack.c.bf16 %v288, %v286
      %v429 = vpack.c.bf16 %v289, %v287
      %v430 = vpack.c.bf16 %v292, %v290
      %v431 = vpack.c.bf16 %v293, %v291
      %v432 = vpack.c.bf16 %v296, %v294
      %v433 = vpack.c.bf16 %v297, %v295
      %v434 = vpack.c.bf16 %v300, %v298
      %v435 = vpack.c.bf16 %v301, %v299
      %v436 = vpack.c.bf16 %v304, %v302
      %v437 = vpack.c.bf16 %v305, %v303
      %v438 = vpack.c.bf16 %v308, %v306
      %v439 = vpack.c.bf16 %v309, %v307
      %v440 = vpack.c.bf16 %v312, %v310
      %v441 = vpack.c.bf16 %v313, %v311
      %v442 = vpack.c.bf16 %v316, %v314
      %v443 = vpack.c.bf16 %v317, %v315
      %v444 = vpack.c.bf16 %v320, %v318
      %v445 = vpack.c.bf16 %v321, %v319
      %v446 = vpack.c.bf16 %v324, %v322
      %v447 = vpack.c.bf16 %v325, %v323
      %v448 = vpack.c.bf16 %v328, %v326
      %v449 = vpack.c.bf16 %v329, %v327
      %v450 = vpack.c.bf16 %v332, %v330
      %v451 = vpack.c.bf16 %v333, %v331
      %v452 = vpack.c.bf16 %v336, %v334
      %v453 = vpack.c.bf16 %v337, %v335
      %v454 = vpack.c.bf16 %v340, %v338
      %v455 = vpack.c.bf16 %v341, %v339
      %v456 = vpack.c.bf16 %v344, %v342
      %v457 = vpack.c.bf16 %v345, %v343
      %v458 = vpack.c.bf16 %v348, %v346
      %v459 = vpack.c.bf16 %v349, %v347
      %v460 = vpack.c.bf16 %v352, %v350
      %v461 = vpack.c.bf16 %v353, %v351
      %v462 = vpack.c.bf16 %v356, %v354
      %v463 = vpack.c.bf16 %v357, %v355
      %v464 = vpack.c.bf16 %v360, %v358
      %v465 = vpack.c.bf16 %v361, %v359
      %v466 = vpack.c.bf16 %v364, %v362
      %v467 = vpack.c.bf16 %v365, %v363
      %v468 = vpack.c.bf16 %v368, %v366
      %v469 = vpack.c.bf16 %v369, %v367
      %v470 = vpack.c.bf16 %v372, %v370
      %v471 = vpack.c.bf16 %v373, %v371
      %v472 = vld [vmem:[%s1] sm:$0xff]
      %v473 = vld [vmem:[%s1 + $0x8] sm:$0xff]
      %v474 = vld [vmem:[%s1 + $0x10] sm:$0xff]
      %v475 = vld [vmem:[%s1 + $0x18] sm:$0xff]
      %v476 = vld [vmem:[%s1 + $0x20] sm:$0xff]
      %v477 = vld [vmem:[%s1 + $0x28] sm:$0xff]
      %v478 = vld [vmem:[%s1 + $0x30] sm:$0xff]
      %v479 = vld [vmem:[%s1 + $0x38] sm:$0xff]
      %v480 = vld [vmem:[%s1 + $0x40] sm:$0xff]
      %v481 = vld [vmem:[%s1 + $0x48] sm:$0xff]
      %v482 = vld [vmem:[%s1 + $0x50] sm:$0xff]
      %v483 = vld [vmem:[%s1 + $0x58] sm:$0xff]
      %v484 = vld [vmem:[%s1 + $0x60] sm:$0xff]
      %v485 = vld [vmem:[%s1 + $0x68] sm:$0xff]
      %v486 = vld [vmem:[%s1 + $0x70] sm:$0xff]
      %v487 = vld [vmem:[%s1 + $0x78] sm:$0xff]
      %v488 = vld [vmem:[%s1 + $0x80] sm:$0xff]
      %v489 = vld [vmem:[%s1 + $0x88] sm:$0xff]
      %v490 = vpack.c.bf16 %v473, %v472
      %v491 = vpack.c.bf16 %v475, %v474
      %v492 = vpack.c.bf16 %v477, %v476
      %v493 = vpack.c.bf16 %v479, %v478
      %v494 = vpack.c.bf16 %v481, %v480
      %v495 = vpack.c.bf16 %v483, %v482
      %v496 = vpack.c.bf16 %v485, %v484
      %v497 = vpack.c.bf16 %v487, %v486
      %v498 = vpack.c.bf16 %v489, %v488
      %v499 = vld [vmem:[%s2] sm:$0x1]
      %v501 = vlaneseq
      %v502 = vshrl.u32 %v501, 7
      %v503 = vsub.s32 0, %v502
      %v504 = vrot.slane %v499, %v503
      %vm506 = vcmask 130048
      %v508 = vsel %vm506, %v375, 0
      %v511 = vsel %vm506, %v377, 0
      %v514 = vsel %vm506, %v379, 0
      %v517 = vsel %vm506, %v381, 0
      %v520 = vsel %vm506, %v383, 0
      %v523 = vsel %vm506, %v385, 0
      %v526 = vsel %vm506, %v387, 0
      %v529 = vsel %vm506, %v389, 0
      %v532 = vsel %vm506, %v391, 0
      %v535 = vsel %vm506, %v393, 0
      %v538 = vsel %vm506, %v395, 0
      %v541 = vsel %vm506, %v397, 0
      %v544 = vsel %vm506, %v399, 0
      %v547 = vsel %vm506, %v401, 0
      %v550 = vsel %vm506, %v403, 0
      %v553 = vsel %vm506, %v405, 0
      %v556 = vsel %vm506, %v407, 0
      %v559 = vsel %vm506, %v409, 0
      %v562 = vsel %vm506, %v411, 0
      %v565 = vsel %vm506, %v413, 0
      %v568 = vsel %vm506, %v415, 0
      %v571 = vsel %vm506, %v417, 0
      %v574 = vsel %vm506, %v419, 0
      %v577 = vsel %vm506, %v421, 0
      %v580 = vsel %vm506, %v423, 0
      %v583 = vsel %vm506, %v425, 0
      %v586 = vsel %vm506, %v427, 0
      %v589 = vsel %vm506, %v429, 0
      %v592 = vsel %vm506, %v431, 0
      %v595 = vsel %vm506, %v433, 0
      %v598 = vsel %vm506, %v435, 0
      %v601 = vsel %vm506, %v437, 0
      %v604 = vsel %vm506, %v439, 0
      %v607 = vsel %vm506, %v441, 0
      %v610 = vsel %vm506, %v443, 0
      %v613 = vsel %vm506, %v445, 0
      %v616 = vsel %vm506, %v447, 0
      %v619 = vsel %vm506, %v449, 0
      %v622 = vsel %vm506, %v451, 0
      %v625 = vsel %vm506, %v453, 0
      %v628 = vsel %vm506, %v455, 0
      %v631 = vsel %vm506, %v457, 0
      %v634 = vsel %vm506, %v459, 0
      %v637 = vsel %vm506, %v461, 0
      %v640 = vsel %vm506, %v463, 0
      %v643 = vsel %vm506, %v465, 0
      %v646 = vsel %vm506, %v467, 0
      %v649 = vsel %vm506, %v469, 0
      %v652 = vsel %vm506, %v471, 0
      %654 = vmatprep.subr.bf16.mxu0 0
      %655 = vmatpush1.bf16.msra.mxu0 %v490
      %656 = vmatprep.subr.bf16.mxu0 0
      %657 = vmatpush1.bf16.msra.mxu0 %v491
      %658 = vmatprep.subr.bf16.mxu0 0
      %659 = vmatpush1.bf16.msra.mxu0 %v492
      %660 = vmatprep.subr.bf16.mxu0 0
      %661 = vmatpush1.bf16.msra.mxu0 %v493
      %662 = vmatprep.subr.bf16.mxu0 0
      %663 = vmatpush1.bf16.msra.mxu0 %v494
      %664 = vmatprep.subr.bf16.mxu0 0
      %665 = vmatpush1.bf16.msra.mxu0 %v495
      %666 = vmatprep.subr.bf16.mxu0 0
      %667 = vmatpush1.bf16.msra.mxu0 %v496
      %668 = vmatprep.subr.bf16.mxu0 0
      %669 = vmatpush1.bf16.msra.mxu0 %v497
      %670 = vmatprep.subr.bf16.mxu0 0
      %671 = vmatpush1.bf16.msra.mxu0 %v498
      %672 = vmatprep.subr.bf16.mxu0 0
      %673 = vmatpush1.bf16.msra.mxu0 0
      %674 = vmatprep.subr.bf16.mxu0 0
      %675 = vmatpush1.bf16.msra.mxu0 0
      %676 = vmatprep.subr.bf16.mxu0 0
      %677 = vmatpush1.bf16.msra.mxu0 0
      %678 = vmatprep.subr.bf16.mxu0 0
      %679 = vmatpush1.bf16.msra.mxu0 0
      %680 = vmatprep.subr.bf16.mxu0 0
      %681 = vmatpush1.bf16.msra.mxu0 0
      %682 = vmatprep.subr.bf16.mxu0 0
      %683 = vmatpush1.bf16.msra.mxu0 0
      %684 = vmatprep.subr.bf16.mxu0 0
      %685 = vmatpush1.bf16.msra.mxu0 0
      %686 = vmatprep.mubr.bf16.mxu0 %v508
      %687 = vmatmul.mubr.bf16.gmra.mrb[0].mxu0 %v374
      %v688 = vpop.f32.mrb[0].mxu0
      %v689 = vadd.f32 %v504, %v688
      %v690 = vpop.f32.mrb[0].mxu0
      %v691 = vpop.f32.mrb[0].mxu0
      %v692 = vadd.f32 %v504, %v691
      %v693 = vpop.f32.mrb[0].mxu0
      %694 = vmatprep.mubr.bf16.mxu0 %v511
      %695 = vmatmul.mubr.bf16.gmra.mrb[0].mxu0 %v376
      %v696 = vpop.f32.mrb[0].mxu0
      %v697 = vadd.f32 %v504, %v696
      %v698 = vpop.f32.mrb[0].mxu0
      %v699 = vpop.f32.mrb[0].mxu0
      %v700 = vadd.f32 %v504, %v699
      %v701 = vpop.f32.mrb[0].mxu0
      %702 = vmatprep.mubr.bf16.mxu0 %v514
      %703 = vmatmul.mubr.bf16.gmra.mrb[0].mxu0 %v378
      %v704 = vpop.f32.mrb[0].mxu0
      %v705 = vadd.f32 %v504, %v704
      %v706 = vpop.f32.mrb[0].mxu0
      %v707 = vpop.f32.mrb[0].mxu0
      %v708 = vadd.f32 %v504, %v707
      %v709 = vpop.f32.mrb[0].mxu0
      %710 = vmatprep.mubr.bf16.mxu0 %v517
      %711 = vmatmul.mubr.bf16.gmra.mrb[0].mxu0 %v380
      %v712 = vpop.f32.mrb[0].mxu0
      %v713 = vadd.f32 %v504, %v712
      %v714 = vpop.f32.mrb[0].mxu0
      %v715 = vpop.f32.mrb[0].mxu0
      %v716 = vadd.f32 %v504, %v715
      %v717 = vpop.f32.mrb[0].mxu0
      %718 = vmatprep.mubr.bf16.mxu0 %v520
      %719 = vmatmul.mubr.bf16.gmra.mrb[0].mxu0 %v382
      %v720 = vpop.f32.mrb[0].mxu0
      %v721 = vadd.f32 %v504, %v720
      %v722 = vpop.f32.mrb[0].mxu0
      %v723 = vpop.f32.mrb[0].mxu0
      %v724 = vadd.f32 %v504, %v723
      %v725 = vpop.f32.mrb[0].mxu0
      %726 = vmatprep.mubr.bf16.mxu0 %v523
      %727 = vmatmul.mubr.bf16.gmra.mrb[0].mxu0 %v384
      %v728 = vpop.f32.mrb[0].mxu0
      %v729 = vadd.f32 %v504, %v728
      %v730 = vpop.f32.mrb[0].mxu0
      %v731 = vpop.f32.mrb[0].mxu0
      %v732 = vadd.f32 %v504, %v731
      %v733 = vpop.f32.mrb[0].mxu0
      %734 = vmatprep.mubr.bf16.mxu0 %v526
      %735 = vmatmul.mubr.bf16.gmra.mrb[0].mxu0 %v386
      %v736 = vpop.f32.mrb[0].mxu0
      %v737 = vadd.f32 %v504, %v736
      %v738 = vpop.f32.mrb[0].mxu0
      %v739 = vpop.f32.mrb[0].mxu0
      %v740 = vadd.f32 %v504, %v739
      %v741 = vpop.f32.mrb[0].mxu0
      %742 = vmatprep.mubr.bf16.mxu0 %v529
      %743 = vmatmul.mubr.bf16.gmra.mrb[0].mxu0 %v388
      %v744 = vpop.f32.mrb[0].mxu0
      %v745 = vadd.f32 %v504, %v744
      %v746 = vpop.f32.mrb[0].mxu0
      %v747 = vpop.f32.mrb[0].mxu0
      %v748 = vadd.f32 %v504, %v747
      %v749 = vpop.f32.mrb[0].mxu0
      %750 = vmatprep.mubr.bf16.mxu0 %v532
      %751 = vmatmul.mubr.bf16.gmra.mrb[0].mxu0 %v390
      %v752 = vpop.f32.mrb[0].mxu0
      %v753 = vadd.f32 %v504, %v752
      %v754 = vpop.f32.mrb[0].mxu0
      %v755 = vpop.f32.mrb[0].mxu0
      %v756 = vadd.f32 %v504, %v755
      %v757 = vpop.f32.mrb[0].mxu0
      %758 = vmatprep.mubr.bf16.mxu0 %v535
      %759 = vmatmul.mubr.bf16.gmra.mrb[0].mxu0 %v392
      %v760 = vpop.f32.mrb[0].mxu0
      %v761 = vadd.f32 %v504, %v760
      %v762 = vpop.f32.mrb[0].mxu0
      %v763 = vpop.f32.mrb[0].mxu0
      %v764 = vadd.f32 %v504, %v763
      %v765 = vpop.f32.mrb[0].mxu0
      %766 = vmatprep.mubr.bf16.mxu0 %v538
      %767 = vmatmul.mubr.bf16.gmra.mrb[0].mxu0 %v394
      %v768 = vpop.f32.mrb[0].mxu0
      %v769 = vadd.f32 %v504, %v768
      %v770 = vpop.f32.mrb[0].mxu0
      %v771 = vpop.f32.mrb[0].mxu0
      %v772 = vadd.f32 %v504, %v771
      %v773 = vpop.f32.mrb[0].mxu0
      %774 = vmatprep.mubr.bf16.mxu0 %v541
      %775 = vmatmul.mubr.bf16.gmra.mrb[0].mxu0 %v396
      %v776 = vpop.f32.mrb[0].mxu0
      %v777 = vadd.f32 %v504, %v776
      %v778 = vpop.f32.mrb[0].mxu0
      %v779 = vpop.f32.mrb[0].mxu0
      %v780 = vadd.f32 %v504, %v779
      %v781 = vpop.f32.mrb[0].mxu0
      %782 = vmatprep.mubr.bf16.mxu0 %v544
      %783 = vmatmul.mubr.bf16.gmra.mrb[0].mxu0 %v398
      %v784 = vpop.f32.mrb[0].mxu0
      %v785 = vadd.f32 %v504, %v784
      %v786 = vpop.f32.mrb[0].mxu0
      %v787 = vpop.f32.mrb[0].mxu0
      %v788 = vadd.f32 %v504, %v787
      %v789 = vpop.f32.mrb[0].mxu0
      %790 = vmatprep.mubr.bf16.mxu0 %v547
      %791 = vmatmul.mubr.bf16.gmra.mrb[0].mxu0 %v400
      %v792 = vpop.f32.mrb[0].mxu0
      %v793 = vadd.f32 %v504, %v792
      %v794 = vpop.f32.mrb[0].mxu0
      %v795 = vpop.f32.mrb[0].mxu0
      %v796 = vadd.f32 %v504, %v795
      %v797 = vpop.f32.mrb[0].mxu0
      %798 = vmatprep.mubr.bf16.mxu0 %v550
      %799 = vmatmul.mubr.bf16.gmra.mrb[0].mxu0 %v402
      %v800 = vpop.f32.mrb[0].mxu0
      %v801 = vadd.f32 %v504, %v800
      %v802 = vpop.f32.mrb[0].mxu0
      %v803 = vpop.f32.mrb[0].mxu0
      %v804 = vadd.f32 %v504, %v803
      %v805 = vpop.f32.mrb[0].mxu0
      %806 = vmatprep.mubr.bf16.mxu0 %v553
      %807 = vmatmul.mubr.bf16.gmra.mrb[0].mxu0 %v404
      %v808 = vpop.f32.mrb[0].mxu0
      %v809 = vadd.f32 %v504, %v808
      %v810 = vpop.f32.mrb[0].mxu0
      %v811 = vpop.f32.mrb[0].mxu0
      %v812 = vadd.f32 %v504, %v811
      %v813 = vpop.f32.mrb[0].mxu0
      %814 = vmatprep.mubr.bf16.mxu0 %v556
      %815 = vmatmul.mubr.bf16.gmra.mrb[0].mxu0 %v406
      %v816 = vpop.f32.mrb[0].mxu0
      %v817 = vadd.f32 %v504, %v816
      %v818 = vpop.f32.mrb[0].mxu0
      %v819 = vpop.f32.mrb[0].mxu0
      %v820 = vadd.f32 %v504, %v819
      %v821 = vpop.f32.mrb[0].mxu0
      %822 = vmatprep.mubr.bf16.mxu0 %v559
      %823 = vmatmul.mubr.bf16.gmra.mrb[0].mxu0 %v408
      %v824 = vpop.f32.mrb[0].mxu0
      %v825 = vadd.f32 %v504, %v824
      %v826 = vpop.f32.mrb[0].mxu0
      %v827 = vpop.f32.mrb[0].mxu0
      %v828 = vadd.f32 %v504, %v827
      %v829 = vpop.f32.mrb[0].mxu0
      %830 = vmatprep.mubr.bf16.mxu0 %v562
      %831 = vmatmul.mubr.bf16.gmra.mrb[0].mxu0 %v410
      %v832 = vpop.f32.mrb[0].mxu0
      %v833 = vadd.f32 %v504, %v832
      %v834 = vpop.f32.mrb[0].mxu0
      %v835 = vpop.f32.mrb[0].mxu0
      %v836 = vadd.f32 %v504, %v835
      %v837 = vpop.f32.mrb[0].mxu0
      %838 = vmatprep.mubr.bf16.mxu0 %v565
      %839 = vmatmul.mubr.bf16.gmra.mrb[0].mxu0 %v412
      %v840 = vpop.f32.mrb[0].mxu0
      %v841 = vadd.f32 %v504, %v840
      %v842 = vpop.f32.mrb[0].mxu0
      %v843 = vpop.f32.mrb[0].mxu0
      %v844 = vadd.f32 %v504, %v843
      %v845 = vpop.f32.mrb[0].mxu0
      %846 = vmatprep.mubr.bf16.mxu0 %v568
      %847 = vmatmul.mubr.bf16.gmra.mrb[0].mxu0 %v414
      %v848 = vpop.f32.mrb[0].mxu0
      %v849 = vadd.f32 %v504, %v848
      %v850 = vpop.f32.mrb[0].mxu0
      %v851 = vpop.f32.mrb[0].mxu0
      %v852 = vadd.f32 %v504, %v851
      %v853 = vpop.f32.mrb[0].mxu0
      %854 = vmatprep.mubr.bf16.mxu0 %v571
      %855 = vmatmul.mubr.bf16.gmra.mrb[0].mxu0 %v416
      %v856 = vpop.f32.mrb[0].mxu0
      %v857 = vadd.f32 %v504, %v856
      %v858 = vpop.f32.mrb[0].mxu0
      %v859 = vpop.f32.mrb[0].mxu0
      %v860 = vadd.f32 %v504, %v859
      %v861 = vpop.f32.mrb[0].mxu0
      %862 = vmatprep.mubr.bf16.mxu0 %v574
      %863 = vmatmul.mubr.bf16.gmra.mrb[0].mxu0 %v418
      %v864 = vpop.f32.mrb[0].mxu0
      %v865 = vadd.f32 %v504, %v864
      %v866 = vpop.f32.mrb[0].mxu0
      %v867 = vpop.f32.mrb[0].mxu0
      %v868 = vadd.f32 %v504, %v867
      %v869 = vpop.f32.mrb[0].mxu0
      %870 = vmatprep.mubr.bf16.mxu0 %v577
      %871 = vmatmul.mubr.bf16.gmra.mrb[0].mxu0 %v420
      %v872 = vpop.f32.mrb[0].mxu0
      %v873 = vadd.f32 %v504, %v872
      %v874 = vpop.f32.mrb[0].mxu0
      %v875 = vpop.f32.mrb[0].mxu0
      %v876 = vadd.f32 %v504, %v875
      %v877 = vpop.f32.mrb[0].mxu0
      %878 = vmatprep.mubr.bf16.mxu0 %v580
      %879 = vmatmul.mubr.bf16.gmra.mrb[0].mxu0 %v422
      %v880 = vpop.f32.mrb[0].mxu0
      %v881 = vadd.f32 %v504, %v880
      %v882 = vpop.f32.mrb[0].mxu0
      %v883 = vpop.f32.mrb[0].mxu0
      %v884 = vadd.f32 %v504, %v883
      %v885 = vpop.f32.mrb[0].mxu0
      %886 = vmatprep.mubr.bf16.mxu0 %v583
      %887 = vmatmul.mubr.bf16.gmra.mrb[0].mxu0 %v424
      %v888 = vpop.f32.mrb[0].mxu0
      %v889 = vadd.f32 %v504, %v888
      %v890 = vpop.f32.mrb[0].mxu0
      %v891 = vpop.f32.mrb[0].mxu0
      %v892 = vadd.f32 %v504, %v891
      %v893 = vpop.f32.mrb[0].mxu0
      %894 = vmatprep.mubr.bf16.mxu0 %v586
      %895 = vmatmul.mubr.bf16.gmra.mrb[0].mxu0 %v426
      %v896 = vpop.f32.mrb[0].mxu0
      %v897 = vadd.f32 %v504, %v896
      %v898 = vpop.f32.mrb[0].mxu0
      %v899 = vpop.f32.mrb[0].mxu0
      %v900 = vadd.f32 %v504, %v899
      %v901 = vpop.f32.mrb[0].mxu0
      %902 = vmatprep.mubr.bf16.mxu0 %v589
      %903 = vmatmul.mubr.bf16.gmra.mrb[0].mxu0 %v428
      %v904 = vpop.f32.mrb[0].mxu0
      %v905 = vadd.f32 %v504, %v904
      %v906 = vpop.f32.mrb[0].mxu0
      %v907 = vpop.f32.mrb[0].mxu0
      %v908 = vadd.f32 %v504, %v907
      %v909 = vpop.f32.mrb[0].mxu0
      %910 = vmatprep.mubr.bf16.mxu0 %v592
      %911 = vmatmul.mubr.bf16.gmra.mrb[0].mxu0 %v430
      %v912 = vpop.f32.mrb[0].mxu0
      %v913 = vadd.f32 %v504, %v912
      %v914 = vpop.f32.mrb[0].mxu0
      %v915 = vpop.f32.mrb[0].mxu0
      %v916 = vadd.f32 %v504, %v915
      %v917 = vpop.f32.mrb[0].mxu0
      %918 = vmatprep.mubr.bf16.mxu0 %v595
      %919 = vmatmul.mubr.bf16.gmra.mrb[0].mxu0 %v432
      %v920 = vpop.f32.mrb[0].mxu0
      %v921 = vadd.f32 %v504, %v920
      %v922 = vpop.f32.mrb[0].mxu0
      %v923 = vpop.f32.mrb[0].mxu0
      %v924 = vadd.f32 %v504, %v923
      %v925 = vpop.f32.mrb[0].mxu0
      %926 = vmatprep.mubr.bf16.mxu0 %v598
      %927 = vmatmul.mubr.bf16.gmra.mrb[0].mxu0 %v434
      %v928 = vpop.f32.mrb[0].mxu0
      %v929 = vadd.f32 %v504, %v928
      %v930 = vpop.f32.mrb[0].mxu0
      %v931 = vpop.f32.mrb[0].mxu0
      %v932 = vadd.f32 %v504, %v931
      %v933 = vpop.f32.mrb[0].mxu0
      %934 = vmatprep.mubr.bf16.mxu0 %v601
      %935 = vmatmul.mubr.bf16.gmra.mrb[0].mxu0 %v436
      %v936 = vpop.f32.mrb[0].mxu0
      %v937 = vadd.f32 %v504, %v936
      %v938 = vpop.f32.mrb[0].mxu0
      %v939 = vpop.f32.mrb[0].mxu0
      %v940 = vadd.f32 %v504, %v939
      %v941 = vpop.f32.mrb[0].mxu0
      %942 = vmatprep.mubr.bf16.mxu0 %v604
      %943 = vmatmul.mubr.bf16.gmra.mrb[0].mxu0 %v438
      %v944 = vpop.f32.mrb[0].mxu0
      %v945 = vadd.f32 %v504, %v944
      %v946 = vpop.f32.mrb[0].mxu0
      %v947 = vpop.f32.mrb[0].mxu0
      %v948 = vadd.f32 %v504, %v947
      %v949 = vpop.f32.mrb[0].mxu0
      %950 = vmatprep.mubr.bf16.mxu0 %v607
      %951 = vmatmul.mubr.bf16.gmra.mrb[0].mxu0 %v440
      %v952 = vpop.f32.mrb[0].mxu0
      %v953 = vadd.f32 %v504, %v952
      %v954 = vpop.f32.mrb[0].mxu0
      %v955 = vpop.f32.mrb[0].mxu0
      %v956 = vadd.f32 %v504, %v955
      %v957 = vpop.f32.mrb[0].mxu0
      %958 = vmatprep.mubr.bf16.mxu0 %v610
      %959 = vmatmul.mubr.bf16.gmra.mrb[0].mxu0 %v442
      %v960 = vpop.f32.mrb[0].mxu0
      %v961 = vadd.f32 %v504, %v960
      %v962 = vpop.f32.mrb[0].mxu0
      %v963 = vpop.f32.mrb[0].mxu0
      %v964 = vadd.f32 %v504, %v963
      %v965 = vpop.f32.mrb[0].mxu0
      %966 = vmatprep.mubr.bf16.mxu0 %v613
      %967 = vmatmul.mubr.bf16.gmra.mrb[0].mxu0 %v444
      %v968 = vpop.f32.mrb[0].mxu0
      %v969 = vadd.f32 %v504, %v968
      %v970 = vpop.f32.mrb[0].mxu0
      %v971 = vpop.f32.mrb[0].mxu0
      %v972 = vadd.f32 %v504, %v971
      %v973 = vpop.f32.mrb[0].mxu0
      %974 = vmatprep.mubr.bf16.mxu0 %v616
      %975 = vmatmul.mubr.bf16.gmra.mrb[0].mxu0 %v446
      %v976 = vpop.f32.mrb[0].mxu0
      %v977 = vadd.f32 %v504, %v976
      %v978 = vpop.f32.mrb[0].mxu0
      %v979 = vpop.f32.mrb[0].mxu0
      %v980 = vadd.f32 %v504, %v979
      %v981 = vpop.f32.mrb[0].mxu0
      %982 = vmatprep.mubr.bf16.mxu0 %v619
      %983 = vmatmul.mubr.bf16.gmra.mrb[0].mxu0 %v448
      %v984 = vpop.f32.mrb[0].mxu0
      %v985 = vadd.f32 %v504, %v984
      %v986 = vpop.f32.mrb[0].mxu0
      %v987 = vpop.f32.mrb[0].mxu0
      %v988 = vadd.f32 %v504, %v987
      %v989 = vpop.f32.mrb[0].mxu0
      %990 = vmatprep.mubr.bf16.mxu0 %v622
      %991 = vmatmul.mubr.bf16.gmra.mrb[0].mxu0 %v450
      %v992 = vpop.f32.mrb[0].mxu0
      %v993 = vadd.f32 %v504, %v992
      %v994 = vpop.f32.mrb[0].mxu0
      %v995 = vpop.f32.mrb[0].mxu0
      %v996 = vadd.f32 %v504, %v995
      %v997 = vpop.f32.mrb[0].mxu0
      %998 = vmatprep.mubr.bf16.mxu0 %v625
      %999 = vmatmul.mubr.bf16.gmra.mrb[0].mxu0 %v452
      %v1000 = vpop.f32.mrb[0].mxu0
      %v1001 = vadd.f32 %v504, %v1000
      %v1002 = vpop.f32.mrb[0].mxu0
      %v1003 = vpop.f32.mrb[0].mxu0
      %v1004 = vadd.f32 %v504, %v1003
      %v1005 = vpop.f32.mrb[0].mxu0
      %1006 = vmatprep.mubr.bf16.mxu0 %v628
      %1007 = vmatmul.mubr.bf16.gmra.mrb[0].mxu0 %v454
      %v1008 = vpop.f32.mrb[0].mxu0
      %v1009 = vadd.f32 %v504, %v1008
      %v1010 = vpop.f32.mrb[0].mxu0
      %v1011 = vpop.f32.mrb[0].mxu0
      %v1012 = vadd.f32 %v504, %v1011
      %v1013 = vpop.f32.mrb[0].mxu0
      %1014 = vmatprep.mubr.bf16.mxu0 %v631
      %1015 = vmatmul.mubr.bf16.gmra.mrb[0].mxu0 %v456
      %v1016 = vpop.f32.mrb[0].mxu0
      %v1017 = vadd.f32 %v504, %v1016
      %v1018 = vpop.f32.mrb[0].mxu0
      %v1019 = vpop.f32.mrb[0].mxu0
      %v1020 = vadd.f32 %v504, %v1019
      %v1021 = vpop.f32.mrb[0].mxu0
      %1022 = vmatprep.mubr.bf16.mxu0 %v634
      %1023 = vmatmul.mubr.bf16.gmra.mrb[0].mxu0 %v458
      %v1024 = vpop.f32.mrb[0].mxu0
      %v1025 = vadd.f32 %v504, %v1024
      %v1026 = vpop.f32.mrb[0].mxu0
      %v1027 = vpop.f32.mrb[0].mxu0
      %v1028 = vadd.f32 %v504, %v1027
      %v1029 = vpop.f32.mrb[0].mxu0
      %1030 = vmatprep.mubr.bf16.mxu0 %v637
      %1031 = vmatmul.mubr.bf16.gmra.mrb[0].mxu0 %v460
      %v1032 = vpop.f32.mrb[0].mxu0
      %v1033 = vadd.f32 %v504, %v1032
      %v1034 = vpop.f32.mrb[0].mxu0
      %v1035 = vpop.f32.mrb[0].mxu0
      %v1036 = vadd.f32 %v504, %v1035
      %v1037 = vpop.f32.mrb[0].mxu0
      %1038 = vmatprep.mubr.bf16.mxu0 %v640
      %1039 = vmatmul.mubr.bf16.gmra.mrb[0].mxu0 %v462
      %v1040 = vpop.f32.mrb[0].mxu0
      %v1041 = vadd.f32 %v504, %v1040
      %v1042 = vpop.f32.mrb[0].mxu0
      %v1043 = vpop.f32.mrb[0].mxu0
      %v1044 = vadd.f32 %v504, %v1043
      %v1045 = vpop.f32.mrb[0].mxu0
      %1046 = vmatprep.mubr.bf16.mxu0 %v643
      %1047 = vmatmul.mubr.bf16.gmra.mrb[0].mxu0 %v464
      %v1048 = vpop.f32.mrb[0].mxu0
      %v1049 = vadd.f32 %v504, %v1048
      %v1050 = vpop.f32.mrb[0].mxu0
      %v1051 = vpop.f32.mrb[0].mxu0
      %v1052 = vadd.f32 %v504, %v1051
      %v1053 = vpop.f32.mrb[0].mxu0
      %1054 = vmatprep.mubr.bf16.mxu0 %v646
      %1055 = vmatmul.mubr.bf16.gmra.mrb[0].mxu0 %v466
      %v1056 = vpop.f32.mrb[0].mxu0
      %v1057 = vadd.f32 %v504, %v1056
      %v1058 = vpop.f32.mrb[0].mxu0
      %v1059 = vpop.f32.mrb[0].mxu0
      %v1060 = vadd.f32 %v504, %v1059
      %v1061 = vpop.f32.mrb[0].mxu0
      %1062 = vmatprep.mubr.bf16.mxu0 %v649
      %1063 = vmatmul.mubr.bf16.gmra.mrb[0].mxu0 %v468
      %v1064 = vpop.f32.mrb[0].mxu0
      %v1065 = vadd.f32 %v504, %v1064
      %v1066 = vpop.f32.mrb[0].mxu0
      %v1067 = vpop.f32.mrb[0].mxu0
      %v1068 = vadd.f32 %v504, %v1067
      %v1069 = vpop.f32.mrb[0].mxu0
      %1070 = vmatprep.mubr.bf16.mxu0 %v652
      %1071 = vmatmul.mubr.bf16.gmra.mrb[0].mxu0 %v470
      %v1072 = vpop.f32.mrb[0].mxu0
      %v1073 = vadd.f32 %v504, %v1072
      %v1074 = vpop.f32.mrb[0].mxu0
      %v1075 = vpop.f32.mrb[0].mxu0
      %v1076 = vadd.f32 %v504, %v1075
      %v1077 = vpop.f32.mrb[0].mxu0
      %1078 = vdwg.mxu0
      %v1079 = vxor.u32 %v689, 2147483648
      %v1080 = vxor.u32 %v692, 2147483648
      %v1081 = vxor.u32 %v697, 2147483648
      %v1082 = vxor.u32 %v700, 2147483648
      %v1083 = vxor.u32 %v705, 2147483648
      %v1084 = vxor.u32 %v708, 2147483648
      %v1085 = vxor.u32 %v713, 2147483648
      %v1086 = vxor.u32 %v716, 2147483648
      %v1087 = vxor.u32 %v721, 2147483648
      %v1088 = vxor.u32 %v724, 2147483648
      %v1089 = vxor.u32 %v729, 2147483648
      %v1090 = vxor.u32 %v732, 2147483648
      %v1091 = vxor.u32 %v737, 2147483648
      %v1092 = vxor.u32 %v740, 2147483648
      %v1093 = vxor.u32 %v745, 2147483648
      %v1094 = vxor.u32 %v748, 2147483648
      %v1095 = vxor.u32 %v753, 2147483648
      %v1096 = vxor.u32 %v756, 2147483648
      %v1097 = vxor.u32 %v761, 2147483648
      %v1098 = vxor.u32 %v764, 2147483648
      %v1099 = vxor.u32 %v769, 2147483648
      %v1100 = vxor.u32 %v772, 2147483648
      %v1101 = vxor.u32 %v777, 2147483648
      %v1102 = vxor.u32 %v780, 2147483648
      %v1103 = vxor.u32 %v785, 2147483648
      %v1104 = vxor.u32 %v788, 2147483648
      %v1105 = vxor.u32 %v793, 2147483648
      %v1106 = vxor.u32 %v796, 2147483648
      %v1107 = vxor.u32 %v801, 2147483648
      %v1108 = vxor.u32 %v804, 2147483648
      %v1109 = vxor.u32 %v809, 2147483648
      %v1110 = vxor.u32 %v812, 2147483648
      %v1111 = vxor.u32 %v817, 2147483648
      %v1112 = vxor.u32 %v820, 2147483648
      %v1113 = vxor.u32 %v825, 2147483648
      %v1114 = vxor.u32 %v828, 2147483648
      %v1115 = vxor.u32 %v833, 2147483648
      %v1116 = vxor.u32 %v836, 2147483648
      %v1117 = vxor.u32 %v841, 2147483648
      %v1118 = vxor.u32 %v844, 2147483648
      %v1119 = vxor.u32 %v849, 2147483648
      %v1120 = vxor.u32 %v852, 2147483648
      %v1121 = vxor.u32 %v857, 2147483648
      %v1122 = vxor.u32 %v860, 2147483648
      %v1123 = vxor.u32 %v865, 2147483648
      %v1124 = vxor.u32 %v868, 2147483648
      %v1125 = vxor.u32 %v873, 2147483648
      %v1126 = vxor.u32 %v876, 2147483648
      %v1127 = vxor.u32 %v881, 2147483648
      %v1128 = vxor.u32 %v884, 2147483648
      %v1129 = vxor.u32 %v889, 2147483648
      %v1130 = vxor.u32 %v892, 2147483648
      %v1131 = vxor.u32 %v897, 2147483648
      %v1132 = vxor.u32 %v900, 2147483648
      %v1133 = vxor.u32 %v905, 2147483648
      %v1134 = vxor.u32 %v908, 2147483648
      %v1135 = vxor.u32 %v913, 2147483648
      %v1136 = vxor.u32 %v916, 2147483648
      %v1137 = vxor.u32 %v921, 2147483648
      %v1138 = vxor.u32 %v924, 2147483648
      %v1139 = vxor.u32 %v929, 2147483648
      %v1140 = vxor.u32 %v932, 2147483648
      %v1141 = vxor.u32 %v937, 2147483648
      %v1142 = vxor.u32 %v940, 2147483648
      %v1143 = vxor.u32 %v945, 2147483648
      %v1144 = vxor.u32 %v948, 2147483648
      %v1145 = vxor.u32 %v953, 2147483648
      %v1146 = vxor.u32 %v956, 2147483648
      %v1147 = vxor.u32 %v961, 2147483648
      %v1148 = vxor.u32 %v964, 2147483648
      %v1149 = vxor.u32 %v969, 2147483648
      %v1150 = vxor.u32 %v972, 2147483648
      %v1151 = vxor.u32 %v977, 2147483648
      %v1152 = vxor.u32 %v980, 2147483648
      %v1153 = vxor.u32 %v985, 2147483648
      %v1154 = vxor.u32 %v988, 2147483648
      %v1155 = vxor.u32 %v993, 2147483648
      %v1156 = vxor.u32 %v996, 2147483648
      %v1157 = vxor.u32 %v1001, 2147483648
      %v1158 = vxor.u32 %v1004, 2147483648
      %v1159 = vxor.u32 %v1009, 2147483648
      %v1160 = vxor.u32 %v1012, 2147483648
      %v1161 = vxor.u32 %v1017, 2147483648
      %v1162 = vxor.u32 %v1020, 2147483648
      %v1163 = vxor.u32 %v1025, 2147483648
      %v1164 = vxor.u32 %v1028, 2147483648
      %v1165 = vxor.u32 %v1033, 2147483648
      %v1166 = vxor.u32 %v1036, 2147483648
      %v1167 = vxor.u32 %v1041, 2147483648
      %v1168 = vxor.u32 %v1044, 2147483648
      %v1169 = vxor.u32 %v1049, 2147483648
      %v1170 = vxor.u32 %v1052, 2147483648
      %v1171 = vxor.u32 %v1057, 2147483648
      %v1172 = vxor.u32 %v1060, 2147483648
      %v1173 = vxor.u32 %v1065, 2147483648
      %v1174 = vxor.u32 %v1068, 2147483648
      %v1175 = vxor.u32 %v1073, 2147483648
      %v1176 = vxor.u32 %v1076, 2147483648
      %v1177 = vmul.f32 %v1079, 1.442695
      %v1178 = vpow.pop %v1177
      %v1179 = vmul.f32 %v1080, 1.442695
      %v1180 = vpow.pop %v1179
      %v1181 = vmul.f32 %v1081, 1.442695
      %v1182 = vpow.pop %v1181
      %v1183 = vmul.f32 %v1082, 1.442695
      %v1184 = vpow.pop %v1183
      %v1185 = vmul.f32 %v1083, 1.442695
      %v1186 = vpow.pop %v1185
      %v1187 = vmul.f32 %v1084, 1.442695
      %v1188 = vpow.pop %v1187
      %v1189 = vmul.f32 %v1085, 1.442695
      %v1190 = vpow.pop %v1189
      %v1191 = vmul.f32 %v1086, 1.442695
      %v1192 = vpow.pop %v1191
      %v1193 = vmul.f32 %v1087, 1.442695
      %v1194 = vpow.pop %v1193
      %v1195 = vmul.f32 %v1088, 1.442695
      %v1196 = vpow.pop %v1195
      %v1197 = vmul.f32 %v1089, 1.442695
      %v1198 = vpow.pop %v1197
      %v1199 = vmul.f32 %v1090, 1.442695
      %v1200 = vpow.pop %v1199
      %v1201 = vmul.f32 %v1091, 1.442695
      %v1202 = vpow.pop %v1201
      %v1203 = vmul.f32 %v1092, 1.442695
      %v1204 = vpow.pop %v1203
      %v1205 = vmul.f32 %v1093, 1.442695
      %v1206 = vpow.pop %v1205
      %v1207 = vmul.f32 %v1094, 1.442695
      %v1208 = vpow.pop %v1207
      %v1209 = vmul.f32 %v1095, 1.442695
      %v1210 = vpow.pop %v1209
      %v1211 = vmul.f32 %v1096, 1.442695
      %v1212 = vpow.pop %v1211
      %v1213 = vmul.f32 %v1097, 1.442695
      %v1214 = vpow.pop %v1213
      %v1215 = vmul.f32 %v1098, 1.442695
      %v1216 = vpow.pop %v1215
      %v1217 = vmul.f32 %v1099, 1.442695
      %v1218 = vpow.pop %v1217
      %v1219 = vmul.f32 %v1100, 1.442695
      %v1220 = vpow.pop %v1219
      %v1221 = vmul.f32 %v1101, 1.442695
      %v1222 = vpow.pop %v1221
      %v1223 = vmul.f32 %v1102, 1.442695
      %v1224 = vpow.pop %v1223
      %v1225 = vmul.f32 %v1103, 1.442695
      %v1226 = vpow.pop %v1225
      %v1227 = vmul.f32 %v1104, 1.442695
      %v1228 = vpow.pop %v1227
      %v1229 = vmul.f32 %v1105, 1.442695
      %v1230 = vpow.pop %v1229
      %v1231 = vmul.f32 %v1106, 1.442695
      %v1232 = vpow.pop %v1231
      %v1233 = vmul.f32 %v1107, 1.442695
      %v1234 = vpow.pop %v1233
      %v1235 = vmul.f32 %v1108, 1.442695
      %v1236 = vpow.pop %v1235
      %v1237 = vmul.f32 %v1109, 1.442695
      %v1238 = vpow.pop %v1237
      %v1239 = vmul.f32 %v1110, 1.442695
      %v1240 = vpow.pop %v1239
      %v1241 = vmul.f32 %v1111, 1.442695
      %v1242 = vpow.pop %v1241
      %v1243 = vmul.f32 %v1112, 1.442695
      %v1244 = vpow.pop %v1243
      %v1245 = vmul.f32 %v1113, 1.442695
      %v1246 = vpow.pop %v1245
      %v1247 = vmul.f32 %v1114, 1.442695
      %v1248 = vpow.pop %v1247
      %v1249 = vmul.f32 %v1115, 1.442695
      %v1250 = vpow.pop %v1249
      %v1251 = vmul.f32 %v1116, 1.442695
      %v1252 = vpow.pop %v1251
      %v1253 = vmul.f32 %v1117, 1.442695
      %v1254 = vpow.pop %v1253
      %v1255 = vmul.f32 %v1118, 1.442695
      %v1256 = vpow.pop %v1255
      %v1257 = vmul.f32 %v1119, 1.442695
      %v1258 = vpow.pop %v1257
      %v1259 = vmul.f32 %v1120, 1.442695
      %v1260 = vpow.pop %v1259
      %v1261 = vmul.f32 %v1121, 1.442695
      %v1262 = vpow.pop %v1261
      %v1263 = vmul.f32 %v1122, 1.442695
      %v1264 = vpow.pop %v1263
      %v1265 = vmul.f32 %v1123, 1.442695
      %v1266 = vpow.pop %v1265
      %v1267 = vmul.f32 %v1124, 1.442695
      %v1268 = vpow.pop %v1267
      %v1269 = vmul.f32 %v1125, 1.442695
      %v1270 = vpow.pop %v1269
      %v1271 = vmul.f32 %v1126, 1.442695
      %v1272 = vpow.pop %v1271
      %v1273 = vmul.f32 %v1127, 1.442695
      %v1274 = vpow.pop %v1273
      %v1275 = vmul.f32 %v1128, 1.442695
      %v1276 = vpow.pop %v1275
      %v1277 = vmul.f32 %v1129, 1.442695
      %v1278 = vpow.pop %v1277
      %v1279 = vmul.f32 %v1130, 1.442695
      %v1280 = vpow.pop %v1279
      %v1281 = vmul.f32 %v1131, 1.442695
      %v1282 = vpow.pop %v1281
      %v1283 = vmul.f32 %v1132, 1.442695
      %v1284 = vpow.pop %v1283
      %v1285 = vmul.f32 %v1133, 1.442695
      %v1286 = vpow.pop %v1285
      %v1287 = vmul.f32 %v1134, 1.442695
      %v1288 = vpow.pop %v1287
      %v1289 = vmul.f32 %v1135, 1.442695
      %v1290 = vpow.pop %v1289
      %v1291 = vmul.f32 %v1136, 1.442695
      %v1292 = vpow.pop %v1291
      %v1293 = vmul.f32 %v1137, 1.442695
      %v1294 = vpow.pop %v1293
      %v1295 = vmul.f32 %v1138, 1.442695
      %v1296 = vpow.pop %v1295
      %v1297 = vmul.f32 %v1139, 1.442695
      %v1298 = vpow.pop %v1297
      %v1299 = vmul.f32 %v1140, 1.442695
      %v1300 = vpow.pop %v1299
      %v1301 = vmul.f32 %v1141, 1.442695
      %v1302 = vpow.pop %v1301
      %v1303 = vmul.f32 %v1142, 1.442695
      %v1304 = vpow.pop %v1303
      %v1305 = vmul.f32 %v1143, 1.442695
      %v1306 = vpow.pop %v1305
      %v1307 = vmul.f32 %v1144, 1.442695
      %v1308 = vpow.pop %v1307
      %v1309 = vmul.f32 %v1145, 1.442695
      %v1310 = vpow.pop %v1309
      %v1311 = vmul.f32 %v1146, 1.442695
      %v1312 = vpow.pop %v1311
      %v1313 = vmul.f32 %v1147, 1.442695
      %v1314 = vpow.pop %v1313
      %v1315 = vmul.f32 %v1148, 1.442695
      %v1316 = vpow.pop %v1315
      %v1317 = vmul.f32 %v1149, 1.442695
      %v1318 = vpow.pop %v1317
      %v1319 = vmul.f32 %v1150, 1.442695
      %v1320 = vpow.pop %v1319
      %v1321 = vmul.f32 %v1151, 1.442695
      %v1322 = vpow.pop %v1321
      %v1323 = vmul.f32 %v1152, 1.442695
      %v1324 = vpow.pop %v1323
      %v1325 = vmul.f32 %v1153, 1.442695
      %v1326 = vpow.pop %v1325
      %v1327 = vmul.f32 %v1154, 1.442695
      %v1328 = vpow.pop %v1327
      %v1329 = vmul.f32 %v1155, 1.442695
      %v1330 = vpow.pop %v1329
      %v1331 = vmul.f32 %v1156, 1.442695
      %v1332 = vpow.pop %v1331
      %v1333 = vmul.f32 %v1157, 1.442695
      %v1334 = vpow.pop %v1333
      %v1335 = vmul.f32 %v1158, 1.442695
      %v1336 = vpow.pop %v1335
      %v1337 = vmul.f32 %v1159, 1.442695
      %v1338 = vpow.pop %v1337
      %v1339 = vmul.f32 %v1160, 1.442695
      %v1340 = vpow.pop %v1339
      %v1341 = vmul.f32 %v1161, 1.442695
      %v1342 = vpow.pop %v1341
      %v1343 = vmul.f32 %v1162, 1.442695
      %v1344 = vpow.pop %v1343
      %v1345 = vmul.f32 %v1163, 1.442695
      %v1346 = vpow.pop %v1345
      %v1347 = vmul.f32 %v1164, 1.442695
      %v1348 = vpow.pop %v1347
      %v1349 = vmul.f32 %v1165, 1.442695
      %v1350 = vpow.pop %v1349
      %v1351 = vmul.f32 %v1166, 1.442695
      %v1352 = vpow.pop %v1351
      %v1353 = vmul.f32 %v1167, 1.442695
      %v1354 = vpow.pop %v1353
      %v1355 = vmul.f32 %v1168, 1.442695
      %v1356 = vpow.pop %v1355
      %v1357 = vmul.f32 %v1169, 1.442695
      %v1358 = vpow.pop %v1357
      %v1359 = vmul.f32 %v1170, 1.442695
      %v1360 = vpow.pop %v1359
      %v1361 = vmul.f32 %v1171, 1.442695
      %v1362 = vpow.pop %v1361
      %v1363 = vmul.f32 %v1172, 1.442695
      %v1364 = vpow.pop %v1363
      %v1365 = vmul.f32 %v1173, 1.442695
      %v1366 = vpow.pop %v1365
      %v1367 = vmul.f32 %v1174, 1.442695
      %v1368 = vpow.pop %v1367
      %v1369 = vmul.f32 %v1175, 1.442695
      %v1370 = vpow.pop %v1369
      %v1371 = vmul.f32 %v1176, 1.442695
      %v1372 = vpow.pop %v1371
      %v1373 = vadd.f32 %v1178, 1.0
      %v1374 = vadd.f32 %v1180, 1.0
      %v1375 = vadd.f32 %v1182, 1.0
      %v1376 = vadd.f32 %v1184, 1.0
      %v1377 = vadd.f32 %v1186, 1.0
      %v1378 = vadd.f32 %v1188, 1.0
      %v1379 = vadd.f32 %v1190, 1.0
      %v1380 = vadd.f32 %v1192, 1.0
      %v1381 = vadd.f32 %v1194, 1.0
      %v1382 = vadd.f32 %v1196, 1.0
      %v1383 = vadd.f32 %v1198, 1.0
      %v1384 = vadd.f32 %v1200, 1.0
      %v1385 = vadd.f32 %v1202, 1.0
      %v1386 = vadd.f32 %v1204, 1.0
      %v1387 = vadd.f32 %v1206, 1.0
      %v1388 = vadd.f32 %v1208, 1.0
      %v1389 = vadd.f32 %v1210, 1.0
      %v1390 = vadd.f32 %v1212, 1.0
      %v1391 = vadd.f32 %v1214, 1.0
      %v1392 = vadd.f32 %v1216, 1.0
      %v1393 = vadd.f32 %v1218, 1.0
      %v1394 = vadd.f32 %v1220, 1.0
      %v1395 = vadd.f32 %v1222, 1.0
      %v1396 = vadd.f32 %v1224, 1.0
      %v1397 = vadd.f32 %v1226, 1.0
      %v1398 = vadd.f32 %v1228, 1.0
      %v1399 = vadd.f32 %v1230, 1.0
      %v1400 = vadd.f32 %v1232, 1.0
      %v1401 = vadd.f32 %v1234, 1.0
      %v1402 = vadd.f32 %v1236, 1.0
      %v1403 = vadd.f32 %v1238, 1.0
      %v1404 = vadd.f32 %v1240, 1.0
      %v1405 = vadd.f32 %v1242, 1.0
      %v1406 = vadd.f32 %v1244, 1.0
      %v1407 = vadd.f32 %v1246, 1.0
      %v1408 = vadd.f32 %v1248, 1.0
      %v1409 = vadd.f32 %v1250, 1.0
      %v1410 = vadd.f32 %v1252, 1.0
      %v1411 = vadd.f32 %v1254, 1.0
      %v1412 = vadd.f32 %v1256, 1.0
      %v1413 = vadd.f32 %v1258, 1.0
      %v1414 = vadd.f32 %v1260, 1.0
      %v1415 = vadd.f32 %v1262, 1.0
      %v1416 = vadd.f32 %v1264, 1.0
      %v1417 = vadd.f32 %v1266, 1.0
      %v1418 = vadd.f32 %v1268, 1.0
      %v1419 = vadd.f32 %v1270, 1.0
      %v1420 = vadd.f32 %v1272, 1.0
      %v1421 = vadd.f32 %v1274, 1.0
      %v1422 = vadd.f32 %v1276, 1.0
      %v1423 = vadd.f32 %v1278, 1.0
      %v1424 = vadd.f32 %v1280, 1.0
      %v1425 = vadd.f32 %v1282, 1.0
      %v1426 = vadd.f32 %v1284, 1.0
      %v1427 = vadd.f32 %v1286, 1.0
      %v1428 = vadd.f32 %v1288, 1.0
      %v1429 = vadd.f32 %v1290, 1.0
      %v1430 = vadd.f32 %v1292, 1.0
      %v1431 = vadd.f32 %v1294, 1.0
      %v1432 = vadd.f32 %v1296, 1.0
      %v1433 = vadd.f32 %v1298, 1.0
      %v1434 = vadd.f32 %v1300, 1.0
      %v1435 = vadd.f32 %v1302, 1.0
      %v1436 = vadd.f32 %v1304, 1.0
      %v1437 = vadd.f32 %v1306, 1.0
      %v1438 = vadd.f32 %v1308, 1.0
      %v1439 = vadd.f32 %v1310, 1.0
      %v1440 = vadd.f32 %v1312, 1.0
      %v1441 = vadd.f32 %v1314, 1.0
      %v1442 = vadd.f32 %v1316, 1.0
      %v1443 = vadd.f32 %v1318, 1.0
      %v1444 = vadd.f32 %v1320, 1.0
      %v1445 = vadd.f32 %v1322, 1.0
      %v1446 = vadd.f32 %v1324, 1.0
      %v1447 = vadd.f32 %v1326, 1.0
      %v1448 = vadd.f32 %v1328, 1.0
      %v1449 = vadd.f32 %v1330, 1.0
      %v1450 = vadd.f32 %v1332, 1.0
      %v1451 = vadd.f32 %v1334, 1.0
      %v1452 = vadd.f32 %v1336, 1.0
      %v1453 = vadd.f32 %v1338, 1.0
      %v1454 = vadd.f32 %v1340, 1.0
      %v1455 = vadd.f32 %v1342, 1.0
      %v1456 = vadd.f32 %v1344, 1.0
      %v1457 = vadd.f32 %v1346, 1.0
      %v1458 = vadd.f32 %v1348, 1.0
      %v1459 = vadd.f32 %v1350, 1.0
      %v1460 = vadd.f32 %v1352, 1.0
      %v1461 = vadd.f32 %v1354, 1.0
      %v1462 = vadd.f32 %v1356, 1.0
      %v1463 = vadd.f32 %v1358, 1.0
      %v1464 = vadd.f32 %v1360, 1.0
      %v1465 = vadd.f32 %v1362, 1.0
      %v1466 = vadd.f32 %v1364, 1.0
      %v1467 = vadd.f32 %v1366, 1.0
      %v1468 = vadd.f32 %v1368, 1.0
      %v1469 = vadd.f32 %v1370, 1.0
      %v1470 = vadd.f32 %v1372, 1.0
      %v1471 = vrcp.pop %v1373
      %v1472 = vmul.f32 1.0, %v1471
      %v1473 = vrcp.pop %v1374
      %v1474 = vmul.f32 1.0, %v1473
      %v1475 = vrcp.pop %v1375
      %v1476 = vmul.f32 1.0, %v1475
      %v1477 = vrcp.pop %v1376
      %v1478 = vmul.f32 1.0, %v1477
      %v1479 = vrcp.pop %v1377
      %v1480 = vmul.f32 1.0, %v1479
      %v1481 = vrcp.pop %v1378
      %v1482 = vmul.f32 1.0, %v1481
      %v1483 = vrcp.pop %v1379
      %v1484 = vmul.f32 1.0, %v1483
      %v1485 = vrcp.pop %v1380
      %v1486 = vmul.f32 1.0, %v1485
      %v1487 = vrcp.pop %v1381
      %v1488 = vmul.f32 1.0, %v1487
      %v1489 = vrcp.pop %v1382
      %v1490 = vmul.f32 1.0, %v1489
      %v1491 = vrcp.pop %v1383
      %v1492 = vmul.f32 1.0, %v1491
      %v1493 = vrcp.pop %v1384
      %v1494 = vmul.f32 1.0, %v1493
      %v1495 = vrcp.pop %v1385
      %v1496 = vmul.f32 1.0, %v1495
      %v1497 = vrcp.pop %v1386
      %v1498 = vmul.f32 1.0, %v1497
      %v1499 = vrcp.pop %v1387
      %v1500 = vmul.f32 1.0, %v1499
      %v1501 = vrcp.pop %v1388
      %v1502 = vmul.f32 1.0, %v1501
      %v1503 = vrcp.pop %v1389
      %v1504 = vmul.f32 1.0, %v1503
      %v1505 = vrcp.pop %v1390
      %v1506 = vmul.f32 1.0, %v1505
      %v1507 = vrcp.pop %v1391
      %v1508 = vmul.f32 1.0, %v1507
      %v1509 = vrcp.pop %v1392
      %v1510 = vmul.f32 1.0, %v1509
      %v1511 = vrcp.pop %v1393
      %v1512 = vmul.f32 1.0, %v1511
      %v1513 = vrcp.pop %v1394
      %v1514 = vmul.f32 1.0, %v1513
      %v1515 = vrcp.pop %v1395
      %v1516 = vmul.f32 1.0, %v1515
      %v1517 = vrcp.pop %v1396
      %v1518 = vmul.f32 1.0, %v1517
      %v1519 = vrcp.pop %v1397
      %v1520 = vmul.f32 1.0, %v1519
      %v1521 = vrcp.pop %v1398
      %v1522 = vmul.f32 1.0, %v1521
      %v1523 = vrcp.pop %v1399
      %v1524 = vmul.f32 1.0, %v1523
      %v1525 = vrcp.pop %v1400
      %v1526 = vmul.f32 1.0, %v1525
      %v1527 = vrcp.pop %v1401
      %v1528 = vmul.f32 1.0, %v1527
      %v1529 = vrcp.pop %v1402
      %v1530 = vmul.f32 1.0, %v1529
      %v1531 = vrcp.pop %v1403
      %v1532 = vmul.f32 1.0, %v1531
      %v1533 = vrcp.pop %v1404
      %v1534 = vmul.f32 1.0, %v1533
      %v1535 = vrcp.pop %v1405
      %v1536 = vmul.f32 1.0, %v1535
      %v1537 = vrcp.pop %v1406
      %v1538 = vmul.f32 1.0, %v1537
      %v1539 = vrcp.pop %v1407
      %v1540 = vmul.f32 1.0, %v1539
      %v1541 = vrcp.pop %v1408
      %v1542 = vmul.f32 1.0, %v1541
      %v1543 = vrcp.pop %v1409
      %v1544 = vmul.f32 1.0, %v1543
      %v1545 = vrcp.pop %v1410
      %v1546 = vmul.f32 1.0, %v1545
      %v1547 = vrcp.pop %v1411
      %v1548 = vmul.f32 1.0, %v1547
      %v1549 = vrcp.pop %v1412
      %v1550 = vmul.f32 1.0, %v1549
      %v1551 = vrcp.pop %v1413
      %v1552 = vmul.f32 1.0, %v1551
      %v1553 = vrcp.pop %v1414
      %v1554 = vmul.f32 1.0, %v1553
      %v1555 = vrcp.pop %v1415
      %v1556 = vmul.f32 1.0, %v1555
      %v1557 = vrcp.pop %v1416
      %v1558 = vmul.f32 1.0, %v1557
      %v1559 = vrcp.pop %v1417
      %v1560 = vmul.f32 1.0, %v1559
      %v1561 = vrcp.pop %v1418
      %v1562 = vmul.f32 1.0, %v1561
      %v1563 = vrcp.pop %v1419
      %v1564 = vmul.f32 1.0, %v1563
      %v1565 = vrcp.pop %v1420
      %v1566 = vmul.f32 1.0, %v1565
      %v1567 = vrcp.pop %v1421
      %v1568 = vmul.f32 1.0, %v1567
      %v1569 = vrcp.pop %v1422
      %v1570 = vmul.f32 1.0, %v1569
      %v1571 = vrcp.pop %v1423
      %v1572 = vmul.f32 1.0, %v1571
      %v1573 = vrcp.pop %v1424
      %v1574 = vmul.f32 1.0, %v1573
      %v1575 = vrcp.pop %v1425
      %v1576 = vmul.f32 1.0, %v1575
      %v1577 = vrcp.pop %v1426
      %v1578 = vmul.f32 1.0, %v1577
      %v1579 = vrcp.pop %v1427
      %v1580 = vmul.f32 1.0, %v1579
      %v1581 = vrcp.pop %v1428
      %v1582 = vmul.f32 1.0, %v1581
      %v1583 = vrcp.pop %v1429
      %v1584 = vmul.f32 1.0, %v1583
      %v1585 = vrcp.pop %v1430
      %v1586 = vmul.f32 1.0, %v1585
      %v1587 = vrcp.pop %v1431
      %v1588 = vmul.f32 1.0, %v1587
      %v1589 = vrcp.pop %v1432
      %v1590 = vmul.f32 1.0, %v1589
      %v1591 = vrcp.pop %v1433
      %v1592 = vmul.f32 1.0, %v1591
      %v1593 = vrcp.pop %v1434
      %v1594 = vmul.f32 1.0, %v1593
      %v1595 = vrcp.pop %v1435
      %v1596 = vmul.f32 1.0, %v1595
      %v1597 = vrcp.pop %v1436
      %v1598 = vmul.f32 1.0, %v1597
      %v1599 = vrcp.pop %v1437
      %v1600 = vmul.f32 1.0, %v1599
      %v1601 = vrcp.pop %v1438
      %v1602 = vmul.f32 1.0, %v1601
      %v1603 = vrcp.pop %v1439
      %v1604 = vmul.f32 1.0, %v1603
      %v1605 = vrcp.pop %v1440
      %v1606 = vmul.f32 1.0, %v1605
      %v1607 = vrcp.pop %v1441
      %v1608 = vmul.f32 1.0, %v1607
      %v1609 = vrcp.pop %v1442
      %v1610 = vmul.f32 1.0, %v1609
      %v1611 = vrcp.pop %v1443
      %v1612 = vmul.f32 1.0, %v1611
      %v1613 = vrcp.pop %v1444
      %v1614 = vmul.f32 1.0, %v1613
      %v1615 = vrcp.pop %v1445
      %v1616 = vmul.f32 1.0, %v1615
      %v1617 = vrcp.pop %v1446
      %v1618 = vmul.f32 1.0, %v1617
      %v1619 = vrcp.pop %v1447
      %v1620 = vmul.f32 1.0, %v1619
      %v1621 = vrcp.pop %v1448
      %v1622 = vmul.f32 1.0, %v1621
      %v1623 = vrcp.pop %v1449
      %v1624 = vmul.f32 1.0, %v1623
      %v1625 = vrcp.pop %v1450
      %v1626 = vmul.f32 1.0, %v1625
      %v1627 = vrcp.pop %v1451
      %v1628 = vmul.f32 1.0, %v1627
      %v1629 = vrcp.pop %v1452
      %v1630 = vmul.f32 1.0, %v1629
      %v1631 = vrcp.pop %v1453
      %v1632 = vmul.f32 1.0, %v1631
      %v1633 = vrcp.pop %v1454
      %v1634 = vmul.f32 1.0, %v1633
      %v1635 = vrcp.pop %v1455
      %v1636 = vmul.f32 1.0, %v1635
      %v1637 = vrcp.pop %v1456
      %v1638 = vmul.f32 1.0, %v1637
      %v1639 = vrcp.pop %v1457
      %v1640 = vmul.f32 1.0, %v1639
      %v1641 = vrcp.pop %v1458
      %v1642 = vmul.f32 1.0, %v1641
      %v1643 = vrcp.pop %v1459
      %v1644 = vmul.f32 1.0, %v1643
      %v1645 = vrcp.pop %v1460
      %v1646 = vmul.f32 1.0, %v1645
      %v1647 = vrcp.pop %v1461
      %v1648 = vmul.f32 1.0, %v1647
      %v1649 = vrcp.pop %v1462
      %v1650 = vmul.f32 1.0, %v1649
      %v1651 = vrcp.pop %v1463
      %v1652 = vmul.f32 1.0, %v1651
      %v1653 = vrcp.pop %v1464
      %v1654 = vmul.f32 1.0, %v1653
      %v1655 = vrcp.pop %v1465
      %v1656 = vmul.f32 1.0, %v1655
      %v1657 = vrcp.pop %v1466
      %v1658 = vmul.f32 1.0, %v1657
      %v1659 = vrcp.pop %v1467
      %v1660 = vmul.f32 1.0, %v1659
      %v1661 = vrcp.pop %v1468
      %v1662 = vmul.f32 1.0, %v1661
      %v1663 = vrcp.pop %v1469
      %v1664 = vmul.f32 1.0, %v1663
      %v1665 = vrcp.pop %v1470
      %v1666 = vmul.f32 1.0, %v1665
      %vm1667 = vcmask 23552
      %1668 = vst.msk [vmem:[%s175] sm:$0xff] %vm1667, %v1472
      %1669 = vst.msk [vmem:[%s175 + $0x8] sm:$0xff] %vm1667, %v1474
      %1670 = vst.msk [vmem:[%s175 + $0x10] sm:$0xff] %vm1667, %v1476
      %1671 = vst.msk [vmem:[%s175 + $0x18] sm:$0xff] %vm1667, %v1478
      %1672 = vst.msk [vmem:[%s175 + $0x20] sm:$0xff] %vm1667, %v1480
      %1673 = vst.msk [vmem:[%s175 + $0x28] sm:$0xff] %vm1667, %v1482
      %1674 = vst.msk [vmem:[%s175 + $0x30] sm:$0xff] %vm1667, %v1484
      %1675 = vst.msk [vmem:[%s175 + $0x38] sm:$0xff] %vm1667, %v1486
      %1676 = vst.msk [vmem:[%s175 + $0x40] sm:$0xff] %vm1667, %v1488
      %1677 = vst.msk [vmem:[%s175 + $0x48] sm:$0xff] %vm1667, %v1490
      %1678 = vst.msk [vmem:[%s175 + $0x50] sm:$0xff] %vm1667, %v1492
      %1679 = vst.msk [vmem:[%s175 + $0x58] sm:$0xff] %vm1667, %v1494
      %1680 = vst.msk [vmem:[%s175 + $0x60] sm:$0xff] %vm1667, %v1496
      %1681 = vst.msk [vmem:[%s175 + $0x68] sm:$0xff] %vm1667, %v1498
      %1682 = vst.msk [vmem:[%s175 + $0x70] sm:$0xff] %vm1667, %v1500
      %1683 = vst.msk [vmem:[%s175 + $0x78] sm:$0xff] %vm1667, %v1502
      %1684 = vst.msk [vmem:[%s175 + $0x80] sm:$0xff] %vm1667, %v1504
      %1685 = vst.msk [vmem:[%s175 + $0x88] sm:$0xff] %vm1667, %v1506
      %1686 = vst.msk [vmem:[%s175 + $0x90] sm:$0xff] %vm1667, %v1508
      %1687 = vst.msk [vmem:[%s175 + $0x98] sm:$0xff] %vm1667, %v1510
      %1688 = vst.msk [vmem:[%s175 + $0xa0] sm:$0xff] %vm1667, %v1512
      %1689 = vst.msk [vmem:[%s175 + $0xa8] sm:$0xff] %vm1667, %v1514
      %1690 = vst.msk [vmem:[%s175 + $0xb0] sm:$0xff] %vm1667, %v1516
      %1691 = vst.msk [vmem:[%s175 + $0xb8] sm:$0xff] %vm1667, %v1518
      %1692 = vst.msk [vmem:[%s175 + $0xc0] sm:$0xff] %vm1667, %v1520
      %1693 = vst.msk [vmem:[%s175 + $0xc8] sm:$0xff] %vm1667, %v1522
      %1694 = vst.msk [vmem:[%s175 + $0xd0] sm:$0xff] %vm1667, %v1524
      %1695 = vst.msk [vmem:[%s175 + $0xd8] sm:$0xff] %vm1667, %v1526
      %1696 = vst.msk [vmem:[%s175 + $0xe0] sm:$0xff] %vm1667, %v1528
      %1697 = vst.msk [vmem:[%s175 + $0xe8] sm:$0xff] %vm1667, %v1530
      %1698 = vst.msk [vmem:[%s175 + $0xf0] sm:$0xff] %vm1667, %v1532
      %1699 = vst.msk [vmem:[%s175 + $0xf8] sm:$0xff] %vm1667, %v1534
      %1700 = vst.msk [vmem:[%s175 + $0x100] sm:$0xff] %vm1667, %v1536
      %1701 = vst.msk [vmem:[%s175 + $0x108] sm:$0xff] %vm1667, %v1538
      %1702 = vst.msk [vmem:[%s175 + $0x110] sm:$0xff] %vm1667, %v1540
      %1703 = vst.msk [vmem:[%s175 + $0x118] sm:$0xff] %vm1667, %v1542
      %1704 = vst.msk [vmem:[%s175 + $0x120] sm:$0xff] %vm1667, %v1544
      %1705 = vst.msk [vmem:[%s175 + $0x128] sm:$0xff] %vm1667, %v1546
      %1706 = vst.msk [vmem:[%s175 + $0x130] sm:$0xff] %vm1667, %v1548
      %1707 = vst.msk [vmem:[%s175 + $0x138] sm:$0xff] %vm1667, %v1550
      %1708 = vst.msk [vmem:[%s175 + $0x140] sm:$0xff] %vm1667, %v1552
      %1709 = vst.msk [vmem:[%s175 + $0x148] sm:$0xff] %vm1667, %v1554
      %1710 = vst.msk [vmem:[%s175 + $0x150] sm:$0xff] %vm1667, %v1556
      %1711 = vst.msk [vmem:[%s175 + $0x158] sm:$0xff] %vm1667, %v1558
      %1712 = vst.msk [vmem:[%s175 + $0x160] sm:$0xff] %vm1667, %v1560
      %1713 = vst.msk [vmem:[%s175 + $0x168] sm:$0xff] %vm1667, %v1562
      %1714 = vst.msk [vmem:[%s175 + $0x170] sm:$0xff] %vm1667, %v1564
      %1715 = vst.msk [vmem:[%s175 + $0x178] sm:$0xff] %vm1667, %v1566
      %1716 = vst.msk [vmem:[%s175 + $0x180] sm:$0xff] %vm1667, %v1568
      %1717 = vst.msk [vmem:[%s175 + $0x188] sm:$0xff] %vm1667, %v1570
      %1718 = vst.msk [vmem:[%s175 + $0x190] sm:$0xff] %vm1667, %v1572
      %1719 = vst.msk [vmem:[%s175 + $0x198] sm:$0xff] %vm1667, %v1574
      %1720 = vst.msk [vmem:[%s175 + $0x1a0] sm:$0xff] %vm1667, %v1576
      %1721 = vst.msk [vmem:[%s175 + $0x1a8] sm:$0xff] %vm1667, %v1578
      %1722 = vst.msk [vmem:[%s175 + $0x1b0] sm:$0xff] %vm1667, %v1580
      %1723 = vst.msk [vmem:[%s175 + $0x1b8] sm:$0xff] %vm1667, %v1582
      %1724 = vst.msk [vmem:[%s175 + $0x1c0] sm:$0xff] %vm1667, %v1584
      %1725 = vst.msk [vmem:[%s175 + $0x1c8] sm:$0xff] %vm1667, %v1586
      %1726 = vst.msk [vmem:[%s175 + $0x1d0] sm:$0xff] %vm1667, %v1588
      %1727 = vst.msk [vmem:[%s175 + $0x1d8] sm:$0xff] %vm1667, %v1590
      %1728 = vst.msk [vmem:[%s175 + $0x1e0] sm:$0xff] %vm1667, %v1592
      %1729 = vst.msk [vmem:[%s175 + $0x1e8] sm:$0xff] %vm1667, %v1594
      %1730 = vst.msk [vmem:[%s175 + $0x1f0] sm:$0xff] %vm1667, %v1596
      %1731 = vst.msk [vmem:[%s175 + $0x1f8] sm:$0xff] %vm1667, %v1598
      %1732 = vst.msk [vmem:[%s175 + $0x200] sm:$0xff] %vm1667, %v1600
      %1733 = vst.msk [vmem:[%s175 + $0x208] sm:$0xff] %vm1667, %v1602
      %1734 = vst.msk [vmem:[%s175 + $0x210] sm:$0xff] %vm1667, %v1604
      %1735 = vst.msk [vmem:[%s175 + $0x218] sm:$0xff] %vm1667, %v1606
      %1736 = vst.msk [vmem:[%s175 + $0x220] sm:$0xff] %vm1667, %v1608
      %1737 = vst.msk [vmem:[%s175 + $0x228] sm:$0xff] %vm1667, %v1610
      %1738 = vst.msk [vmem:[%s175 + $0x230] sm:$0xff] %vm1667, %v1612
      %1739 = vst.msk [vmem:[%s175 + $0x238] sm:$0xff] %vm1667, %v1614
      %1740 = vst.msk [vmem:[%s175 + $0x240] sm:$0xff] %vm1667, %v1616
      %1741 = vst.msk [vmem:[%s175 + $0x248] sm:$0xff] %vm1667, %v1618
      %1742 = vst.msk [vmem:[%s175 + $0x250] sm:$0xff] %vm1667, %v1620
      %1743 = vst.msk [vmem:[%s175 + $0x258] sm:$0xff] %vm1667, %v1622
      %1744 = vst.msk [vmem:[%s175 + $0x260] sm:$0xff] %vm1667, %v1624
      %1745 = vst.msk [vmem:[%s175 + $0x268] sm:$0xff] %vm1667, %v1626
      %1746 = vst.msk [vmem:[%s175 + $0x270] sm:$0xff] %vm1667, %v1628
      %1747 = vst.msk [vmem:[%s175 + $0x278] sm:$0xff] %vm1667, %v1630
      %1748 = vst.msk [vmem:[%s175 + $0x280] sm:$0xff] %vm1667, %v1632
      %1749 = vst.msk [vmem:[%s175 + $0x288] sm:$0xff] %vm1667, %v1634
      %1750 = vst.msk [vmem:[%s175 + $0x290] sm:$0xff] %vm1667, %v1636
      %1751 = vst.msk [vmem:[%s175 + $0x298] sm:$0xff] %vm1667, %v1638
      %1752 = vst.msk [vmem:[%s175 + $0x2a0] sm:$0xff] %vm1667, %v1640
      %1753 = vst.msk [vmem:[%s175 + $0x2a8] sm:$0xff] %vm1667, %v1642
      %1754 = vst.msk [vmem:[%s175 + $0x2b0] sm:$0xff] %vm1667, %v1644
      %1755 = vst.msk [vmem:[%s175 + $0x2b8] sm:$0xff] %vm1667, %v1646
      %1756 = vst.msk [vmem:[%s175 + $0x2c0] sm:$0xff] %vm1667, %v1648
      %1757 = vst.msk [vmem:[%s175 + $0x2c8] sm:$0xff] %vm1667, %v1650
      %1758 = vst.msk [vmem:[%s175 + $0x2d0] sm:$0xff] %vm1667, %v1652
      %1759 = vst.msk [vmem:[%s175 + $0x2d8] sm:$0xff] %vm1667, %v1654
      %1760 = vst.msk [vmem:[%s175 + $0x2e0] sm:$0xff] %vm1667, %v1656
      %1761 = vst.msk [vmem:[%s175 + $0x2e8] sm:$0xff] %vm1667, %v1658
      %1762 = vst.msk [vmem:[%s175 + $0x2f0] sm:$0xff] %vm1667, %v1660
      %1763 = vst.msk [vmem:[%s175 + $0x2f8] sm:$0xff] %vm1667, %v1662
      %1764 = vst.msk [vmem:[%s175 + $0x300] sm:$0xff] %vm1667, %v1664
      %1765 = vst.msk [vmem:[%s175 + $0x308] sm:$0xff] %vm1667, %v1666
      %s1766 = smul.u32 98, %s14
      %p1767 = scmp.lt.s32.totalorder %s1766, 195
      %s1768 = scalar_select %p1767, %s1766, 195
      %s1769 = smul.addr %s1768, 8
      %s1770 = scalar_lea.vmem %s3, %s1769
      // Predicated region
      $region33: #{vae_forward.17} parent=31 // pred_check
        %p1771 = pneg %p100
      $region34: #{vae_forward.17} parent=31 // pred_check_branch
        %1773 = sbr.rel (%p1771) target = $region36
      $region35: #{vae_forward.17} parent=31 // pred_region
        %s1774 = smul.u32 98, %s14
      $region36: #{vae_forward.17} parent=31 // pred_fallthru
        _
    $region32: #{vae_forward.17} parent=5 // pred_fallthru
      _
    %p1775 = scmp.le.s32.totalorder 2, %s9
    // Predicated region
    $region37: #{vae_forward.17} parent=5 // pred_check
      %p1776 = pneg %p1775
    $region38: #{vae_forward.17} parent=5 // pred_check_branch
      %1778 = sbr.rel (%p1776) target = $region40
    $region39: #{vae_forward.17} parent=5 // pred_region
      %s1779 = ssub.s32 %s9, 2
      // Predicated region
      $region41: #{vae_forward.17} parent=39 // pred_check
        %p1780 = pneg %p106
      $region42: #{vae_forward.17} parent=39 // pred_check_branch
        %1782 = sbr.rel (%p1780) target = $region44
      $region43: #{vae_forward.17} parent=39 // pred_region
        %s1783 = smul.u32 98, %s15
        %p1784 = scmp.lt.s32.totalorder %s1783, 195
        %s1785 = scalar_select %p1784, %s1783, 195
        %s1786 = smul.addr %s1785, 8
        %s1787 = scalar_lea.vmem %s3, %s1786
      $region44: #{vae_forward.17} parent=39 // pred_fallthru
        _
    $region40: #{vae_forward.17} parent=5 // pred_fallthru
      _
  $region6: #{vae_forward.17} parent=0 // loop_footer
    %s13 = sadd.s32 1, %s9
  $region7: #{vae_forward.17} parent=0 // loop_footer_branch
    %8 = sbr.rel target = $region3
  $region8: #{vae_forward.17} parent=0 // loop_exit
    _

</llo_original>
